<compile_context>
chip_gen: v5e
topology: v5e:2x2
jax: 0.10.0
libtpu: 0.0.40
codegen_flags: <defaults>
</compile_context>

<pallas_src>
import jax
import jax.numpy as jnp
from jax.experimental import pallas as pl
from jax.experimental.pallas import tpu as pltpu

NCLS_PAD = 128  # lane-dense logits slab


# ---------------------------------------------------------------------------
# Fused Pallas kernel (one batch tile of TB rows per grid step)
# ---------------------------------------------------------------------------

def fused_forward_kernel(xpad_ref, w1_ref, b1_ref, w2_ref, b2_ref,
                         wl0_ref, bl0_ref, wl1_ref, bl1_ref,
                         w1t_ref, w1e_ref, bfc1_ref, wfc2_ref, bfc2_ref,
                         wfc3_ref, bfc3_ref, emoji_ref, out_ref, h1p_ref):
    """Entire SentimentModel forward (eval mode) on VMEM-resident data.

    xpad_ref : (TB, L+2, 1) f32   zero-padded text tile (conv pad=1 done on host)
    w1_ref   : (3, C1)      f32   conv1 taps, row k = weight[:, 0, k]
    b1_ref   : (1, 1, C1)   f32
    w2_ref   : (3*C1, C2)   bf16  conv2 im2col weight, row k*C1+c = weight[:, c, k]
    b2_ref   : (1, C2)      f32
    wl0_ref  : (E, 8H)      bf16  LSTM layer0 [fwd | rev] input weights (W_ih^T)
    bl0_ref  : (1, 8H)      f32   (b_ih + b_hh) per direction
    wl1_ref  : (2H, 8H)     bf16  LSTM layer1 [fwd | rev]
    bl1_ref  : (1, 8H)      f32
    w1t_ref  : (L4*C2, 512) bf16  fc1 text block, rows in NLC-flatten order (l*C2 + c)
    w1e_ref  : (2H, 512)    bf16  fc1 emoji block
    bfc1_ref : (1, 512)     f32
    wfc2_ref : (512, 256)   bf16
    bfc2_ref : (1, 256)     f32
    wfc3_ref : (256, 128)   bf16  (num_classes padded to 128 lanes)
    bfc3_ref : (1, 128)     f32
    emoji_ref: (TB, E)      f32
    out_ref  : (TB, 128)    f32   lane-dense logits slab
    h1p_ref  : (TB, L2+2, C1) f32 VMEM scratch: zero-padded conv2 input
    """
    TB, Lp2, _ = xpad_ref.shape
    L = Lp2 - 2
    L2, L4 = L // 2, L // 4
    C1 = w1_ref.shape[1]
    C2 = w2_ref.shape[1]
    H = wl0_ref.shape[1] // 8
    f32, bf16 = jnp.float32, jnp.bfloat16

    # ----- conv1 (Cin=1, K=3, pad=1): broadcast x across channels ONCE, 3 VPU FMAs -----
    xb = jnp.broadcast_to(xpad_ref[...], (TB, Lp2, C1))            # single lane splat
    acc1 = (xb[:, 0:L, :] * w1_ref[0:1, :][None]
            + xb[:, 1:L + 1, :] * w1_ref[1:2, :][None]
            + xb[:, 2:L + 2, :] * w1_ref[2:3, :][None]
            + b1_ref[...])                                         # (TB, L, C1)
    a1 = jnp.maximum(acc1, 0.0)                                    # ReLU
    h1 = jnp.max(a1.reshape(TB, L2, 2, C1), axis=2)                # MaxPool1d(2) -> (TB, L2, C1)

    # ----- conv2 (128->256, K=3, pad=1): zero-padded scratch + ONE K=384 im2col matmul -----
    h1p_ref[:, 0:1, :] = jnp.zeros((TB, 1, C1), f32)               # pad row (left)
    h1p_ref[:, L2 + 1:L2 + 2, :] = jnp.zeros((TB, 1, C1), f32)     # pad row (right)
    h1p_ref[:, 1:L2 + 1, :] = h1
    cols2 = jnp.concatenate(
        [h1p_ref[:, 0:L2, :], h1p_ref[:, 1:L2 + 1, :], h1p_ref[:, 2:L2 + 2, :]],
        axis=-1).reshape(TB * L2, 3 * C1)                          # (TB*L2, 384)
    g2 = jnp.dot(cols2.astype(bf16), w2_ref[...],
                 preferred_element_type=f32)                        # (TB*L2, C2)
    a2 = jnp.maximum(g2 + b2_ref[...], 0.0)                        # ReLU
    h2 = jnp.max(a2.reshape(TB, L4, 2, C2), axis=2)                # MaxPool1d(2) -> (TB, L4, C2)
    h2_flat = h2.astype(bf16).reshape(TB, L4 * C2)                 # NLC flatten (weights match)

    # ----- emoji bi-LSTM, seq_len == 1, zero initial (h0, c0) -----
    # With h0 = c0 = 0 the recurrent W_hh term and f*c0 vanish: gates = x@W_ih^T + b_ih + b_hh,
    # c = i*g, h = o*tanh(c).  Gate order (i, f, g, o).  Both directions in one matmul.
    def lstm_h(g):                                                 # g: (TB, 4H) f32 pre-activations
        i_g = jax.nn.sigmoid(g[:, 0:H])
        g_g = jnp.tanh(g[:, 2 * H:3 * H])
        o_g = jax.nn.sigmoid(g[:, 3 * H:4 * H])
        return o_g * jnp.tanh(i_g * g_g)

    emoji = emoji_ref[...]
    g0 = jnp.dot(emoji.astype(bf16), wl0_ref[...],
                 preferred_element_type=f32) + bl0_ref[...]         # (TB, 8H)
    l1_in = jnp.concatenate([lstm_h(g0[:, 0:4 * H]), lstm_h(g0[:, 4 * H:8 * H])], axis=1)
    g1 = jnp.dot(l1_in.astype(bf16), wl1_ref[...],
                 preferred_element_type=f32) + bl1_ref[...]         # (TB, 8H)
    emoji_feat = jnp.concatenate([lstm_h(g1[:, 0:4 * H]), lstm_h(g1[:, 4 * H:8 * H])], axis=1)

    # ----- classifier: fc1 = ONE long-K text matmul + emoji matmul (flatten folded into weights) -----
    acc = (jnp.dot(h2_flat, w1t_ref[...], preferred_element_type=f32)
           + jnp.dot(emoji_feat.astype(bf16), w1e_ref[...], preferred_element_type=f32)
           + bfc1_ref[...])
    h = jnp.maximum(acc, 0.0)
    # TODO(synk): nn.Dropout(0.5)/(0.3) are stochastic only in train mode; eval forward = identity.
    h = jnp.maximum(jnp.dot(h.astype(bf16), wfc2_ref[...],
                            preferred_element_type=f32) + bfc2_ref[...], 0.0)
    out_ref[...] = jnp.dot(h.astype(bf16), wfc3_ref[...],
                           preferred_element_type=f32) + bfc3_ref[...]


# ---------------------------------------------------------------------------
# Wrapper: batch tiling + BlockSpecs
# ---------------------------------------------------------------------------

def _round_up(x, m):
    return (x + m - 1) // m * m


def sentiment_forward(params, text_features, emoji_features, *, batch_tile=128):
    """text_features: (B, L) f32, emoji_features: (B, E) f32 -> (B, num_classes) f32."""
    B, L = text_features.shape
    assert L % 4 == 0, "two MaxPool1d(2) + Flatten sizing assumes L divisible by 4"
    # Note: L//2 being a multiple of 8 keeps the in-kernel reshapes tile-aligned (perf only).
    E = emoji_features.shape[1]
    C1 = 128

    TB = min(batch_tile, _round_up(B, 8))      # batch tile (sublane-aligned)
    B_pad = _round_up(B, TB)
    nB = B_pad // TB

    # conv pad=1 and batch padding done on host; padded rows are sliced off at the end.
    xpad = jnp.pad(text_features.astype(jnp.float32),
                   ((0, B_pad - B), (1, 1)))[:, :, None]            # (B_pad, L+2, 1)
    emoji = jnp.pad(emoji_features.astype(jnp.float32),
                    ((0, B_pad - B), (0, 0)))                       # (B_pad, E)

    weight_names = ["conv1_w", "conv1_b", "conv2_w", "conv2_b",
                    "lstm0_w", "lstm0_b", "lstm1_w", "lstm1_b",
                    "fc1_wt", "fc1_we", "fc1_b", "fc2_w", "fc2_b",
                    "fc3_w", "fc3_b"]
    weights = [params[n] for n in weight_names]

    def const_spec(a):
        # Full-array block with a constant index map -> fetched once, VMEM-resident for all tiles.
        return pl.BlockSpec(a.shape, lambda b, nd=a.ndim: (0,) * nd)

    in_specs = ([pl.BlockSpec((TB, L + 2, 1), lambda b: (b, 0, 0))]   # streamed per batch tile
                + [const_spec(w) for w in weights]
                + [pl.BlockSpec((TB, E), lambda b: (b, 0))])          # streamed per batch tile

    out_pad = pl.pallas_call(
        fused_forward_kernel,
        out_shape=jax.ShapeDtypeStruct((B_pad, NCLS_PAD), jnp.float32),
        grid=(nB,),
        in_specs=in_specs,
        out_specs=pl.BlockSpec((TB, NCLS_PAD), lambda b: (b, 0)),
        scratch_shapes=[pltpu.VMEM((TB, L // 2 + 2, C1), jnp.float32)],  # padded conv2 input
        compiler_params=pltpu.CompilerParams(
            dimension_semantics=("parallel",),          # shards batch tiles across v7x's 2 TCs
            vmem_limit_bytes=64 * 1024 * 1024),
    )(xpad, *weights, emoji)
    return out_pad[:B, :params["num_classes"]]


# ---------------------------------------------------------------------------
# Parameter init + packing (torch layout -> kernel layout; MXU weights in bf16)
# ---------------------------------------------------------------------------

def init_params(key, text_input_size, emoji_input_size, num_classes=3):
    H, C1, C2 = 256, 128, 256
    L4 = text_input_size // 4
    keys = iter(jax.random.split(key, 40))
    bf16 = jnp.bfloat16

    def nrm(shape, scale=0.05):
        return scale * jax.random.normal(next(keys), shape, dtype=jnp.float32)

    p = {}
    # conv1: torch Conv1d(1, 128, 3, padding=1) -- stays f32 (VPU path)
    w = nrm((C1, 1, 3))
    p["conv1_w"] = w.reshape(C1, 3).T                              # (3, C1), row k = tap k
    p["conv1_b"] = nrm((C1,)).reshape(1, 1, C1)
    # conv2: torch Conv1d(128, 256, 3, padding=1) -> single im2col weight (3*C1, C2)
    w = nrm((C2, C1, 3))
    p["conv2_w"] = jnp.transpose(w, (2, 1, 0)).reshape(3 * C1, C2).astype(bf16)
    p["conv2_b"] = nrm((C2,)).reshape(1, C2)

    # LSTM(emoji_input_size, 256, num_layers=2, bidirectional). seq_len==1 & zero state =>
    # W_hh multiplies zeros; only W_ih and (b_ih + b_hh) matter. Pack fwd|rev side by side.
    def lstm_layer(in_size):
        w_f, w_r = nrm((4 * H, in_size)), nrm((4 * H, in_size))
        bi_f, bh_f = nrm((4 * H,)), nrm((4 * H,))
        bi_r, bh_r = nrm((4 * H,)), nrm((4 * H,))
        w = jnp.concatenate([w_f.T, w_r.T], axis=1).astype(bf16)   # (in, 8H)
        b = jnp.concatenate([bi_f + bh_f, bi_r + bh_r])[None, :]   # (1, 8H)
        return w, b

    p["lstm0_w"], p["lstm0_b"] = lstm_layer(emoji_input_size)
    p["lstm1_w"], p["lstm1_b"] = lstm_layer(2 * H)

    # classifier: fc1 split into (permuted) text block + emoji block.
    # Text part of torch fc1 expects NCL-flatten order (column index c*L4 + l); repack once at
    # init so the kernel's NLC flatten (row index l*C2 + c) hits the matching weight rows.
    cin = C2 * L4 + 2 * H
    w, b = nrm((512, cin)), nrm((512,))
    w_text = w[:, :C2 * L4].reshape(512, C2, L4)
    p["fc1_wt"] = jnp.transpose(w_text, (2, 1, 0)).reshape(L4 * C2, 512).astype(bf16)
    p["fc1_we"] = w[:, C2 * L4:].T.astype(bf16)                    # (2H, 512)
    p["fc1_b"] = b[None, :]
    w, b = nrm((256, 512)), nrm((256,))
    p["fc2_w"], p["fc2_b"] = w.T.astype(bf16), b[None, :]
    w, b = nrm((num_classes, 256)), nrm((num_classes,))
    wp = jnp.zeros((256, NCLS_PAD), jnp.float32).at[:, :num_classes].set(w.T)
    bp = jnp.zeros((1, NCLS_PAD), jnp.float32).at[0, :num_classes].set(b)
    p["fc3_w"], p["fc3_b"] = wp.astype(bf16), bp
    p["num_classes"] = num_classes                                 # python int (wrapper slice)
    return p


if __name__ == "__main__":
    B, L, E, NCLS = 2, 16, 8, 3
    key = jax.random.PRNGKey(0)
    k_text, k_emoji, k_params = jax.random.split(key, 3)

    text = jax.random.normal(k_text, (B, L), dtype=jnp.float32)
    emoji = jax.random.normal(k_emoji, (B, E), dtype=jnp.float32)
    params = init_params(k_params, text_input_size=L, emoji_input_size=E, num_classes=NCLS)

    out = sentiment_forward(params, text, emoji)
    out = jax.block_until_ready(out)
    assert out.shape == (B, NCLS), out.shape
    assert jnp.all(jnp.isfinite(out))
    print("KERNEL_OK")
</pallas_src>

<mosaic_0001>
module attributes {stable_mosaic.version = 11 : i64} {
  func.func @fused_forward_kernel(%arg0: i32, %arg1: memref<8x18x1xf32, #tpu.memory_space<vmem>>, %arg2: memref<3x128xf32, #tpu.memory_space<vmem>>, %arg3: memref<1x1x128xf32, #tpu.memory_space<vmem>>, %arg4: memref<384x256xbf16, #tpu.memory_space<vmem>>, %arg5: memref<1x256xf32, #tpu.memory_space<vmem>>, %arg6: memref<8x2048xbf16, #tpu.memory_space<vmem>>, %arg7: memref<1x2048xf32, #tpu.memory_space<vmem>>, %arg8: memref<512x2048xbf16, #tpu.memory_space<vmem>>, %arg9: memref<1x2048xf32, #tpu.memory_space<vmem>>, %arg10: memref<1024x512xbf16, #tpu.memory_space<vmem>>, %arg11: memref<512x512xbf16, #tpu.memory_space<vmem>>, %arg12: memref<1x512xf32, #tpu.memory_space<vmem>>, %arg13: memref<512x256xbf16, #tpu.memory_space<vmem>>, %arg14: memref<1x256xf32, #tpu.memory_space<vmem>>, %arg15: memref<256x128xbf16, #tpu.memory_space<vmem>>, %arg16: memref<1x128xf32, #tpu.memory_space<vmem>>, %arg17: memref<8x8xf32, #tpu.memory_space<vmem>>, %arg18: memref<8x128xf32, #tpu.memory_space<vmem>>, %arg19: memref<8x10x128xf32, #tpu.memory_space<vmem>>) attributes {dimension_semantics = [#tpu.dimension_semantics<parallel>], iteration_bounds = array<i64: 1>, scalar_prefetch = 0 : i64, scratch_operands = 1 : i64, tpu.core_type = #tpu.core_type<tc>, window_params = [{transform_indices = @transform_0, window_bounds = array<i64: 8, 18, 1>}, {pipeline_mode = #tpu.pipeline_mode<synchronous>, transform_indices = @transform_1, window_bounds = array<i64: 3, 128>}, {pipeline_mode = #tpu.pipeline_mode<synchronous>, transform_indices = @transform_2, window_bounds = array<i64: 1, 1, 128>}, {pipeline_mode = #tpu.pipeline_mode<synchronous>, transform_indices = @transform_3, window_bounds = array<i64: 384, 256>}, {pipeline_mode = #tpu.pipeline_mode<synchronous>, transform_indices = @transform_4, window_bounds = array<i64: 1, 256>}, {pipeline_mode = #tpu.pipeline_mode<synchronous>, transform_indices = @transform_5, window_bounds = array<i64: 8, 2048>}, {pipeline_mode = #tpu.pipeline_mode<synchronous>, transform_indices = @transform_6, window_bounds = array<i64: 1, 2048>}, {pipeline_mode = #tpu.pipeline_mode<synchronous>, transform_indices = @transform_7, window_bounds = array<i64: 512, 2048>}, {pipeline_mode = #tpu.pipeline_mode<synchronous>, transform_indices = @transform_8, window_bounds = array<i64: 1, 2048>}, {pipeline_mode = #tpu.pipeline_mode<synchronous>, transform_indices = @transform_9, window_bounds = array<i64: 1024, 512>}, {pipeline_mode = #tpu.pipeline_mode<synchronous>, transform_indices = @transform_10, window_bounds = array<i64: 512, 512>}, {pipeline_mode = #tpu.pipeline_mode<synchronous>, transform_indices = @transform_11, window_bounds = array<i64: 1, 512>}, {pipeline_mode = #tpu.pipeline_mode<synchronous>, transform_indices = @transform_12, window_bounds = array<i64: 512, 256>}, {pipeline_mode = #tpu.pipeline_mode<synchronous>, transform_indices = @transform_13, window_bounds = array<i64: 1, 256>}, {pipeline_mode = #tpu.pipeline_mode<synchronous>, transform_indices = @transform_14, window_bounds = array<i64: 256, 128>}, {pipeline_mode = #tpu.pipeline_mode<synchronous>, transform_indices = @transform_15, window_bounds = array<i64: 1, 128>}, {transform_indices = @transform_16, window_bounds = array<i64: 8, 8>}, {transform_indices = @transform_17, window_bounds = array<i64: 8, 128>}]} {
    %c0 = arith.constant 0 : index
    %c0_0 = arith.constant 0 : index
    %c0_1 = arith.constant 0 : index
    %0 = vector.load %arg1[%c0, %c0_0, %c0_1] : memref<8x18x1xf32, #tpu.memory_space<vmem>>, vector<8x18x1xf32>
    %1 = vector.shape_cast %0 : vector<8x18x1xf32> to vector<8x18x1xf32>
    %2 = vector.broadcast %1 : vector<8x18x1xf32> to vector<8x18x128xf32>
    %3 = vector.extract_strided_slice %2 {offsets = [0, 0, 0], sizes = [8, 16, 128], strides = [1, 1, 1]} : vector<8x18x128xf32> to vector<8x16x128xf32>
    %c0_2 = arith.constant 0 : index
    %c0_3 = arith.constant 0 : index
    %4 = vector.load %arg2[%c0_2, %c0_3] : memref<3x128xf32, #tpu.memory_space<vmem>>, vector<1x128xf32>
    %5 = vector.shape_cast %4 : vector<1x128xf32> to vector<1x1x128xf32>
    %6 = vector.broadcast %5 : vector<1x1x128xf32> to vector<8x16x128xf32>
    %7 = arith.mulf %3, %6 : vector<8x16x128xf32>
    %8 = vector.extract_strided_slice %2 {offsets = [0, 1, 0], sizes = [8, 16, 128], strides = [1, 1, 1]} : vector<8x18x128xf32> to vector<8x16x128xf32>
    %c1 = arith.constant 1 : index
    %c0_4 = arith.constant 0 : index
    %9 = vector.load %arg2[%c1, %c0_4] : memref<3x128xf32, #tpu.memory_space<vmem>>, vector<1x128xf32>
    %10 = vector.shape_cast %9 : vector<1x128xf32> to vector<1x1x128xf32>
    %11 = vector.broadcast %10 : vector<1x1x128xf32> to vector<8x16x128xf32>
    %12 = arith.mulf %8, %11 : vector<8x16x128xf32>
    %13 = arith.addf %7, %12 : vector<8x16x128xf32>
    %14 = vector.extract_strided_slice %2 {offsets = [0, 2, 0], sizes = [8, 16, 128], strides = [1, 1, 1]} : vector<8x18x128xf32> to vector<8x16x128xf32>
    %c2 = arith.constant 2 : index
    %c0_5 = arith.constant 0 : index
    %15 = vector.load %arg2[%c2, %c0_5] : memref<3x128xf32, #tpu.memory_space<vmem>>, vector<1x128xf32>
    %16 = vector.shape_cast %15 : vector<1x128xf32> to vector<1x1x128xf32>
    %17 = vector.broadcast %16 : vector<1x1x128xf32> to vector<8x16x128xf32>
    %18 = arith.mulf %14, %17 : vector<8x16x128xf32>
    %19 = arith.addf %13, %18 : vector<8x16x128xf32>
    %c0_6 = arith.constant 0 : index
    %c0_7 = arith.constant 0 : index
    %c0_8 = arith.constant 0 : index
    %20 = vector.load %arg3[%c0_6, %c0_7, %c0_8] : memref<1x1x128xf32, #tpu.memory_space<vmem>>, vector<1x1x128xf32>
    %21 = vector.broadcast %20 : vector<1x1x128xf32> to vector<8x16x128xf32>
    %22 = arith.addf %19, %21 : vector<8x16x128xf32>
    %cst = arith.constant 0.000000e+00 : f32
    %23 = vector.broadcast %cst : f32 to vector<8x16x128xf32>
    %24 = arith.maximumf %22, %23 : vector<8x16x128xf32>
    %25 = vector.shape_cast %24 : vector<8x16x128xf32> to vector<8x8x2x128xf32>
    %cst_9 = arith.constant dense<0xFF800000> : vector<8x8x128xf32>
    %26 = vector.multi_reduction <maximumf>, %25, %cst_9 [2] : vector<8x8x2x128xf32> to vector<8x8x128xf32>
    %cst_10 = arith.constant 0.000000e+00 : f32
    %27 = vector.broadcast %cst_10 : f32 to vector<8x1x128xf32>
    %c0_11 = arith.constant 0 : index
    %c0_12 = arith.constant 0 : index
    %c0_13 = arith.constant 0 : index
    %28 = vector.load %arg19[%c0_11, %c0_12, %c0_13] : memref<8x10x128xf32, #tpu.memory_space<vmem>>, vector<8x1x128xf32>
    tpu.vector_store %arg19[%c0_11, %c0_12, %c0_13], %27 {strides = array<i32>} : memref<8x10x128xf32, #tpu.memory_space<vmem>>, vector<8x1x128xf32>,
    %cst_14 = arith.constant 0.000000e+00 : f32
    %29 = vector.broadcast %cst_14 : f32 to vector<8x1x128xf32>
    %c0_15 = arith.constant 0 : index
    %c9 = arith.constant 9 : index
    %c0_16 = arith.constant 0 : index
    %30 = vector.load %arg19[%c0_15, %c9, %c0_16] : memref<8x10x128xf32, #tpu.memory_space<vmem>>, vector<8x1x128xf32>
    tpu.vector_store %arg19[%c0_15, %c9, %c0_16], %29 {strides = array<i32>} : memref<8x10x128xf32, #tpu.memory_space<vmem>>, vector<8x1x128xf32>,
    %c0_17 = arith.constant 0 : index
    %c1_18 = arith.constant 1 : index
    %c0_19 = arith.constant 0 : index
    %31 = vector.load %arg19[%c0_17, %c1_18, %c0_19] : memref<8x10x128xf32, #tpu.memory_space<vmem>>, vector<8x8x128xf32>
    tpu.vector_store %arg19[%c0_17, %c1_18, %c0_19], %26 {strides = array<i32>} : memref<8x10x128xf32, #tpu.memory_space<vmem>>, vector<8x8x128xf32>,
    %c0_20 = arith.constant 0 : index
    %c0_21 = arith.constant 0 : index
    %c0_22 = arith.constant 0 : index
    %32 = vector.load %arg19[%c0_20, %c0_21, %c0_22] : memref<8x10x128xf32, #tpu.memory_space<vmem>>, vector<8x8x128xf32>
    %c0_23 = arith.constant 0 : index
    %c1_24 = arith.constant 1 : index
    %c0_25 = arith.constant 0 : index
    %33 = vector.load %arg19[%c0_23, %c1_24, %c0_25] : memref<8x10x128xf32, #tpu.memory_space<vmem>>, vector<8x8x128xf32>
    %c0_26 = arith.constant 0 : index
    %c2_27 = arith.constant 2 : index
    %c0_28 = arith.constant 0 : index
    %34 = vector.load %arg19[%c0_26, %c2_27, %c0_28] : memref<8x10x128xf32, #tpu.memory_space<vmem>>, vector<8x8x128xf32>
    %35 = tpu.concatenate %32, %33, %34 in 2 : vector<8x8x128xf32>, vector<8x8x128xf32>, vector<8x8x128xf32> -> vector<8x8x384xf32>
    %36 = vector.shape_cast %35 : vector<8x8x384xf32> to vector<64x384xf32>
    %37 = arith.truncf %36 : vector<64x384xf32> to vector<64x384xbf16>
    %c0_29 = arith.constant 0 : index
    %c0_30 = arith.constant 0 : index
    %38 = vector.load %arg4[%c0_29, %c0_30] : memref<384x256xbf16, #tpu.memory_space<vmem>>, vector<384x256xbf16>
    %cst_31 = arith.constant dense<0.000000e+00> : vector<64x256xf32>
    %39 = tpu.matmul %37, %38, %cst_31 {dimension_numbers = #tpu.dot_dimension_numbers<[1], [0], [0], [1], [0, 0, 1, 1], [], []>} : vector<64x384xbf16>, vector<384x256xbf16>, vector<64x256xf32> -> vector<64x256xf32>
    %c0_32 = arith.constant 0 : index
    %c0_33 = arith.constant 0 : index
    %40 = vector.load %arg5[%c0_32, %c0_33] : memref<1x256xf32, #tpu.memory_space<vmem>>, vector<1x256xf32>
    %41 = vector.broadcast %40 : vector<1x256xf32> to vector<64x256xf32>
    %42 = arith.addf %39, %41 : vector<64x256xf32>
    %cst_34 = arith.constant 0.000000e+00 : f32
    %43 = vector.broadcast %cst_34 : f32 to vector<64x256xf32>
    %44 = arith.maximumf %42, %43 : vector<64x256xf32>
    %45 = vector.shape_cast %44 : vector<64x256xf32> to vector<8x4x2x256xf32>
    %cst_35 = arith.constant dense<0xFF800000> : vector<8x4x256xf32>
    %46 = vector.multi_reduction <maximumf>, %45, %cst_35 [2] : vector<8x4x2x256xf32> to vector<8x4x256xf32>
    %47 = arith.truncf %46 : vector<8x4x256xf32> to vector<8x4x256xbf16>
    %48 = vector.shape_cast %47 : vector<8x4x256xbf16> to vector<8x1024xbf16>
    %c0_36 = arith.constant 0 : index
    %c0_37 = arith.constant 0 : index
    %49 = vector.load %arg17[%c0_36, %c0_37] : memref<8x8xf32, #tpu.memory_space<vmem>>, vector<8x8xf32>
    %50 = arith.truncf %49 : vector<8x8xf32> to vector<8x8xbf16>
    %c0_38 = arith.constant 0 : index
    %c0_39 = arith.constant 0 : index
    %51 = vector.load %arg6[%c0_38, %c0_39] : memref<8x2048xbf16, #tpu.memory_space<vmem>>, vector<8x2048xbf16>
    %cst_40 = arith.constant dense<0.000000e+00> : vector<8x2048xf32>
    %52 = tpu.matmul %50, %51, %cst_40 {dimension_numbers = #tpu.dot_dimension_numbers<[1], [0], [0], [1], [0, 0, 1, 1], [], []>} : vector<8x8xbf16>, vector<8x2048xbf16>, vector<8x2048xf32> -> vector<8x2048xf32>
    %c0_41 = arith.constant 0 : index
    %c0_42 = arith.constant 0 : index
    %53 = vector.load %arg7[%c0_41, %c0_42] : memref<1x2048xf32, #tpu.memory_space<vmem>>, vector<1x2048xf32>
    %54 = vector.broadcast %53 : vector<1x2048xf32> to vector<8x2048xf32>
    %55 = arith.addf %52, %54 : vector<8x2048xf32>
    %56 = vector.extract_strided_slice %55 {offsets = [0, 0], sizes = [8, 1024], strides = [1, 1]} : vector<8x2048xf32> to vector<8x1024xf32>
    %57 = vector.extract_strided_slice %56 {offsets = [0, 0], sizes = [8, 256], strides = [1, 1]} : vector<8x1024xf32> to vector<8x256xf32>
    %58 = arith.negf %57 : vector<8x256xf32>
    %59 = math.exp %58 : vector<8x256xf32>
    %cst_43 = arith.constant 1.000000e+00 : f32
    %60 = vector.broadcast %cst_43 : f32 to vector<8x256xf32>
    %61 = arith.addf %60, %59 : vector<8x256xf32>
    %62 = arith.divf %60, %61 : vector<8x256xf32>
    %63 = vector.extract_strided_slice %56 {offsets = [0, 512], sizes = [8, 256], strides = [1, 1]} : vector<8x1024xf32> to vector<8x256xf32>
    %64 = math.tanh %63 : vector<8x256xf32>
    %65 = vector.extract_strided_slice %56 {offsets = [0, 768], sizes = [8, 256], strides = [1, 1]} : vector<8x1024xf32> to vector<8x256xf32>
    %66 = arith.negf %65 : vector<8x256xf32>
    %67 = math.exp %66 : vector<8x256xf32>
    %cst_44 = arith.constant 1.000000e+00 : f32
    %68 = vector.broadcast %cst_44 : f32 to vector<8x256xf32>
    %69 = arith.addf %68, %67 : vector<8x256xf32>
    %70 = arith.divf %68, %69 : vector<8x256xf32>
    %71 = arith.mulf %62, %64 : vector<8x256xf32>
    %72 = math.tanh %71 : vector<8x256xf32>
    %73 = arith.mulf %70, %72 : vector<8x256xf32>
    %74 = vector.extract_strided_slice %55 {offsets = [0, 1024], sizes = [8, 1024], strides = [1, 1]} : vector<8x2048xf32> to vector<8x1024xf32>
    %75 = vector.extract_strided_slice %74 {offsets = [0, 0], sizes = [8, 256], strides = [1, 1]} : vector<8x1024xf32> to vector<8x256xf32>
    %76 = arith.negf %75 : vector<8x256xf32>
    %77 = math.exp %76 : vector<8x256xf32>
    %cst_45 = arith.constant 1.000000e+00 : f32
    %78 = vector.broadcast %cst_45 : f32 to vector<8x256xf32>
    %79 = arith.addf %78, %77 : vector<8x256xf32>
    %80 = arith.divf %78, %79 : vector<8x256xf32>
    %81 = vector.extract_strided_slice %74 {offsets = [0, 512], sizes = [8, 256], strides = [1, 1]} : vector<8x1024xf32> to vector<8x256xf32>
    %82 = math.tanh %81 : vector<8x256xf32>
    %83 = vector.extract_strided_slice %74 {offsets = [0, 768], sizes = [8, 256], strides = [1, 1]} : vector<8x1024xf32> to vector<8x256xf32>
    %84 = arith.negf %83 : vector<8x256xf32>
    %85 = math.exp %84 : vector<8x256xf32>
    %cst_46 = arith.constant 1.000000e+00 : f32
    %86 = vector.broadcast %cst_46 : f32 to vector<8x256xf32>
    %87 = arith.addf %86, %85 : vector<8x256xf32>
    %88 = arith.divf %86, %87 : vector<8x256xf32>
    %89 = arith.mulf %80, %82 : vector<8x256xf32>
    %90 = math.tanh %89 : vector<8x256xf32>
    %91 = arith.mulf %88, %90 : vector<8x256xf32>
    %92 = tpu.concatenate %73, %91 in 1 : vector<8x256xf32>, vector<8x256xf32> -> vector<8x512xf32>
    %93 = arith.truncf %92 : vector<8x512xf32> to vector<8x512xbf16>
    %c0_47 = arith.constant 0 : index
    %c0_48 = arith.constant 0 : index
    %94 = vector.load %arg8[%c0_47, %c0_48] : memref<512x2048xbf16, #tpu.memory_space<vmem>>, vector<512x2048xbf16>
    %cst_49 = arith.constant dense<0.000000e+00> : vector<8x2048xf32>
    %95 = tpu.matmul %93, %94, %cst_49 {dimension_numbers = #tpu.dot_dimension_numbers<[1], [0], [0], [1], [0, 0, 1, 1], [], []>} : vector<8x512xbf16>, vector<512x2048xbf16>, vector<8x2048xf32> -> vector<8x2048xf32>
    %c0_50 = arith.constant 0 : index
    %c0_51 = arith.constant 0 : index
    %96 = vector.load %arg9[%c0_50, %c0_51] : memref<1x2048xf32, #tpu.memory_space<vmem>>, vector<1x2048xf32>
    %97 = vector.broadcast %96 : vector<1x2048xf32> to vector<8x2048xf32>
    %98 = arith.addf %95, %97 : vector<8x2048xf32>
    %99 = vector.extract_strided_slice %98 {offsets = [0, 0], sizes = [8, 1024], strides = [1, 1]} : vector<8x2048xf32> to vector<8x1024xf32>
    %100 = vector.extract_strided_slice %99 {offsets = [0, 0], sizes = [8, 256], strides = [1, 1]} : vector<8x1024xf32> to vector<8x256xf32>
    %101 = arith.negf %100 : vector<8x256xf32>
    %102 = math.exp %101 : vector<8x256xf32>
    %cst_52 = arith.constant 1.000000e+00 : f32
    %103 = vector.broadcast %cst_52 : f32 to vector<8x256xf32>
    %104 = arith.addf %103, %102 : vector<8x256xf32>
    %105 = arith.divf %103, %104 : vector<8x256xf32>
    %106 = vector.extract_strided_slice %99 {offsets = [0, 512], sizes = [8, 256], strides = [1, 1]} : vector<8x1024xf32> to vector<8x256xf32>
    %107 = math.tanh %106 : vector<8x256xf32>
    %108 = vector.extract_strided_slice %99 {offsets = [0, 768], sizes = [8, 256], strides = [1, 1]} : vector<8x1024xf32> to vector<8x256xf32>
    %109 = arith.negf %108 : vector<8x256xf32>
    %110 = math.exp %109 : vector<8x256xf32>
    %cst_53 = arith.constant 1.000000e+00 : f32
    %111 = vector.broadcast %cst_53 : f32 to vector<8x256xf32>
    %112 = arith.addf %111, %110 : vector<8x256xf32>
    %113 = arith.divf %111, %112 : vector<8x256xf32>
    %114 = arith.mulf %105, %107 : vector<8x256xf32>
    %115 = math.tanh %114 : vector<8x256xf32>
    %116 = arith.mulf %113, %115 : vector<8x256xf32>
    %117 = vector.extract_strided_slice %98 {offsets = [0, 1024], sizes = [8, 1024], strides = [1, 1]} : vector<8x2048xf32> to vector<8x1024xf32>
    %118 = vector.extract_strided_slice %117 {offsets = [0, 0], sizes = [8, 256], strides = [1, 1]} : vector<8x1024xf32> to vector<8x256xf32>
    %119 = arith.negf %118 : vector<8x256xf32>
    %120 = math.exp %119 : vector<8x256xf32>
    %cst_54 = arith.constant 1.000000e+00 : f32
    %121 = vector.broadcast %cst_54 : f32 to vector<8x256xf32>
    %122 = arith.addf %121, %120 : vector<8x256xf32>
    %123 = arith.divf %121, %122 : vector<8x256xf32>
    %124 = vector.extract_strided_slice %117 {offsets = [0, 512], sizes = [8, 256], strides = [1, 1]} : vector<8x1024xf32> to vector<8x256xf32>
    %125 = math.tanh %124 : vector<8x256xf32>
    %126 = vector.extract_strided_slice %117 {offsets = [0, 768], sizes = [8, 256], strides = [1, 1]} : vector<8x1024xf32> to vector<8x256xf32>
    %127 = arith.negf %126 : vector<8x256xf32>
    %128 = math.exp %127 : vector<8x256xf32>
    %cst_55 = arith.constant 1.000000e+00 : f32
    %129 = vector.broadcast %cst_55 : f32 to vector<8x256xf32>
    %130 = arith.addf %129, %128 : vector<8x256xf32>
    %131 = arith.divf %129, %130 : vector<8x256xf32>
    %132 = arith.mulf %123, %125 : vector<8x256xf32>
    %133 = math.tanh %132 : vector<8x256xf32>
    %134 = arith.mulf %131, %133 : vector<8x256xf32>
    %135 = tpu.concatenate %116, %134 in 1 : vector<8x256xf32>, vector<8x256xf32> -> vector<8x512xf32>
    %c0_56 = arith.constant 0 : index
    %c0_57 = arith.constant 0 : index
    %136 = vector.load %arg10[%c0_56, %c0_57] : memref<1024x512xbf16, #tpu.memory_space<vmem>>, vector<1024x512xbf16>
    %cst_58 = arith.constant dense<0.000000e+00> : vector<8x512xf32>
    %137 = tpu.matmul %48, %136, %cst_58 {dimension_numbers = #tpu.dot_dimension_numbers<[1], [0], [0], [1], [0, 0, 1, 1], [], []>} : vector<8x1024xbf16>, vector<1024x512xbf16>, vector<8x512xf32> -> vector<8x512xf32>
    %138 = arith.truncf %135 : vector<8x512xf32> to vector<8x512xbf16>
    %c0_59 = arith.constant 0 : index
    %c0_60 = arith.constant 0 : index
    %139 = vector.load %arg11[%c0_59, %c0_60] : memref<512x512xbf16, #tpu.memory_space<vmem>>, vector<512x512xbf16>
    %cst_61 = arith.constant dense<0.000000e+00> : vector<8x512xf32>
    %140 = tpu.matmul %138, %139, %cst_61 {dimension_numbers = #tpu.dot_dimension_numbers<[1], [0], [0], [1], [0, 0, 1, 1], [], []>} : vector<8x512xbf16>, vector<512x512xbf16>, vector<8x512xf32> -> vector<8x512xf32>
    %141 = arith.addf %137, %140 : vector<8x512xf32>
    %c0_62 = arith.constant 0 : index
    %c0_63 = arith.constant 0 : index
    %142 = vector.load %arg12[%c0_62, %c0_63] : memref<1x512xf32, #tpu.memory_space<vmem>>, vector<1x512xf32>
    %143 = vector.broadcast %142 : vector<1x512xf32> to vector<8x512xf32>
    %144 = arith.addf %141, %143 : vector<8x512xf32>
    %cst_64 = arith.constant 0.000000e+00 : f32
    %145 = vector.broadcast %cst_64 : f32 to vector<8x512xf32>
    %146 = arith.maximumf %144, %145 : vector<8x512xf32>
    %147 = arith.truncf %146 : vector<8x512xf32> to vector<8x512xbf16>
    %c0_65 = arith.constant 0 : index
    %c0_66 = arith.constant 0 : index
    %148 = vector.load %arg13[%c0_65, %c0_66] : memref<512x256xbf16, #tpu.memory_space<vmem>>, vector<512x256xbf16>
    %cst_67 = arith.constant dense<0.000000e+00> : vector<8x256xf32>
    %149 = tpu.matmul %147, %148, %cst_67 {dimension_numbers = #tpu.dot_dimension_numbers<[1], [0], [0], [1], [0, 0, 1, 1], [], []>} : vector<8x512xbf16>, vector<512x256xbf16>, vector<8x256xf32> -> vector<8x256xf32>
    %c0_68 = arith.constant 0 : index
    %c0_69 = arith.constant 0 : index
    %150 = vector.load %arg14[%c0_68, %c0_69] : memref<1x256xf32, #tpu.memory_space<vmem>>, vector<1x256xf32>
    %151 = vector.broadcast %150 : vector<1x256xf32> to vector<8x256xf32>
    %152 = arith.addf %149, %151 : vector<8x256xf32>
    %cst_70 = arith.constant 0.000000e+00 : f32
    %153 = vector.broadcast %cst_70 : f32 to vector<8x256xf32>
    %154 = arith.maximumf %152, %153 : vector<8x256xf32>
    %155 = arith.truncf %154 : vector<8x256xf32> to vector<8x256xbf16>
    %c0_71 = arith.constant 0 : index
    %c0_72 = arith.constant 0 : index
    %156 = vector.load %arg15[%c0_71, %c0_72] : memref<256x128xbf16, #tpu.memory_space<vmem>>, vector<256x128xbf16>
    %cst_73 = arith.constant dense<0.000000e+00> : vector<8x128xf32>
    %157 = tpu.matmul %155, %156, %cst_73 {dimension_numbers = #tpu.dot_dimension_numbers<[1], [0], [0], [1], [0, 0, 1, 1], [], []>} : vector<8x256xbf16>, vector<256x128xbf16>, vector<8x128xf32> -> vector<8x128xf32>
    %c0_74 = arith.constant 0 : index
    %c0_75 = arith.constant 0 : index
    %158 = vector.load %arg16[%c0_74, %c0_75] : memref<1x128xf32, #tpu.memory_space<vmem>>, vector<1x128xf32>
    %159 = vector.broadcast %158 : vector<1x128xf32> to vector<8x128xf32>
    %160 = arith.addf %157, %159 : vector<8x128xf32>
    %c0_76 = arith.constant 0 : index
    %c0_77 = arith.constant 0 : index
    %161 = vector.load %arg18[%c0_76, %c0_77] : memref<8x128xf32, #tpu.memory_space<vmem>>, vector<8x128xf32>
    tpu.vector_store %arg18[%c0_76, %c0_77], %160 {strides = array<i32>} : memref<8x128xf32, #tpu.memory_space<vmem>>, vector<8x128xf32>,
    return
  }
  func.func @transform_0(%arg0: i32) -> (i32, i32, i32) {
    %c0_i32 = arith.constant 0 : i32
    %c0_i32_0 = arith.constant 0 : i32
    %c0_i32_1 = arith.constant 0 : i32
    return %arg0, %c0_i32, %c0_i32_0 : i32, i32, i32
  }
  func.func @transform_1(%arg0: i32) -> (i32, i32) {
    %c0_i32 = arith.constant 0 : i32
    %c0_i32_0 = arith.constant 0 : i32
    %c0_i32_1 = arith.constant 0 : i32
    return %c0_i32, %c0_i32_0 : i32, i32
  }
  func.func @transform_2(%arg0: i32) -> (i32, i32, i32) {
    %c0_i32 = arith.constant 0 : i32
    %c0_i32_0 = arith.constant 0 : i32
    %c0_i32_1 = arith.constant 0 : i32
    %c0_i32_2 = arith.constant 0 : i32
    return %c0_i32, %c0_i32_0, %c0_i32_1 : i32, i32, i32
  }
  func.func @transform_3(%arg0: i32) -> (i32, i32) {
    %c0_i32 = arith.constant 0 : i32
    %c0_i32_0 = arith.constant 0 : i32
    %c0_i32_1 = arith.constant 0 : i32
    return %c0_i32, %c0_i32_0 : i32, i32
  }
  func.func @transform_4(%arg0: i32) -> (i32, i32) {
    %c0_i32 = arith.constant 0 : i32
    %c0_i32_0 = arith.constant 0 : i32
    %c0_i32_1 = arith.constant 0 : i32
    return %c0_i32, %c0_i32_0 : i32, i32
  }
  func.func @transform_5(%arg0: i32) -> (i32, i32) {
    %c0_i32 = arith.constant 0 : i32
    %c0_i32_0 = arith.constant 0 : i32
    %c0_i32_1 = arith.constant 0 : i32
    return %c0_i32, %c0_i32_0 : i32, i32
  }
  func.func @transform_6(%arg0: i32) -> (i32, i32) {
    %c0_i32 = arith.constant 0 : i32
    %c0_i32_0 = arith.constant 0 : i32
    %c0_i32_1 = arith.constant 0 : i32
    return %c0_i32, %c0_i32_0 : i32, i32
  }
  func.func @transform_7(%arg0: i32) -> (i32, i32) {
    %c0_i32 = arith.constant 0 : i32
    %c0_i32_0 = arith.constant 0 : i32
    %c0_i32_1 = arith.constant 0 : i32
    return %c0_i32, %c0_i32_0 : i32, i32
  }
  func.func @transform_8(%arg0: i32) -> (i32, i32) {
    %c0_i32 = arith.constant 0 : i32
    %c0_i32_0 = arith.constant 0 : i32
    %c0_i32_1 = arith.constant 0 : i32
    return %c0_i32, %c0_i32_0 : i32, i32
  }
  func.func @transform_9(%arg0: i32) -> (i32, i32) {
    %c0_i32 = arith.constant 0 : i32
    %c0_i32_0 = arith.constant 0 : i32
    %c0_i32_1 = arith.constant 0 : i32
    return %c0_i32, %c0_i32_0 : i32, i32
  }
  func.func @transform_10(%arg0: i32) -> (i32, i32) {
    %c0_i32 = arith.constant 0 : i32
    %c0_i32_0 = arith.constant 0 : i32
    %c0_i32_1 = arith.constant 0 : i32
    return %c0_i32, %c0_i32_0 : i32, i32
  }
  func.func @transform_11(%arg0: i32) -> (i32, i32) {
    %c0_i32 = arith.constant 0 : i32
    %c0_i32_0 = arith.constant 0 : i32
    %c0_i32_1 = arith.constant 0 : i32
    return %c0_i32, %c0_i32_0 : i32, i32
  }
  func.func @transform_12(%arg0: i32) -> (i32, i32) {
    %c0_i32 = arith.constant 0 : i32
    %c0_i32_0 = arith.constant 0 : i32
    %c0_i32_1 = arith.constant 0 : i32
    return %c0_i32, %c0_i32_0 : i32, i32
  }
  func.func @transform_13(%arg0: i32) -> (i32, i32) {
    %c0_i32 = arith.constant 0 : i32
    %c0_i32_0 = arith.constant 0 : i32
    %c0_i32_1 = arith.constant 0 : i32
    return %c0_i32, %c0_i32_0 : i32, i32
  }
  func.func @transform_14(%arg0: i32) -> (i32, i32) {
    %c0_i32 = arith.constant 0 : i32
    %c0_i32_0 = arith.constant 0 : i32
    %c0_i32_1 = arith.constant 0 : i32
    return %c0_i32, %c0_i32_0 : i32, i32
  }
  func.func @transform_15(%arg0: i32) -> (i32, i32) {
    %c0_i32 = arith.constant 0 : i32
    %c0_i32_0 = arith.constant 0 : i32
    %c0_i32_1 = arith.constant 0 : i32
    return %c0_i32, %c0_i32_0 : i32, i32
  }
  func.func @transform_16(%arg0: i32) -> (i32, i32) {
    %c0_i32 = arith.constant 0 : i32
    %c0_i32_0 = arith.constant 0 : i32
    return %arg0, %c0_i32 : i32, i32
  }
  func.func @transform_17(%arg0: i32) -> (i32, i32) {
    %c0_i32 = arith.constant 0 : i32
    %c0_i32_0 = arith.constant 0 : i32
    return %arg0, %c0_i32 : i32, i32
  }
}

</mosaic_0001>

<llo_original>
// kernel: tpu_custom_call.1
$region0: #{tpu_custom_call.1}
  #allocation0 [shape = 'u32[]', space=smem, size = 0x4, offset = 0x4, fixed_abs, tag = 'smem constant byte address 0x4 - core index']
  #allocation1 [shape = 'u32[72,128]{1,0:T(1,128)}', space=vmem, size = 0x9000, scoped, tag = 'internal scratch']
  #allocation2 [shape = 'f32[8,10,128]{2,1,0:T(8,128)}', space=vmem, size = 0x10000, scoped, tag = 'scratch operand']
  %s0 = inlined_call_operand.vmem [shape: f32[8,18,1], index: 0, kind: input, shape index: {}]
  %s1 = inlined_call_operand.hbm [shape: f32[3,128], index: 1, kind: input, shape index: {}]
  %s2 = inlined_call_operand.hbm [shape: f32[1,1,128], index: 2, kind: input, shape index: {}]
  %s3 = inlined_call_operand.hbm [shape: bf16[384,256], index: 3, kind: input, shape index: {}]
  %s4 = inlined_call_operand.hbm [shape: f32[1,256], index: 4, kind: input, shape index: {}]
  %s5 = inlined_call_operand.hbm [shape: bf16[8,2048], index: 5, kind: input, shape index: {}]
  %s6 = inlined_call_operand.hbm [shape: f32[1,2048], index: 6, kind: input, shape index: {}]
  %s7 = inlined_call_operand.hbm [shape: bf16[512,2048], index: 7, kind: input, shape index: {}]
  %s8 = inlined_call_operand.hbm [shape: f32[1,2048], index: 8, kind: input, shape index: {}]
  %s9 = inlined_call_operand.hbm [shape: bf16[1024,512], index: 9, kind: input, shape index: {}]
  %s10 = inlined_call_operand.hbm [shape: bf16[512,512], index: 10, kind: input, shape index: {}]
  %s11 = inlined_call_operand.hbm [shape: f32[1,512], index: 11, kind: input, shape index: {}]
  %s12 = inlined_call_operand.hbm [shape: bf16[512,256], index: 12, kind: input, shape index: {}]
  %s13 = inlined_call_operand.hbm [shape: f32[1,256], index: 13, kind: input, shape index: {}]
  %s14 = inlined_call_operand.hbm [shape: bf16[256,128], index: 14, kind: input, shape index: {}]
  %s15 = inlined_call_operand.hbm [shape: f32[1,128], index: 15, kind: input, shape index: {}]
  %s16 = inlined_call_operand.hbm [shape: f32[8,8], index: 16, kind: input, shape index: {}]
  %s17 = inlined_call_operand.hbm [shape: f32[8,128], index: 17, kind: output, shape index: {}]
  %s18 = sld [smem:[#allocation0]]
  $region142: #{tpu_custom_call.1} parent=0
    _
  %s20 = ssub.s32 1, %s18
  %s21 = scalar_select 0, %s20, %s18
  $region1: #{tpu_custom_call.1} parent=0
    #allocation3 [shape = 'u8[2048]{0}', space=vmem, size = 0x800, scoped, tag = 'input window, operand 1, single buffered']
    #allocation4 [shape = 's32[1]{0}', space=sflag, size = 0x4, scoped, tag = 'scoped memory for tpu_custom_call.1']
    #allocation5 [shape = 's32[1]{0}', space=sflag, size = 0x4, scoped, tag = 'scoped memory for tpu_custom_call.1']
    #allocation6 [shape = 'u8[512]{0}', space=vmem, size = 0x400, scoped, tag = 'input window, operand 2, single buffered']
    #allocation7 [shape = 's32[1]{0}', space=sflag, size = 0x4, scoped, tag = 'scoped memory for tpu_custom_call.1']
    #allocation8 [shape = 'u8[196608]{0}', space=vmem, size = 0x30000, scoped, tag = 'input window, operand 3, single buffered']
    #allocation9 [shape = 'u8[1024]{0}', space=vmem, size = 0x400, scoped, tag = 'input window, operand 4, single buffered']
    #allocation10 [shape = 's32[1]{0}', space=sflag, size = 0x4, scoped, tag = 'scoped memory for tpu_custom_call.1']
    #allocation11 [shape = 'u8[32768]{0}', space=vmem, size = 0x8000, scoped, tag = 'input window, operand 5, single buffered']
    #allocation12 [shape = 'u8[8192]{0}', space=vmem, size = 0x2000, scoped, tag = 'input window, operand 6, single buffered']
    #allocation13 [shape = 's32[1]{0}', space=sflag, size = 0x4, scoped, tag = 'scoped memory for tpu_custom_call.1']
    #allocation14 [shape = 'u8[2097152]{0}', space=vmem, size = 0x200000, scoped, tag = 'input window, operand 7, single buffered']
    #allocation15 [shape = 'u8[8192]{0}', space=vmem, size = 0x2000, scoped, tag = 'input window, operand 8, single buffered']
    #allocation16 [shape = 's32[1]{0}', space=sflag, size = 0x4, scoped, tag = 'scoped memory for tpu_custom_call.1']
    #allocation17 [shape = 'u8[1048576]{0}', space=vmem, size = 0x100000, scoped, tag = 'input window, operand 9, single buffered']
    #allocation18 [shape = 'u8[524288]{0}', space=vmem, size = 0x80000, scoped, tag = 'input window, operand 10, single buffered']
    #allocation19 [shape = 's32[1]{0}', space=sflag, size = 0x4, scoped, tag = 'scoped memory for tpu_custom_call.1']
    #allocation20 [shape = 'u8[2048]{0}', space=vmem, size = 0x800, scoped, tag = 'input window, operand 11, single buffered']
    #allocation21 [shape = 'u8[262144]{0}', space=vmem, size = 0x40000, scoped, tag = 'input window, operand 12, single buffered']
    #allocation22 [shape = 's32[1]{0}', space=sflag, size = 0x4, scoped, tag = 'scoped memory for tpu_custom_call.1']
    #allocation23 [shape = 'u8[1024]{0}', space=vmem, size = 0x400, scoped, tag = 'input window, operand 13, single buffered']
    #allocation24 [shape = 'u8[65536]{0}', space=vmem, size = 0x10000, scoped, tag = 'input window, operand 14, single buffered']
    #allocation25 [shape = 's32[1]{0}', space=sflag, size = 0x4, scoped, tag = 'scoped memory for tpu_custom_call.1']
    #allocation26 [shape = 'u8[512]{0}', space=vmem, size = 0x400, scoped, tag = 'input window, operand 15, single buffered']
    #allocation27 [shape = 'u8[4096]{0}', space=vmem, size = 0x1000, scoped, tag = 'input window, operand 16, single buffered']
    #allocation28 [shape = 's32[1]{0}', space=sflag, size = 0x4, scoped, tag = 'scoped memory for tpu_custom_call.1']
    #allocation29 [shape = 'u8[4096]{0}', space=vmem, size = 0x1000, scoped, tag = 'output window, operand 0, single buffered']
    %22 = vsyncpa [#allocation4], 0
    %23 = vsyncpa [#allocation7], 0
    %24 = vsyncpa [#allocation10], 0
    %25 = vsyncpa [#allocation13], 0
    %26 = vsyncpa [#allocation16], 0
    %27 = vsyncpa [#allocation19], 0
    %28 = vsyncpa [#allocation22], 0
    %29 = vsyncpa [#allocation25], 0
    %30 = vsyncpa [#allocation28], 0
    %31 = vsyncpa [#allocation5], 0
    // Predicated region
    $region2: #{tpu_custom_call.1} parent=1 // pred_check
      _
    $region3: #{tpu_custom_call.1} parent=1 // pred_check_branch
      %33 = sbr.rel (0) target = $region5
    $region4: #{tpu_custom_call.1} parent=1 // pred_region
      _
    $region5: #{tpu_custom_call.1} parent=1 // pred_fallthru
      _
    // Predicated region
    $region6: #{tpu_custom_call.1} parent=1 // pred_check
      _
    $region7: #{tpu_custom_call.1} parent=1 // pred_check_branch
      %35 = sbr.rel (0) target = $region9
    $region8: #{tpu_custom_call.1} parent=1 // pred_region
      %37 = vsyncadd [#allocation4], 0
      %s39 = sshll.u32 %s1, 4
      %s40 = int_to_ptr.hbm [resolvable:$true] %s39
      %s41 = sshll.u32 [#allocation3], 4
      %s42 = int_to_ptr.vmem [resolvable:$true] %s41
      %44 = dma.hbm_to_vmem [thread:$0]  %s40, 64, %s42, [#allocation4]
    $region9: #{tpu_custom_call.1} parent=1 // pred_fallthru
      _
    // Predicated region
    $region10: #{tpu_custom_call.1} parent=1 // pred_check
      _
    $region11: #{tpu_custom_call.1} parent=1 // pred_check_branch
      %46 = sbr.rel (0) target = $region13
    $region12: #{tpu_custom_call.1} parent=1 // pred_region
      %48 = vsyncadd [#allocation7], 0
      %s50 = sshll.u32 %s2, 4
      %s51 = int_to_ptr.hbm [resolvable:$true] %s50
      %s52 = sshll.u32 [#allocation6], 4
      %s53 = int_to_ptr.vmem [resolvable:$true] %s52
      %55 = dma.hbm_to_vmem [thread:$0]  %s51, 16, %s53, [#allocation7]
    $region13: #{tpu_custom_call.1} parent=1 // pred_fallthru
      _
    // Predicated region
    $region14: #{tpu_custom_call.1} parent=1 // pred_check
      _
    $region15: #{tpu_custom_call.1} parent=1 // pred_check_branch
      %57 = sbr.rel (0) target = $region17
    $region16: #{tpu_custom_call.1} parent=1 // pred_region
      %59 = vsyncadd [#allocation7], 0
      %s60 = sshll.u32 %s3, 4
      %s61 = int_to_ptr.hbm [resolvable:$true] %s60
      %s62 = sshll.u32 [#allocation8], 4
      %s63 = int_to_ptr.vmem [resolvable:$true] %s62
      %68 = dma.hbm_to_vmem [thread:$0]  %s61, 6144, %s63, [#allocation7], 128, 128, 8
    $region17: #{tpu_custom_call.1} parent=1 // pred_fallthru
      _
    // Predicated region
    $region18: #{tpu_custom_call.1} parent=1 // pred_check
      _
    $region19: #{tpu_custom_call.1} parent=1 // pred_check_branch
      %70 = sbr.rel (0) target = $region21
    $region20: #{tpu_custom_call.1} parent=1 // pred_region
      %72 = vsyncadd [#allocation10], 0
      %s74 = sshll.u32 %s4, 4
      %s75 = int_to_ptr.hbm [resolvable:$true] %s74
      %s76 = sshll.u32 [#allocation9], 4
      %s77 = int_to_ptr.vmem [resolvable:$true] %s76
      %79 = dma.hbm_to_vmem [thread:$0]  %s75, 32, %s77, [#allocation10]
    $region21: #{tpu_custom_call.1} parent=1 // pred_fallthru
      _
    // Predicated region
    $region22: #{tpu_custom_call.1} parent=1 // pred_check
      _
    $region23: #{tpu_custom_call.1} parent=1 // pred_check_branch
      %81 = sbr.rel (0) target = $region25
    $region24: #{tpu_custom_call.1} parent=1 // pred_region
      %83 = vsyncadd [#allocation10], 0
      %s85 = sshll.u32 %s5, 4
      %s86 = int_to_ptr.hbm [resolvable:$true] %s85
      %s87 = sshll.u32 [#allocation11], 4
      %s88 = int_to_ptr.vmem [resolvable:$true] %s87
      %90 = dma.hbm_to_vmem [thread:$0]  %s86, 1024, %s88, [#allocation10]
    $region25: #{tpu_custom_call.1} parent=1 // pred_fallthru
      _
    // Predicated region
    $region26: #{tpu_custom_call.1} parent=1 // pred_check
      _
    $region27: #{tpu_custom_call.1} parent=1 // pred_check_branch
      %92 = sbr.rel (0) target = $region29
    $region28: #{tpu_custom_call.1} parent=1 // pred_region
      %94 = vsyncadd [#allocation13], 0
      %s96 = sshll.u32 %s6, 4
      %s97 = int_to_ptr.hbm [resolvable:$true] %s96
      %s98 = sshll.u32 [#allocation12], 4
      %s99 = int_to_ptr.vmem [resolvable:$true] %s98
      %101 = dma.hbm_to_vmem [thread:$0]  %s97, 256, %s99, [#allocation13]
    $region29: #{tpu_custom_call.1} parent=1 // pred_fallthru
      _
    // Predicated region
    $region30: #{tpu_custom_call.1} parent=1 // pred_check
      _
    $region31: #{tpu_custom_call.1} parent=1 // pred_check_branch
      %103 = sbr.rel (0) target = $region33
    $region32: #{tpu_custom_call.1} parent=1 // pred_region
      %105 = vsyncadd [#allocation13], 0
      %s106 = sshll.u32 %s7, 4
      %s107 = int_to_ptr.hbm [resolvable:$true] %s106
      %s108 = sshll.u32 [#allocation14], 4
      %s109 = int_to_ptr.vmem [resolvable:$true] %s108
      %114 = dma.hbm_to_vmem [thread:$0]  %s107, 65536, %s109, [#allocation13], 1024, 1024, 64
    $region33: #{tpu_custom_call.1} parent=1 // pred_fallthru
      _
    // Predicated region
    $region34: #{tpu_custom_call.1} parent=1 // pred_check
      _
    $region35: #{tpu_custom_call.1} parent=1 // pred_check_branch
      %116 = sbr.rel (0) target = $region37
    $region36: #{tpu_custom_call.1} parent=1 // pred_region
      %118 = vsyncadd [#allocation16], 0
      %s120 = sshll.u32 %s8, 4
      %s121 = int_to_ptr.hbm [resolvable:$true] %s120
      %s122 = sshll.u32 [#allocation15], 4
      %s123 = int_to_ptr.vmem [resolvable:$true] %s122
      %125 = dma.hbm_to_vmem [thread:$0]  %s121, 256, %s123, [#allocation16]
    $region37: #{tpu_custom_call.1} parent=1 // pred_fallthru
      _
    // Predicated region
    $region38: #{tpu_custom_call.1} parent=1 // pred_check
      _
    $region39: #{tpu_custom_call.1} parent=1 // pred_check_branch
      %127 = sbr.rel (0) target = $region41
    $region40: #{tpu_custom_call.1} parent=1 // pred_region
      %129 = vsyncadd [#allocation16], 0
      %s130 = sshll.u32 %s9, 4
      %s131 = int_to_ptr.hbm [resolvable:$true] %s130
      %s132 = sshll.u32 [#allocation17], 4
      %s133 = int_to_ptr.vmem [resolvable:$true] %s132
      %138 = dma.hbm_to_vmem [thread:$0]  %s131, 32768, %s133, [#allocation16], 256, 256, 16
    $region41: #{tpu_custom_call.1} parent=1 // pred_fallthru
      _
    // Predicated region
    $region42: #{tpu_custom_call.1} parent=1 // pred_check
      _
    $region43: #{tpu_custom_call.1} parent=1 // pred_check_branch
      %140 = sbr.rel (0) target = $region45
    $region44: #{tpu_custom_call.1} parent=1 // pred_region
      %142 = vsyncadd [#allocation19], 0
      %s143 = sshll.u32 %s10, 4
      %s144 = int_to_ptr.hbm [resolvable:$true] %s143
      %s145 = sshll.u32 [#allocation18], 4
      %s146 = int_to_ptr.vmem [resolvable:$true] %s145
      %151 = dma.hbm_to_vmem [thread:$0]  %s144, 16384, %s146, [#allocation19], 256, 256, 16
    $region45: #{tpu_custom_call.1} parent=1 // pred_fallthru
      _
    // Predicated region
    $region46: #{tpu_custom_call.1} parent=1 // pred_check
      _
    $region47: #{tpu_custom_call.1} parent=1 // pred_check_branch
      %153 = sbr.rel (0) target = $region49
    $region48: #{tpu_custom_call.1} parent=1 // pred_region
      %155 = vsyncadd [#allocation19], 0
      %s157 = sshll.u32 %s11, 4
      %s158 = int_to_ptr.hbm [resolvable:$true] %s157
      %s159 = sshll.u32 [#allocation20], 4
      %s160 = int_to_ptr.vmem [resolvable:$true] %s159
      %162 = dma.hbm_to_vmem [thread:$0]  %s158, 64, %s160, [#allocation19]
    $region49: #{tpu_custom_call.1} parent=1 // pred_fallthru
      _
    // Predicated region
    $region50: #{tpu_custom_call.1} parent=1 // pred_check
      _
    $region51: #{tpu_custom_call.1} parent=1 // pred_check_branch
      %164 = sbr.rel (0) target = $region53
    $region52: #{tpu_custom_call.1} parent=1 // pred_region
      %166 = vsyncadd [#allocation22], 0
      %s167 = sshll.u32 %s12, 4
      %s168 = int_to_ptr.hbm [resolvable:$true] %s167
      %s169 = sshll.u32 [#allocation21], 4
      %s170 = int_to_ptr.vmem [resolvable:$true] %s169
      %175 = dma.hbm_to_vmem [thread:$0]  %s168, 8192, %s170, [#allocation22], 128, 128, 8
    $region53: #{tpu_custom_call.1} parent=1 // pred_fallthru
      _
    // Predicated region
    $region54: #{tpu_custom_call.1} parent=1 // pred_check
      _
    $region55: #{tpu_custom_call.1} parent=1 // pred_check_branch
      %177 = sbr.rel (0) target = $region57
    $region56: #{tpu_custom_call.1} parent=1 // pred_region
      %179 = vsyncadd [#allocation22], 0
      %s181 = sshll.u32 %s13, 4
      %s182 = int_to_ptr.hbm [resolvable:$true] %s181
      %s183 = sshll.u32 [#allocation23], 4
      %s184 = int_to_ptr.vmem [resolvable:$true] %s183
      %186 = dma.hbm_to_vmem [thread:$0]  %s182, 32, %s184, [#allocation22]
    $region57: #{tpu_custom_call.1} parent=1 // pred_fallthru
      _
    // Predicated region
    $region58: #{tpu_custom_call.1} parent=1 // pred_check
      _
    $region59: #{tpu_custom_call.1} parent=1 // pred_check_branch
      %188 = sbr.rel (0) target = $region61
    $region60: #{tpu_custom_call.1} parent=1 // pred_region
      %190 = vsyncadd [#allocation25], 0
      %s191 = sshll.u32 %s14, 4
      %s192 = int_to_ptr.hbm [resolvable:$true] %s191
      %s193 = sshll.u32 [#allocation24], 4
      %s194 = int_to_ptr.vmem [resolvable:$true] %s193
      %199 = dma.hbm_to_vmem [thread:$0]  %s192, 2048, %s194, [#allocation25], 64, 64, 4
    $region61: #{tpu_custom_call.1} parent=1 // pred_fallthru
      _
    // Predicated region
    $region62: #{tpu_custom_call.1} parent=1 // pred_check
      _
    $region63: #{tpu_custom_call.1} parent=1 // pred_check_branch
      %201 = sbr.rel (0) target = $region65
    $region64: #{tpu_custom_call.1} parent=1 // pred_region
      %203 = vsyncadd [#allocation25], 0
      %s205 = sshll.u32 %s15, 4
      %s206 = int_to_ptr.hbm [resolvable:$true] %s205
      %s207 = sshll.u32 [#allocation26], 4
      %s208 = int_to_ptr.vmem [resolvable:$true] %s207
      %210 = dma.hbm_to_vmem [thread:$0]  %s206, 16, %s208, [#allocation25]
    $region65: #{tpu_custom_call.1} parent=1 // pred_fallthru
      _
    // Predicated region
    $region66: #{tpu_custom_call.1} parent=1 // pred_check
      _
    $region67: #{tpu_custom_call.1} parent=1 // pred_check_branch
      %212 = sbr.rel (0) target = $region69
    $region68: #{tpu_custom_call.1} parent=1 // pred_region
      %214 = vsyncadd [#allocation28], 0
      %s216 = sshll.u32 %s16, 4
      %s217 = int_to_ptr.hbm [resolvable:$true] %s216
      %s218 = sshll.u32 [#allocation27], 4
      %s219 = int_to_ptr.vmem [resolvable:$true] %s218
      %221 = dma.hbm_to_vmem [thread:$0]  %s217, 128, %s219, [#allocation28]
    $region69: #{tpu_custom_call.1} parent=1 // pred_fallthru
      _
    // Predicated region
    $region70: #{tpu_custom_call.1} parent=1 // pred_check
      _
    $region71: #{tpu_custom_call.1} parent=1 // pred_check_branch
      %223 = sbr.rel (0) target = $region73
    $region72: #{tpu_custom_call.1} parent=1 // pred_region
      %225 = dma.done [#allocation4], 64
    $region73: #{tpu_custom_call.1} parent=1 // pred_fallthru
      _
    // Predicated region
    $region74: #{tpu_custom_call.1} parent=1 // pred_check
      _
    $region75: #{tpu_custom_call.1} parent=1 // pred_check_branch
      %227 = sbr.rel (0) target = $region77
    $region76: #{tpu_custom_call.1} parent=1 // pred_region
      %229 = dma.done [#allocation7], 16
    $region77: #{tpu_custom_call.1} parent=1 // pred_fallthru
      _
    // Predicated region
    $region78: #{tpu_custom_call.1} parent=1 // pred_check
      _
    $region79: #{tpu_custom_call.1} parent=1 // pred_check_branch
      %231 = sbr.rel (0) target = $region81
    $region80: #{tpu_custom_call.1} parent=1 // pred_region
      %233 = dma.done [#allocation7], 6144
    $region81: #{tpu_custom_call.1} parent=1 // pred_fallthru
      _
    // Predicated region
    $region82: #{tpu_custom_call.1} parent=1 // pred_check
      _
    $region83: #{tpu_custom_call.1} parent=1 // pred_check_branch
      %235 = sbr.rel (0) target = $region85
    $region84: #{tpu_custom_call.1} parent=1 // pred_region
      %237 = dma.done [#allocation10], 32
    $region85: #{tpu_custom_call.1} parent=1 // pred_fallthru
      _
    // Predicated region
    $region86: #{tpu_custom_call.1} parent=1 // pred_check
      _
    $region87: #{tpu_custom_call.1} parent=1 // pred_check_branch
      %239 = sbr.rel (0) target = $region89
    $region88: #{tpu_custom_call.1} parent=1 // pred_region
      %241 = dma.done [#allocation10], 1024
    $region89: #{tpu_custom_call.1} parent=1 // pred_fallthru
      _
    // Predicated region
    $region90: #{tpu_custom_call.1} parent=1 // pred_check
      _
    $region91: #{tpu_custom_call.1} parent=1 // pred_check_branch
      %243 = sbr.rel (0) target = $region93
    $region92: #{tpu_custom_call.1} parent=1 // pred_region
      %245 = dma.done [#allocation13], 256
    $region93: #{tpu_custom_call.1} parent=1 // pred_fallthru
      _
    // Predicated region
    $region94: #{tpu_custom_call.1} parent=1 // pred_check
      _
    $region95: #{tpu_custom_call.1} parent=1 // pred_check_branch
      %247 = sbr.rel (0) target = $region97
    $region96: #{tpu_custom_call.1} parent=1 // pred_region
      %249 = dma.done [#allocation13], 65536
    $region97: #{tpu_custom_call.1} parent=1 // pred_fallthru
      _
    // Predicated region
    $region98: #{tpu_custom_call.1} parent=1 // pred_check
      _
    $region99: #{tpu_custom_call.1} parent=1 // pred_check_branch
      %251 = sbr.rel (0) target = $region101
    $region100: #{tpu_custom_call.1} parent=1 // pred_region
      %253 = dma.done [#allocation16], 256
    $region101: #{tpu_custom_call.1} parent=1 // pred_fallthru
      _
    // Predicated region
    $region102: #{tpu_custom_call.1} parent=1 // pred_check
      _
    $region103: #{tpu_custom_call.1} parent=1 // pred_check_branch
      %255 = sbr.rel (0) target = $region105
    $region104: #{tpu_custom_call.1} parent=1 // pred_region
      %257 = dma.done [#allocation16], 32768
    $region105: #{tpu_custom_call.1} parent=1 // pred_fallthru
      _
    // Predicated region
    $region106: #{tpu_custom_call.1} parent=1 // pred_check
      _
    $region107: #{tpu_custom_call.1} parent=1 // pred_check_branch
      %259 = sbr.rel (0) target = $region109
    $region108: #{tpu_custom_call.1} parent=1 // pred_region
      %261 = dma.done [#allocation19], 16384
    $region109: #{tpu_custom_call.1} parent=1 // pred_fallthru
      _
    // Predicated region
    $region110: #{tpu_custom_call.1} parent=1 // pred_check
      _
    $region111: #{tpu_custom_call.1} parent=1 // pred_check_branch
      %263 = sbr.rel (0) target = $region113
    $region112: #{tpu_custom_call.1} parent=1 // pred_region
      %265 = dma.done [#allocation19], 64
    $region113: #{tpu_custom_call.1} parent=1 // pred_fallthru
      _
    // Predicated region
    $region114: #{tpu_custom_call.1} parent=1 // pred_check
      _
    $region115: #{tpu_custom_call.1} parent=1 // pred_check_branch
      %267 = sbr.rel (0) target = $region117
    $region116: #{tpu_custom_call.1} parent=1 // pred_region
      %269 = dma.done [#allocation22], 8192
    $region117: #{tpu_custom_call.1} parent=1 // pred_fallthru
      _
    // Predicated region
    $region118: #{tpu_custom_call.1} parent=1 // pred_check
      _
    $region119: #{tpu_custom_call.1} parent=1 // pred_check_branch
      %271 = sbr.rel (0) target = $region121
    $region120: #{tpu_custom_call.1} parent=1 // pred_region
      %273 = dma.done [#allocation22], 32
    $region121: #{tpu_custom_call.1} parent=1 // pred_fallthru
      _
    // Predicated region
    $region122: #{tpu_custom_call.1} parent=1 // pred_check
      _
    $region123: #{tpu_custom_call.1} parent=1 // pred_check_branch
      %275 = sbr.rel (0) target = $region125
    $region124: #{tpu_custom_call.1} parent=1 // pred_region
      %277 = dma.done [#allocation25], 2048
    $region125: #{tpu_custom_call.1} parent=1 // pred_fallthru
      _
    // Predicated region
    $region126: #{tpu_custom_call.1} parent=1 // pred_check
      _
    $region127: #{tpu_custom_call.1} parent=1 // pred_check_branch
      %279 = sbr.rel (0) target = $region129
    $region128: #{tpu_custom_call.1} parent=1 // pred_region
      %281 = dma.done [#allocation25], 16
    $region129: #{tpu_custom_call.1} parent=1 // pred_fallthru
      _
    // Predicated region
    $region130: #{tpu_custom_call.1} parent=1 // pred_check
      _
    $region131: #{tpu_custom_call.1} parent=1 // pred_check_branch
      %283 = sbr.rel (0) target = $region133
    $region132: #{tpu_custom_call.1} parent=1 // pred_region
      %285 = dma.done [#allocation28], 128
    $region133: #{tpu_custom_call.1} parent=1 // pred_fallthru
      _
    %v287 = vld [vmem:[%s0] sm:$0xff]
    %v288 = vld [vmem:[%s0 + $0x8] sm:$0xff]
    %v289 = vld [vmem:[%s0 + $0x10] sm:$0x3]
    %v290 = vld [vmem:[%s0 + $0x18] sm:$0xff]
    %v291 = vld [vmem:[%s0 + $0x20] sm:$0xff]
    %v292 = vld [vmem:[%s0 + $0x28] sm:$0x3]
    %v293 = vld [vmem:[%s0 + $0x30] sm:$0xff]
    %v294 = vld [vmem:[%s0 + $0x38] sm:$0xff]
    %v295 = vld [vmem:[%s0 + $0x40] sm:$0x3]
    %v296 = vld [vmem:[%s0 + $0x48] sm:$0xff]
    %v297 = vld [vmem:[%s0 + $0x50] sm:$0xff]
    %v298 = vld [vmem:[%s0 + $0x58] sm:$0x3]
    %v299 = vld [vmem:[%s0 + $0x60] sm:$0xff]
    %v300 = vld [vmem:[%s0 + $0x68] sm:$0xff]
    %v301 = vld [vmem:[%s0 + $0x70] sm:$0x3]
    %v302 = vld [vmem:[%s0 + $0x78] sm:$0xff]
    %v303 = vld [vmem:[%s0 + $0x80] sm:$0xff]
    %v304 = vld [vmem:[%s0 + $0x88] sm:$0x3]
    %v305 = vld [vmem:[%s0 + $0x90] sm:$0xff]
    %v306 = vld [vmem:[%s0 + $0x98] sm:$0xff]
    %v307 = vld [vmem:[%s0 + $0xa0] sm:$0x3]
    %v308 = vld [vmem:[%s0 + $0xa8] sm:$0xff]
    %v309 = vld [vmem:[%s0 + $0xb0] sm:$0xff]
    %v310 = vld [vmem:[%s0 + $0xb8] sm:$0x3]
    %312 = vset.pattern.permute.xlu0 0
    %313 = vperm.xlu0 %312, %v287
    %v314 = vpop.permute.xlu0 %313
    %317 = vset.pattern.permute.xlu0 0
    %318 = vperm.xlu0 %317, %v288
    %v319 = vpop.permute.xlu0 %318
    %322 = vset.pattern.permute.xlu0 0
    %323 = vperm.xlu0 %322, %v290
    %v324 = vpop.permute.xlu0 %323
    %327 = vset.pattern.permute.xlu0 0
    %328 = vperm.xlu0 %327, %v291
    %v329 = vpop.permute.xlu0 %328
    %332 = vset.pattern.permute.xlu0 0
    %333 = vperm.xlu0 %332, %v293
    %v334 = vpop.permute.xlu0 %333
    %337 = vset.pattern.permute.xlu0 0
    %338 = vperm.xlu0 %337, %v294
    %v339 = vpop.permute.xlu0 %338
    %342 = vset.pattern.permute.xlu0 0
    %343 = vperm.xlu0 %342, %v296
    %v344 = vpop.permute.xlu0 %343
    %347 = vset.pattern.permute.xlu0 0
    %348 = vperm.xlu0 %347, %v297
    %v349 = vpop.permute.xlu0 %348
    %352 = vset.pattern.permute.xlu0 0
    %353 = vperm.xlu0 %352, %v299
    %v354 = vpop.permute.xlu0 %353
    %357 = vset.pattern.permute.xlu0 0
    %358 = vperm.xlu0 %357, %v300
    %v359 = vpop.permute.xlu0 %358
    %362 = vset.pattern.permute.xlu0 0
    %363 = vperm.xlu0 %362, %v302
    %v364 = vpop.permute.xlu0 %363
    %367 = vset.pattern.permute.xlu0 0
    %368 = vperm.xlu0 %367, %v303
    %v369 = vpop.permute.xlu0 %368
    %372 = vset.pattern.permute.xlu0 0
    %373 = vperm.xlu0 %372, %v305
    %v374 = vpop.permute.xlu0 %373
    %377 = vset.pattern.permute.xlu0 0
    %378 = vperm.xlu0 %377, %v306
    %v379 = vpop.permute.xlu0 %378
    %382 = vset.pattern.permute.xlu0 0
    %383 = vperm.xlu0 %382, %v308
    %v384 = vpop.permute.xlu0 %383
    %387 = vset.pattern.permute.xlu0 0
    %388 = vperm.xlu0 %387, %v309
    %v389 = vpop.permute.xlu0 %388
    %v391 = vld [vmem:[#allocation3] sm:$0x1]
    %v392 = vperm.slane %v391, 0
    %v393 = vmul.f32 %v314, %v392
    %v394 = vmul.f32 %v319, %v392
    %v395 = vmul.f32 %v324, %v392
    %v396 = vmul.f32 %v329, %v392
    %v397 = vmul.f32 %v334, %v392
    %v398 = vmul.f32 %v339, %v392
    %v399 = vmul.f32 %v344, %v392
    %v400 = vmul.f32 %v349, %v392
    %v401 = vmul.f32 %v354, %v392
    %v402 = vmul.f32 %v359, %v392
    %v403 = vmul.f32 %v364, %v392
    %v404 = vmul.f32 %v369, %v392
    %v405 = vmul.f32 %v374, %v392
    %v406 = vmul.f32 %v379, %v392
    %v407 = vmul.f32 %v384, %v392
    %v408 = vmul.f32 %v389, %v392
    %410 = vset.pattern.permute.xlu0 0
    %411 = vperm.xlu0 %410, %v289
    %v412 = vpop.permute.xlu0 %411
    %415 = vset.pattern.permute.xlu0 0
    %416 = vperm.xlu0 %415, %v292
    %v417 = vpop.permute.xlu0 %416
    %420 = vset.pattern.permute.xlu0 0
    %421 = vperm.xlu0 %420, %v295
    %v422 = vpop.permute.xlu0 %421
    %425 = vset.pattern.permute.xlu0 0
    %426 = vperm.xlu0 %425, %v298
    %v427 = vpop.permute.xlu0 %426
    %430 = vset.pattern.permute.xlu0 0
    %431 = vperm.xlu0 %430, %v301
    %v432 = vpop.permute.xlu0 %431
    %435 = vset.pattern.permute.xlu0 0
    %436 = vperm.xlu0 %435, %v304
    %v437 = vpop.permute.xlu0 %436
    %440 = vset.pattern.permute.xlu0 0
    %441 = vperm.xlu0 %440, %v307
    %v442 = vpop.permute.xlu0 %441
    %445 = vset.pattern.permute.xlu0 0
    %446 = vperm.xlu0 %445, %v310
    %v447 = vpop.permute.xlu0 %446
    %v449 = vld [vmem:[#allocation3 + $0x1] sm:$0x1]
    %v450 = vperm.slane %v449, 0
    %v451 = vmul.f32 %v314, %v450
    %v452 = vmul.f32 %v319, %v450
    %v453 = vmul.f32 %v412, %v450
    %v454 = vmul.f32 %v324, %v450
    %v455 = vmul.f32 %v329, %v450
    %v456 = vmul.f32 %v417, %v450
    %v457 = vmul.f32 %v334, %v450
    %v458 = vmul.f32 %v339, %v450
    %v459 = vmul.f32 %v422, %v450
    %v460 = vmul.f32 %v344, %v450
    %v461 = vmul.f32 %v349, %v450
    %v462 = vmul.f32 %v427, %v450
    %v463 = vmul.f32 %v354, %v450
    %v464 = vmul.f32 %v359, %v450
    %v465 = vmul.f32 %v432, %v450
    %v466 = vmul.f32 %v364, %v450
    %v467 = vmul.f32 %v369, %v450
    %v468 = vmul.f32 %v437, %v450
    %v469 = vmul.f32 %v374, %v450
    %v470 = vmul.f32 %v379, %v450
    %v471 = vmul.f32 %v442, %v450
    %v472 = vmul.f32 %v384, %v450
    %v473 = vmul.f32 %v389, %v450
    %v474 = vmul.f32 %v447, %v450
    %vm499 = vcmask 1046528
    %v500 = vrot.slane %v451, 1
    %v501 = vrot.slane %v452, 1
    %v502 = vsel %vm499, %v500, %v501
    %v503 = vrot.slane %v453, 1
    %v504 = vsel %vm499, %v501, %v503
    %v505 = vrot.slane %v454, 1
    %v506 = vrot.slane %v455, 1
    %v507 = vsel %vm499, %v505, %v506
    %v508 = vrot.slane %v456, 1
    %v509 = vsel %vm499, %v506, %v508
    %v510 = vrot.slane %v457, 1
    %v511 = vrot.slane %v458, 1
    %v512 = vsel %vm499, %v510, %v511
    %v513 = vrot.slane %v459, 1
    %v514 = vsel %vm499, %v511, %v513
    %v515 = vrot.slane %v460, 1
    %v516 = vrot.slane %v461, 1
    %v517 = vsel %vm499, %v515, %v516
    %v518 = vrot.slane %v462, 1
    %v519 = vsel %vm499, %v516, %v518
    %v520 = vrot.slane %v463, 1
    %v521 = vrot.slane %v464, 1
    %v522 = vsel %vm499, %v520, %v521
    %v523 = vrot.slane %v465, 1
    %v524 = vsel %vm499, %v521, %v523
    %v525 = vrot.slane %v466, 1
    %v526 = vrot.slane %v467, 1
    %v527 = vsel %vm499, %v525, %v526
    %v528 = vrot.slane %v468, 1
    %v529 = vsel %vm499, %v526, %v528
    %v530 = vrot.slane %v469, 1
    %v531 = vrot.slane %v470, 1
    %v532 = vsel %vm499, %v530, %v531
    %v533 = vrot.slane %v471, 1
    %v534 = vsel %vm499, %v531, %v533
    %v535 = vrot.slane %v472, 1
    %v536 = vrot.slane %v473, 1
    %v537 = vsel %vm499, %v535, %v536
    %v538 = vrot.slane %v474, 1
    %v539 = vsel %vm499, %v536, %v538
    %v556 = vadd.f32 %v393, %v502
    %v557 = vadd.f32 %v394, %v504
    %v558 = vadd.f32 %v395, %v507
    %v559 = vadd.f32 %v396, %v509
    %v560 = vadd.f32 %v397, %v512
    %v561 = vadd.f32 %v398, %v514
    %v562 = vadd.f32 %v399, %v517
    %v563 = vadd.f32 %v400, %v519
    %v564 = vadd.f32 %v401, %v522
    %v565 = vadd.f32 %v402, %v524
    %v566 = vadd.f32 %v403, %v527
    %v567 = vadd.f32 %v404, %v529
    %v568 = vadd.f32 %v405, %v532
    %v569 = vadd.f32 %v406, %v534
    %v570 = vadd.f32 %v407, %v537
    %v571 = vadd.f32 %v408, %v539
    %v572 = vld [vmem:[#allocation3 + $0x2] sm:$0x1]
    %v573 = vperm.slane %v572, 0
    %v574 = vmul.f32 %v314, %v573
    %v575 = vmul.f32 %v319, %v573
    %v576 = vmul.f32 %v412, %v573
    %v577 = vmul.f32 %v324, %v573
    %v578 = vmul.f32 %v329, %v573
    %v579 = vmul.f32 %v417, %v573
    %v580 = vmul.f32 %v334, %v573
    %v581 = vmul.f32 %v339, %v573
    %v582 = vmul.f32 %v422, %v573
    %v583 = vmul.f32 %v344, %v573
    %v584 = vmul.f32 %v349, %v573
    %v585 = vmul.f32 %v427, %v573
    %v586 = vmul.f32 %v354, %v573
    %v587 = vmul.f32 %v359, %v573
    %v588 = vmul.f32 %v432, %v573
    %v589 = vmul.f32 %v364, %v573
    %v590 = vmul.f32 %v369, %v573
    %v591 = vmul.f32 %v437, %v573
    %v592 = vmul.f32 %v374, %v573
    %v593 = vmul.f32 %v379, %v573
    %v594 = vmul.f32 %v442, %v573
    %v595 = vmul.f32 %v384, %v573
    %v596 = vmul.f32 %v389, %v573
    %v597 = vmul.f32 %v447, %v573
    %vm622 = vcmask 1045504
    %v623 = vrot.slane %v574, 2
    %v624 = vrot.slane %v575, 2
    %v625 = vsel %vm622, %v623, %v624
    %v626 = vrot.slane %v576, 2
    %v627 = vsel %vm622, %v624, %v626
    %v628 = vrot.slane %v577, 2
    %v629 = vrot.slane %v578, 2
    %v630 = vsel %vm622, %v628, %v629
    %v631 = vrot.slane %v579, 2
    %v632 = vsel %vm622, %v629, %v631
    %v633 = vrot.slane %v580, 2
    %v634 = vrot.slane %v581, 2
    %v635 = vsel %vm622, %v633, %v634
    %v636 = vrot.slane %v582, 2
    %v637 = vsel %vm622, %v634, %v636
    %v638 = vrot.slane %v583, 2
    %v639 = vrot.slane %v584, 2
    %v640 = vsel %vm622, %v638, %v639
    %v641 = vrot.slane %v585, 2
    %v642 = vsel %vm622, %v639, %v641
    %v643 = vrot.slane %v586, 2
    %v644 = vrot.slane %v587, 2
    %v645 = vsel %vm622, %v643, %v644
    %v646 = vrot.slane %v588, 2
    %v647 = vsel %vm622, %v644, %v646
    %v648 = vrot.slane %v589, 2
    %v649 = vrot.slane %v590, 2
    %v650 = vsel %vm622, %v648, %v649
    %v651 = vrot.slane %v591, 2
    %v652 = vsel %vm622, %v649, %v651
    %v653 = vrot.slane %v592, 2
    %v654 = vrot.slane %v593, 2
    %v655 = vsel %vm622, %v653, %v654
    %v656 = vrot.slane %v594, 2
    %v657 = vsel %vm622, %v654, %v656
    %v658 = vrot.slane %v595, 2
    %v659 = vrot.slane %v596, 2
    %v660 = vsel %vm622, %v658, %v659
    %v661 = vrot.slane %v597, 2
    %v662 = vsel %vm622, %v659, %v661
    %v679 = vadd.f32 %v556, %v625
    %v680 = vadd.f32 %v557, %v627
    %v681 = vadd.f32 %v558, %v630
    %v682 = vadd.f32 %v559, %v632
    %v683 = vadd.f32 %v560, %v635
    %v684 = vadd.f32 %v561, %v637
    %v685 = vadd.f32 %v562, %v640
    %v686 = vadd.f32 %v563, %v642
    %v687 = vadd.f32 %v564, %v645
    %v688 = vadd.f32 %v565, %v647
    %v689 = vadd.f32 %v566, %v650
    %v690 = vadd.f32 %v567, %v652
    %v691 = vadd.f32 %v568, %v655
    %v692 = vadd.f32 %v569, %v657
    %v693 = vadd.f32 %v570, %v660
    %v694 = vadd.f32 %v571, %v662
    %v695 = vld [vmem:[#allocation6] sm:$0x1]
    %v697 = vperm.slane %v695, 0
    %v699 = vadd.f32 %v679, %v697
    %v700 = vadd.f32 %v680, %v697
    %v701 = vadd.f32 %v681, %v697
    %v702 = vadd.f32 %v682, %v697
    %v703 = vadd.f32 %v683, %v697
    %v704 = vadd.f32 %v684, %v697
    %v705 = vadd.f32 %v685, %v697
    %v706 = vadd.f32 %v686, %v697
    %v707 = vadd.f32 %v687, %v697
    %v708 = vadd.f32 %v688, %v697
    %v709 = vadd.f32 %v689, %v697
    %v710 = vadd.f32 %v690, %v697
    %v711 = vadd.f32 %v691, %v697
    %v712 = vadd.f32 %v692, %v697
    %v713 = vadd.f32 %v693, %v697
    %v714 = vadd.f32 %v694, %v697
    %v715 = vmax.f32 %v699, 0.0
    %v716 = vmax.f32 %v700, 0.0
    %v717 = vmax.f32 %v701, 0.0
    %v718 = vmax.f32 %v702, 0.0
    %v719 = vmax.f32 %v703, 0.0
    %v720 = vmax.f32 %v704, 0.0
    %v721 = vmax.f32 %v705, 0.0
    %v722 = vmax.f32 %v706, 0.0
    %v723 = vmax.f32 %v707, 0.0
    %v724 = vmax.f32 %v708, 0.0
    %v725 = vmax.f32 %v709, 0.0
    %v726 = vmax.f32 %v710, 0.0
    %v727 = vmax.f32 %v711, 0.0
    %v728 = vmax.f32 %v712, 0.0
    %v729 = vmax.f32 %v713, 0.0
    %v730 = vmax.f32 %v714, 0.0
    %v747 = vrot.slane %v715, 2
    %v748 = vrot.slane %v715, 4
    %v749 = vrot.slane %v715, 6
    %v750 = vrot.slane %v716, 2
    %v751 = vrot.slane %v716, 4
    %v752 = vrot.slane %v716, 6
    %v753 = vrot.slane %v717, 2
    %v754 = vrot.slane %v717, 4
    %v755 = vrot.slane %v717, 6
    %v756 = vrot.slane %v718, 2
    %v757 = vrot.slane %v718, 4
    %v758 = vrot.slane %v718, 6
    %v759 = vrot.slane %v719, 2
    %v760 = vrot.slane %v719, 4
    %v761 = vrot.slane %v719, 6
    %v762 = vrot.slane %v720, 2
    %v763 = vrot.slane %v720, 4
    %v764 = vrot.slane %v720, 6
    %v765 = vrot.slane %v721, 2
    %v766 = vrot.slane %v721, 4
    %v767 = vrot.slane %v721, 6
    %v768 = vrot.slane %v722, 2
    %v769 = vrot.slane %v722, 4
    %v770 = vrot.slane %v722, 6
    %v771 = vrot.slane %v723, 2
    %v772 = vrot.slane %v723, 4
    %v773 = vrot.slane %v723, 6
    %v774 = vrot.slane %v724, 2
    %v775 = vrot.slane %v724, 4
    %v776 = vrot.slane %v724, 6
    %v777 = vrot.slane %v725, 2
    %v778 = vrot.slane %v725, 4
    %v779 = vrot.slane %v725, 6
    %v780 = vrot.slane %v726, 2
    %v781 = vrot.slane %v726, 4
    %v782 = vrot.slane %v726, 6
    %v783 = vrot.slane %v727, 2
    %v784 = vrot.slane %v727, 4
    %v785 = vrot.slane %v727, 6
    %v786 = vrot.slane %v728, 2
    %v787 = vrot.slane %v728, 4
    %v788 = vrot.slane %v728, 6
    %v789 = vrot.slane %v729, 2
    %v790 = vrot.slane %v729, 4
    %v791 = vrot.slane %v729, 6
    %v792 = vrot.slane %v730, 2
    %v793 = vrot.slane %v730, 4
    %v794 = vrot.slane %v730, 6
    %vm843 = vcmask 1041408
    %v844 = vsel %vm843, %v715, -inf
    %v845 = vrot.slane %v844, 4
    %v846 = vmax.f32 %v844, %v845
    %v847 = vrot.slane %v846, 2
    %v848 = vmax.f32 %v846, %v847
    %v849 = vrot.slane %v848, 1
    %v850 = vmax.f32 %v848, %v849
    %v851 = vsel %vm843, %v747, -inf
    %v852 = vrot.slane %v851, 4
    %v853 = vmax.f32 %v851, %v852
    %v854 = vrot.slane %v853, 2
    %v855 = vmax.f32 %v853, %v854
    %v856 = vrot.slane %v855, 1
    %v857 = vmax.f32 %v855, %v856
    %v858 = vsel %vm843, %v748, -inf
    %v859 = vrot.slane %v858, 4
    %v860 = vmax.f32 %v858, %v859
    %v861 = vrot.slane %v860, 2
    %v862 = vmax.f32 %v860, %v861
    %v863 = vrot.slane %v862, 1
    %v864 = vmax.f32 %v862, %v863
    %v865 = vsel %vm843, %v749, -inf
    %v866 = vrot.slane %v865, 4
    %v867 = vmax.f32 %v865, %v866
    %v868 = vrot.slane %v867, 2
    %v869 = vmax.f32 %v867, %v868
    %v870 = vrot.slane %v869, 1
    %v871 = vmax.f32 %v869, %v870
    %v872 = vsel %vm843, %v716, -inf
    %v873 = vrot.slane %v872, 4
    %v874 = vmax.f32 %v872, %v873
    %v875 = vrot.slane %v874, 2
    %v876 = vmax.f32 %v874, %v875
    %v877 = vrot.slane %v876, 1
    %v878 = vmax.f32 %v876, %v877
    %v879 = vsel %vm843, %v750, -inf
    %v880 = vrot.slane %v879, 4
    %v881 = vmax.f32 %v879, %v880
    %v882 = vrot.slane %v881, 2
    %v883 = vmax.f32 %v881, %v882
    %v884 = vrot.slane %v883, 1
    %v885 = vmax.f32 %v883, %v884
    %v886 = vsel %vm843, %v751, -inf
    %v887 = vrot.slane %v886, 4
    %v888 = vmax.f32 %v886, %v887
    %v889 = vrot.slane %v888, 2
    %v890 = vmax.f32 %v888, %v889
    %v891 = vrot.slane %v890, 1
    %v892 = vmax.f32 %v890, %v891
    %v893 = vsel %vm843, %v752, -inf
    %v894 = vrot.slane %v893, 4
    %v895 = vmax.f32 %v893, %v894
    %v896 = vrot.slane %v895, 2
    %v897 = vmax.f32 %v895, %v896
    %v898 = vrot.slane %v897, 1
    %v899 = vmax.f32 %v897, %v898
    %v900 = vsel %vm843, %v717, -inf
    %v901 = vrot.slane %v900, 4
    %v902 = vmax.f32 %v900, %v901
    %v903 = vrot.slane %v902, 2
    %v904 = vmax.f32 %v902, %v903
    %v905 = vrot.slane %v904, 1
    %v906 = vmax.f32 %v904, %v905
    %v907 = vsel %vm843, %v753, -inf
    %v908 = vrot.slane %v907, 4
    %v909 = vmax.f32 %v907, %v908
    %v910 = vrot.slane %v909, 2
    %v911 = vmax.f32 %v909, %v910
    %v912 = vrot.slane %v911, 1
    %v913 = vmax.f32 %v911, %v912
    %v914 = vsel %vm843, %v754, -inf
    %v915 = vrot.slane %v914, 4
    %v916 = vmax.f32 %v914, %v915
    %v917 = vrot.slane %v916, 2
    %v918 = vmax.f32 %v916, %v917
    %v919 = vrot.slane %v918, 1
    %v920 = vmax.f32 %v918, %v919
    %v921 = vsel %vm843, %v755, -inf
    %v922 = vrot.slane %v921, 4
    %v923 = vmax.f32 %v921, %v922
    %v924 = vrot.slane %v923, 2
    %v925 = vmax.f32 %v923, %v924
    %v926 = vrot.slane %v925, 1
    %v927 = vmax.f32 %v925, %v926
    %v928 = vsel %vm843, %v718, -inf
    %v929 = vrot.slane %v928, 4
    %v930 = vmax.f32 %v928, %v929
    %v931 = vrot.slane %v930, 2
    %v932 = vmax.f32 %v930, %v931
    %v933 = vrot.slane %v932, 1
    %v934 = vmax.f32 %v932, %v933
    %v935 = vsel %vm843, %v756, -inf
    %v936 = vrot.slane %v935, 4
    %v937 = vmax.f32 %v935, %v936
    %v938 = vrot.slane %v937, 2
    %v939 = vmax.f32 %v937, %v938
    %v940 = vrot.slane %v939, 1
    %v941 = vmax.f32 %v939, %v940
    %v942 = vsel %vm843, %v757, -inf
    %v943 = vrot.slane %v942, 4
    %v944 = vmax.f32 %v942, %v943
    %v945 = vrot.slane %v944, 2
    %v946 = vmax.f32 %v944, %v945
    %v947 = vrot.slane %v946, 1
    %v948 = vmax.f32 %v946, %v947
    %v949 = vsel %vm843, %v758, -inf
    %v950 = vrot.slane %v949, 4
    %v951 = vmax.f32 %v949, %v950
    %v952 = vrot.slane %v951, 2
    %v953 = vmax.f32 %v951, %v952
    %v954 = vrot.slane %v953, 1
    %v955 = vmax.f32 %v953, %v954
    %v956 = vsel %vm843, %v719, -inf
    %v957 = vrot.slane %v956, 4
    %v958 = vmax.f32 %v956, %v957
    %v959 = vrot.slane %v958, 2
    %v960 = vmax.f32 %v958, %v959
    %v961 = vrot.slane %v960, 1
    %v962 = vmax.f32 %v960, %v961
    %v963 = vsel %vm843, %v759, -inf
    %v964 = vrot.slane %v963, 4
    %v965 = vmax.f32 %v963, %v964
    %v966 = vrot.slane %v965, 2
    %v967 = vmax.f32 %v965, %v966
    %v968 = vrot.slane %v967, 1
    %v969 = vmax.f32 %v967, %v968
    %v970 = vsel %vm843, %v760, -inf
    %v971 = vrot.slane %v970, 4
    %v972 = vmax.f32 %v970, %v971
    %v973 = vrot.slane %v972, 2
    %v974 = vmax.f32 %v972, %v973
    %v975 = vrot.slane %v974, 1
    %v976 = vmax.f32 %v974, %v975
    %v977 = vsel %vm843, %v761, -inf
    %v978 = vrot.slane %v977, 4
    %v979 = vmax.f32 %v977, %v978
    %v980 = vrot.slane %v979, 2
    %v981 = vmax.f32 %v979, %v980
    %v982 = vrot.slane %v981, 1
    %v983 = vmax.f32 %v981, %v982
    %v984 = vsel %vm843, %v720, -inf
    %v985 = vrot.slane %v984, 4
    %v986 = vmax.f32 %v984, %v985
    %v987 = vrot.slane %v986, 2
    %v988 = vmax.f32 %v986, %v987
    %v989 = vrot.slane %v988, 1
    %v990 = vmax.f32 %v988, %v989
    %v991 = vsel %vm843, %v762, -inf
    %v992 = vrot.slane %v991, 4
    %v993 = vmax.f32 %v991, %v992
    %v994 = vrot.slane %v993, 2
    %v995 = vmax.f32 %v993, %v994
    %v996 = vrot.slane %v995, 1
    %v997 = vmax.f32 %v995, %v996
    %v998 = vsel %vm843, %v763, -inf
    %v999 = vrot.slane %v998, 4
    %v1000 = vmax.f32 %v998, %v999
    %v1001 = vrot.slane %v1000, 2
    %v1002 = vmax.f32 %v1000, %v1001
    %v1003 = vrot.slane %v1002, 1
    %v1004 = vmax.f32 %v1002, %v1003
    %v1005 = vsel %vm843, %v764, -inf
    %v1006 = vrot.slane %v1005, 4
    %v1007 = vmax.f32 %v1005, %v1006
    %v1008 = vrot.slane %v1007, 2
    %v1009 = vmax.f32 %v1007, %v1008
    %v1010 = vrot.slane %v1009, 1
    %v1011 = vmax.f32 %v1009, %v1010
    %v1012 = vsel %vm843, %v721, -inf
    %v1013 = vrot.slane %v1012, 4
    %v1014 = vmax.f32 %v1012, %v1013
    %v1015 = vrot.slane %v1014, 2
    %v1016 = vmax.f32 %v1014, %v1015
    %v1017 = vrot.slane %v1016, 1
    %v1018 = vmax.f32 %v1016, %v1017
    %v1019 = vsel %vm843, %v765, -inf
    %v1020 = vrot.slane %v1019, 4
    %v1021 = vmax.f32 %v1019, %v1020
    %v1022 = vrot.slane %v1021, 2
    %v1023 = vmax.f32 %v1021, %v1022
    %v1024 = vrot.slane %v1023, 1
    %v1025 = vmax.f32 %v1023, %v1024
    %v1026 = vsel %vm843, %v766, -inf
    %v1027 = vrot.slane %v1026, 4
    %v1028 = vmax.f32 %v1026, %v1027
    %v1029 = vrot.slane %v1028, 2
    %v1030 = vmax.f32 %v1028, %v1029
    %v1031 = vrot.slane %v1030, 1
    %v1032 = vmax.f32 %v1030, %v1031
    %v1033 = vsel %vm843, %v767, -inf
    %v1034 = vrot.slane %v1033, 4
    %v1035 = vmax.f32 %v1033, %v1034
    %v1036 = vrot.slane %v1035, 2
    %v1037 = vmax.f32 %v1035, %v1036
    %v1038 = vrot.slane %v1037, 1
    %v1039 = vmax.f32 %v1037, %v1038
    %v1040 = vsel %vm843, %v722, -inf
    %v1041 = vrot.slane %v1040, 4
    %v1042 = vmax.f32 %v1040, %v1041
    %v1043 = vrot.slane %v1042, 2
    %v1044 = vmax.f32 %v1042, %v1043
    %v1045 = vrot.slane %v1044, 1
    %v1046 = vmax.f32 %v1044, %v1045
    %v1047 = vsel %vm843, %v768, -inf
    %v1048 = vrot.slane %v1047, 4
    %v1049 = vmax.f32 %v1047, %v1048
    %v1050 = vrot.slane %v1049, 2
    %v1051 = vmax.f32 %v1049, %v1050
    %v1052 = vrot.slane %v1051, 1
    %v1053 = vmax.f32 %v1051, %v1052
    %v1054 = vsel %vm843, %v769, -inf
    %v1055 = vrot.slane %v1054, 4
    %v1056 = vmax.f32 %v1054, %v1055
    %v1057 = vrot.slane %v1056, 2
    %v1058 = vmax.f32 %v1056, %v1057
    %v1059 = vrot.slane %v1058, 1
    %v1060 = vmax.f32 %v1058, %v1059
    %v1061 = vsel %vm843, %v770, -inf
    %v1062 = vrot.slane %v1061, 4
    %v1063 = vmax.f32 %v1061, %v1062
    %v1064 = vrot.slane %v1063, 2
    %v1065 = vmax.f32 %v1063, %v1064
    %v1066 = vrot.slane %v1065, 1
    %v1067 = vmax.f32 %v1065, %v1066
    %v1068 = vsel %vm843, %v723, -inf
    %v1069 = vrot.slane %v1068, 4
    %v1070 = vmax.f32 %v1068, %v1069
    %v1071 = vrot.slane %v1070, 2
    %v1072 = vmax.f32 %v1070, %v1071
    %v1073 = vrot.slane %v1072, 1
    %v1074 = vmax.f32 %v1072, %v1073
    %v1075 = vsel %vm843, %v771, -inf
    %v1076 = vrot.slane %v1075, 4
    %v1077 = vmax.f32 %v1075, %v1076
    %v1078 = vrot.slane %v1077, 2
    %v1079 = vmax.f32 %v1077, %v1078
    %v1080 = vrot.slane %v1079, 1
    %v1081 = vmax.f32 %v1079, %v1080
    %v1082 = vsel %vm843, %v772, -inf
    %v1083 = vrot.slane %v1082, 4
    %v1084 = vmax.f32 %v1082, %v1083
    %v1085 = vrot.slane %v1084, 2
    %v1086 = vmax.f32 %v1084, %v1085
    %v1087 = vrot.slane %v1086, 1
    %v1088 = vmax.f32 %v1086, %v1087
    %v1089 = vsel %vm843, %v773, -inf
    %v1090 = vrot.slane %v1089, 4
    %v1091 = vmax.f32 %v1089, %v1090
    %v1092 = vrot.slane %v1091, 2
    %v1093 = vmax.f32 %v1091, %v1092
    %v1094 = vrot.slane %v1093, 1
    %v1095 = vmax.f32 %v1093, %v1094
    %v1096 = vsel %vm843, %v724, -inf
    %v1097 = vrot.slane %v1096, 4
    %v1098 = vmax.f32 %v1096, %v1097
    %v1099 = vrot.slane %v1098, 2
    %v1100 = vmax.f32 %v1098, %v1099
    %v1101 = vrot.slane %v1100, 1
    %v1102 = vmax.f32 %v1100, %v1101
    %v1103 = vsel %vm843, %v774, -inf
    %v1104 = vrot.slane %v1103, 4
    %v1105 = vmax.f32 %v1103, %v1104
    %v1106 = vrot.slane %v1105, 2
    %v1107 = vmax.f32 %v1105, %v1106
    %v1108 = vrot.slane %v1107, 1
    %v1109 = vmax.f32 %v1107, %v1108
    %v1110 = vsel %vm843, %v775, -inf
    %v1111 = vrot.slane %v1110, 4
    %v1112 = vmax.f32 %v1110, %v1111
    %v1113 = vrot.slane %v1112, 2
    %v1114 = vmax.f32 %v1112, %v1113
    %v1115 = vrot.slane %v1114, 1
    %v1116 = vmax.f32 %v1114, %v1115
    %v1117 = vsel %vm843, %v776, -inf
    %v1118 = vrot.slane %v1117, 4
    %v1119 = vmax.f32 %v1117, %v1118
    %v1120 = vrot.slane %v1119, 2
    %v1121 = vmax.f32 %v1119, %v1120
    %v1122 = vrot.slane %v1121, 1
    %v1123 = vmax.f32 %v1121, %v1122
    %v1124 = vsel %vm843, %v725, -inf
    %v1125 = vrot.slane %v1124, 4
    %v1126 = vmax.f32 %v1124, %v1125
    %v1127 = vrot.slane %v1126, 2
    %v1128 = vmax.f32 %v1126, %v1127
    %v1129 = vrot.slane %v1128, 1
    %v1130 = vmax.f32 %v1128, %v1129
    %v1131 = vsel %vm843, %v777, -inf
    %v1132 = vrot.slane %v1131, 4
    %v1133 = vmax.f32 %v1131, %v1132
    %v1134 = vrot.slane %v1133, 2
    %v1135 = vmax.f32 %v1133, %v1134
    %v1136 = vrot.slane %v1135, 1
    %v1137 = vmax.f32 %v1135, %v1136
    %v1138 = vsel %vm843, %v778, -inf
    %v1139 = vrot.slane %v1138, 4
    %v1140 = vmax.f32 %v1138, %v1139
    %v1141 = vrot.slane %v1140, 2
    %v1142 = vmax.f32 %v1140, %v1141
    %v1143 = vrot.slane %v1142, 1
    %v1144 = vmax.f32 %v1142, %v1143
    %v1145 = vsel %vm843, %v779, -inf
    %v1146 = vrot.slane %v1145, 4
    %v1147 = vmax.f32 %v1145, %v1146
    %v1148 = vrot.slane %v1147, 2
    %v1149 = vmax.f32 %v1147, %v1148
    %v1150 = vrot.slane %v1149, 1
    %v1151 = vmax.f32 %v1149, %v1150
    %v1152 = vsel %vm843, %v726, -inf
    %v1153 = vrot.slane %v1152, 4
    %v1154 = vmax.f32 %v1152, %v1153
    %v1155 = vrot.slane %v1154, 2
    %v1156 = vmax.f32 %v1154, %v1155
    %v1157 = vrot.slane %v1156, 1
    %v1158 = vmax.f32 %v1156, %v1157
    %v1159 = vsel %vm843, %v780, -inf
    %v1160 = vrot.slane %v1159, 4
    %v1161 = vmax.f32 %v1159, %v1160
    %v1162 = vrot.slane %v1161, 2
    %v1163 = vmax.f32 %v1161, %v1162
    %v1164 = vrot.slane %v1163, 1
    %v1165 = vmax.f32 %v1163, %v1164
    %v1166 = vsel %vm843, %v781, -inf
    %v1167 = vrot.slane %v1166, 4
    %v1168 = vmax.f32 %v1166, %v1167
    %v1169 = vrot.slane %v1168, 2
    %v1170 = vmax.f32 %v1168, %v1169
    %v1171 = vrot.slane %v1170, 1
    %v1172 = vmax.f32 %v1170, %v1171
    %v1173 = vsel %vm843, %v782, -inf
    %v1174 = vrot.slane %v1173, 4
    %v1175 = vmax.f32 %v1173, %v1174
    %v1176 = vrot.slane %v1175, 2
    %v1177 = vmax.f32 %v1175, %v1176
    %v1178 = vrot.slane %v1177, 1
    %v1179 = vmax.f32 %v1177, %v1178
    %v1180 = vsel %vm843, %v727, -inf
    %v1181 = vrot.slane %v1180, 4
    %v1182 = vmax.f32 %v1180, %v1181
    %v1183 = vrot.slane %v1182, 2
    %v1184 = vmax.f32 %v1182, %v1183
    %v1185 = vrot.slane %v1184, 1
    %v1186 = vmax.f32 %v1184, %v1185
    %v1187 = vsel %vm843, %v783, -inf
    %v1188 = vrot.slane %v1187, 4
    %v1189 = vmax.f32 %v1187, %v1188
    %v1190 = vrot.slane %v1189, 2
    %v1191 = vmax.f32 %v1189, %v1190
    %v1192 = vrot.slane %v1191, 1
    %v1193 = vmax.f32 %v1191, %v1192
    %v1194 = vsel %vm843, %v784, -inf
    %v1195 = vrot.slane %v1194, 4
    %v1196 = vmax.f32 %v1194, %v1195
    %v1197 = vrot.slane %v1196, 2
    %v1198 = vmax.f32 %v1196, %v1197
    %v1199 = vrot.slane %v1198, 1
    %v1200 = vmax.f32 %v1198, %v1199
    %v1201 = vsel %vm843, %v785, -inf
    %v1202 = vrot.slane %v1201, 4
    %v1203 = vmax.f32 %v1201, %v1202
    %v1204 = vrot.slane %v1203, 2
    %v1205 = vmax.f32 %v1203, %v1204
    %v1206 = vrot.slane %v1205, 1
    %v1207 = vmax.f32 %v1205, %v1206
    %v1208 = vsel %vm843, %v728, -inf
    %v1209 = vrot.slane %v1208, 4
    %v1210 = vmax.f32 %v1208, %v1209
    %v1211 = vrot.slane %v1210, 2
    %v1212 = vmax.f32 %v1210, %v1211
    %v1213 = vrot.slane %v1212, 1
    %v1214 = vmax.f32 %v1212, %v1213
    %v1215 = vsel %vm843, %v786, -inf
    %v1216 = vrot.slane %v1215, 4
    %v1217 = vmax.f32 %v1215, %v1216
    %v1218 = vrot.slane %v1217, 2
    %v1219 = vmax.f32 %v1217, %v1218
    %v1220 = vrot.slane %v1219, 1
    %v1221 = vmax.f32 %v1219, %v1220
    %v1222 = vsel %vm843, %v787, -inf
    %v1223 = vrot.slane %v1222, 4
    %v1224 = vmax.f32 %v1222, %v1223
    %v1225 = vrot.slane %v1224, 2
    %v1226 = vmax.f32 %v1224, %v1225
    %v1227 = vrot.slane %v1226, 1
    %v1228 = vmax.f32 %v1226, %v1227
    %v1229 = vsel %vm843, %v788, -inf
    %v1230 = vrot.slane %v1229, 4
    %v1231 = vmax.f32 %v1229, %v1230
    %v1232 = vrot.slane %v1231, 2
    %v1233 = vmax.f32 %v1231, %v1232
    %v1234 = vrot.slane %v1233, 1
    %v1235 = vmax.f32 %v1233, %v1234
    %v1236 = vsel %vm843, %v729, -inf
    %v1237 = vrot.slane %v1236, 4
    %v1238 = vmax.f32 %v1236, %v1237
    %v1239 = vrot.slane %v1238, 2
    %v1240 = vmax.f32 %v1238, %v1239
    %v1241 = vrot.slane %v1240, 1
    %v1242 = vmax.f32 %v1240, %v1241
    %v1243 = vsel %vm843, %v789, -inf
    %v1244 = vrot.slane %v1243, 4
    %v1245 = vmax.f32 %v1243, %v1244
    %v1246 = vrot.slane %v1245, 2
    %v1247 = vmax.f32 %v1245, %v1246
    %v1248 = vrot.slane %v1247, 1
    %v1249 = vmax.f32 %v1247, %v1248
    %v1250 = vsel %vm843, %v790, -inf
    %v1251 = vrot.slane %v1250, 4
    %v1252 = vmax.f32 %v1250, %v1251
    %v1253 = vrot.slane %v1252, 2
    %v1254 = vmax.f32 %v1252, %v1253
    %v1255 = vrot.slane %v1254, 1
    %v1256 = vmax.f32 %v1254, %v1255
    %v1257 = vsel %vm843, %v791, -inf
    %v1258 = vrot.slane %v1257, 4
    %v1259 = vmax.f32 %v1257, %v1258
    %v1260 = vrot.slane %v1259, 2
    %v1261 = vmax.f32 %v1259, %v1260
    %v1262 = vrot.slane %v1261, 1
    %v1263 = vmax.f32 %v1261, %v1262
    %v1264 = vsel %vm843, %v730, -inf
    %v1265 = vrot.slane %v1264, 4
    %v1266 = vmax.f32 %v1264, %v1265
    %v1267 = vrot.slane %v1266, 2
    %v1268 = vmax.f32 %v1266, %v1267
    %v1269 = vrot.slane %v1268, 1
    %v1270 = vmax.f32 %v1268, %v1269
    %v1271 = vsel %vm843, %v792, -inf
    %v1272 = vrot.slane %v1271, 4
    %v1273 = vmax.f32 %v1271, %v1272
    %v1274 = vrot.slane %v1273, 2
    %v1275 = vmax.f32 %v1273, %v1274
    %v1276 = vrot.slane %v1275, 1
    %v1277 = vmax.f32 %v1275, %v1276
    %v1278 = vsel %vm843, %v793, -inf
    %v1279 = vrot.slane %v1278, 4
    %v1280 = vmax.f32 %v1278, %v1279
    %v1281 = vrot.slane %v1280, 2
    %v1282 = vmax.f32 %v1280, %v1281
    %v1283 = vrot.slane %v1282, 1
    %v1284 = vmax.f32 %v1282, %v1283
    %v1285 = vsel %vm843, %v794, -inf
    %v1286 = vrot.slane %v1285, 4
    %v1287 = vmax.f32 %v1285, %v1286
    %v1288 = vrot.slane %v1287, 2
    %v1289 = vmax.f32 %v1287, %v1288
    %v1290 = vrot.slane %v1289, 1
    %v1291 = vmax.f32 %v1289, %v1290
    %1292 = vst [vmem:[#allocation2] sm:$0x1] 0.0
    %1293 = vst [vmem:[#allocation2 + $0x10] sm:$0x1] 0.0
    %1294 = vst [vmem:[#allocation2 + $0x20] sm:$0x1] 0.0
    %1295 = vst [vmem:[#allocation2 + $0x30] sm:$0x1] 0.0
    %1296 = vst [vmem:[#allocation2 + $0x40] sm:$0x1] 0.0
    %1297 = vst [vmem:[#allocation2 + $0x50] sm:$0x1] 0.0
    %1298 = vst [vmem:[#allocation2 + $0x60] sm:$0x1] 0.0
    %1299 = vst [vmem:[#allocation2 + $0x70] sm:$0x1] 0.0
    %1300 = vst [vmem:[#allocation2 + $0x9] sm:$0x1] 0.0
    %1301 = vst [vmem:[#allocation2 + $0x19] sm:$0x1] 0.0
    %1302 = vst [vmem:[#allocation2 + $0x29] sm:$0x1] 0.0
    %1303 = vst [vmem:[#allocation2 + $0x39] sm:$0x1] 0.0
    %1304 = vst [vmem:[#allocation2 + $0x49] sm:$0x1] 0.0
    %1305 = vst [vmem:[#allocation2 + $0x59] sm:$0x1] 0.0
    %1306 = vst [vmem:[#allocation2 + $0x69] sm:$0x1] 0.0
    %1307 = vst [vmem:[#allocation2 + $0x79] sm:$0x1] 0.0
    %vm1372 = vcmask 1041409
    %v1373 = vsel %vm1372, %v857, %v850
    %vm1374 = vcmask 1042434
    %v1375 = vsel %vm1374, %v864, %v1373
    %vm1376 = vcmask 1043459
    %v1377 = vsel %vm1376, %v871, %v1375
    %vm1378 = vcmask 1044484
    %v1379 = vsel %vm1378, %v878, %v1377
    %vm1380 = vcmask 1045509
    %v1381 = vsel %vm1380, %v885, %v1379
    %vm1382 = vcmask 1046534
    %v1383 = vsel %vm1382, %v892, %v1381
    %vm1384 = vcmask 1047559
    %v1385 = vsel %vm1384, %v899, %v1383
    %v1386 = vsel %vm1372, %v913, %v906
    %v1387 = vsel %vm1374, %v920, %v1386
    %v1388 = vsel %vm1376, %v927, %v1387
    %v1389 = vsel %vm1378, %v934, %v1388
    %v1390 = vsel %vm1380, %v941, %v1389
    %v1391 = vsel %vm1382, %v948, %v1390
    %v1392 = vsel %vm1384, %v955, %v1391
    %v1393 = vsel %vm1372, %v969, %v962
    %v1394 = vsel %vm1374, %v976, %v1393
    %v1395 = vsel %vm1376, %v983, %v1394
    %v1396 = vsel %vm1378, %v990, %v1395
    %v1397 = vsel %vm1380, %v997, %v1396
    %v1398 = vsel %vm1382, %v1004, %v1397
    %v1399 = vsel %vm1384, %v1011, %v1398
    %v1400 = vsel %vm1372, %v1025, %v1018
    %v1401 = vsel %vm1374, %v1032, %v1400
    %v1402 = vsel %vm1376, %v1039, %v1401
    %v1403 = vsel %vm1378, %v1046, %v1402
    %v1404 = vsel %vm1380, %v1053, %v1403
    %v1405 = vsel %vm1382, %v1060, %v1404
    %v1406 = vsel %vm1384, %v1067, %v1405
    %v1407 = vsel %vm1372, %v1081, %v1074
    %v1408 = vsel %vm1374, %v1088, %v1407
    %v1409 = vsel %vm1376, %v1095, %v1408
    %v1410 = vsel %vm1378, %v1102, %v1409
    %v1411 = vsel %vm1380, %v1109, %v1410
    %v1412 = vsel %vm1382, %v1116, %v1411
    %v1413 = vsel %vm1384, %v1123, %v1412
    %v1414 = vsel %vm1372, %v1137, %v1130
    %v1415 = vsel %vm1374, %v1144, %v1414
    %v1416 = vsel %vm1376, %v1151, %v1415
    %v1417 = vsel %vm1378, %v1158, %v1416
    %v1418 = vsel %vm1380, %v1165, %v1417
    %v1419 = vsel %vm1382, %v1172, %v1418
    %v1420 = vsel %vm1384, %v1179, %v1419
    %v1421 = vsel %vm1372, %v1193, %v1186
    %v1422 = vsel %vm1374, %v1200, %v1421
    %v1423 = vsel %vm1376, %v1207, %v1422
    %v1424 = vsel %vm1378, %v1214, %v1423
    %v1425 = vsel %vm1380, %v1221, %v1424
    %v1426 = vsel %vm1382, %v1228, %v1425
    %v1427 = vsel %vm1384, %v1235, %v1426
    %v1428 = vsel %vm1372, %v1249, %v1242
    %v1429 = vsel %vm1374, %v1256, %v1428
    %v1430 = vsel %vm1376, %v1263, %v1429
    %v1431 = vsel %vm1378, %v1270, %v1430
    %v1432 = vsel %vm1380, %v1277, %v1431
    %v1433 = vsel %vm1382, %v1284, %v1432
    %v1434 = vsel %vm1384, %v1291, %v1433
    %1443 = vst [vmem:[#allocation2 + $0x1] sm:$0xff] %v1385
    %1444 = vst [vmem:[#allocation2 + $0x11] sm:$0xff] %v1392
    %1445 = vst [vmem:[#allocation2 + $0x21] sm:$0xff] %v1399
    %1446 = vst [vmem:[#allocation2 + $0x31] sm:$0xff] %v1406
    %1447 = vst [vmem:[#allocation2 + $0x41] sm:$0xff] %v1413
    %1448 = vst [vmem:[#allocation2 + $0x51] sm:$0xff] %v1420
    %1449 = vst [vmem:[#allocation2 + $0x61] sm:$0xff] %v1427
    %1450 = vst [vmem:[#allocation2 + $0x71] sm:$0xff] %v1434
    %v1451 = vld [vmem:[#allocation2] sm:$0xff]
    %v1452 = vld [vmem:[#allocation2 + $0x10] sm:$0xff]
    %v1453 = vld [vmem:[#allocation2 + $0x20] sm:$0xff]
    %v1454 = vld [vmem:[#allocation2 + $0x30] sm:$0xff]
    %v1455 = vld [vmem:[#allocation2 + $0x40] sm:$0xff]
    %v1456 = vld [vmem:[#allocation2 + $0x50] sm:$0xff]
    %v1457 = vld [vmem:[#allocation2 + $0x60] sm:$0xff]
    %v1458 = vld [vmem:[#allocation2 + $0x70] sm:$0xff]
    %v1459 = vld [vmem:[#allocation2 + $0x1] sm:$0xff]
    %v1460 = vld [vmem:[#allocation2 + $0x11] sm:$0xff]
    %v1461 = vld [vmem:[#allocation2 + $0x21] sm:$0xff]
    %v1462 = vld [vmem:[#allocation2 + $0x31] sm:$0xff]
    %v1463 = vld [vmem:[#allocation2 + $0x41] sm:$0xff]
    %v1464 = vld [vmem:[#allocation2 + $0x51] sm:$0xff]
    %v1465 = vld [vmem:[#allocation2 + $0x61] sm:$0xff]
    %v1466 = vld [vmem:[#allocation2 + $0x71] sm:$0xff]
    %v1467 = vld [vmem:[#allocation2 + $0x2] sm:$0xff]
    %v1468 = vld [vmem:[#allocation2 + $0x12] sm:$0xff]
    %v1469 = vld [vmem:[#allocation2 + $0x22] sm:$0xff]
    %v1470 = vld [vmem:[#allocation2 + $0x32] sm:$0xff]
    %v1471 = vld [vmem:[#allocation2 + $0x42] sm:$0xff]
    %v1472 = vld [vmem:[#allocation2 + $0x52] sm:$0xff]
    %v1473 = vld [vmem:[#allocation2 + $0x62] sm:$0xff]
    %v1474 = vld [vmem:[#allocation2 + $0x72] sm:$0xff]
    %v1475 = vpack.c.bf16 %v1452, %v1451
    %v1476 = vpack.c.bf16 %v1460, %v1459
    %v1477 = vpack.c.bf16 %v1468, %v1467
    %v1478 = vpack.c.bf16 %v1454, %v1453
    %v1479 = vpack.c.bf16 %v1462, %v1461
    %v1480 = vpack.c.bf16 %v1470, %v1469
    %v1481 = vpack.c.bf16 %v1456, %v1455
    %v1482 = vpack.c.bf16 %v1464, %v1463
    %v1483 = vpack.c.bf16 %v1472, %v1471
    %v1484 = vpack.c.bf16 %v1458, %v1457
    %v1485 = vpack.c.bf16 %v1466, %v1465
    %v1486 = vpack.c.bf16 %v1474, %v1473
    %v1487 = vld [vmem:[#allocation8] sm:$0xff]
    %v1488 = vld [vmem:[#allocation8 + $0x8] sm:$0xff]
    %v1489 = vld [vmem:[#allocation8 + $0x10] sm:$0xff]
    %v1490 = vld [vmem:[#allocation8 + $0x18] sm:$0xff]
    %v1491 = vld [vmem:[#allocation8 + $0x20] sm:$0xff]
    %v1492 = vld [vmem:[#allocation8 + $0x28] sm:$0xff]
    %v1493 = vld [vmem:[#allocation8 + $0x30] sm:$0xff]
    %v1494 = vld [vmem:[#allocation8 + $0x38] sm:$0xff]
    %v1495 = vld [vmem:[#allocation8 + $0x40] sm:$0xff]
    %v1496 = vld [vmem:[#allocation8 + $0x48] sm:$0xff]
    %v1497 = vld [vmem:[#allocation8 + $0x50] sm:$0xff]
    %v1498 = vld [vmem:[#allocation8 + $0x58] sm:$0xff]
    %v1499 = vld [vmem:[#allocation8 + $0x60] sm:$0xff]
    %v1500 = vld [vmem:[#allocation8 + $0x68] sm:$0xff]
    %v1501 = vld [vmem:[#allocation8 + $0x70] sm:$0xff]
    %v1502 = vld [vmem:[#allocation8 + $0x78] sm:$0xff]
    %v1503 = vld [vmem:[#allocation8 + $0x80] sm:$0xff]
    %v1504 = vld [vmem:[#allocation8 + $0x88] sm:$0xff]
    %v1505 = vld [vmem:[#allocation8 + $0x90] sm:$0xff]
    %v1506 = vld [vmem:[#allocation8 + $0x98] sm:$0xff]
    %v1507 = vld [vmem:[#allocation8 + $0xa0] sm:$0xff]
    %v1508 = vld [vmem:[#allocation8 + $0xa8] sm:$0xff]
    %v1509 = vld [vmem:[#allocation8 + $0xb0] sm:$0xff]
    %v1510 = vld [vmem:[#allocation8 + $0xb8] sm:$0xff]
    %v1511 = vld [vmem:[#allocation8 + $0xc0] sm:$0xff]
    %v1512 = vld [vmem:[#allocation8 + $0xc8] sm:$0xff]
    %v1513 = vld [vmem:[#allocation8 + $0xd0] sm:$0xff]
    %v1514 = vld [vmem:[#allocation8 + $0xd8] sm:$0xff]
    %v1515 = vld [vmem:[#allocation8 + $0xe0] sm:$0xff]
    %v1516 = vld [vmem:[#allocation8 + $0xe8] sm:$0xff]
    %v1517 = vld [vmem:[#allocation8 + $0xf0] sm:$0xff]
    %v1518 = vld [vmem:[#allocation8 + $0xf8] sm:$0xff]
    %v1519 = vld [vmem:[#allocation8 + $0x100] sm:$0xff]
    %v1520 = vld [vmem:[#allocation8 + $0x108] sm:$0xff]
    %v1521 = vld [vmem:[#allocation8 + $0x110] sm:$0xff]
    %v1522 = vld [vmem:[#allocation8 + $0x118] sm:$0xff]
    %v1523 = vld [vmem:[#allocation8 + $0x120] sm:$0xff]
    %v1524 = vld [vmem:[#allocation8 + $0x128] sm:$0xff]
    %v1525 = vld [vmem:[#allocation8 + $0x130] sm:$0xff]
    %v1526 = vld [vmem:[#allocation8 + $0x138] sm:$0xff]
    %v1527 = vld [vmem:[#allocation8 + $0x140] sm:$0xff]
    %v1528 = vld [vmem:[#allocation8 + $0x148] sm:$0xff]
    %v1529 = vld [vmem:[#allocation8 + $0x150] sm:$0xff]
    %v1530 = vld [vmem:[#allocation8 + $0x158] sm:$0xff]
    %v1531 = vld [vmem:[#allocation8 + $0x160] sm:$0xff]
    %v1532 = vld [vmem:[#allocation8 + $0x168] sm:$0xff]
    %v1533 = vld [vmem:[#allocation8 + $0x170] sm:$0xff]
    %v1534 = vld [vmem:[#allocation8 + $0x178] sm:$0xff]
    %v1535 = vld [vmem:[#allocation9] sm:$0x3]
    %v1537 = vperm.slane %v1535, 0
    %v1538 = vperm.slane %v1535, 1
    %v1589 = vunpack.c.l.b16 %v1487
    %v1590 = vunpack.c.h.b16 %v1487
    %v1591 = vunpack.c.l.b16 %v1488
    %v1592 = vunpack.c.h.b16 %v1488
    %v1593 = vunpack.c.l.b16 %v1489
    %v1594 = vunpack.c.h.b16 %v1489
    %v1595 = vunpack.c.l.b16 %v1490
    %v1596 = vunpack.c.h.b16 %v1490
    %v1597 = vunpack.c.l.b16 %v1491
    %v1598 = vunpack.c.h.b16 %v1491
    %v1599 = vunpack.c.l.b16 %v1492
    %v1600 = vunpack.c.h.b16 %v1492
    %v1601 = vunpack.c.l.b16 %v1493
    %v1602 = vunpack.c.h.b16 %v1493
    %v1603 = vunpack.c.l.b16 %v1494
    %v1604 = vunpack.c.h.b16 %v1494
    %v1605 = vunpack.c.l.b16 %v1495
    %v1606 = vunpack.c.h.b16 %v1495
    %v1607 = vunpack.c.l.b16 %v1496
    %v1608 = vunpack.c.h.b16 %v1496
    %v1609 = vunpack.c.l.b16 %v1497
    %v1610 = vunpack.c.h.b16 %v1497
    %v1611 = vunpack.c.l.b16 %v1498
    %v1612 = vunpack.c.h.b16 %v1498
    %v1613 = vunpack.c.l.b16 %v1499
    %v1614 = vunpack.c.h.b16 %v1499
    %v1615 = vunpack.c.l.b16 %v1500
    %v1616 = vunpack.c.h.b16 %v1500
    %v1617 = vunpack.c.l.b16 %v1501
    %v1618 = vunpack.c.h.b16 %v1501
    %v1619 = vunpack.c.l.b16 %v1502
    %v1620 = vunpack.c.h.b16 %v1502
    %v1621 = vunpack.c.l.b16 %v1503
    %v1622 = vunpack.c.h.b16 %v1503
    %v1623 = vunpack.c.l.b16 %v1504
    %v1624 = vunpack.c.h.b16 %v1504
    %v1625 = vunpack.c.l.b16 %v1505
    %v1626 = vunpack.c.h.b16 %v1505
    %v1627 = vunpack.c.l.b16 %v1506
    %v1628 = vunpack.c.h.b16 %v1506
    %v1629 = vunpack.c.l.b16 %v1507
    %v1630 = vunpack.c.h.b16 %v1507
    %v1631 = vunpack.c.l.b16 %v1508
    %v1632 = vunpack.c.h.b16 %v1508
    %v1633 = vunpack.c.l.b16 %v1509
    %v1634 = vunpack.c.h.b16 %v1509
    %v1635 = vunpack.c.l.b16 %v1510
    %v1636 = vunpack.c.h.b16 %v1510
    %v1637 = vunpack.c.l.b16 %v1511
    %v1638 = vunpack.c.h.b16 %v1511
    %v1639 = vunpack.c.l.b16 %v1512
    %v1640 = vunpack.c.h.b16 %v1512
    %v1641 = vunpack.c.l.b16 %v1513
    %v1642 = vunpack.c.h.b16 %v1513
    %v1643 = vunpack.c.l.b16 %v1514
    %v1644 = vunpack.c.h.b16 %v1514
    %v1645 = vunpack.c.l.b16 %v1515
    %v1646 = vunpack.c.h.b16 %v1515
    %v1647 = vunpack.c.l.b16 %v1516
    %v1648 = vunpack.c.h.b16 %v1516
    %v1649 = vunpack.c.l.b16 %v1517
    %v1650 = vunpack.c.h.b16 %v1517
    %v1651 = vunpack.c.l.b16 %v1518
    %v1652 = vunpack.c.h.b16 %v1518
    %v1653 = vunpack.c.l.b16 %v1519
    %v1654 = vunpack.c.h.b16 %v1519
    %v1655 = vunpack.c.l.b16 %v1520
    %v1656 = vunpack.c.h.b16 %v1520
    %v1657 = vunpack.c.l.b16 %v1521
    %v1658 = vunpack.c.h.b16 %v1521
    %v1659 = vunpack.c.l.b16 %v1522
    %v1660 = vunpack.c.h.b16 %v1522
    %v1661 = vunpack.c.l.b16 %v1523
    %v1662 = vunpack.c.h.b16 %v1523
    %v1663 = vunpack.c.l.b16 %v1524
    %v1664 = vunpack.c.h.b16 %v1524
    %v1665 = vunpack.c.l.b16 %v1525
    %v1666 = vunpack.c.h.b16 %v1525
    %v1667 = vunpack.c.l.b16 %v1526
    %v1668 = vunpack.c.h.b16 %v1526
    %v1669 = vunpack.c.l.b16 %v1527
    %v1670 = vunpack.c.h.b16 %v1527
    %v1671 = vunpack.c.l.b16 %v1528
    %v1672 = vunpack.c.h.b16 %v1528
    %v1673 = vunpack.c.l.b16 %v1529
    %v1674 = vunpack.c.h.b16 %v1529
    %v1675 = vunpack.c.l.b16 %v1530
    %v1676 = vunpack.c.h.b16 %v1530
    %v1677 = vunpack.c.l.b16 %v1531
    %v1678 = vunpack.c.h.b16 %v1531
    %v1679 = vunpack.c.l.b16 %v1532
    %v1680 = vunpack.c.h.b16 %v1532
    %v1681 = vunpack.c.l.b16 %v1533
    %v1682 = vunpack.c.h.b16 %v1533
    %v1683 = vunpack.c.l.b16 %v1534
    %v1684 = vunpack.c.h.b16 %v1534
    %v1685 = vpack.c.b16 %v1591, %v1589
    %v1686 = vpack.c.b16 %v1592, %v1590
    %v1687 = vpack.c.b16 %v1595, %v1593
    %v1688 = vpack.c.b16 %v1596, %v1594
    %v1689 = vpack.c.b16 %v1599, %v1597
    %v1690 = vpack.c.b16 %v1600, %v1598
    %v1691 = vpack.c.b16 %v1603, %v1601
    %v1692 = vpack.c.b16 %v1604, %v1602
    %v1693 = vpack.c.b16 %v1607, %v1605
    %v1694 = vpack.c.b16 %v1608, %v1606
    %v1695 = vpack.c.b16 %v1611, %v1609
    %v1696 = vpack.c.b16 %v1612, %v1610
    %v1697 = vpack.c.b16 %v1615, %v1613
    %v1698 = vpack.c.b16 %v1616, %v1614
    %v1699 = vpack.c.b16 %v1619, %v1617
    %v1700 = vpack.c.b16 %v1620, %v1618
    %v1701 = vpack.c.b16 %v1623, %v1621
    %v1702 = vpack.c.b16 %v1624, %v1622
    %v1703 = vpack.c.b16 %v1627, %v1625
    %v1704 = vpack.c.b16 %v1628, %v1626
    %v1705 = vpack.c.b16 %v1631, %v1629
    %v1706 = vpack.c.b16 %v1632, %v1630
    %v1707 = vpack.c.b16 %v1635, %v1633
    %v1708 = vpack.c.b16 %v1636, %v1634
    %v1709 = vpack.c.b16 %v1639, %v1637
    %v1710 = vpack.c.b16 %v1640, %v1638
    %v1711 = vpack.c.b16 %v1643, %v1641
    %v1712 = vpack.c.b16 %v1644, %v1642
    %v1713 = vpack.c.b16 %v1647, %v1645
    %v1714 = vpack.c.b16 %v1648, %v1646
    %v1715 = vpack.c.b16 %v1651, %v1649
    %v1716 = vpack.c.b16 %v1652, %v1650
    %v1717 = vpack.c.b16 %v1655, %v1653
    %v1718 = vpack.c.b16 %v1656, %v1654
    %v1719 = vpack.c.b16 %v1659, %v1657
    %v1720 = vpack.c.b16 %v1660, %v1658
    %v1721 = vpack.c.b16 %v1663, %v1661
    %v1722 = vpack.c.b16 %v1664, %v1662
    %v1723 = vpack.c.b16 %v1667, %v1665
    %v1724 = vpack.c.b16 %v1668, %v1666
    %v1725 = vpack.c.b16 %v1671, %v1669
    %v1726 = vpack.c.b16 %v1672, %v1670
    %v1727 = vpack.c.b16 %v1675, %v1673
    %v1728 = vpack.c.b16 %v1676, %v1674
    %v1729 = vpack.c.b16 %v1679, %v1677
    %v1730 = vpack.c.b16 %v1680, %v1678
    %v1731 = vpack.c.b16 %v1683, %v1681
    %v1732 = vpack.c.b16 %v1684, %v1682
    %1781 = vmatpush.bf16.msra.mxu0 %v1699
    %1782 = vmatpush.bf16.msra.mxu0 %v1697
    %1783 = vmatpush.bf16.msra.mxu0 %v1695
    %1784 = vmatpush.bf16.msra.mxu0 %v1693
    %1785 = vmatpush.bf16.msra.mxu0 %v1691
    %1786 = vmatpush.bf16.msra.mxu0 %v1689
    %1787 = vmatpush.bf16.msra.mxu0 %v1687
    %1788 = vmatpush.bf16.msra.mxu0 %v1685
    %1789 = vmatmul.bf16.gmra.mxu0 %v1475
    %v1790 = vpop.f32.mrf.mxu0
    %v1791 = vadd.f32 %v1537, %v1790
    %v1792 = vpop.f32.mrf.mxu0
    %v1793 = vadd.f32 %v1537, %v1792
    %1794 = vmatmul.bf16.gmra.mxu0 %v1478
    %v1795 = vpop.f32.mrf.mxu0
    %v1796 = vadd.f32 %v1537, %v1795
    %v1797 = vpop.f32.mrf.mxu0
    %v1798 = vadd.f32 %v1537, %v1797
    %1799 = vmatmul.bf16.gmra.mxu0 %v1481
    %v1800 = vpop.f32.mrf.mxu0
    %v1801 = vadd.f32 %v1537, %v1800
    %v1802 = vpop.f32.mrf.mxu0
    %v1803 = vadd.f32 %v1537, %v1802
    %1804 = vmatmul.bf16.gmra.mxu0 %v1484
    %v1805 = vpop.f32.mrf.mxu0
    %v1806 = vadd.f32 %v1537, %v1805
    %v1807 = vpop.f32.mrf.mxu0
    %v1808 = vadd.f32 %v1537, %v1807
    %1809 = vdwg.mxu0
    %1810 = vmatpush.bf16.msra.mxu0 %v1715
    %1811 = vmatpush.bf16.msra.mxu0 %v1713
    %1812 = vmatpush.bf16.msra.mxu0 %v1711
    %1813 = vmatpush.bf16.msra.mxu0 %v1709
    %1814 = vmatpush.bf16.msra.mxu0 %v1707
    %1815 = vmatpush.bf16.msra.mxu0 %v1705
    %1816 = vmatpush.bf16.msra.mxu0 %v1703
    %1817 = vmatpush.bf16.msra.mxu0 %v1701
    %1818 = vmatmul.bf16.gmra.mxu0 %v1476
    %v1819 = vpop.f32.mrf.mxu0
    %v1820 = vadd.f32 %v1791, %v1819
    %v1821 = vpop.f32.mrf.mxu0
    %v1822 = vadd.f32 %v1793, %v1821
    %1823 = vmatmul.bf16.gmra.mxu0 %v1479
    %v1824 = vpop.f32.mrf.mxu0
    %v1825 = vadd.f32 %v1796, %v1824
    %v1826 = vpop.f32.mrf.mxu0
    %v1827 = vadd.f32 %v1798, %v1826
    %1828 = vmatmul.bf16.gmra.mxu0 %v1482
    %v1829 = vpop.f32.mrf.mxu0
    %v1830 = vadd.f32 %v1801, %v1829
    %v1831 = vpop.f32.mrf.mxu0
    %v1832 = vadd.f32 %v1803, %v1831
    %1833 = vmatmul.bf16.gmra.mxu0 %v1485
    %v1834 = vpop.f32.mrf.mxu0
    %v1835 = vadd.f32 %v1806, %v1834
    %v1836 = vpop.f32.mrf.mxu0
    %v1837 = vadd.f32 %v1808, %v1836
    %1838 = vdwg.mxu0
    %1839 = vmatpush.bf16.msra.mxu0 %v1731
    %1840 = vmatpush.bf16.msra.mxu0 %v1729
    %1841 = vmatpush.bf16.msra.mxu0 %v1727
    %1842 = vmatpush.bf16.msra.mxu0 %v1725
    %1843 = vmatpush.bf16.msra.mxu0 %v1723
    %1844 = vmatpush.bf16.msra.mxu0 %v1721
    %1845 = vmatpush.bf16.msra.mxu0 %v1719
    %1846 = vmatpush.bf16.msra.mxu0 %v1717
    %1847 = vmatmul.bf16.gmra.mxu0 %v1477
    %v1848 = vpop.f32.mrf.mxu0
    %v1849 = vadd.f32 %v1820, %v1848
    %v1850 = vpop.f32.mrf.mxu0
    %v1851 = vadd.f32 %v1822, %v1850
    %1852 = vmatmul.bf16.gmra.mxu0 %v1480
    %v1853 = vpop.f32.mrf.mxu0
    %v1854 = vadd.f32 %v1825, %v1853
    %v1855 = vpop.f32.mrf.mxu0
    %v1856 = vadd.f32 %v1827, %v1855
    %1857 = vmatmul.bf16.gmra.mxu0 %v1483
    %v1858 = vpop.f32.mrf.mxu0
    %v1859 = vadd.f32 %v1830, %v1858
    %v1860 = vpop.f32.mrf.mxu0
    %v1861 = vadd.f32 %v1832, %v1860
    %1862 = vmatmul.bf16.gmra.mxu0 %v1486
    %v1863 = vpop.f32.mrf.mxu0
    %v1864 = vadd.f32 %v1835, %v1863
    %v1865 = vpop.f32.mrf.mxu0
    %v1866 = vadd.f32 %v1837, %v1865
    %1867 = vdwg.mxu0
    %1868 = vmatpush.bf16.msra.mxu0 %v1700
    %1869 = vmatpush.bf16.msra.mxu0 %v1698
    %1870 = vmatpush.bf16.msra.mxu0 %v1696
    %1871 = vmatpush.bf16.msra.mxu0 %v1694
    %1872 = vmatpush.bf16.msra.mxu0 %v1692
    %1873 = vmatpush.bf16.msra.mxu0 %v1690
    %1874 = vmatpush.bf16.msra.mxu0 %v1688
    %1875 = vmatpush.bf16.msra.mxu0 %v1686
    %1876 = vmatmul.bf16.gmra.mxu0 %v1475
    %v1877 = vpop.f32.mrf.mxu0
    %v1878 = vadd.f32 %v1538, %v1877
    %v1879 = vpop.f32.mrf.mxu0
    %v1880 = vadd.f32 %v1538, %v1879
    %1881 = vmatmul.bf16.gmra.mxu0 %v1478
    %v1882 = vpop.f32.mrf.mxu0
    %v1883 = vadd.f32 %v1538, %v1882
    %v1884 = vpop.f32.mrf.mxu0
    %v1885 = vadd.f32 %v1538, %v1884
    %1886 = vmatmul.bf16.gmra.mxu0 %v1481
    %v1887 = vpop.f32.mrf.mxu0
    %v1888 = vadd.f32 %v1538, %v1887
    %v1889 = vpop.f32.mrf.mxu0
    %v1890 = vadd.f32 %v1538, %v1889
    %1891 = vmatmul.bf16.gmra.mxu0 %v1484
    %v1892 = vpop.f32.mrf.mxu0
    %v1893 = vadd.f32 %v1538, %v1892
    %v1894 = vpop.f32.mrf.mxu0
    %v1895 = vadd.f32 %v1538, %v1894
    %1896 = vdwg.mxu0
    %1897 = vmatpush.bf16.msra.mxu0 %v1716
    %1898 = vmatpush.bf16.msra.mxu0 %v1714
    %1899 = vmatpush.bf16.msra.mxu0 %v1712
    %1900 = vmatpush.bf16.msra.mxu0 %v1710
    %1901 = vmatpush.bf16.msra.mxu0 %v1708
    %1902 = vmatpush.bf16.msra.mxu0 %v1706
    %1903 = vmatpush.bf16.msra.mxu0 %v1704
    %1904 = vmatpush.bf16.msra.mxu0 %v1702
    %1905 = vmatmul.bf16.gmra.mxu0 %v1476
    %v1906 = vpop.f32.mrf.mxu0
    %v1907 = vadd.f32 %v1878, %v1906
    %v1908 = vpop.f32.mrf.mxu0
    %v1909 = vadd.f32 %v1880, %v1908
    %1910 = vmatmul.bf16.gmra.mxu0 %v1479
    %v1911 = vpop.f32.mrf.mxu0
    %v1912 = vadd.f32 %v1883, %v1911
    %v1913 = vpop.f32.mrf.mxu0
    %v1914 = vadd.f32 %v1885, %v1913
    %1915 = vmatmul.bf16.gmra.mxu0 %v1482
    %v1916 = vpop.f32.mrf.mxu0
    %v1917 = vadd.f32 %v1888, %v1916
    %v1918 = vpop.f32.mrf.mxu0
    %v1919 = vadd.f32 %v1890, %v1918
    %1920 = vmatmul.bf16.gmra.mxu0 %v1485
    %v1921 = vpop.f32.mrf.mxu0
    %v1922 = vadd.f32 %v1893, %v1921
    %v1923 = vpop.f32.mrf.mxu0
    %v1924 = vadd.f32 %v1895, %v1923
    %1925 = vdwg.mxu0
    %1926 = vmatpush.bf16.msra.mxu0 %v1732
    %1927 = vmatpush.bf16.msra.mxu0 %v1730
    %1928 = vmatpush.bf16.msra.mxu0 %v1728
    %1929 = vmatpush.bf16.msra.mxu0 %v1726
    %1930 = vmatpush.bf16.msra.mxu0 %v1724
    %1931 = vmatpush.bf16.msra.mxu0 %v1722
    %1932 = vmatpush.bf16.msra.mxu0 %v1720
    %1933 = vmatpush.bf16.msra.mxu0 %v1718
    %1934 = vmatmul.bf16.gmra.mxu0 %v1477
    %v1935 = vpop.f32.mrf.mxu0
    %v1936 = vadd.f32 %v1907, %v1935
    %v1937 = vpop.f32.mrf.mxu0
    %v1938 = vadd.f32 %v1909, %v1937
    %1939 = vmatmul.bf16.gmra.mxu0 %v1480
    %v1940 = vpop.f32.mrf.mxu0
    %v1941 = vadd.f32 %v1912, %v1940
    %v1942 = vpop.f32.mrf.mxu0
    %v1943 = vadd.f32 %v1914, %v1942
    %1944 = vmatmul.bf16.gmra.mxu0 %v1483
    %v1945 = vpop.f32.mrf.mxu0
    %v1946 = vadd.f32 %v1917, %v1945
    %v1947 = vpop.f32.mrf.mxu0
    %v1948 = vadd.f32 %v1919, %v1947
    %1949 = vmatmul.bf16.gmra.mxu0 %v1486
    %v1950 = vpop.f32.mrf.mxu0
    %v1951 = vadd.f32 %v1922, %v1950
    %v1952 = vpop.f32.mrf.mxu0
    %v1953 = vadd.f32 %v1924, %v1952
    %1954 = vdwg.mxu0
    %v1955 = vmax.f32 %v1849, 0.0
    %v1956 = vmax.f32 %v1936, 0.0
    %v1957 = vmax.f32 %v1851, 0.0
    %v1958 = vmax.f32 %v1938, 0.0
    %v1959 = vmax.f32 %v1854, 0.0
    %v1960 = vmax.f32 %v1941, 0.0
    %v1961 = vmax.f32 %v1856, 0.0
    %v1962 = vmax.f32 %v1943, 0.0
    %v1963 = vmax.f32 %v1859, 0.0
    %v1964 = vmax.f32 %v1946, 0.0
    %v1965 = vmax.f32 %v1861, 0.0
    %v1966 = vmax.f32 %v1948, 0.0
    %v1967 = vmax.f32 %v1864, 0.0
    %v1968 = vmax.f32 %v1951, 0.0
    %v1969 = vmax.f32 %v1866, 0.0
    %v1970 = vmax.f32 %v1953, 0.0
    %v1987 = vrot.slane %v1956, 6
    %v1988 = vrot.slane %v1958, 6
    %v1989 = vrot.slane %v1960, 6
    %v1990 = vrot.slane %v1962, 6
    %v1991 = vrot.slane %v1964, 6
    %v1992 = vrot.slane %v1966, 6
    %v1993 = vrot.slane %v1968, 6
    %v1994 = vrot.slane %v1970, 6
    %v1995 = vsel %vm843, %v1955, %v1987
    %vm1996 = vcmask 1043458
    %v1997 = vsel %vm1996, %v1955, %v1987
    %v1998 = vrot.slane %v1997, 2
    %vm1999 = vcmask 1045508
    %v2000 = vsel %vm1999, %v1955, %v1987
    %v2001 = vrot.slane %v2000, 4
    %v2002 = vsel %vm622, %v1987, %v1955
    %v2003 = vrot.slane %v2002, 6
    %v2004 = vsel %vm843, %v1957, %v1988
    %v2005 = vsel %vm1996, %v1957, %v1988
    %v2006 = vrot.slane %v2005, 2
    %v2007 = vsel %vm1999, %v1957, %v1988
    %v2008 = vrot.slane %v2007, 4
    %v2009 = vsel %vm622, %v1988, %v1957
    %v2010 = vrot.slane %v2009, 6
    %v2011 = vsel %vm843, %v1959, %v1989
    %v2012 = vsel %vm1996, %v1959, %v1989
    %v2013 = vrot.slane %v2012, 2
    %v2014 = vsel %vm1999, %v1959, %v1989
    %v2015 = vrot.slane %v2014, 4
    %v2016 = vsel %vm622, %v1989, %v1959
    %v2017 = vrot.slane %v2016, 6
    %v2018 = vsel %vm843, %v1961, %v1990
    %v2019 = vsel %vm1996, %v1961, %v1990
    %v2020 = vrot.slane %v2019, 2
    %v2021 = vsel %vm1999, %v1961, %v1990
    %v2022 = vrot.slane %v2021, 4
    %v2023 = vsel %vm622, %v1990, %v1961
    %v2024 = vrot.slane %v2023, 6
    %v2025 = vsel %vm843, %v1963, %v1991
    %v2026 = vsel %vm1996, %v1963, %v1991
    %v2027 = vrot.slane %v2026, 2
    %v2028 = vsel %vm1999, %v1963, %v1991
    %v2029 = vrot.slane %v2028, 4
    %v2030 = vsel %vm622, %v1991, %v1963
    %v2031 = vrot.slane %v2030, 6
    %v2032 = vsel %vm843, %v1965, %v1992
    %v2033 = vsel %vm1996, %v1965, %v1992
    %v2034 = vrot.slane %v2033, 2
    %v2035 = vsel %vm1999, %v1965, %v1992
    %v2036 = vrot.slane %v2035, 4
    %v2037 = vsel %vm622, %v1992, %v1965
    %v2038 = vrot.slane %v2037, 6
    %v2039 = vsel %vm843, %v1967, %v1993
    %v2040 = vsel %vm1996, %v1967, %v1993
    %v2041 = vrot.slane %v2040, 2
    %v2042 = vsel %vm1999, %v1967, %v1993
    %v2043 = vrot.slane %v2042, 4
    %v2044 = vsel %vm622, %v1993, %v1967
    %v2045 = vrot.slane %v2044, 6
    %v2046 = vsel %vm843, %v1969, %v1994
    %v2047 = vsel %vm1996, %v1969, %v1994
    %v2048 = vrot.slane %v2047, 2
    %v2049 = vsel %vm1999, %v1969, %v1994
    %v2050 = vrot.slane %v2049, 4
    %v2051 = vsel %vm622, %v1994, %v1969
    %v2052 = vrot.slane %v2051, 6
    %2053 = vst [vmem:[#allocation1] ss:$4 sm:$0xff] %v1995
    %v2054 = vld.sshfl [vmem:[#allocation1] sm:$0xff pattern:$0x73625140]
    %v2055 = vld.sshfl [vmem:[#allocation1 + $0x8] sm:$0xff pattern:$0x73625140]
    %s2056 = scalar_lea.vmem [#allocation1], 32
    %2057 = vst [vmem:[%s2056] ss:$4 sm:$0xff] %v1998
    %v2058 = vld.sshfl [vmem:[#allocation1 + $0x20] sm:$0xff pattern:$0x73625140]
    %v2059 = vld.sshfl [vmem:[#allocation1 + $0x28] sm:$0xff pattern:$0x73625140]
    %2060 = vst [vmem:[#allocation1] ss:$4 sm:$0xff] %v2001
    %v2061 = vld.sshfl [vmem:[#allocation1] sm:$0xff pattern:$0x73625140]
    %v2062 = vld.sshfl [vmem:[#allocation1 + $0x8] sm:$0xff pattern:$0x73625140]
    %2063 = vst [vmem:[%s2056] ss:$4 sm:$0xff] %v2003
    %v2064 = vld.sshfl [vmem:[#allocation1 + $0x20] sm:$0xff pattern:$0x73625140]
    %v2065 = vld.sshfl [vmem:[#allocation1 + $0x28] sm:$0xff pattern:$0x73625140]
    %2066 = vst [vmem:[#allocation1] ss:$4 sm:$0xff] %v2004
    %v2067 = vld.sshfl [vmem:[#allocation1] sm:$0xff pattern:$0x73625140]
    %v2068 = vld.sshfl [vmem:[#allocation1 + $0x8] sm:$0xff pattern:$0x73625140]
    %2069 = vst [vmem:[%s2056] ss:$4 sm:$0xff] %v2006
    %v2070 = vld.sshfl [vmem:[#allocation1 + $0x20] sm:$0xff pattern:$0x73625140]
    %v2071 = vld.sshfl [vmem:[#allocation1 + $0x28] sm:$0xff pattern:$0x73625140]
    %2072 = vst [vmem:[#allocation1] ss:$4 sm:$0xff] %v2008
    %v2073 = vld.sshfl [vmem:[#allocation1] sm:$0xff pattern:$0x73625140]
    %v2074 = vld.sshfl [vmem:[#allocation1 + $0x8] sm:$0xff pattern:$0x73625140]
    %2075 = vst [vmem:[%s2056] ss:$4 sm:$0xff] %v2010
    %v2076 = vld.sshfl [vmem:[#allocation1 + $0x20] sm:$0xff pattern:$0x73625140]
    %v2077 = vld.sshfl [vmem:[#allocation1 + $0x28] sm:$0xff pattern:$0x73625140]
    %2078 = vst [vmem:[#allocation1] ss:$4 sm:$0xff] %v2011
    %v2079 = vld.sshfl [vmem:[#allocation1] sm:$0xff pattern:$0x73625140]
    %v2080 = vld.sshfl [vmem:[#allocation1 + $0x8] sm:$0xff pattern:$0x73625140]
    %2081 = vst [vmem:[%s2056] ss:$4 sm:$0xff] %v2013
    %v2082 = vld.sshfl [vmem:[#allocation1 + $0x20] sm:$0xff pattern:$0x73625140]
    %v2083 = vld.sshfl [vmem:[#allocation1 + $0x28] sm:$0xff pattern:$0x73625140]
    %2084 = vst [vmem:[#allocation1] ss:$4 sm:$0xff] %v2015
    %v2085 = vld.sshfl [vmem:[#allocation1] sm:$0xff pattern:$0x73625140]
    %v2086 = vld.sshfl [vmem:[#allocation1 + $0x8] sm:$0xff pattern:$0x73625140]
    %2087 = vst [vmem:[%s2056] ss:$4 sm:$0xff] %v2017
    %v2088 = vld.sshfl [vmem:[#allocation1 + $0x20] sm:$0xff pattern:$0x73625140]
    %v2089 = vld.sshfl [vmem:[#allocation1 + $0x28] sm:$0xff pattern:$0x73625140]
    %2090 = vst [vmem:[#allocation1] ss:$4 sm:$0xff] %v2018
    %v2091 = vld.sshfl [vmem:[#allocation1] sm:$0xff pattern:$0x73625140]
    %v2092 = vld.sshfl [vmem:[#allocation1 + $0x8] sm:$0xff pattern:$0x73625140]
    %2093 = vst [vmem:[%s2056] ss:$4 sm:$0xff] %v2020
    %v2094 = vld.sshfl [vmem:[#allocation1 + $0x20] sm:$0xff pattern:$0x73625140]
    %v2095 = vld.sshfl [vmem:[#allocation1 + $0x28] sm:$0xff pattern:$0x73625140]
    %2096 = vst [vmem:[#allocation1] ss:$4 sm:$0xff] %v2022
    %v2097 = vld.sshfl [vmem:[#allocation1] sm:$0xff pattern:$0x73625140]
    %v2098 = vld.sshfl [vmem:[#allocation1 + $0x8] sm:$0xff pattern:$0x73625140]
    %2099 = vst [vmem:[%s2056] ss:$4 sm:$0xff] %v2024
    %v2100 = vld.sshfl [vmem:[#allocation1 + $0x20] sm:$0xff pattern:$0x73625140]
    %v2101 = vld.sshfl [vmem:[#allocation1 + $0x28] sm:$0xff pattern:$0x73625140]
    %2102 = vst [vmem:[#allocation1] ss:$4 sm:$0xff] %v2025
    %v2103 = vld.sshfl [vmem:[#allocation1] sm:$0xff pattern:$0x73625140]
    %v2104 = vld.sshfl [vmem:[#allocation1 + $0x8] sm:$0xff pattern:$0x73625140]
    %2105 = vst [vmem:[%s2056] ss:$4 sm:$0xff] %v2027
    %v2106 = vld.sshfl [vmem:[#allocation1 + $0x20] sm:$0xff pattern:$0x73625140]
    %v2107 = vld.sshfl [vmem:[#allocation1 + $0x28] sm:$0xff pattern:$0x73625140]
    %2108 = vst [vmem:[#allocation1] ss:$4 sm:$0xff] %v2029
    %v2109 = vld.sshfl [vmem:[#allocation1] sm:$0xff pattern:$0x73625140]
    %v2110 = vld.sshfl [vmem:[#allocation1 + $0x8] sm:$0xff pattern:$0x73625140]
    %2111 = vst [vmem:[%s2056] ss:$4 sm:$0xff] %v2031
    %v2112 = vld.sshfl [vmem:[#allocation1 + $0x20] sm:$0xff pattern:$0x73625140]
    %v2113 = vld.sshfl [vmem:[#allocation1 + $0x28] sm:$0xff pattern:$0x73625140]
    %2114 = vst [vmem:[#allocation1] ss:$4 sm:$0xff] %v2032
    %v2115 = vld.sshfl [vmem:[#allocation1] sm:$0xff pattern:$0x73625140]
    %v2116 = vld.sshfl [vmem:[#allocation1 + $0x8] sm:$0xff pattern:$0x73625140]
    %2117 = vst [vmem:[%s2056] ss:$4 sm:$0xff] %v2034
    %v2118 = vld.sshfl [vmem:[#allocation1 + $0x20] sm:$0xff pattern:$0x73625140]
    %v2119 = vld.sshfl [vmem:[#allocation1 + $0x28] sm:$0xff pattern:$0x73625140]
    %2120 = vst [vmem:[#allocation1] ss:$4 sm:$0xff] %v2036
    %v2121 = vld.sshfl [vmem:[#allocation1] sm:$0xff pattern:$0x73625140]
    %v2122 = vld.sshfl [vmem:[#allocation1 + $0x8] sm:$0xff pattern:$0x73625140]
    %2123 = vst [vmem:[%s2056] ss:$4 sm:$0xff] %v2038
    %v2124 = vld.sshfl [vmem:[#allocation1 + $0x20] sm:$0xff pattern:$0x73625140]
    %v2125 = vld.sshfl [vmem:[#allocation1 + $0x28] sm:$0xff pattern:$0x73625140]
    %2126 = vst [vmem:[#allocation1] ss:$4 sm:$0xff] %v2039
    %v2127 = vld.sshfl [vmem:[#allocation1] sm:$0xff pattern:$0x73625140]
    %v2128 = vld.sshfl [vmem:[#allocation1 + $0x8] sm:$0xff pattern:$0x73625140]
    %2129 = vst [vmem:[%s2056] ss:$4 sm:$0xff] %v2041
    %v2130 = vld.sshfl [vmem:[#allocation1 + $0x20] sm:$0xff pattern:$0x73625140]
    %v2131 = vld.sshfl [vmem:[#allocation1 + $0x28] sm:$0xff pattern:$0x73625140]
    %2132 = vst [vmem:[#allocation1] ss:$4 sm:$0xff] %v2043
    %v2133 = vld.sshfl [vmem:[#allocation1] sm:$0xff pattern:$0x73625140]
    %v2134 = vld.sshfl [vmem:[#allocation1 + $0x8] sm:$0xff pattern:$0x73625140]
    %2135 = vst [vmem:[%s2056] ss:$4 sm:$0xff] %v2045
    %v2136 = vld.sshfl [vmem:[#allocation1 + $0x20] sm:$0xff pattern:$0x73625140]
    %v2137 = vld.sshfl [vmem:[#allocation1 + $0x28] sm:$0xff pattern:$0x73625140]
    %2138 = vst [vmem:[#allocation1] ss:$4 sm:$0xff] %v2046
    %v2139 = vld.sshfl [vmem:[#allocation1] sm:$0xff pattern:$0x73625140]
    %v2140 = vld.sshfl [vmem:[#allocation1 + $0x8] sm:$0xff pattern:$0x73625140]
    %2141 = vst [vmem:[%s2056] ss:$4 sm:$0xff] %v2048
    %v2142 = vld.sshfl [vmem:[#allocation1 + $0x20] sm:$0xff pattern:$0x73625140]
    %v2143 = vld.sshfl [vmem:[#allocation1 + $0x28] sm:$0xff pattern:$0x73625140]
    %2144 = vst [vmem:[#allocation1] ss:$4 sm:$0xff] %v2050
    %v2145 = vld.sshfl [vmem:[#allocation1] sm:$0xff pattern:$0x73625140]
    %v2146 = vld.sshfl [vmem:[#allocation1 + $0x8] sm:$0xff pattern:$0x73625140]
    %2147 = vst [vmem:[%s2056] ss:$4 sm:$0xff] %v2052
    %v2148 = vld.sshfl [vmem:[#allocation1 + $0x20] sm:$0xff pattern:$0x73625140]
    %v2149 = vld.sshfl [vmem:[#allocation1 + $0x28] sm:$0xff pattern:$0x73625140]
    %v2214 = vsel %vm843, %v2054, -inf
    %v2215 = vrot.slane %v2214, 4
    %v2216 = vmax.f32 %v2214, %v2215
    %v2217 = vrot.slane %v2216, 2
    %v2218 = vmax.f32 %v2216, %v2217
    %v2219 = vrot.slane %v2218, 1
    %v2220 = vmax.f32 %v2218, %v2219
    %v2221 = vsel %vm843, %v2055, -inf
    %v2222 = vrot.slane %v2221, 4
    %v2223 = vmax.f32 %v2221, %v2222
    %v2224 = vrot.slane %v2223, 2
    %v2225 = vmax.f32 %v2223, %v2224
    %v2226 = vrot.slane %v2225, 1
    %v2227 = vmax.f32 %v2225, %v2226
    %v2228 = vsel %vm843, %v2058, -inf
    %v2229 = vrot.slane %v2228, 4
    %v2230 = vmax.f32 %v2228, %v2229
    %v2231 = vrot.slane %v2230, 2
    %v2232 = vmax.f32 %v2230, %v2231
    %v2233 = vrot.slane %v2232, 1
    %v2234 = vmax.f32 %v2232, %v2233
    %v2235 = vsel %vm843, %v2059, -inf
    %v2236 = vrot.slane %v2235, 4
    %v2237 = vmax.f32 %v2235, %v2236
    %v2238 = vrot.slane %v2237, 2
    %v2239 = vmax.f32 %v2237, %v2238
    %v2240 = vrot.slane %v2239, 1
    %v2241 = vmax.f32 %v2239, %v2240
    %v2242 = vsel %vm843, %v2061, -inf
    %v2243 = vrot.slane %v2242, 4
    %v2244 = vmax.f32 %v2242, %v2243
    %v2245 = vrot.slane %v2244, 2
    %v2246 = vmax.f32 %v2244, %v2245
    %v2247 = vrot.slane %v2246, 1
    %v2248 = vmax.f32 %v2246, %v2247
    %v2249 = vsel %vm843, %v2062, -inf
    %v2250 = vrot.slane %v2249, 4
    %v2251 = vmax.f32 %v2249, %v2250
    %v2252 = vrot.slane %v2251, 2
    %v2253 = vmax.f32 %v2251, %v2252
    %v2254 = vrot.slane %v2253, 1
    %v2255 = vmax.f32 %v2253, %v2254
    %v2256 = vsel %vm843, %v2064, -inf
    %v2257 = vrot.slane %v2256, 4
    %v2258 = vmax.f32 %v2256, %v2257
    %v2259 = vrot.slane %v2258, 2
    %v2260 = vmax.f32 %v2258, %v2259
    %v2261 = vrot.slane %v2260, 1
    %v2262 = vmax.f32 %v2260, %v2261
    %v2263 = vsel %vm843, %v2065, -inf
    %v2264 = vrot.slane %v2263, 4
    %v2265 = vmax.f32 %v2263, %v2264
    %v2266 = vrot.slane %v2265, 2
    %v2267 = vmax.f32 %v2265, %v2266
    %v2268 = vrot.slane %v2267, 1
    %v2269 = vmax.f32 %v2267, %v2268
    %v2270 = vsel %vm843, %v2067, -inf
    %v2271 = vrot.slane %v2270, 4
    %v2272 = vmax.f32 %v2270, %v2271
    %v2273 = vrot.slane %v2272, 2
    %v2274 = vmax.f32 %v2272, %v2273
    %v2275 = vrot.slane %v2274, 1
    %v2276 = vmax.f32 %v2274, %v2275
    %v2277 = vsel %vm843, %v2068, -inf
    %v2278 = vrot.slane %v2277, 4
    %v2279 = vmax.f32 %v2277, %v2278
    %v2280 = vrot.slane %v2279, 2
    %v2281 = vmax.f32 %v2279, %v2280
    %v2282 = vrot.slane %v2281, 1
    %v2283 = vmax.f32 %v2281, %v2282
    %v2284 = vsel %vm843, %v2070, -inf
    %v2285 = vrot.slane %v2284, 4
    %v2286 = vmax.f32 %v2284, %v2285
    %v2287 = vrot.slane %v2286, 2
    %v2288 = vmax.f32 %v2286, %v2287
    %v2289 = vrot.slane %v2288, 1
    %v2290 = vmax.f32 %v2288, %v2289
    %v2291 = vsel %vm843, %v2071, -inf
    %v2292 = vrot.slane %v2291, 4
    %v2293 = vmax.f32 %v2291, %v2292
    %v2294 = vrot.slane %v2293, 2
    %v2295 = vmax.f32 %v2293, %v2294
    %v2296 = vrot.slane %v2295, 1
    %v2297 = vmax.f32 %v2295, %v2296
    %v2298 = vsel %vm843, %v2073, -inf
    %v2299 = vrot.slane %v2298, 4
    %v2300 = vmax.f32 %v2298, %v2299
    %v2301 = vrot.slane %v2300, 2
    %v2302 = vmax.f32 %v2300, %v2301
    %v2303 = vrot.slane %v2302, 1
    %v2304 = vmax.f32 %v2302, %v2303
    %v2305 = vsel %vm843, %v2074, -inf
    %v2306 = vrot.slane %v2305, 4
    %v2307 = vmax.f32 %v2305, %v2306
    %v2308 = vrot.slane %v2307, 2
    %v2309 = vmax.f32 %v2307, %v2308
    %v2310 = vrot.slane %v2309, 1
    %v2311 = vmax.f32 %v2309, %v2310
    %v2312 = vsel %vm843, %v2076, -inf
    %v2313 = vrot.slane %v2312, 4
    %v2314 = vmax.f32 %v2312, %v2313
    %v2315 = vrot.slane %v2314, 2
    %v2316 = vmax.f32 %v2314, %v2315
    %v2317 = vrot.slane %v2316, 1
    %v2318 = vmax.f32 %v2316, %v2317
    %v2319 = vsel %vm843, %v2077, -inf
    %v2320 = vrot.slane %v2319, 4
    %v2321 = vmax.f32 %v2319, %v2320
    %v2322 = vrot.slane %v2321, 2
    %v2323 = vmax.f32 %v2321, %v2322
    %v2324 = vrot.slane %v2323, 1
    %v2325 = vmax.f32 %v2323, %v2324
    %v2326 = vsel %vm843, %v2079, -inf
    %v2327 = vrot.slane %v2326, 4
    %v2328 = vmax.f32 %v2326, %v2327
    %v2329 = vrot.slane %v2328, 2
    %v2330 = vmax.f32 %v2328, %v2329
    %v2331 = vrot.slane %v2330, 1
    %v2332 = vmax.f32 %v2330, %v2331
    %v2333 = vsel %vm843, %v2080, -inf
    %v2334 = vrot.slane %v2333, 4
    %v2335 = vmax.f32 %v2333, %v2334
    %v2336 = vrot.slane %v2335, 2
    %v2337 = vmax.f32 %v2335, %v2336
    %v2338 = vrot.slane %v2337, 1
    %v2339 = vmax.f32 %v2337, %v2338
    %v2340 = vsel %vm843, %v2082, -inf
    %v2341 = vrot.slane %v2340, 4
    %v2342 = vmax.f32 %v2340, %v2341
    %v2343 = vrot.slane %v2342, 2
    %v2344 = vmax.f32 %v2342, %v2343
    %v2345 = vrot.slane %v2344, 1
    %v2346 = vmax.f32 %v2344, %v2345
    %v2347 = vsel %vm843, %v2083, -inf
    %v2348 = vrot.slane %v2347, 4
    %v2349 = vmax.f32 %v2347, %v2348
    %v2350 = vrot.slane %v2349, 2
    %v2351 = vmax.f32 %v2349, %v2350
    %v2352 = vrot.slane %v2351, 1
    %v2353 = vmax.f32 %v2351, %v2352
    %v2354 = vsel %vm843, %v2085, -inf
    %v2355 = vrot.slane %v2354, 4
    %v2356 = vmax.f32 %v2354, %v2355
    %v2357 = vrot.slane %v2356, 2
    %v2358 = vmax.f32 %v2356, %v2357
    %v2359 = vrot.slane %v2358, 1
    %v2360 = vmax.f32 %v2358, %v2359
    %v2361 = vsel %vm843, %v2086, -inf
    %v2362 = vrot.slane %v2361, 4
    %v2363 = vmax.f32 %v2361, %v2362
    %v2364 = vrot.slane %v2363, 2
    %v2365 = vmax.f32 %v2363, %v2364
    %v2366 = vrot.slane %v2365, 1
    %v2367 = vmax.f32 %v2365, %v2366
    %v2368 = vsel %vm843, %v2088, -inf
    %v2369 = vrot.slane %v2368, 4
    %v2370 = vmax.f32 %v2368, %v2369
    %v2371 = vrot.slane %v2370, 2
    %v2372 = vmax.f32 %v2370, %v2371
    %v2373 = vrot.slane %v2372, 1
    %v2374 = vmax.f32 %v2372, %v2373
    %v2375 = vsel %vm843, %v2089, -inf
    %v2376 = vrot.slane %v2375, 4
    %v2377 = vmax.f32 %v2375, %v2376
    %v2378 = vrot.slane %v2377, 2
    %v2379 = vmax.f32 %v2377, %v2378
    %v2380 = vrot.slane %v2379, 1
    %v2381 = vmax.f32 %v2379, %v2380
    %v2382 = vsel %vm843, %v2091, -inf
    %v2383 = vrot.slane %v2382, 4
    %v2384 = vmax.f32 %v2382, %v2383
    %v2385 = vrot.slane %v2384, 2
    %v2386 = vmax.f32 %v2384, %v2385
    %v2387 = vrot.slane %v2386, 1
    %v2388 = vmax.f32 %v2386, %v2387
    %v2389 = vsel %vm843, %v2092, -inf
    %v2390 = vrot.slane %v2389, 4
    %v2391 = vmax.f32 %v2389, %v2390
    %v2392 = vrot.slane %v2391, 2
    %v2393 = vmax.f32 %v2391, %v2392
    %v2394 = vrot.slane %v2393, 1
    %v2395 = vmax.f32 %v2393, %v2394
    %v2396 = vsel %vm843, %v2094, -inf
    %v2397 = vrot.slane %v2396, 4
    %v2398 = vmax.f32 %v2396, %v2397
    %v2399 = vrot.slane %v2398, 2
    %v2400 = vmax.f32 %v2398, %v2399
    %v2401 = vrot.slane %v2400, 1
    %v2402 = vmax.f32 %v2400, %v2401
    %v2403 = vsel %vm843, %v2095, -inf
    %v2404 = vrot.slane %v2403, 4
    %v2405 = vmax.f32 %v2403, %v2404
    %v2406 = vrot.slane %v2405, 2
    %v2407 = vmax.f32 %v2405, %v2406
    %v2408 = vrot.slane %v2407, 1
    %v2409 = vmax.f32 %v2407, %v2408
    %v2410 = vsel %vm843, %v2097, -inf
    %v2411 = vrot.slane %v2410, 4
    %v2412 = vmax.f32 %v2410, %v2411
    %v2413 = vrot.slane %v2412, 2
    %v2414 = vmax.f32 %v2412, %v2413
    %v2415 = vrot.slane %v2414, 1
    %v2416 = vmax.f32 %v2414, %v2415
    %v2417 = vsel %vm843, %v2098, -inf
    %v2418 = vrot.slane %v2417, 4
    %v2419 = vmax.f32 %v2417, %v2418
    %v2420 = vrot.slane %v2419, 2
    %v2421 = vmax.f32 %v2419, %v2420
    %v2422 = vrot.slane %v2421, 1
    %v2423 = vmax.f32 %v2421, %v2422
    %v2424 = vsel %vm843, %v2100, -inf
    %v2425 = vrot.slane %v2424, 4
    %v2426 = vmax.f32 %v2424, %v2425
    %v2427 = vrot.slane %v2426, 2
    %v2428 = vmax.f32 %v2426, %v2427
    %v2429 = vrot.slane %v2428, 1
    %v2430 = vmax.f32 %v2428, %v2429
    %v2431 = vsel %vm843, %v2101, -inf
    %v2432 = vrot.slane %v2431, 4
    %v2433 = vmax.f32 %v2431, %v2432
    %v2434 = vrot.slane %v2433, 2
    %v2435 = vmax.f32 %v2433, %v2434
    %v2436 = vrot.slane %v2435, 1
    %v2437 = vmax.f32 %v2435, %v2436
    %v2438 = vsel %vm843, %v2103, -inf
    %v2439 = vrot.slane %v2438, 4
    %v2440 = vmax.f32 %v2438, %v2439
    %v2441 = vrot.slane %v2440, 2
    %v2442 = vmax.f32 %v2440, %v2441
    %v2443 = vrot.slane %v2442, 1
    %v2444 = vmax.f32 %v2442, %v2443
    %v2445 = vsel %vm843, %v2104, -inf
    %v2446 = vrot.slane %v2445, 4
    %v2447 = vmax.f32 %v2445, %v2446
    %v2448 = vrot.slane %v2447, 2
    %v2449 = vmax.f32 %v2447, %v2448
    %v2450 = vrot.slane %v2449, 1
    %v2451 = vmax.f32 %v2449, %v2450
    %v2452 = vsel %vm843, %v2106, -inf
    %v2453 = vrot.slane %v2452, 4
    %v2454 = vmax.f32 %v2452, %v2453
    %v2455 = vrot.slane %v2454, 2
    %v2456 = vmax.f32 %v2454, %v2455
    %v2457 = vrot.slane %v2456, 1
    %v2458 = vmax.f32 %v2456, %v2457
    %v2459 = vsel %vm843, %v2107, -inf
    %v2460 = vrot.slane %v2459, 4
    %v2461 = vmax.f32 %v2459, %v2460
    %v2462 = vrot.slane %v2461, 2
    %v2463 = vmax.f32 %v2461, %v2462
    %v2464 = vrot.slane %v2463, 1
    %v2465 = vmax.f32 %v2463, %v2464
    %v2466 = vsel %vm843, %v2109, -inf
    %v2467 = vrot.slane %v2466, 4
    %v2468 = vmax.f32 %v2466, %v2467
    %v2469 = vrot.slane %v2468, 2
    %v2470 = vmax.f32 %v2468, %v2469
    %v2471 = vrot.slane %v2470, 1
    %v2472 = vmax.f32 %v2470, %v2471
    %v2473 = vsel %vm843, %v2110, -inf
    %v2474 = vrot.slane %v2473, 4
    %v2475 = vmax.f32 %v2473, %v2474
    %v2476 = vrot.slane %v2475, 2
    %v2477 = vmax.f32 %v2475, %v2476
    %v2478 = vrot.slane %v2477, 1
    %v2479 = vmax.f32 %v2477, %v2478
    %v2480 = vsel %vm843, %v2112, -inf
    %v2481 = vrot.slane %v2480, 4
    %v2482 = vmax.f32 %v2480, %v2481
    %v2483 = vrot.slane %v2482, 2
    %v2484 = vmax.f32 %v2482, %v2483
    %v2485 = vrot.slane %v2484, 1
    %v2486 = vmax.f32 %v2484, %v2485
    %v2487 = vsel %vm843, %v2113, -inf
    %v2488 = vrot.slane %v2487, 4
    %v2489 = vmax.f32 %v2487, %v2488
    %v2490 = vrot.slane %v2489, 2
    %v2491 = vmax.f32 %v2489, %v2490
    %v2492 = vrot.slane %v2491, 1
    %v2493 = vmax.f32 %v2491, %v2492
    %v2494 = vsel %vm843, %v2115, -inf
    %v2495 = vrot.slane %v2494, 4
    %v2496 = vmax.f32 %v2494, %v2495
    %v2497 = vrot.slane %v2496, 2
    %v2498 = vmax.f32 %v2496, %v2497
    %v2499 = vrot.slane %v2498, 1
    %v2500 = vmax.f32 %v2498, %v2499
    %v2501 = vsel %vm843, %v2116, -inf
    %v2502 = vrot.slane %v2501, 4
    %v2503 = vmax.f32 %v2501, %v2502
    %v2504 = vrot.slane %v2503, 2
    %v2505 = vmax.f32 %v2503, %v2504
    %v2506 = vrot.slane %v2505, 1
    %v2507 = vmax.f32 %v2505, %v2506
    %v2508 = vsel %vm843, %v2118, -inf
    %v2509 = vrot.slane %v2508, 4
    %v2510 = vmax.f32 %v2508, %v2509
    %v2511 = vrot.slane %v2510, 2
    %v2512 = vmax.f32 %v2510, %v2511
    %v2513 = vrot.slane %v2512, 1
    %v2514 = vmax.f32 %v2512, %v2513
    %v2515 = vsel %vm843, %v2119, -inf
    %v2516 = vrot.slane %v2515, 4
    %v2517 = vmax.f32 %v2515, %v2516
    %v2518 = vrot.slane %v2517, 2
    %v2519 = vmax.f32 %v2517, %v2518
    %v2520 = vrot.slane %v2519, 1
    %v2521 = vmax.f32 %v2519, %v2520
    %v2522 = vsel %vm843, %v2121, -inf
    %v2523 = vrot.slane %v2522, 4
    %v2524 = vmax.f32 %v2522, %v2523
    %v2525 = vrot.slane %v2524, 2
    %v2526 = vmax.f32 %v2524, %v2525
    %v2527 = vrot.slane %v2526, 1
    %v2528 = vmax.f32 %v2526, %v2527
    %v2529 = vsel %vm843, %v2122, -inf
    %v2530 = vrot.slane %v2529, 4
    %v2531 = vmax.f32 %v2529, %v2530
    %v2532 = vrot.slane %v2531, 2
    %v2533 = vmax.f32 %v2531, %v2532
    %v2534 = vrot.slane %v2533, 1
    %v2535 = vmax.f32 %v2533, %v2534
    %v2536 = vsel %vm843, %v2124, -inf
    %v2537 = vrot.slane %v2536, 4
    %v2538 = vmax.f32 %v2536, %v2537
    %v2539 = vrot.slane %v2538, 2
    %v2540 = vmax.f32 %v2538, %v2539
    %v2541 = vrot.slane %v2540, 1
    %v2542 = vmax.f32 %v2540, %v2541
    %v2543 = vsel %vm843, %v2125, -inf
    %v2544 = vrot.slane %v2543, 4
    %v2545 = vmax.f32 %v2543, %v2544
    %v2546 = vrot.slane %v2545, 2
    %v2547 = vmax.f32 %v2545, %v2546
    %v2548 = vrot.slane %v2547, 1
    %v2549 = vmax.f32 %v2547, %v2548
    %v2550 = vsel %vm843, %v2127, -inf
    %v2551 = vrot.slane %v2550, 4
    %v2552 = vmax.f32 %v2550, %v2551
    %v2553 = vrot.slane %v2552, 2
    %v2554 = vmax.f32 %v2552, %v2553
    %v2555 = vrot.slane %v2554, 1
    %v2556 = vmax.f32 %v2554, %v2555
    %v2557 = vsel %vm843, %v2128, -inf
    %v2558 = vrot.slane %v2557, 4
    %v2559 = vmax.f32 %v2557, %v2558
    %v2560 = vrot.slane %v2559, 2
    %v2561 = vmax.f32 %v2559, %v2560
    %v2562 = vrot.slane %v2561, 1
    %v2563 = vmax.f32 %v2561, %v2562
    %v2564 = vsel %vm843, %v2130, -inf
    %v2565 = vrot.slane %v2564, 4
    %v2566 = vmax.f32 %v2564, %v2565
    %v2567 = vrot.slane %v2566, 2
    %v2568 = vmax.f32 %v2566, %v2567
    %v2569 = vrot.slane %v2568, 1
    %v2570 = vmax.f32 %v2568, %v2569
    %v2571 = vsel %vm843, %v2131, -inf
    %v2572 = vrot.slane %v2571, 4
    %v2573 = vmax.f32 %v2571, %v2572
    %v2574 = vrot.slane %v2573, 2
    %v2575 = vmax.f32 %v2573, %v2574
    %v2576 = vrot.slane %v2575, 1
    %v2577 = vmax.f32 %v2575, %v2576
    %v2578 = vsel %vm843, %v2133, -inf
    %v2579 = vrot.slane %v2578, 4
    %v2580 = vmax.f32 %v2578, %v2579
    %v2581 = vrot.slane %v2580, 2
    %v2582 = vmax.f32 %v2580, %v2581
    %v2583 = vrot.slane %v2582, 1
    %v2584 = vmax.f32 %v2582, %v2583
    %v2585 = vsel %vm843, %v2134, -inf
    %v2586 = vrot.slane %v2585, 4
    %v2587 = vmax.f32 %v2585, %v2586
    %v2588 = vrot.slane %v2587, 2
    %v2589 = vmax.f32 %v2587, %v2588
    %v2590 = vrot.slane %v2589, 1
    %v2591 = vmax.f32 %v2589, %v2590
    %v2592 = vsel %vm843, %v2136, -inf
    %v2593 = vrot.slane %v2592, 4
    %v2594 = vmax.f32 %v2592, %v2593
    %v2595 = vrot.slane %v2594, 2
    %v2596 = vmax.f32 %v2594, %v2595
    %v2597 = vrot.slane %v2596, 1
    %v2598 = vmax.f32 %v2596, %v2597
    %v2599 = vsel %vm843, %v2137, -inf
    %v2600 = vrot.slane %v2599, 4
    %v2601 = vmax.f32 %v2599, %v2600
    %v2602 = vrot.slane %v2601, 2
    %v2603 = vmax.f32 %v2601, %v2602
    %v2604 = vrot.slane %v2603, 1
    %v2605 = vmax.f32 %v2603, %v2604
    %v2606 = vsel %vm843, %v2139, -inf
    %v2607 = vrot.slane %v2606, 4
    %v2608 = vmax.f32 %v2606, %v2607
    %v2609 = vrot.slane %v2608, 2
    %v2610 = vmax.f32 %v2608, %v2609
    %v2611 = vrot.slane %v2610, 1
    %v2612 = vmax.f32 %v2610, %v2611
    %v2613 = vsel %vm843, %v2140, -inf
    %v2614 = vrot.slane %v2613, 4
    %v2615 = vmax.f32 %v2613, %v2614
    %v2616 = vrot.slane %v2615, 2
    %v2617 = vmax.f32 %v2615, %v2616
    %v2618 = vrot.slane %v2617, 1
    %v2619 = vmax.f32 %v2617, %v2618
    %v2620 = vsel %vm843, %v2142, -inf
    %v2621 = vrot.slane %v2620, 4
    %v2622 = vmax.f32 %v2620, %v2621
    %v2623 = vrot.slane %v2622, 2
    %v2624 = vmax.f32 %v2622, %v2623
    %v2625 = vrot.slane %v2624, 1
    %v2626 = vmax.f32 %v2624, %v2625
    %v2627 = vsel %vm843, %v2143, -inf
    %v2628 = vrot.slane %v2627, 4
    %v2629 = vmax.f32 %v2627, %v2628
    %v2630 = vrot.slane %v2629, 2
    %v2631 = vmax.f32 %v2629, %v2630
    %v2632 = vrot.slane %v2631, 1
    %v2633 = vmax.f32 %v2631, %v2632
    %v2634 = vsel %vm843, %v2145, -inf
    %v2635 = vrot.slane %v2634, 4
    %v2636 = vmax.f32 %v2634, %v2635
    %v2637 = vrot.slane %v2636, 2
    %v2638 = vmax.f32 %v2636, %v2637
    %v2639 = vrot.slane %v2638, 1
    %v2640 = vmax.f32 %v2638, %v2639
    %v2641 = vsel %vm843, %v2146, -inf
    %v2642 = vrot.slane %v2641, 4
    %v2643 = vmax.f32 %v2641, %v2642
    %v2644 = vrot.slane %v2643, 2
    %v2645 = vmax.f32 %v2643, %v2644
    %v2646 = vrot.slane %v2645, 1
    %v2647 = vmax.f32 %v2645, %v2646
    %v2648 = vsel %vm843, %v2148, -inf
    %v2649 = vrot.slane %v2648, 4
    %v2650 = vmax.f32 %v2648, %v2649
    %v2651 = vrot.slane %v2650, 2
    %v2652 = vmax.f32 %v2650, %v2651
    %v2653 = vrot.slane %v2652, 1
    %v2654 = vmax.f32 %v2652, %v2653
    %v2655 = vsel %vm843, %v2149, -inf
    %v2656 = vrot.slane %v2655, 4
    %v2657 = vmax.f32 %v2655, %v2656
    %v2658 = vrot.slane %v2657, 2
    %v2659 = vmax.f32 %v2657, %v2658
    %v2660 = vrot.slane %v2659, 1
    %v2661 = vmax.f32 %v2659, %v2660
    %v2662 = vpack.c.bf16 %v2227, %v2220
    %v2663 = vpack.c.bf16 %v2241, %v2234
    %v2664 = vpack.c.bf16 %v2255, %v2248
    %v2665 = vpack.c.bf16 %v2269, %v2262
    %v2666 = vpack.c.bf16 %v2283, %v2276
    %v2667 = vpack.c.bf16 %v2297, %v2290
    %v2668 = vpack.c.bf16 %v2311, %v2304
    %v2669 = vpack.c.bf16 %v2325, %v2318
    %v2670 = vpack.c.bf16 %v2339, %v2332
    %v2671 = vpack.c.bf16 %v2353, %v2346
    %v2672 = vpack.c.bf16 %v2367, %v2360
    %v2673 = vpack.c.bf16 %v2381, %v2374
    %v2674 = vpack.c.bf16 %v2395, %v2388
    %v2675 = vpack.c.bf16 %v2409, %v2402
    %v2676 = vpack.c.bf16 %v2423, %v2416
    %v2677 = vpack.c.bf16 %v2437, %v2430
    %v2678 = vpack.c.bf16 %v2451, %v2444
    %v2679 = vpack.c.bf16 %v2465, %v2458
    %v2680 = vpack.c.bf16 %v2479, %v2472
    %v2681 = vpack.c.bf16 %v2493, %v2486
    %v2682 = vpack.c.bf16 %v2507, %v2500
    %v2683 = vpack.c.bf16 %v2521, %v2514
    %v2684 = vpack.c.bf16 %v2535, %v2528
    %v2685 = vpack.c.bf16 %v2549, %v2542
    %v2686 = vpack.c.bf16 %v2563, %v2556
    %v2687 = vpack.c.bf16 %v2577, %v2570
    %v2688 = vpack.c.bf16 %v2591, %v2584
    %v2689 = vpack.c.bf16 %v2605, %v2598
    %v2690 = vpack.c.bf16 %v2619, %v2612
    %v2691 = vpack.c.bf16 %v2633, %v2626
    %v2692 = vpack.c.bf16 %v2647, %v2640
    %v2693 = vpack.c.bf16 %v2661, %v2654
    %v2726 = vunpack.c.l.b16 %v2662
    %v2727 = vunpack.c.h.b16 %v2662
    %v2728 = vunpack.c.l.b16 %v2663
    %v2729 = vunpack.c.h.b16 %v2663
    %v2730 = vunpack.c.l.b16 %v2664
    %v2731 = vunpack.c.h.b16 %v2664
    %v2732 = vunpack.c.l.b16 %v2665
    %v2733 = vunpack.c.h.b16 %v2665
    %v2734 = vunpack.c.l.b16 %v2666
    %v2735 = vunpack.c.h.b16 %v2666
    %v2736 = vunpack.c.l.b16 %v2667
    %v2737 = vunpack.c.h.b16 %v2667
    %v2738 = vunpack.c.l.b16 %v2668
    %v2739 = vunpack.c.h.b16 %v2668
    %v2740 = vunpack.c.l.b16 %v2669
    %v2741 = vunpack.c.h.b16 %v2669
    %v2742 = vunpack.c.l.b16 %v2670
    %v2743 = vunpack.c.h.b16 %v2670
    %v2744 = vunpack.c.l.b16 %v2671
    %v2745 = vunpack.c.h.b16 %v2671
    %v2746 = vunpack.c.l.b16 %v2672
    %v2747 = vunpack.c.h.b16 %v2672
    %v2748 = vunpack.c.l.b16 %v2673
    %v2749 = vunpack.c.h.b16 %v2673
    %v2750 = vunpack.c.l.b16 %v2674
    %v2751 = vunpack.c.h.b16 %v2674
    %v2752 = vunpack.c.l.b16 %v2675
    %v2753 = vunpack.c.h.b16 %v2675
    %v2754 = vunpack.c.l.b16 %v2676
    %v2755 = vunpack.c.h.b16 %v2676
    %v2756 = vunpack.c.l.b16 %v2677
    %v2757 = vunpack.c.h.b16 %v2677
    %v2758 = vunpack.c.l.b16 %v2678
    %v2759 = vunpack.c.h.b16 %v2678
    %v2760 = vunpack.c.l.b16 %v2679
    %v2761 = vunpack.c.h.b16 %v2679
    %v2762 = vunpack.c.l.b16 %v2680
    %v2763 = vunpack.c.h.b16 %v2680
    %v2764 = vunpack.c.l.b16 %v2681
    %v2765 = vunpack.c.h.b16 %v2681
    %v2766 = vunpack.c.l.b16 %v2682
    %v2767 = vunpack.c.h.b16 %v2682
    %v2768 = vunpack.c.l.b16 %v2683
    %v2769 = vunpack.c.h.b16 %v2683
    %v2770 = vunpack.c.l.b16 %v2684
    %v2771 = vunpack.c.h.b16 %v2684
    %v2772 = vunpack.c.l.b16 %v2685
    %v2773 = vunpack.c.h.b16 %v2685
    %v2774 = vunpack.c.l.b16 %v2686
    %v2775 = vunpack.c.h.b16 %v2686
    %v2776 = vunpack.c.l.b16 %v2687
    %v2777 = vunpack.c.h.b16 %v2687
    %v2778 = vunpack.c.l.b16 %v2688
    %v2779 = vunpack.c.h.b16 %v2688
    %v2780 = vunpack.c.l.b16 %v2689
    %v2781 = vunpack.c.h.b16 %v2689
    %v2782 = vunpack.c.l.b16 %v2690
    %v2783 = vunpack.c.h.b16 %v2690
    %v2784 = vunpack.c.l.b16 %v2691
    %v2785 = vunpack.c.h.b16 %v2691
    %v2786 = vunpack.c.l.b16 %v2692
    %v2787 = vunpack.c.h.b16 %v2692
    %v2788 = vunpack.c.l.b16 %v2693
    %v2789 = vunpack.c.h.b16 %v2693
    %v2790 = vsel %vm1372, %v2728, %v2726
    %v2791 = vsel %vm1374, %v2730, %v2790
    %v2792 = vsel %vm1376, %v2732, %v2791
    %v2793 = vsel %vm1372, %v2729, %v2727
    %v2794 = vsel %vm1374, %v2731, %v2793
    %v2795 = vsel %vm1376, %v2733, %v2794
    %v2796 = vsel %vm1372, %v2736, %v2734
    %v2797 = vsel %vm1374, %v2738, %v2796
    %v2798 = vsel %vm1376, %v2740, %v2797
    %v2799 = vsel %vm1372, %v2737, %v2735
    %v2800 = vsel %vm1374, %v2739, %v2799
    %v2801 = vsel %vm1376, %v2741, %v2800
    %v2802 = vsel %vm1372, %v2744, %v2742
    %v2803 = vsel %vm1374, %v2746, %v2802
    %v2804 = vsel %vm1376, %v2748, %v2803
    %v2805 = vsel %vm1372, %v2745, %v2743
    %v2806 = vsel %vm1374, %v2747, %v2805
    %v2807 = vsel %vm1376, %v2749, %v2806
    %v2808 = vsel %vm1372, %v2752, %v2750
    %v2809 = vsel %vm1374, %v2754, %v2808
    %v2810 = vsel %vm1376, %v2756, %v2809
    %v2811 = vsel %vm1372, %v2753, %v2751
    %v2812 = vsel %vm1374, %v2755, %v2811
    %v2813 = vsel %vm1376, %v2757, %v2812
    %v2814 = vsel %vm1372, %v2760, %v2758
    %v2815 = vsel %vm1374, %v2762, %v2814
    %v2816 = vsel %vm1376, %v2764, %v2815
    %v2817 = vsel %vm1372, %v2761, %v2759
    %v2818 = vsel %vm1374, %v2763, %v2817
    %v2819 = vsel %vm1376, %v2765, %v2818
    %v2820 = vsel %vm1372, %v2768, %v2766
    %v2821 = vsel %vm1374, %v2770, %v2820
    %v2822 = vsel %vm1376, %v2772, %v2821
    %v2823 = vsel %vm1372, %v2769, %v2767
    %v2824 = vsel %vm1374, %v2771, %v2823
    %v2825 = vsel %vm1376, %v2773, %v2824
    %v2826 = vsel %vm1372, %v2776, %v2774
    %v2827 = vsel %vm1374, %v2778, %v2826
    %v2828 = vsel %vm1376, %v2780, %v2827
    %v2829 = vsel %vm1372, %v2777, %v2775
    %v2830 = vsel %vm1374, %v2779, %v2829
    %v2831 = vsel %vm1376, %v2781, %v2830
    %v2832 = vsel %vm1372, %v2784, %v2782
    %v2833 = vsel %vm1374, %v2786, %v2832
    %v2834 = vsel %vm1376, %v2788, %v2833
    %v2835 = vsel %vm1372, %v2785, %v2783
    %v2836 = vsel %vm1374, %v2787, %v2835
    %v2837 = vsel %vm1376, %v2789, %v2836
    %v2838 = vpack.c.b16 %v2795, %v2792
    %v2839 = vpack.c.b16 %v2801, %v2798
    %v2840 = vpack.c.b16 %v2807, %v2804
    %v2841 = vpack.c.b16 %v2813, %v2810
    %v2842 = vpack.c.b16 %v2819, %v2816
    %v2843 = vpack.c.b16 %v2825, %v2822
    %v2844 = vpack.c.b16 %v2831, %v2828
    %v2845 = vpack.c.b16 %v2837, %v2834
    %v2854 = vrot.slane %v2842, 4
    %vm2855 = vcmask 1047556
    %v2856 = vsel %vm2855, %v2854, %v2838
    %v2857 = vrot.slane %v2838, 4
    %v2858 = vsel %vm2855, %v2842, %v2857
    %v2860 = vunpack.c.l.s4 1983009808
    %v2861 = vunpack.c.0.s8 %v2860
    %v2862 = vperm.slane %v2856, %v2861
    %v2864 = vunpack.c.l.s4 1983009808
    %v2865 = vunpack.c.0.s8 %v2864
    %v2866 = vperm.slane %v2858, %v2865
    %v2867 = vrot.slane %v2844, 4
    %v2868 = vsel %vm2855, %v2867, %v2840
    %v2869 = vrot.slane %v2840, 4
    %v2870 = vsel %vm2855, %v2844, %v2869
    %v2872 = vunpack.c.l.s4 1983009808
    %v2873 = vunpack.c.0.s8 %v2872
    %v2874 = vperm.slane %v2868, %v2873
    %v2876 = vunpack.c.l.s4 1983009808
    %v2877 = vunpack.c.0.s8 %v2876
    %v2878 = vperm.slane %v2870, %v2877
    %v2879 = vrot.slane %v2874, 4
    %v2880 = vsel %vm2855, %v2879, %v2862
    %v2882 = vunpack.c.l.s4 1934713408
    %v2883 = vunpack.c.0.s8 %v2882
    %v2884 = vperm.slane %v2880, %v2883
    %v2885 = vrot.slane %v2878, 4
    %v2886 = vsel %vm2855, %v2885, %v2866
    %v2888 = vunpack.c.l.s4 1934713408
    %v2889 = vunpack.c.0.s8 %v2888
    %v2890 = vperm.slane %v2886, %v2889
    %v2891 = vrot.slane %v2890, 4
    %v2892 = vsel %vm2855, %v2891, %v2884
    %v2893 = vrot.slane %v2884, 4
    %v2894 = vsel %vm2855, %v2890, %v2893
    %v2895 = vrot.slane %v2843, 4
    %v2896 = vsel %vm2855, %v2895, %v2839
    %v2897 = vrot.slane %v2839, 4
    %v2898 = vsel %vm2855, %v2843, %v2897
    %v2900 = vunpack.c.l.s4 1983009808
    %v2901 = vunpack.c.0.s8 %v2900
    %v2902 = vperm.slane %v2896, %v2901
    %v2904 = vunpack.c.l.s4 1983009808
    %v2905 = vunpack.c.0.s8 %v2904
    %v2906 = vperm.slane %v2898, %v2905
    %v2907 = vrot.slane %v2845, 4
    %v2908 = vsel %vm2855, %v2907, %v2841
    %v2909 = vrot.slane %v2841, 4
    %v2910 = vsel %vm2855, %v2845, %v2909
    %v2912 = vunpack.c.l.s4 1983009808
    %v2913 = vunpack.c.0.s8 %v2912
    %v2914 = vperm.slane %v2908, %v2913
    %v2916 = vunpack.c.l.s4 1983009808
    %v2917 = vunpack.c.0.s8 %v2916
    %v2918 = vperm.slane %v2910, %v2917
    %v2919 = vrot.slane %v2914, 4
    %v2920 = vsel %vm2855, %v2919, %v2902
    %v2922 = vunpack.c.l.s4 1934713408
    %v2923 = vunpack.c.0.s8 %v2922
    %v2924 = vperm.slane %v2920, %v2923
    %v2925 = vrot.slane %v2918, 4
    %v2926 = vsel %vm2855, %v2925, %v2906
    %v2928 = vunpack.c.l.s4 1934713408
    %v2929 = vunpack.c.0.s8 %v2928
    %v2930 = vperm.slane %v2926, %v2929
    %v2931 = vrot.slane %v2930, 4
    %v2932 = vsel %vm2855, %v2931, %v2924
    %v2933 = vrot.slane %v2924, 4
    %v2934 = vsel %vm2855, %v2930, %v2933
    %v2937 = vpack.i.b16 %v2932, %v2892
    %v2938 = vshrl.u32 %v2892, 16
    %v2939 = vshrl.u32 %v2932, 16
    %v2940 = vpack.i.b16 %v2939, %v2938
    %v2943 = vpack.i.b16 %v2934, %v2894
    %v2944 = vshrl.u32 %v2894, 16
    %v2945 = vshrl.u32 %v2934, 16
    %v2946 = vpack.i.b16 %v2945, %v2944
    %v2947 = vunpack.c.l.b16 %v2937
    %v2948 = vunpack.c.h.b16 %v2937
    %v2949 = vpack.c.b16 %v2947, %v2947
    %v2950 = vpack.c.b16 %v2948, %v2948
    %v2953 = vunpack.c.l.b16 %v2940
    %v2954 = vunpack.c.h.b16 %v2940
    %v2955 = vpack.c.b16 %v2953, %v2953
    %v2956 = vpack.c.b16 %v2954, %v2954
    %v2959 = vunpack.c.l.b16 %v2943
    %v2960 = vunpack.c.h.b16 %v2943
    %v2961 = vpack.c.b16 %v2959, %v2959
    %v2962 = vpack.c.b16 %v2960, %v2960
    %v2965 = vunpack.c.l.b16 %v2946
    %v2966 = vunpack.c.h.b16 %v2946
    %v2967 = vpack.c.b16 %v2965, %v2965
    %v2968 = vpack.c.b16 %v2966, %v2966
    %v2971 = vld [vmem:[#allocation27] sm:$0xff]
    %v2972 = vpack.c.bf16 %v2971, %v2971
    %v2973 = vld [vmem:[#allocation11] sm:$0xff]
    %v2974 = vld [vmem:[#allocation11 + $0x10] sm:$0xff]
    %v2975 = vld [vmem:[#allocation11 + $0x18] sm:$0xff]
    %v2976 = vld [vmem:[#allocation11 + $0x20] sm:$0xff]
    %v2977 = vld [vmem:[#allocation11 + $0x30] sm:$0xff]
    %v2978 = vld [vmem:[#allocation11 + $0x38] sm:$0xff]
    %v2979 = vld [vmem:[#allocation12] sm:$0xff]
    %v2980 = vld [vmem:[#allocation12 + $0x8] sm:$0xff]
    %v2983 = vperm.slane %v2979, 0
    %v2984 = vperm.slane %v2979, 1
    %v2985 = vperm.slane %v2979, 4
    %v2986 = vperm.slane %v2979, 5
    %v2987 = vperm.slane %v2979, 6
    %v2988 = vperm.slane %v2979, 7
    %v2989 = vperm.slane %v2980, 0
    %v2990 = vperm.slane %v2980, 1
    %v2991 = vperm.slane %v2980, 4
    %v2992 = vperm.slane %v2980, 5
    %v2993 = vperm.slane %v2980, 6
    %v2994 = vperm.slane %v2980, 7
    %v3013 = vunpack.c.l.b16 %v2973
    %v3014 = vunpack.c.h.b16 %v2973
    %v3015 = vunpack.c.l.b16 %v2974
    %v3016 = vunpack.c.h.b16 %v2974
    %v3017 = vunpack.c.l.b16 %v2975
    %v3018 = vunpack.c.h.b16 %v2975
    %v3019 = vunpack.c.l.b16 %v2976
    %v3020 = vunpack.c.h.b16 %v2976
    %v3021 = vunpack.c.l.b16 %v2977
    %v3022 = vunpack.c.h.b16 %v2977
    %v3023 = vunpack.c.l.b16 %v2978
    %v3024 = vunpack.c.h.b16 %v2978
    %v3025 = vpack.c.b16 %v3013, %v3013
    %v3026 = vpack.c.b16 %v3014, %v3014
    %v3027 = vpack.c.b16 %v3015, %v3015
    %v3028 = vpack.c.b16 %v3016, %v3016
    %v3029 = vpack.c.b16 %v3017, %v3017
    %v3030 = vpack.c.b16 %v3018, %v3018
    %v3031 = vpack.c.b16 %v3019, %v3019
    %v3032 = vpack.c.b16 %v3020, %v3020
    %v3033 = vpack.c.b16 %v3021, %v3021
    %v3034 = vpack.c.b16 %v3022, %v3022
    %v3035 = vpack.c.b16 %v3023, %v3023
    %v3036 = vpack.c.b16 %v3024, %v3024
    %vm3037 = vcmask 64512
    %v3039 = vsel %vm3037, %v2972, 0
    %vm3041 = vcmask 1043456
    %v3043 = vsel %vm3041, %v3025, 0
    %v3046 = vsel %vm3041, %v3026, 0
    %v3049 = vsel %vm3041, %v3027, 0
    %v3052 = vsel %vm3041, %v3028, 0
    %v3055 = vsel %vm3041, %v3029, 0
    %v3058 = vsel %vm3041, %v3030, 0
    %v3061 = vsel %vm3041, %v3031, 0
    %v3064 = vsel %vm3041, %v3032, 0
    %v3067 = vsel %vm3041, %v3033, 0
    %v3070 = vsel %vm3041, %v3034, 0
    %v3073 = vsel %vm3041, %v3035, 0
    %v3076 = vsel %vm3041, %v3036, 0
    %3078 = vmatpush.bf16.msra.mxu0 0
    %3079 = vmatpush.bf16.msra.mxu0 0
    %3080 = vmatpush.bf16.msra.mxu0 0
    %3081 = vmatpush.bf16.msra.mxu0 0
    %3082 = vmatpush.bf16.msra.mxu0 0
    %3083 = vmatpush.bf16.msra.mxu0 0
    %3084 = vmatpush.bf16.msra.mxu0 0
    %3085 = vmatpush.bf16.msra.mxu0 %v3043
    %3086 = vmatmul.bf16.gmra.mxu0 %v3039
    %v3087 = vpop.f32.mrf.mxu0
    %v3088 = vadd.f32 %v2983, %v3087
    %v3089 = vpop.f32.mrf.mxu0
    %3090 = vdwg.mxu0
    %3091 = vmatpush.bf16.msra.mxu0 0
    %3092 = vmatpush.bf16.msra.mxu0 0
    %3093 = vmatpush.bf16.msra.mxu0 0
    %3094 = vmatpush.bf16.msra.mxu0 0
    %3095 = vmatpush.bf16.msra.mxu0 0
    %3096 = vmatpush.bf16.msra.mxu0 0
    %3097 = vmatpush.bf16.msra.mxu0 0
    %3098 = vmatpush.bf16.msra.mxu0 %v3046
    %3099 = vmatmul.bf16.gmra.mxu0 %v3039
    %v3100 = vpop.f32.mrf.mxu0
    %v3101 = vadd.f32 %v2984, %v3100
    %v3102 = vpop.f32.mrf.mxu0
    %3103 = vdwg.mxu0
    %3104 = vmatpush.bf16.msra.mxu0 0
    %3105 = vmatpush.bf16.msra.mxu0 0
    %3106 = vmatpush.bf16.msra.mxu0 0
    %3107 = vmatpush.bf16.msra.mxu0 0
    %3108 = vmatpush.bf16.msra.mxu0 0
    %3109 = vmatpush.bf16.msra.mxu0 0
    %3110 = vmatpush.bf16.msra.mxu0 0
    %3111 = vmatpush.bf16.msra.mxu0 %v3049
    %3112 = vmatmul.bf16.gmra.mxu0 %v3039
    %v3113 = vpop.f32.mrf.mxu0
    %v3114 = vadd.f32 %v2985, %v3113
    %v3115 = vpop.f32.mrf.mxu0
    %3116 = vdwg.mxu0
    %3117 = vmatpush.bf16.msra.mxu0 0
    %3118 = vmatpush.bf16.msra.mxu0 0
    %3119 = vmatpush.bf16.msra.mxu0 0
    %3120 = vmatpush.bf16.msra.mxu0 0
    %3121 = vmatpush.bf16.msra.mxu0 0
    %3122 = vmatpush.bf16.msra.mxu0 0
    %3123 = vmatpush.bf16.msra.mxu0 0
    %3124 = vmatpush.bf16.msra.mxu0 %v3052
    %3125 = vmatmul.bf16.gmra.mxu0 %v3039
    %v3126 = vpop.f32.mrf.mxu0
    %v3127 = vadd.f32 %v2986, %v3126
    %v3128 = vpop.f32.mrf.mxu0
    %3129 = vdwg.mxu0
    %3130 = vmatpush.bf16.msra.mxu0 0
    %3131 = vmatpush.bf16.msra.mxu0 0
    %3132 = vmatpush.bf16.msra.mxu0 0
    %3133 = vmatpush.bf16.msra.mxu0 0
    %3134 = vmatpush.bf16.msra.mxu0 0
    %3135 = vmatpush.bf16.msra.mxu0 0
    %3136 = vmatpush.bf16.msra.mxu0 0
    %3137 = vmatpush.bf16.msra.mxu0 %v3055
    %3138 = vmatmul.bf16.gmra.mxu0 %v3039
    %v3139 = vpop.f32.mrf.mxu0
    %v3140 = vadd.f32 %v2987, %v3139
    %v3141 = vpop.f32.mrf.mxu0
    %3142 = vdwg.mxu0
    %3143 = vmatpush.bf16.msra.mxu0 0
    %3144 = vmatpush.bf16.msra.mxu0 0
    %3145 = vmatpush.bf16.msra.mxu0 0
    %3146 = vmatpush.bf16.msra.mxu0 0
    %3147 = vmatpush.bf16.msra.mxu0 0
    %3148 = vmatpush.bf16.msra.mxu0 0
    %3149 = vmatpush.bf16.msra.mxu0 0
    %3150 = vmatpush.bf16.msra.mxu0 %v3058
    %3151 = vmatmul.bf16.gmra.mxu0 %v3039
    %v3152 = vpop.f32.mrf.mxu0
    %v3153 = vadd.f32 %v2988, %v3152
    %v3154 = vpop.f32.mrf.mxu0
    %3155 = vdwg.mxu0
    %3156 = vmatpush.bf16.msra.mxu0 0
    %3157 = vmatpush.bf16.msra.mxu0 0
    %3158 = vmatpush.bf16.msra.mxu0 0
    %3159 = vmatpush.bf16.msra.mxu0 0
    %3160 = vmatpush.bf16.msra.mxu0 0
    %3161 = vmatpush.bf16.msra.mxu0 0
    %3162 = vmatpush.bf16.msra.mxu0 0
    %3163 = vmatpush.bf16.msra.mxu0 %v3061
    %3164 = vmatmul.bf16.gmra.mxu0 %v3039
    %v3165 = vpop.f32.mrf.mxu0
    %v3166 = vadd.f32 %v2989, %v3165
    %v3167 = vpop.f32.mrf.mxu0
    %3168 = vdwg.mxu0
    %3169 = vmatpush.bf16.msra.mxu0 0
    %3170 = vmatpush.bf16.msra.mxu0 0
    %3171 = vmatpush.bf16.msra.mxu0 0
    %3172 = vmatpush.bf16.msra.mxu0 0
    %3173 = vmatpush.bf16.msra.mxu0 0
    %3174 = vmatpush.bf16.msra.mxu0 0
    %3175 = vmatpush.bf16.msra.mxu0 0
    %3176 = vmatpush.bf16.msra.mxu0 %v3064
    %3177 = vmatmul.bf16.gmra.mxu0 %v3039
    %v3178 = vpop.f32.mrf.mxu0
    %v3179 = vadd.f32 %v2990, %v3178
    %v3180 = vpop.f32.mrf.mxu0
    %3181 = vdwg.mxu0
    %3182 = vmatpush.bf16.msra.mxu0 0
    %3183 = vmatpush.bf16.msra.mxu0 0
    %3184 = vmatpush.bf16.msra.mxu0 0
    %3185 = vmatpush.bf16.msra.mxu0 0
    %3186 = vmatpush.bf16.msra.mxu0 0
    %3187 = vmatpush.bf16.msra.mxu0 0
    %3188 = vmatpush.bf16.msra.mxu0 0
    %3189 = vmatpush.bf16.msra.mxu0 %v3067
    %3190 = vmatmul.bf16.gmra.mxu0 %v3039
    %v3191 = vpop.f32.mrf.mxu0
    %v3192 = vadd.f32 %v2991, %v3191
    %v3193 = vpop.f32.mrf.mxu0
    %3194 = vdwg.mxu0
    %3195 = vmatpush.bf16.msra.mxu0 0
    %3196 = vmatpush.bf16.msra.mxu0 0
    %3197 = vmatpush.bf16.msra.mxu0 0
    %3198 = vmatpush.bf16.msra.mxu0 0
    %3199 = vmatpush.bf16.msra.mxu0 0
    %3200 = vmatpush.bf16.msra.mxu0 0
    %3201 = vmatpush.bf16.msra.mxu0 0
    %3202 = vmatpush.bf16.msra.mxu0 %v3070
    %3203 = vmatmul.bf16.gmra.mxu0 %v3039
    %v3204 = vpop.f32.mrf.mxu0
    %v3205 = vadd.f32 %v2992, %v3204
    %v3206 = vpop.f32.mrf.mxu0
    %3207 = vdwg.mxu0
    %3208 = vmatpush.bf16.msra.mxu0 0
    %3209 = vmatpush.bf16.msra.mxu0 0
    %3210 = vmatpush.bf16.msra.mxu0 0
    %3211 = vmatpush.bf16.msra.mxu0 0
    %3212 = vmatpush.bf16.msra.mxu0 0
    %3213 = vmatpush.bf16.msra.mxu0 0
    %3214 = vmatpush.bf16.msra.mxu0 0
    %3215 = vmatpush.bf16.msra.mxu0 %v3073
    %3216 = vmatmul.bf16.gmra.mxu0 %v3039
    %v3217 = vpop.f32.mrf.mxu0
    %v3218 = vadd.f32 %v2993, %v3217
    %v3219 = vpop.f32.mrf.mxu0
    %3220 = vdwg.mxu0
    %3221 = vmatpush.bf16.msra.mxu0 0
    %3222 = vmatpush.bf16.msra.mxu0 0
    %3223 = vmatpush.bf16.msra.mxu0 0
    %3224 = vmatpush.bf16.msra.mxu0 0
    %3225 = vmatpush.bf16.msra.mxu0 0
    %3226 = vmatpush.bf16.msra.mxu0 0
    %3227 = vmatpush.bf16.msra.mxu0 0
    %3228 = vmatpush.bf16.msra.mxu0 %v3076
    %3229 = vmatmul.bf16.gmra.mxu0 %v3039
    %v3230 = vpop.f32.mrf.mxu0
    %v3231 = vadd.f32 %v2994, %v3230
    %v3232 = vpop.f32.mrf.mxu0
    %3233 = vdwg.mxu0
    %v3234 = vxor.u32 %v3088, 2147483648
    %v3235 = vxor.u32 %v3101, 2147483648
    %v3236 = vmul.f32 %v3234, 1.442695
    %v3237 = vpow.pop %v3236
    %v3238 = vmul.f32 %v3235, 1.442695
    %v3239 = vpow.pop %v3238
    %v3240 = vadd.f32 %v3237, 1.0
    %v3241 = vadd.f32 %v3239, 1.0
    %v3242 = vrcp.pop %v3240
    %v3243 = vmul.f32 %v3240, %v3242
    %v3244 = vsub.f32 1.0, %v3243
    %v3245 = vmul.f32 %v3242, %v3244
    %v3246 = vadd.f32 %v3242, %v3245
    %vm3247 = vweird.f32 %v3240
    %vm3248 = vweird.f32 %v3242
    %vm3249 = vmor %vm3247, %vm3248
    %v3250 = vsel %vm3249, %v3242, %v3246
    %v3251 = vand.u32 2147483647, %v3240
    %vm3252 = vcmp.eq.f32.partialorder %v3251, 8.507059e+37
    %v3253 = vand.u32 %v3240, 2147483648
    %v3254 = vor.u32 1.1754944e-38, %v3253
    %v3255 = vsel %vm3252, %v3254, %v3250
    %v3256 = vmul.f32 1.0, %v3255
    %v3257 = vrcp.pop %v3241
    %v3258 = vmul.f32 %v3241, %v3257
    %v3259 = vsub.f32 1.0, %v3258
    %v3260 = vmul.f32 %v3257, %v3259
    %v3261 = vadd.f32 %v3257, %v3260
    %vm3262 = vweird.f32 %v3241
    %vm3263 = vweird.f32 %v3257
    %vm3264 = vmor %vm3262, %vm3263
    %v3265 = vsel %vm3264, %v3257, %v3261
    %v3266 = vand.u32 2147483647, %v3241
    %vm3267 = vcmp.eq.f32.partialorder %v3266, 8.507059e+37
    %v3268 = vand.u32 %v3241, 2147483648
    %v3269 = vor.u32 1.1754944e-38, %v3268
    %v3270 = vsel %vm3267, %v3269, %v3265
    %v3271 = vmul.f32 1.0, %v3270
    %v3272 = vtanh.pop %v3114
    %v3273 = vtanh.pop %v3127
    %v3274 = vxor.u32 %v3140, 2147483648
    %v3275 = vxor.u32 %v3153, 2147483648
    %v3276 = vmul.f32 %v3274, 1.442695
    %v3277 = vpow.pop %v3276
    %v3278 = vmul.f32 %v3275, 1.442695
    %v3279 = vpow.pop %v3278
    %v3280 = vadd.f32 %v3277, 1.0
    %v3281 = vadd.f32 %v3279, 1.0
    %v3282 = vrcp.pop %v3280
    %v3283 = vmul.f32 %v3280, %v3282
    %v3284 = vsub.f32 1.0, %v3283
    %v3285 = vmul.f32 %v3282, %v3284
    %v3286 = vadd.f32 %v3282, %v3285
    %vm3287 = vweird.f32 %v3280
    %vm3288 = vweird.f32 %v3282
    %vm3289 = vmor %vm3287, %vm3288
    %v3290 = vsel %vm3289, %v3282, %v3286
    %v3291 = vand.u32 2147483647, %v3280
    %vm3292 = vcmp.eq.f32.partialorder %v3291, 8.507059e+37
    %v3293 = vand.u32 %v3280, 2147483648
    %v3294 = vor.u32 1.1754944e-38, %v3293
    %v3295 = vsel %vm3292, %v3294, %v3290
    %v3296 = vmul.f32 1.0, %v3295
    %v3297 = vrcp.pop %v3281
    %v3298 = vmul.f32 %v3281, %v3297
    %v3299 = vsub.f32 1.0, %v3298
    %v3300 = vmul.f32 %v3297, %v3299
    %v3301 = vadd.f32 %v3297, %v3300
    %vm3302 = vweird.f32 %v3281
    %vm3303 = vweird.f32 %v3297
    %vm3304 = vmor %vm3302, %vm3303
    %v3305 = vsel %vm3304, %v3297, %v3301
    %v3306 = vand.u32 2147483647, %v3281
    %vm3307 = vcmp.eq.f32.partialorder %v3306, 8.507059e+37
    %v3308 = vand.u32 %v3281, 2147483648
    %v3309 = vor.u32 1.1754944e-38, %v3308
    %v3310 = vsel %vm3307, %v3309, %v3305
    %v3311 = vmul.f32 1.0, %v3310
    %v3312 = vmul.f32 %v3256, %v3272
    %v3313 = vmul.f32 %v3271, %v3273
    %v3314 = vtanh.pop %v3312
    %v3315 = vtanh.pop %v3313
    %v3316 = vmul.f32 %v3296, %v3314
    %v3317 = vmul.f32 %v3311, %v3315
    %v3318 = vxor.u32 %v3166, 2147483648
    %v3319 = vxor.u32 %v3179, 2147483648
    %v3320 = vmul.f32 %v3318, 1.442695
    %v3321 = vpow.pop %v3320
    %v3322 = vmul.f32 %v3319, 1.442695
    %v3323 = vpow.pop %v3322
    %v3324 = vadd.f32 %v3321, 1.0
    %v3325 = vadd.f32 %v3323, 1.0
    %v3326 = vrcp.pop %v3324
    %v3327 = vmul.f32 %v3324, %v3326
    %v3328 = vsub.f32 1.0, %v3327
    %v3329 = vmul.f32 %v3326, %v3328
    %v3330 = vadd.f32 %v3326, %v3329
    %vm3331 = vweird.f32 %v3324
    %vm3332 = vweird.f32 %v3326
    %vm3333 = vmor %vm3331, %vm3332
    %v3334 = vsel %vm3333, %v3326, %v3330
    %v3335 = vand.u32 2147483647, %v3324
    %vm3336 = vcmp.eq.f32.partialorder %v3335, 8.507059e+37
    %v3337 = vand.u32 %v3324, 2147483648
    %v3338 = vor.u32 1.1754944e-38, %v3337
    %v3339 = vsel %vm3336, %v3338, %v3334
    %v3340 = vmul.f32 1.0, %v3339
    %v3341 = vrcp.pop %v3325
    %v3342 = vmul.f32 %v3325, %v3341
    %v3343 = vsub.f32 1.0, %v3342
    %v3344 = vmul.f32 %v3341, %v3343
    %v3345 = vadd.f32 %v3341, %v3344
    %vm3346 = vweird.f32 %v3325
    %vm3347 = vweird.f32 %v3341
    %vm3348 = vmor %vm3346, %vm3347
    %v3349 = vsel %vm3348, %v3341, %v3345
    %v3350 = vand.u32 2147483647, %v3325
    %vm3351 = vcmp.eq.f32.partialorder %v3350, 8.507059e+37
    %v3352 = vand.u32 %v3325, 2147483648
    %v3353 = vor.u32 1.1754944e-38, %v3352
    %v3354 = vsel %vm3351, %v3353, %v3349
    %v3355 = vmul.f32 1.0, %v3354
    %v3356 = vtanh.pop %v3192
    %v3357 = vtanh.pop %v3205
    %v3358 = vxor.u32 %v3218, 2147483648
    %v3359 = vxor.u32 %v3231, 2147483648
    %v3360 = vmul.f32 %v3358, 1.442695
    %v3361 = vpow.pop %v3360
    %v3362 = vmul.f32 %v3359, 1.442695
    %v3363 = vpow.pop %v3362
    %v3364 = vadd.f32 %v3361, 1.0
    %v3365 = vadd.f32 %v3363, 1.0
    %v3366 = vrcp.pop %v3364
    %v3367 = vmul.f32 %v3364, %v3366
    %v3368 = vsub.f32 1.0, %v3367
    %v3369 = vmul.f32 %v3366, %v3368
    %v3370 = vadd.f32 %v3366, %v3369
    %vm3371 = vweird.f32 %v3364
    %vm3372 = vweird.f32 %v3366
    %vm3373 = vmor %vm3371, %vm3372
    %v3374 = vsel %vm3373, %v3366, %v3370
    %v3375 = vand.u32 2147483647, %v3364
    %vm3376 = vcmp.eq.f32.partialorder %v3375, 8.507059e+37
    %v3377 = vand.u32 %v3364, 2147483648
    %v3378 = vor.u32 1.1754944e-38, %v3377
    %v3379 = vsel %vm3376, %v3378, %v3374
    %v3380 = vmul.f32 1.0, %v3379
    %v3381 = vrcp.pop %v3365
    %v3382 = vmul.f32 %v3365, %v3381
    %v3383 = vsub.f32 1.0, %v3382
    %v3384 = vmul.f32 %v3381, %v3383
    %v3385 = vadd.f32 %v3381, %v3384
    %vm3386 = vweird.f32 %v3365
    %vm3387 = vweird.f32 %v3381
    %vm3388 = vmor %vm3386, %vm3387
    %v3389 = vsel %vm3388, %v3381, %v3385
    %v3390 = vand.u32 2147483647, %v3365
    %vm3391 = vcmp.eq.f32.partialorder %v3390, 8.507059e+37
    %v3392 = vand.u32 %v3365, 2147483648
    %v3393 = vor.u32 1.1754944e-38, %v3392
    %v3394 = vsel %vm3391, %v3393, %v3389
    %v3395 = vmul.f32 1.0, %v3394
    %v3396 = vmul.f32 %v3340, %v3356
    %v3397 = vmul.f32 %v3355, %v3357
    %v3398 = vtanh.pop %v3396
    %v3399 = vtanh.pop %v3397
    %v3400 = vmul.f32 %v3380, %v3398
    %v3401 = vmul.f32 %v3395, %v3399
    %v3402 = vpack.c.bf16 %v3316, %v3316
    %v3403 = vpack.c.bf16 %v3317, %v3317
    %v3404 = vpack.c.bf16 %v3400, %v3400
    %v3405 = vpack.c.bf16 %v3401, %v3401
    %v3406 = vld [vmem:[#allocation14] sm:$0xff]
    %v3407 = vld [vmem:[#allocation14 + $0x10] sm:$0xff]
    %v3408 = vld [vmem:[#allocation14 + $0x18] sm:$0xff]
    %v3409 = vld [vmem:[#allocation14 + $0x20] sm:$0xff]
    %v3410 = vld [vmem:[#allocation14 + $0x30] sm:$0xff]
    %v3411 = vld [vmem:[#allocation14 + $0x38] sm:$0xff]
    %v3412 = vld [vmem:[#allocation14 + $0x40] sm:$0xff]
    %v3413 = vld [vmem:[#allocation14 + $0x50] sm:$0xff]
    %v3414 = vld [vmem:[#allocation14 + $0x58] sm:$0xff]
    %v3415 = vld [vmem:[#allocation14 + $0x60] sm:$0xff]
    %v3416 = vld [vmem:[#allocation14 + $0x70] sm:$0xff]
    %v3417 = vld [vmem:[#allocation14 + $0x78] sm:$0xff]
    %v3418 = vld [vmem:[#allocation14 + $0x80] sm:$0xff]
    %v3419 = vld [vmem:[#allocation14 + $0x90] sm:$0xff]
    %v3420 = vld [vmem:[#allocation14 + $0x98] sm:$0xff]
    %v3421 = vld [vmem:[#allocation14 + $0xa0] sm:$0xff]
    %v3422 = vld [vmem:[#allocation14 + $0xb0] sm:$0xff]
    %v3423 = vld [vmem:[#allocation14 + $0xb8] sm:$0xff]
    %v3424 = vld [vmem:[#allocation14 + $0xc0] sm:$0xff]
    %v3425 = vld [vmem:[#allocation14 + $0xd0] sm:$0xff]
    %v3426 = vld [vmem:[#allocation14 + $0xd8] sm:$0xff]
    %v3427 = vld [vmem:[#allocation14 + $0xe0] sm:$0xff]
    %v3428 = vld [vmem:[#allocation14 + $0xf0] sm:$0xff]
    %v3429 = vld [vmem:[#allocation14 + $0xf8] sm:$0xff]
    %v3430 = vld [vmem:[#allocation14 + $0x100] sm:$0xff]
    %v3431 = vld [vmem:[#allocation14 + $0x110] sm:$0xff]
    %v3432 = vld [vmem:[#allocation14 + $0x118] sm:$0xff]
    %v3433 = vld [vmem:[#allocation14 + $0x120] sm:$0xff]
    %v3434 = vld [vmem:[#allocation14 + $0x130] sm:$0xff]
    %v3435 = vld [vmem:[#allocation14 + $0x138] sm:$0xff]
    %v3436 = vld [vmem:[#allocation14 + $0x140] sm:$0xff]
    %v3437 = vld [vmem:[#allocation14 + $0x150] sm:$0xff]
    %v3438 = vld [vmem:[#allocation14 + $0x158] sm:$0xff]
    %v3439 = vld [vmem:[#allocation14 + $0x160] sm:$0xff]
    %v3440 = vld [vmem:[#allocation14 + $0x170] sm:$0xff]
    %v3441 = vld [vmem:[#allocation14 + $0x178] sm:$0xff]
    %v3442 = vld [vmem:[#allocation14 + $0x180] sm:$0xff]
    %v3443 = vld [vmem:[#allocation14 + $0x190] sm:$0xff]
    %v3444 = vld [vmem:[#allocation14 + $0x198] sm:$0xff]
    %v3445 = vld [vmem:[#allocation14 + $0x1a0] sm:$0xff]
    %v3446 = vld [vmem:[#allocation14 + $0x1b0] sm:$0xff]
    %v3447 = vld [vmem:[#allocation14 + $0x1b8] sm:$0xff]
    %v3448 = vld [vmem:[#allocation14 + $0x1c0] sm:$0xff]
    %v3449 = vld [vmem:[#allocation14 + $0x1d0] sm:$0xff]
    %v3450 = vld [vmem:[#allocation14 + $0x1d8] sm:$0xff]
    %v3451 = vld [vmem:[#allocation14 + $0x1e0] sm:$0xff]
    %v3452 = vld [vmem:[#allocation14 + $0x1f0] sm:$0xff]
    %v3453 = vld [vmem:[#allocation14 + $0x1f8] sm:$0xff]
    %v3454 = vld [vmem:[#allocation14 + $0x200] sm:$0xff]
    %v3455 = vld [vmem:[#allocation14 + $0x210] sm:$0xff]
    %v3456 = vld [vmem:[#allocation14 + $0x218] sm:$0xff]
    %v3457 = vld [vmem:[#allocation14 + $0x220] sm:$0xff]
    %v3458 = vld [vmem:[#allocation14 + $0x230] sm:$0xff]
    %v3459 = vld [vmem:[#allocation14 + $0x238] sm:$0xff]
    %v3460 = vld [vmem:[#allocation14 + $0x240] sm:$0xff]
    %v3461 = vld [vmem:[#allocation14 + $0x250] sm:$0xff]
    %v3462 = vld [vmem:[#allocation14 + $0x258] sm:$0xff]
    %v3463 = vld [vmem:[#allocation14 + $0x260] sm:$0xff]
    %v3464 = vld [vmem:[#allocation14 + $0x270] sm:$0xff]
    %v3465 = vld [vmem:[#allocation14 + $0x278] sm:$0xff]
    %v3466 = vld [vmem:[#allocation14 + $0x280] sm:$0xff]
    %v3467 = vld [vmem:[#allocation14 + $0x290] sm:$0xff]
    %v3468 = vld [vmem:[#allocation14 + $0x298] sm:$0xff]
    %v3469 = vld [vmem:[#allocation14 + $0x2a0] sm:$0xff]
    %v3470 = vld [vmem:[#allocation14 + $0x2b0] sm:$0xff]
    %v3471 = vld [vmem:[#allocation14 + $0x2b8] sm:$0xff]
    %v3472 = vld [vmem:[#allocation14 + $0x2c0] sm:$0xff]
    %v3473 = vld [vmem:[#allocation14 + $0x2d0] sm:$0xff]
    %v3474 = vld [vmem:[#allocation14 + $0x2d8] sm:$0xff]
    %v3475 = vld [vmem:[#allocation14 + $0x2e0] sm:$0xff]
    %v3476 = vld [vmem:[#allocation14 + $0x2f0] sm:$0xff]
    %v3477 = vld [vmem:[#allocation14 + $0x2f8] sm:$0xff]
    %v3478 = vld [vmem:[#allocation14 + $0x300] sm:$0xff]
    %v3479 = vld [vmem:[#allocation14 + $0x310] sm:$0xff]
    %v3480 = vld [vmem:[#allocation14 + $0x318] sm:$0xff]
    %v3481 = vld [vmem:[#allocation14 + $0x320] sm:$0xff]
    %v3482 = vld [vmem:[#allocation14 + $0x330] sm:$0xff]
    %v3483 = vld [vmem:[#allocation14 + $0x338] sm:$0xff]
    %v3484 = vld [vmem:[#allocation14 + $0x340] sm:$0xff]
    %v3485 = vld [vmem:[#allocation14 + $0x350] sm:$0xff]
    %v3486 = vld [vmem:[#allocation14 + $0x358] sm:$0xff]
    %v3487 = vld [vmem:[#allocation14 + $0x360] sm:$0xff]
    %v3488 = vld [vmem:[#allocation14 + $0x370] sm:$0xff]
    %v3489 = vld [vmem:[#allocation14 + $0x378] sm:$0xff]
    %v3490 = vld [vmem:[#allocation14 + $0x380] sm:$0xff]
    %v3491 = vld [vmem:[#allocation14 + $0x390] sm:$0xff]
    %v3492 = vld [vmem:[#allocation14 + $0x398] sm:$0xff]
    %v3493 = vld [vmem:[#allocation14 + $0x3a0] sm:$0xff]
    %v3494 = vld [vmem:[#allocation14 + $0x3b0] sm:$0xff]
    %v3495 = vld [vmem:[#allocation14 + $0x3b8] sm:$0xff]
    %v3496 = vld [vmem:[#allocation14 + $0x3c0] sm:$0xff]
    %v3497 = vld [vmem:[#allocation14 + $0x3d0] sm:$0xff]
    %v3498 = vld [vmem:[#allocation14 + $0x3d8] sm:$0xff]
    %v3499 = vld [vmem:[#allocation14 + $0x3e0] sm:$0xff]
    %v3500 = vld [vmem:[#allocation14 + $0x3f0] sm:$0xff]
    %v3501 = vld [vmem:[#allocation14 + $0x3f8] sm:$0xff]
    %v3502 = vld [vmem:[#allocation14 + $0x400] sm:$0xff]
    %v3503 = vld [vmem:[#allocation14 + $0x410] sm:$0xff]
    %v3504 = vld [vmem:[#allocation14 + $0x418] sm:$0xff]
    %v3505 = vld [vmem:[#allocation14 + $0x420] sm:$0xff]
    %v3506 = vld [vmem:[#allocation14 + $0x430] sm:$0xff]
    %v3507 = vld [vmem:[#allocation14 + $0x438] sm:$0xff]
    %v3508 = vld [vmem:[#allocation14 + $0x440] sm:$0xff]
    %v3509 = vld [vmem:[#allocation14 + $0x450] sm:$0xff]
    %v3510 = vld [vmem:[#allocation14 + $0x458] sm:$0xff]
    %v3511 = vld [vmem:[#allocation14 + $0x460] sm:$0xff]
    %v3512 = vld [vmem:[#allocation14 + $0x470] sm:$0xff]
    %v3513 = vld [vmem:[#allocation14 + $0x478] sm:$0xff]
    %v3514 = vld [vmem:[#allocation14 + $0x480] sm:$0xff]
    %v3515 = vld [vmem:[#allocation14 + $0x490] sm:$0xff]
    %v3516 = vld [vmem:[#allocation14 + $0x498] sm:$0xff]
    %v3517 = vld [vmem:[#allocation14 + $0x4a0] sm:$0xff]
    %v3518 = vld [vmem:[#allocation14 + $0x4b0] sm:$0xff]
    %v3519 = vld [vmem:[#allocation14 + $0x4b8] sm:$0xff]
    %v3520 = vld [vmem:[#allocation14 + $0x4c0] sm:$0xff]
    %v3521 = vld [vmem:[#allocation14 + $0x4d0] sm:$0xff]
    %v3522 = vld [vmem:[#allocation14 + $0x4d8] sm:$0xff]
    %v3523 = vld [vmem:[#allocation14 + $0x4e0] sm:$0xff]
    %v3524 = vld [vmem:[#allocation14 + $0x4f0] sm:$0xff]
    %v3525 = vld [vmem:[#allocation14 + $0x4f8] sm:$0xff]
    %v3526 = vld [vmem:[#allocation14 + $0x500] sm:$0xff]
    %v3527 = vld [vmem:[#allocation14 + $0x510] sm:$0xff]
    %v3528 = vld [vmem:[#allocation14 + $0x518] sm:$0xff]
    %v3529 = vld [vmem:[#allocation14 + $0x520] sm:$0xff]
    %v3530 = vld [vmem:[#allocation14 + $0x530] sm:$0xff]
    %v3531 = vld [vmem:[#allocation14 + $0x538] sm:$0xff]
    %v3532 = vld [vmem:[#allocation14 + $0x540] sm:$0xff]
    %v3533 = vld [vmem:[#allocation14 + $0x550] sm:$0xff]
    %v3534 = vld [vmem:[#allocation14 + $0x558] sm:$0xff]
    %v3535 = vld [vmem:[#allocation14 + $0x560] sm:$0xff]
    %v3536 = vld [vmem:[#allocation14 + $0x570] sm:$0xff]
    %v3537 = vld [vmem:[#allocation14 + $0x578] sm:$0xff]
    %v3538 = vld [vmem:[#allocation14 + $0x580] sm:$0xff]
    %v3539 = vld [vmem:[#allocation14 + $0x590] sm:$0xff]
    %v3540 = vld [vmem:[#allocation14 + $0x598] sm:$0xff]
    %v3541 = vld [vmem:[#allocation14 + $0x5a0] sm:$0xff]
    %v3542 = vld [vmem:[#allocation14 + $0x5b0] sm:$0xff]
    %v3543 = vld [vmem:[#allocation14 + $0x5b8] sm:$0xff]
    %v3544 = vld [vmem:[#allocation14 + $0x5c0] sm:$0xff]
    %v3545 = vld [vmem:[#allocation14 + $0x5d0] sm:$0xff]
    %v3546 = vld [vmem:[#allocation14 + $0x5d8] sm:$0xff]
    %v3547 = vld [vmem:[#allocation14 + $0x5e0] sm:$0xff]
    %v3548 = vld [vmem:[#allocation14 + $0x5f0] sm:$0xff]
    %v3549 = vld [vmem:[#allocation14 + $0x5f8] sm:$0xff]
    %v3550 = vld [vmem:[#allocation14 + $0x600] sm:$0xff]
    %v3551 = vld [vmem:[#allocation14 + $0x610] sm:$0xff]
    %v3552 = vld [vmem:[#allocation14 + $0x618] sm:$0xff]
    %v3553 = vld [vmem:[#allocation14 + $0x620] sm:$0xff]
    %v3554 = vld [vmem:[#allocation14 + $0x630] sm:$0xff]
    %v3555 = vld [vmem:[#allocation14 + $0x638] sm:$0xff]
    %v3556 = vld [vmem:[#allocation14 + $0x640] sm:$0xff]
    %v3557 = vld [vmem:[#allocation14 + $0x650] sm:$0xff]
    %v3558 = vld [vmem:[#allocation14 + $0x658] sm:$0xff]
    %v3559 = vld [vmem:[#allocation14 + $0x660] sm:$0xff]
    %v3560 = vld [vmem:[#allocation14 + $0x670] sm:$0xff]
    %v3561 = vld [vmem:[#allocation14 + $0x678] sm:$0xff]
    %v3562 = vld [vmem:[#allocation14 + $0x680] sm:$0xff]
    %v3563 = vld [vmem:[#allocation14 + $0x690] sm:$0xff]
    %v3564 = vld [vmem:[#allocation14 + $0x698] sm:$0xff]
    %v3565 = vld [vmem:[#allocation14 + $0x6a0] sm:$0xff]
    %v3566 = vld [vmem:[#allocation14 + $0x6b0] sm:$0xff]
    %v3567 = vld [vmem:[#allocation14 + $0x6b8] sm:$0xff]
    %v3568 = vld [vmem:[#allocation14 + $0x6c0] sm:$0xff]
    %v3569 = vld [vmem:[#allocation14 + $0x6d0] sm:$0xff]
    %v3570 = vld [vmem:[#allocation14 + $0x6d8] sm:$0xff]
    %v3571 = vld [vmem:[#allocation14 + $0x6e0] sm:$0xff]
    %v3572 = vld [vmem:[#allocation14 + $0x6f0] sm:$0xff]
    %v3573 = vld [vmem:[#allocation14 + $0x6f8] sm:$0xff]
    %v3574 = vld [vmem:[#allocation14 + $0x700] sm:$0xff]
    %v3575 = vld [vmem:[#allocation14 + $0x710] sm:$0xff]
    %v3576 = vld [vmem:[#allocation14 + $0x718] sm:$0xff]
    %v3577 = vld [vmem:[#allocation14 + $0x720] sm:$0xff]
    %v3578 = vld [vmem:[#allocation14 + $0x730] sm:$0xff]
    %v3579 = vld [vmem:[#allocation14 + $0x738] sm:$0xff]
    %v3580 = vld [vmem:[#allocation14 + $0x740] sm:$0xff]
    %v3581 = vld [vmem:[#allocation14 + $0x750] sm:$0xff]
    %v3582 = vld [vmem:[#allocation14 + $0x758] sm:$0xff]
    %v3583 = vld [vmem:[#allocation14 + $0x760] sm:$0xff]
    %v3584 = vld [vmem:[#allocation14 + $0x770] sm:$0xff]
    %v3585 = vld [vmem:[#allocation14 + $0x778] sm:$0xff]
    %v3586 = vld [vmem:[#allocation14 + $0x780] sm:$0xff]
    %v3587 = vld [vmem:[#allocation14 + $0x790] sm:$0xff]
    %v3588 = vld [vmem:[#allocation14 + $0x798] sm:$0xff]
    %v3589 = vld [vmem:[#allocation14 + $0x7a0] sm:$0xff]
    %v3590 = vld [vmem:[#allocation14 + $0x7b0] sm:$0xff]
    %v3591 = vld [vmem:[#allocation14 + $0x7b8] sm:$0xff]
    %v3592 = vld [vmem:[#allocation14 + $0x7c0] sm:$0xff]
    %v3593 = vld [vmem:[#allocation14 + $0x7d0] sm:$0xff]
    %v3594 = vld [vmem:[#allocation14 + $0x7d8] sm:$0xff]
    %v3595 = vld [vmem:[#allocation14 + $0x7e0] sm:$0xff]
    %v3596 = vld [vmem:[#allocation14 + $0x7f0] sm:$0xff]
    %v3597 = vld [vmem:[#allocation14 + $0x7f8] sm:$0xff]
    %v3598 = vld [vmem:[#allocation14 + $0x800] sm:$0xff]
    %v3599 = vld [vmem:[#allocation14 + $0x810] sm:$0xff]
    %v3600 = vld [vmem:[#allocation14 + $0x818] sm:$0xff]
    %v3601 = vld [vmem:[#allocation14 + $0x820] sm:$0xff]
    %v3602 = vld [vmem:[#allocation14 + $0x830] sm:$0xff]
    %v3603 = vld [vmem:[#allocation14 + $0x838] sm:$0xff]
    %v3604 = vld [vmem:[#allocation14 + $0x840] sm:$0xff]
    %v3605 = vld [vmem:[#allocation14 + $0x850] sm:$0xff]
    %v3606 = vld [vmem:[#allocation14 + $0x858] sm:$0xff]
    %v3607 = vld [vmem:[#allocation14 + $0x860] sm:$0xff]
    %v3608 = vld [vmem:[#allocation14 + $0x870] sm:$0xff]
    %v3609 = vld [vmem:[#allocation14 + $0x878] sm:$0xff]
    %v3610 = vld [vmem:[#allocation14 + $0x880] sm:$0xff]
    %v3611 = vld [vmem:[#allocation14 + $0x890] sm:$0xff]
    %v3612 = vld [vmem:[#allocation14 + $0x898] sm:$0xff]
    %v3613 = vld [vmem:[#allocation14 + $0x8a0] sm:$0xff]
    %v3614 = vld [vmem:[#allocation14 + $0x8b0] sm:$0xff]
    %v3615 = vld [vmem:[#allocation14 + $0x8b8] sm:$0xff]
    %v3616 = vld [vmem:[#allocation14 + $0x8c0] sm:$0xff]
    %v3617 = vld [vmem:[#allocation14 + $0x8d0] sm:$0xff]
    %v3618 = vld [vmem:[#allocation14 + $0x8d8] sm:$0xff]
    %v3619 = vld [vmem:[#allocation14 + $0x8e0] sm:$0xff]
    %v3620 = vld [vmem:[#allocation14 + $0x8f0] sm:$0xff]
    %v3621 = vld [vmem:[#allocation14 + $0x8f8] sm:$0xff]
    %v3622 = vld [vmem:[#allocation14 + $0x900] sm:$0xff]
    %v3623 = vld [vmem:[#allocation14 + $0x910] sm:$0xff]
    %v3624 = vld [vmem:[#allocation14 + $0x918] sm:$0xff]
    %v3625 = vld [vmem:[#allocation14 + $0x920] sm:$0xff]
    %v3626 = vld [vmem:[#allocation14 + $0x930] sm:$0xff]
    %v3627 = vld [vmem:[#allocation14 + $0x938] sm:$0xff]
    %v3628 = vld [vmem:[#allocation14 + $0x940] sm:$0xff]
    %v3629 = vld [vmem:[#allocation14 + $0x950] sm:$0xff]
    %v3630 = vld [vmem:[#allocation14 + $0x958] sm:$0xff]
    %v3631 = vld [vmem:[#allocation14 + $0x960] sm:$0xff]
    %v3632 = vld [vmem:[#allocation14 + $0x970] sm:$0xff]
    %v3633 = vld [vmem:[#allocation14 + $0x978] sm:$0xff]
    %v3634 = vld [vmem:[#allocation14 + $0x980] sm:$0xff]
    %v3635 = vld [vmem:[#allocation14 + $0x990] sm:$0xff]
    %v3636 = vld [vmem:[#allocation14 + $0x998] sm:$0xff]
    %v3637 = vld [vmem:[#allocation14 + $0x9a0] sm:$0xff]
    %v3638 = vld [vmem:[#allocation14 + $0x9b0] sm:$0xff]
    %v3639 = vld [vmem:[#allocation14 + $0x9b8] sm:$0xff]
    %v3640 = vld [vmem:[#allocation14 + $0x9c0] sm:$0xff]
    %v3641 = vld [vmem:[#allocation14 + $0x9d0] sm:$0xff]
    %v3642 = vld [vmem:[#allocation14 + $0x9d8] sm:$0xff]
    %v3643 = vld [vmem:[#allocation14 + $0x9e0] sm:$0xff]
    %v3644 = vld [vmem:[#allocation14 + $0x9f0] sm:$0xff]
    %v3645 = vld [vmem:[#allocation14 + $0x9f8] sm:$0xff]
    %v3646 = vld [vmem:[#allocation14 + $0xa00] sm:$0xff]
    %v3647 = vld [vmem:[#allocation14 + $0xa10] sm:$0xff]
    %v3648 = vld [vmem:[#allocation14 + $0xa18] sm:$0xff]
    %v3649 = vld [vmem:[#allocation14 + $0xa20] sm:$0xff]
    %v3650 = vld [vmem:[#allocation14 + $0xa30] sm:$0xff]
    %v3651 = vld [vmem:[#allocation14 + $0xa38] sm:$0xff]
    %v3652 = vld [vmem:[#allocation14 + $0xa40] sm:$0xff]
    %v3653 = vld [vmem:[#allocation14 + $0xa50] sm:$0xff]
    %v3654 = vld [vmem:[#allocation14 + $0xa58] sm:$0xff]
    %v3655 = vld [vmem:[#allocation14 + $0xa60] sm:$0xff]
    %v3656 = vld [vmem:[#allocation14 + $0xa70] sm:$0xff]
    %v3657 = vld [vmem:[#allocation14 + $0xa78] sm:$0xff]
    %v3658 = vld [vmem:[#allocation14 + $0xa80] sm:$0xff]
    %v3659 = vld [vmem:[#allocation14 + $0xa90] sm:$0xff]
    %v3660 = vld [vmem:[#allocation14 + $0xa98] sm:$0xff]
    %v3661 = vld [vmem:[#allocation14 + $0xaa0] sm:$0xff]
    %v3662 = vld [vmem:[#allocation14 + $0xab0] sm:$0xff]
    %v3663 = vld [vmem:[#allocation14 + $0xab8] sm:$0xff]
    %v3664 = vld [vmem:[#allocation14 + $0xac0] sm:$0xff]
    %v3665 = vld [vmem:[#allocation14 + $0xad0] sm:$0xff]
    %v3666 = vld [vmem:[#allocation14 + $0xad8] sm:$0xff]
    %v3667 = vld [vmem:[#allocation14 + $0xae0] sm:$0xff]
    %v3668 = vld [vmem:[#allocation14 + $0xaf0] sm:$0xff]
    %v3669 = vld [vmem:[#allocation14 + $0xaf8] sm:$0xff]
    %v3670 = vld [vmem:[#allocation14 + $0xb00] sm:$0xff]
    %v3671 = vld [vmem:[#allocation14 + $0xb10] sm:$0xff]
    %v3672 = vld [vmem:[#allocation14 + $0xb18] sm:$0xff]
    %v3673 = vld [vmem:[#allocation14 + $0xb20] sm:$0xff]
    %v3674 = vld [vmem:[#allocation14 + $0xb30] sm:$0xff]
    %v3675 = vld [vmem:[#allocation14 + $0xb38] sm:$0xff]
    %v3676 = vld [vmem:[#allocation14 + $0xb40] sm:$0xff]
    %v3677 = vld [vmem:[#allocation14 + $0xb50] sm:$0xff]
    %v3678 = vld [vmem:[#allocation14 + $0xb58] sm:$0xff]
    %v3679 = vld [vmem:[#allocation14 + $0xb60] sm:$0xff]
    %v3680 = vld [vmem:[#allocation14 + $0xb70] sm:$0xff]
    %v3681 = vld [vmem:[#allocation14 + $0xb78] sm:$0xff]
    %v3682 = vld [vmem:[#allocation14 + $0xb80] sm:$0xff]
    %v3683 = vld [vmem:[#allocation14 + $0xb90] sm:$0xff]
    %v3684 = vld [vmem:[#allocation14 + $0xb98] sm:$0xff]
    %v3685 = vld [vmem:[#allocation14 + $0xba0] sm:$0xff]
    %v3686 = vld [vmem:[#allocation14 + $0xbb0] sm:$0xff]
    %v3687 = vld [vmem:[#allocation14 + $0xbb8] sm:$0xff]
    %v3688 = vld [vmem:[#allocation14 + $0xbc0] sm:$0xff]
    %v3689 = vld [vmem:[#allocation14 + $0xbd0] sm:$0xff]
    %v3690 = vld [vmem:[#allocation14 + $0xbd8] sm:$0xff]
    %v3691 = vld [vmem:[#allocation14 + $0xbe0] sm:$0xff]
    %v3692 = vld [vmem:[#allocation14 + $0xbf0] sm:$0xff]
    %v3693 = vld [vmem:[#allocation14 + $0xbf8] sm:$0xff]
    %v3694 = vld [vmem:[#allocation14 + $0xc00] sm:$0xff]
    %v3695 = vld [vmem:[#allocation14 + $0xc10] sm:$0xff]
    %v3696 = vld [vmem:[#allocation14 + $0xc18] sm:$0xff]
    %v3697 = vld [vmem:[#allocation14 + $0xc20] sm:$0xff]
    %v3698 = vld [vmem:[#allocation14 + $0xc30] sm:$0xff]
    %v3699 = vld [vmem:[#allocation14 + $0xc38] sm:$0xff]
    %v3700 = vld [vmem:[#allocation14 + $0xc40] sm:$0xff]
    %v3701 = vld [vmem:[#allocation14 + $0xc50] sm:$0xff]
    %v3702 = vld [vmem:[#allocation14 + $0xc58] sm:$0xff]
    %v3703 = vld [vmem:[#allocation14 + $0xc60] sm:$0xff]
    %v3704 = vld [vmem:[#allocation14 + $0xc70] sm:$0xff]
    %v3705 = vld [vmem:[#allocation14 + $0xc78] sm:$0xff]
    %v3706 = vld [vmem:[#allocation14 + $0xc80] sm:$0xff]
    %v3707 = vld [vmem:[#allocation14 + $0xc90] sm:$0xff]
    %v3708 = vld [vmem:[#allocation14 + $0xc98] sm:$0xff]
    %v3709 = vld [vmem:[#allocation14 + $0xca0] sm:$0xff]
    %v3710 = vld [vmem:[#allocation14 + $0xcb0] sm:$0xff]
    %v3711 = vld [vmem:[#allocation14 + $0xcb8] sm:$0xff]
    %v3712 = vld [vmem:[#allocation14 + $0xcc0] sm:$0xff]
    %v3713 = vld [vmem:[#allocation14 + $0xcd0] sm:$0xff]
    %v3714 = vld [vmem:[#allocation14 + $0xcd8] sm:$0xff]
    %v3715 = vld [vmem:[#allocation14 + $0xce0] sm:$0xff]
    %v3716 = vld [vmem:[#allocation14 + $0xcf0] sm:$0xff]
    %v3717 = vld [vmem:[#allocation14 + $0xcf8] sm:$0xff]
    %v3718 = vld [vmem:[#allocation14 + $0xd00] sm:$0xff]
    %v3719 = vld [vmem:[#allocation14 + $0xd10] sm:$0xff]
    %v3720 = vld [vmem:[#allocation14 + $0xd18] sm:$0xff]
    %v3721 = vld [vmem:[#allocation14 + $0xd20] sm:$0xff]
    %v3722 = vld [vmem:[#allocation14 + $0xd30] sm:$0xff]
    %v3723 = vld [vmem:[#allocation14 + $0xd38] sm:$0xff]
    %v3724 = vld [vmem:[#allocation14 + $0xd40] sm:$0xff]
    %v3725 = vld [vmem:[#allocation14 + $0xd50] sm:$0xff]
    %v3726 = vld [vmem:[#allocation14 + $0xd58] sm:$0xff]
    %v3727 = vld [vmem:[#allocation14 + $0xd60] sm:$0xff]
    %v3728 = vld [vmem:[#allocation14 + $0xd70] sm:$0xff]
    %v3729 = vld [vmem:[#allocation14 + $0xd78] sm:$0xff]
    %v3730 = vld [vmem:[#allocation14 + $0xd80] sm:$0xff]
    %v3731 = vld [vmem:[#allocation14 + $0xd90] sm:$0xff]
    %v3732 = vld [vmem:[#allocation14 + $0xd98] sm:$0xff]
    %v3733 = vld [vmem:[#allocation14 + $0xda0] sm:$0xff]
    %v3734 = vld [vmem:[#allocation14 + $0xdb0] sm:$0xff]
    %v3735 = vld [vmem:[#allocation14 + $0xdb8] sm:$0xff]
    %v3736 = vld [vmem:[#allocation14 + $0xdc0] sm:$0xff]
    %v3737 = vld [vmem:[#allocation14 + $0xdd0] sm:$0xff]
    %v3738 = vld [vmem:[#allocation14 + $0xdd8] sm:$0xff]
    %v3739 = vld [vmem:[#allocation14 + $0xde0] sm:$0xff]
    %v3740 = vld [vmem:[#allocation14 + $0xdf0] sm:$0xff]
    %v3741 = vld [vmem:[#allocation14 + $0xdf8] sm:$0xff]
    %v3742 = vld [vmem:[#allocation14 + $0xe00] sm:$0xff]
    %v3743 = vld [vmem:[#allocation14 + $0xe10] sm:$0xff]
    %v3744 = vld [vmem:[#allocation14 + $0xe18] sm:$0xff]
    %v3745 = vld [vmem:[#allocation14 + $0xe20] sm:$0xff]
    %v3746 = vld [vmem:[#allocation14 + $0xe30] sm:$0xff]
    %v3747 = vld [vmem:[#allocation14 + $0xe38] sm:$0xff]
    %v3748 = vld [vmem:[#allocation14 + $0xe40] sm:$0xff]
    %v3749 = vld [vmem:[#allocation14 + $0xe50] sm:$0xff]
    %v3750 = vld [vmem:[#allocation14 + $0xe58] sm:$0xff]
    %v3751 = vld [vmem:[#allocation14 + $0xe60] sm:$0xff]
    %v3752 = vld [vmem:[#allocation14 + $0xe70] sm:$0xff]
    %v3753 = vld [vmem:[#allocation14 + $0xe78] sm:$0xff]
    %v3754 = vld [vmem:[#allocation14 + $0xe80] sm:$0xff]
    %v3755 = vld [vmem:[#allocation14 + $0xe90] sm:$0xff]
    %v3756 = vld [vmem:[#allocation14 + $0xe98] sm:$0xff]
    %v3757 = vld [vmem:[#allocation14 + $0xea0] sm:$0xff]
    %v3758 = vld [vmem:[#allocation14 + $0xeb0] sm:$0xff]
    %v3759 = vld [vmem:[#allocation14 + $0xeb8] sm:$0xff]
    %v3760 = vld [vmem:[#allocation14 + $0xec0] sm:$0xff]
    %v3761 = vld [vmem:[#allocation14 + $0xed0] sm:$0xff]
    %v3762 = vld [vmem:[#allocation14 + $0xed8] sm:$0xff]
    %v3763 = vld [vmem:[#allocation14 + $0xee0] sm:$0xff]
    %v3764 = vld [vmem:[#allocation14 + $0xef0] sm:$0xff]
    %v3765 = vld [vmem:[#allocation14 + $0xef8] sm:$0xff]
    %v3766 = vld [vmem:[#allocation14 + $0xf00] sm:$0xff]
    %v3767 = vld [vmem:[#allocation14 + $0xf10] sm:$0xff]
    %v3768 = vld [vmem:[#allocation14 + $0xf18] sm:$0xff]
    %v3769 = vld [vmem:[#allocation14 + $0xf20] sm:$0xff]
    %v3770 = vld [vmem:[#allocation14 + $0xf30] sm:$0xff]
    %v3771 = vld [vmem:[#allocation14 + $0xf38] sm:$0xff]
    %v3772 = vld [vmem:[#allocation14 + $0xf40] sm:$0xff]
    %v3773 = vld [vmem:[#allocation14 + $0xf50] sm:$0xff]
    %v3774 = vld [vmem:[#allocation14 + $0xf58] sm:$0xff]
    %v3775 = vld [vmem:[#allocation14 + $0xf60] sm:$0xff]
    %v3776 = vld [vmem:[#allocation14 + $0xf70] sm:$0xff]
    %v3777 = vld [vmem:[#allocation14 + $0xf78] sm:$0xff]
    %v3778 = vld [vmem:[#allocation14 + $0xf80] sm:$0xff]
    %v3779 = vld [vmem:[#allocation14 + $0xf90] sm:$0xff]
    %v3780 = vld [vmem:[#allocation14 + $0xf98] sm:$0xff]
    %v3781 = vld [vmem:[#allocation14 + $0xfa0] sm:$0xff]
    %v3782 = vld [vmem:[#allocation14 + $0xfb0] sm:$0xff]
    %v3783 = vld [vmem:[#allocation14 + $0xfb8] sm:$0xff]
    %v3784 = vld [vmem:[#allocation14 + $0xfc0] sm:$0xff]
    %v3785 = vld [vmem:[#allocation14 + $0xfd0] sm:$0xff]
    %v3786 = vld [vmem:[#allocation14 + $0xfd8] sm:$0xff]
    %v3787 = vld [vmem:[#allocation14 + $0xfe0] sm:$0xff]
    %v3788 = vld [vmem:[#allocation14 + $0xff0] sm:$0xff]
    %v3789 = vld [vmem:[#allocation14 + $0xff8] sm:$0xff]
    %v3790 = vld [vmem:[#allocation15] sm:$0xff]
    %v3791 = vld [vmem:[#allocation15 + $0x8] sm:$0xff]
    %v3794 = vperm.slane %v3790, 0
    %v3795 = vperm.slane %v3790, 1
    %v3796 = vperm.slane %v3790, 4
    %v3797 = vperm.slane %v3790, 5
    %v3798 = vperm.slane %v3790, 6
    %v3799 = vperm.slane %v3790, 7
    %v3800 = vperm.slane %v3791, 0
    %v3801 = vperm.slane %v3791, 1
    %v3802 = vperm.slane %v3791, 4
    %v3803 = vperm.slane %v3791, 5
    %v3804 = vperm.slane %v3791, 6
    %v3805 = vperm.slane %v3791, 7
    %v4202 = vunpack.c.l.b16 %v3406
    %v4203 = vunpack.c.h.b16 %v3406
    %v4204 = vunpack.c.l.b16 %v3407
    %v4205 = vunpack.c.h.b16 %v3407
    %v4206 = vunpack.c.l.b16 %v3408
    %v4207 = vunpack.c.h.b16 %v3408
    %v4208 = vunpack.c.l.b16 %v3409
    %v4209 = vunpack.c.h.b16 %v3409
    %v4210 = vunpack.c.l.b16 %v3410
    %v4211 = vunpack.c.h.b16 %v3410
    %v4212 = vunpack.c.l.b16 %v3411
    %v4213 = vunpack.c.h.b16 %v3411
    %v4214 = vunpack.c.l.b16 %v3412
    %v4215 = vunpack.c.h.b16 %v3412
    %v4216 = vunpack.c.l.b16 %v3413
    %v4217 = vunpack.c.h.b16 %v3413
    %v4218 = vunpack.c.l.b16 %v3414
    %v4219 = vunpack.c.h.b16 %v3414
    %v4220 = vunpack.c.l.b16 %v3415
    %v4221 = vunpack.c.h.b16 %v3415
    %v4222 = vunpack.c.l.b16 %v3416
    %v4223 = vunpack.c.h.b16 %v3416
    %v4224 = vunpack.c.l.b16 %v3417
    %v4225 = vunpack.c.h.b16 %v3417
    %v4226 = vunpack.c.l.b16 %v3418
    %v4227 = vunpack.c.h.b16 %v3418
    %v4228 = vunpack.c.l.b16 %v3419
    %v4229 = vunpack.c.h.b16 %v3419
    %v4230 = vunpack.c.l.b16 %v3420
    %v4231 = vunpack.c.h.b16 %v3420
    %v4232 = vunpack.c.l.b16 %v3421
    %v4233 = vunpack.c.h.b16 %v3421
    %v4234 = vunpack.c.l.b16 %v3422
    %v4235 = vunpack.c.h.b16 %v3422
    %v4236 = vunpack.c.l.b16 %v3423
    %v4237 = vunpack.c.h.b16 %v3423
    %v4238 = vunpack.c.l.b16 %v3424
    %v4239 = vunpack.c.h.b16 %v3424
    %v4240 = vunpack.c.l.b16 %v3425
    %v4241 = vunpack.c.h.b16 %v3425
    %v4242 = vunpack.c.l.b16 %v3426
    %v4243 = vunpack.c.h.b16 %v3426
    %v4244 = vunpack.c.l.b16 %v3427
    %v4245 = vunpack.c.h.b16 %v3427
    %v4246 = vunpack.c.l.b16 %v3428
    %v4247 = vunpack.c.h.b16 %v3428
    %v4248 = vunpack.c.l.b16 %v3429
    %v4249 = vunpack.c.h.b16 %v3429
    %v4250 = vunpack.c.l.b16 %v3430
    %v4251 = vunpack.c.h.b16 %v3430
    %v4252 = vunpack.c.l.b16 %v3431
    %v4253 = vunpack.c.h.b16 %v3431
    %v4254 = vunpack.c.l.b16 %v3432
    %v4255 = vunpack.c.h.b16 %v3432
    %v4256 = vunpack.c.l.b16 %v3433
    %v4257 = vunpack.c.h.b16 %v3433
    %v4258 = vunpack.c.l.b16 %v3434
    %v4259 = vunpack.c.h.b16 %v3434
    %v4260 = vunpack.c.l.b16 %v3435
    %v4261 = vunpack.c.h.b16 %v3435
    %v4262 = vunpack.c.l.b16 %v3436
    %v4263 = vunpack.c.h.b16 %v3436
    %v4264 = vunpack.c.l.b16 %v3437
    %v4265 = vunpack.c.h.b16 %v3437
    %v4266 = vunpack.c.l.b16 %v3438
    %v4267 = vunpack.c.h.b16 %v3438
    %v4268 = vunpack.c.l.b16 %v3439
    %v4269 = vunpack.c.h.b16 %v3439
    %v4270 = vunpack.c.l.b16 %v3440
    %v4271 = vunpack.c.h.b16 %v3440
    %v4272 = vunpack.c.l.b16 %v3441
    %v4273 = vunpack.c.h.b16 %v3441
    %v4274 = vunpack.c.l.b16 %v3442
    %v4275 = vunpack.c.h.b16 %v3442
    %v4276 = vunpack.c.l.b16 %v3443
    %v4277 = vunpack.c.h.b16 %v3443
    %v4278 = vunpack.c.l.b16 %v3444
    %v4279 = vunpack.c.h.b16 %v3444
    %v4280 = vunpack.c.l.b16 %v3445
    %v4281 = vunpack.c.h.b16 %v3445
    %v4282 = vunpack.c.l.b16 %v3446
    %v4283 = vunpack.c.h.b16 %v3446
    %v4284 = vunpack.c.l.b16 %v3447
    %v4285 = vunpack.c.h.b16 %v3447
    %v4286 = vunpack.c.l.b16 %v3448
    %v4287 = vunpack.c.h.b16 %v3448
    %v4288 = vunpack.c.l.b16 %v3449
    %v4289 = vunpack.c.h.b16 %v3449
    %v4290 = vunpack.c.l.b16 %v3450
    %v4291 = vunpack.c.h.b16 %v3450
    %v4292 = vunpack.c.l.b16 %v3451
    %v4293 = vunpack.c.h.b16 %v3451
    %v4294 = vunpack.c.l.b16 %v3452
    %v4295 = vunpack.c.h.b16 %v3452
    %v4296 = vunpack.c.l.b16 %v3453
    %v4297 = vunpack.c.h.b16 %v3453
    %v4298 = vunpack.c.l.b16 %v3454
    %v4299 = vunpack.c.h.b16 %v3454
    %v4300 = vunpack.c.l.b16 %v3455
    %v4301 = vunpack.c.h.b16 %v3455
    %v4302 = vunpack.c.l.b16 %v3456
    %v4303 = vunpack.c.h.b16 %v3456
    %v4304 = vunpack.c.l.b16 %v3457
    %v4305 = vunpack.c.h.b16 %v3457
    %v4306 = vunpack.c.l.b16 %v3458
    %v4307 = vunpack.c.h.b16 %v3458
    %v4308 = vunpack.c.l.b16 %v3459
    %v4309 = vunpack.c.h.b16 %v3459
    %v4310 = vunpack.c.l.b16 %v3460
    %v4311 = vunpack.c.h.b16 %v3460
    %v4312 = vunpack.c.l.b16 %v3461
    %v4313 = vunpack.c.h.b16 %v3461
    %v4314 = vunpack.c.l.b16 %v3462
    %v4315 = vunpack.c.h.b16 %v3462
    %v4316 = vunpack.c.l.b16 %v3463
    %v4317 = vunpack.c.h.b16 %v3463
    %v4318 = vunpack.c.l.b16 %v3464
    %v4319 = vunpack.c.h.b16 %v3464
    %v4320 = vunpack.c.l.b16 %v3465
    %v4321 = vunpack.c.h.b16 %v3465
    %v4322 = vunpack.c.l.b16 %v3466
    %v4323 = vunpack.c.h.b16 %v3466
    %v4324 = vunpack.c.l.b16 %v3467
    %v4325 = vunpack.c.h.b16 %v3467
    %v4326 = vunpack.c.l.b16 %v3468
    %v4327 = vunpack.c.h.b16 %v3468
    %v4328 = vunpack.c.l.b16 %v3469
    %v4329 = vunpack.c.h.b16 %v3469
    %v4330 = vunpack.c.l.b16 %v3470
    %v4331 = vunpack.c.h.b16 %v3470
    %v4332 = vunpack.c.l.b16 %v3471
    %v4333 = vunpack.c.h.b16 %v3471
    %v4334 = vunpack.c.l.b16 %v3472
    %v4335 = vunpack.c.h.b16 %v3472
    %v4336 = vunpack.c.l.b16 %v3473
    %v4337 = vunpack.c.h.b16 %v3473
    %v4338 = vunpack.c.l.b16 %v3474
    %v4339 = vunpack.c.h.b16 %v3474
    %v4340 = vunpack.c.l.b16 %v3475
    %v4341 = vunpack.c.h.b16 %v3475
    %v4342 = vunpack.c.l.b16 %v3476
    %v4343 = vunpack.c.h.b16 %v3476
    %v4344 = vunpack.c.l.b16 %v3477
    %v4345 = vunpack.c.h.b16 %v3477
    %v4346 = vunpack.c.l.b16 %v3478
    %v4347 = vunpack.c.h.b16 %v3478
    %v4348 = vunpack.c.l.b16 %v3479
    %v4349 = vunpack.c.h.b16 %v3479
    %v4350 = vunpack.c.l.b16 %v3480
    %v4351 = vunpack.c.h.b16 %v3480
    %v4352 = vunpack.c.l.b16 %v3481
    %v4353 = vunpack.c.h.b16 %v3481
    %v4354 = vunpack.c.l.b16 %v3482
    %v4355 = vunpack.c.h.b16 %v3482
    %v4356 = vunpack.c.l.b16 %v3483
    %v4357 = vunpack.c.h.b16 %v3483
    %v4358 = vunpack.c.l.b16 %v3484
    %v4359 = vunpack.c.h.b16 %v3484
    %v4360 = vunpack.c.l.b16 %v3485
    %v4361 = vunpack.c.h.b16 %v3485
    %v4362 = vunpack.c.l.b16 %v3486
    %v4363 = vunpack.c.h.b16 %v3486
    %v4364 = vunpack.c.l.b16 %v3487
    %v4365 = vunpack.c.h.b16 %v3487
    %v4366 = vunpack.c.l.b16 %v3488
    %v4367 = vunpack.c.h.b16 %v3488
    %v4368 = vunpack.c.l.b16 %v3489
    %v4369 = vunpack.c.h.b16 %v3489
    %v4370 = vunpack.c.l.b16 %v3490
    %v4371 = vunpack.c.h.b16 %v3490
    %v4372 = vunpack.c.l.b16 %v3491
    %v4373 = vunpack.c.h.b16 %v3491
    %v4374 = vunpack.c.l.b16 %v3492
    %v4375 = vunpack.c.h.b16 %v3492
    %v4376 = vunpack.c.l.b16 %v3493
    %v4377 = vunpack.c.h.b16 %v3493
    %v4378 = vunpack.c.l.b16 %v3494
    %v4379 = vunpack.c.h.b16 %v3494
    %v4380 = vunpack.c.l.b16 %v3495
    %v4381 = vunpack.c.h.b16 %v3495
    %v4382 = vunpack.c.l.b16 %v3496
    %v4383 = vunpack.c.h.b16 %v3496
    %v4384 = vunpack.c.l.b16 %v3497
    %v4385 = vunpack.c.h.b16 %v3497
    %v4386 = vunpack.c.l.b16 %v3498
    %v4387 = vunpack.c.h.b16 %v3498
    %v4388 = vunpack.c.l.b16 %v3499
    %v4389 = vunpack.c.h.b16 %v3499
    %v4390 = vunpack.c.l.b16 %v3500
    %v4391 = vunpack.c.h.b16 %v3500
    %v4392 = vunpack.c.l.b16 %v3501
    %v4393 = vunpack.c.h.b16 %v3501
    %v4394 = vunpack.c.l.b16 %v3502
    %v4395 = vunpack.c.h.b16 %v3502
    %v4396 = vunpack.c.l.b16 %v3503
    %v4397 = vunpack.c.h.b16 %v3503
    %v4398 = vunpack.c.l.b16 %v3504
    %v4399 = vunpack.c.h.b16 %v3504
    %v4400 = vunpack.c.l.b16 %v3505
    %v4401 = vunpack.c.h.b16 %v3505
    %v4402 = vunpack.c.l.b16 %v3506
    %v4403 = vunpack.c.h.b16 %v3506
    %v4404 = vunpack.c.l.b16 %v3507
    %v4405 = vunpack.c.h.b16 %v3507
    %v4406 = vunpack.c.l.b16 %v3508
    %v4407 = vunpack.c.h.b16 %v3508
    %v4408 = vunpack.c.l.b16 %v3509
    %v4409 = vunpack.c.h.b16 %v3509
    %v4410 = vunpack.c.l.b16 %v3510
    %v4411 = vunpack.c.h.b16 %v3510
    %v4412 = vunpack.c.l.b16 %v3511
    %v4413 = vunpack.c.h.b16 %v3511
    %v4414 = vunpack.c.l.b16 %v3512
    %v4415 = vunpack.c.h.b16 %v3512
    %v4416 = vunpack.c.l.b16 %v3513
    %v4417 = vunpack.c.h.b16 %v3513
    %v4418 = vunpack.c.l.b16 %v3514
    %v4419 = vunpack.c.h.b16 %v3514
    %v4420 = vunpack.c.l.b16 %v3515
    %v4421 = vunpack.c.h.b16 %v3515
    %v4422 = vunpack.c.l.b16 %v3516
    %v4423 = vunpack.c.h.b16 %v3516
    %v4424 = vunpack.c.l.b16 %v3517
    %v4425 = vunpack.c.h.b16 %v3517
    %v4426 = vunpack.c.l.b16 %v3518
    %v4427 = vunpack.c.h.b16 %v3518
    %v4428 = vunpack.c.l.b16 %v3519
    %v4429 = vunpack.c.h.b16 %v3519
    %v4430 = vunpack.c.l.b16 %v3520
    %v4431 = vunpack.c.h.b16 %v3520
    %v4432 = vunpack.c.l.b16 %v3521
    %v4433 = vunpack.c.h.b16 %v3521
    %v4434 = vunpack.c.l.b16 %v3522
    %v4435 = vunpack.c.h.b16 %v3522
    %v4436 = vunpack.c.l.b16 %v3523
    %v4437 = vunpack.c.h.b16 %v3523
    %v4438 = vunpack.c.l.b16 %v3524
    %v4439 = vunpack.c.h.b16 %v3524
    %v4440 = vunpack.c.l.b16 %v3525
    %v4441 = vunpack.c.h.b16 %v3525
    %v4442 = vunpack.c.l.b16 %v3526
    %v4443 = vunpack.c.h.b16 %v3526
    %v4444 = vunpack.c.l.b16 %v3527
    %v4445 = vunpack.c.h.b16 %v3527
    %v4446 = vunpack.c.l.b16 %v3528
    %v4447 = vunpack.c.h.b16 %v3528
    %v4448 = vunpack.c.l.b16 %v3529
    %v4449 = vunpack.c.h.b16 %v3529
    %v4450 = vunpack.c.l.b16 %v3530
    %v4451 = vunpack.c.h.b16 %v3530
    %v4452 = vunpack.c.l.b16 %v3531
    %v4453 = vunpack.c.h.b16 %v3531
    %v4454 = vunpack.c.l.b16 %v3532
    %v4455 = vunpack.c.h.b16 %v3532
    %v4456 = vunpack.c.l.b16 %v3533
    %v4457 = vunpack.c.h.b16 %v3533
    %v4458 = vunpack.c.l.b16 %v3534
    %v4459 = vunpack.c.h.b16 %v3534
    %v4460 = vunpack.c.l.b16 %v3535
    %v4461 = vunpack.c.h.b16 %v3535
    %v4462 = vunpack.c.l.b16 %v3536
    %v4463 = vunpack.c.h.b16 %v3536
    %v4464 = vunpack.c.l.b16 %v3537
    %v4465 = vunpack.c.h.b16 %v3537
    %v4466 = vunpack.c.l.b16 %v3538
    %v4467 = vunpack.c.h.b16 %v3538
    %v4468 = vunpack.c.l.b16 %v3539
    %v4469 = vunpack.c.h.b16 %v3539
    %v4470 = vunpack.c.l.b16 %v3540
    %v4471 = vunpack.c.h.b16 %v3540
    %v4472 = vunpack.c.l.b16 %v3541
    %v4473 = vunpack.c.h.b16 %v3541
    %v4474 = vunpack.c.l.b16 %v3542
    %v4475 = vunpack.c.h.b16 %v3542
    %v4476 = vunpack.c.l.b16 %v3543
    %v4477 = vunpack.c.h.b16 %v3543
    %v4478 = vunpack.c.l.b16 %v3544
    %v4479 = vunpack.c.h.b16 %v3544
    %v4480 = vunpack.c.l.b16 %v3545
    %v4481 = vunpack.c.h.b16 %v3545
    %v4482 = vunpack.c.l.b16 %v3546
    %v4483 = vunpack.c.h.b16 %v3546
    %v4484 = vunpack.c.l.b16 %v3547
    %v4485 = vunpack.c.h.b16 %v3547
    %v4486 = vunpack.c.l.b16 %v3548
    %v4487 = vunpack.c.h.b16 %v3548
    %v4488 = vunpack.c.l.b16 %v3549
    %v4489 = vunpack.c.h.b16 %v3549
    %v4490 = vunpack.c.l.b16 %v3550
    %v4491 = vunpack.c.h.b16 %v3550
    %v4492 = vunpack.c.l.b16 %v3551
    %v4493 = vunpack.c.h.b16 %v3551
    %v4494 = vunpack.c.l.b16 %v3552
    %v4495 = vunpack.c.h.b16 %v3552
    %v4496 = vunpack.c.l.b16 %v3553
    %v4497 = vunpack.c.h.b16 %v3553
    %v4498 = vunpack.c.l.b16 %v3554
    %v4499 = vunpack.c.h.b16 %v3554
    %v4500 = vunpack.c.l.b16 %v3555
    %v4501 = vunpack.c.h.b16 %v3555
    %v4502 = vunpack.c.l.b16 %v3556
    %v4503 = vunpack.c.h.b16 %v3556
    %v4504 = vunpack.c.l.b16 %v3557
    %v4505 = vunpack.c.h.b16 %v3557
    %v4506 = vunpack.c.l.b16 %v3558
    %v4507 = vunpack.c.h.b16 %v3558
    %v4508 = vunpack.c.l.b16 %v3559
    %v4509 = vunpack.c.h.b16 %v3559
    %v4510 = vunpack.c.l.b16 %v3560
    %v4511 = vunpack.c.h.b16 %v3560
    %v4512 = vunpack.c.l.b16 %v3561
    %v4513 = vunpack.c.h.b16 %v3561
    %v4514 = vunpack.c.l.b16 %v3562
    %v4515 = vunpack.c.h.b16 %v3562
    %v4516 = vunpack.c.l.b16 %v3563
    %v4517 = vunpack.c.h.b16 %v3563
    %v4518 = vunpack.c.l.b16 %v3564
    %v4519 = vunpack.c.h.b16 %v3564
    %v4520 = vunpack.c.l.b16 %v3565
    %v4521 = vunpack.c.h.b16 %v3565
    %v4522 = vunpack.c.l.b16 %v3566
    %v4523 = vunpack.c.h.b16 %v3566
    %v4524 = vunpack.c.l.b16 %v3567
    %v4525 = vunpack.c.h.b16 %v3567
    %v4526 = vunpack.c.l.b16 %v3568
    %v4527 = vunpack.c.h.b16 %v3568
    %v4528 = vunpack.c.l.b16 %v3569
    %v4529 = vunpack.c.h.b16 %v3569
    %v4530 = vunpack.c.l.b16 %v3570
    %v4531 = vunpack.c.h.b16 %v3570
    %v4532 = vunpack.c.l.b16 %v3571
    %v4533 = vunpack.c.h.b16 %v3571
    %v4534 = vunpack.c.l.b16 %v3572
    %v4535 = vunpack.c.h.b16 %v3572
    %v4536 = vunpack.c.l.b16 %v3573
    %v4537 = vunpack.c.h.b16 %v3573
    %v4538 = vunpack.c.l.b16 %v3574
    %v4539 = vunpack.c.h.b16 %v3574
    %v4540 = vunpack.c.l.b16 %v3575
    %v4541 = vunpack.c.h.b16 %v3575
    %v4542 = vunpack.c.l.b16 %v3576
    %v4543 = vunpack.c.h.b16 %v3576
    %v4544 = vunpack.c.l.b16 %v3577
    %v4545 = vunpack.c.h.b16 %v3577
    %v4546 = vunpack.c.l.b16 %v3578
    %v4547 = vunpack.c.h.b16 %v3578
    %v4548 = vunpack.c.l.b16 %v3579
    %v4549 = vunpack.c.h.b16 %v3579
    %v4550 = vunpack.c.l.b16 %v3580
    %v4551 = vunpack.c.h.b16 %v3580
    %v4552 = vunpack.c.l.b16 %v3581
    %v4553 = vunpack.c.h.b16 %v3581
    %v4554 = vunpack.c.l.b16 %v3582
    %v4555 = vunpack.c.h.b16 %v3582
    %v4556 = vunpack.c.l.b16 %v3583
    %v4557 = vunpack.c.h.b16 %v3583
    %v4558 = vunpack.c.l.b16 %v3584
    %v4559 = vunpack.c.h.b16 %v3584
    %v4560 = vunpack.c.l.b16 %v3585
    %v4561 = vunpack.c.h.b16 %v3585
    %v4562 = vunpack.c.l.b16 %v3586
    %v4563 = vunpack.c.h.b16 %v3586
    %v4564 = vunpack.c.l.b16 %v3587
    %v4565 = vunpack.c.h.b16 %v3587
    %v4566 = vunpack.c.l.b16 %v3588
    %v4567 = vunpack.c.h.b16 %v3588
    %v4568 = vunpack.c.l.b16 %v3589
    %v4569 = vunpack.c.h.b16 %v3589
    %v4570 = vunpack.c.l.b16 %v3590
    %v4571 = vunpack.c.h.b16 %v3590
    %v4572 = vunpack.c.l.b16 %v3591
    %v4573 = vunpack.c.h.b16 %v3591
    %v4574 = vunpack.c.l.b16 %v3592
    %v4575 = vunpack.c.h.b16 %v3592
    %v4576 = vunpack.c.l.b16 %v3593
    %v4577 = vunpack.c.h.b16 %v3593
    %v4578 = vunpack.c.l.b16 %v3594
    %v4579 = vunpack.c.h.b16 %v3594
    %v4580 = vunpack.c.l.b16 %v3595
    %v4581 = vunpack.c.h.b16 %v3595
    %v4582 = vunpack.c.l.b16 %v3596
    %v4583 = vunpack.c.h.b16 %v3596
    %v4584 = vunpack.c.l.b16 %v3597
    %v4585 = vunpack.c.h.b16 %v3597
    %v4586 = vunpack.c.l.b16 %v3598
    %v4587 = vunpack.c.h.b16 %v3598
    %v4588 = vunpack.c.l.b16 %v3599
    %v4589 = vunpack.c.h.b16 %v3599
    %v4590 = vunpack.c.l.b16 %v3600
    %v4591 = vunpack.c.h.b16 %v3600
    %v4592 = vunpack.c.l.b16 %v3601
    %v4593 = vunpack.c.h.b16 %v3601
    %v4594 = vunpack.c.l.b16 %v3602
    %v4595 = vunpack.c.h.b16 %v3602
    %v4596 = vunpack.c.l.b16 %v3603
    %v4597 = vunpack.c.h.b16 %v3603
    %v4598 = vunpack.c.l.b16 %v3604
    %v4599 = vunpack.c.h.b16 %v3604
    %v4600 = vunpack.c.l.b16 %v3605
    %v4601 = vunpack.c.h.b16 %v3605
    %v4602 = vunpack.c.l.b16 %v3606
    %v4603 = vunpack.c.h.b16 %v3606
    %v4604 = vunpack.c.l.b16 %v3607
    %v4605 = vunpack.c.h.b16 %v3607
    %v4606 = vunpack.c.l.b16 %v3608
    %v4607 = vunpack.c.h.b16 %v3608
    %v4608 = vunpack.c.l.b16 %v3609
    %v4609 = vunpack.c.h.b16 %v3609
    %v4610 = vunpack.c.l.b16 %v3610
    %v4611 = vunpack.c.h.b16 %v3610
    %v4612 = vunpack.c.l.b16 %v3611
    %v4613 = vunpack.c.h.b16 %v3611
    %v4614 = vunpack.c.l.b16 %v3612
    %v4615 = vunpack.c.h.b16 %v3612
    %v4616 = vunpack.c.l.b16 %v3613
    %v4617 = vunpack.c.h.b16 %v3613
    %v4618 = vunpack.c.l.b16 %v3614
    %v4619 = vunpack.c.h.b16 %v3614
    %v4620 = vunpack.c.l.b16 %v3615
    %v4621 = vunpack.c.h.b16 %v3615
    %v4622 = vunpack.c.l.b16 %v3616
    %v4623 = vunpack.c.h.b16 %v3616
    %v4624 = vunpack.c.l.b16 %v3617
    %v4625 = vunpack.c.h.b16 %v3617
    %v4626 = vunpack.c.l.b16 %v3618
    %v4627 = vunpack.c.h.b16 %v3618
    %v4628 = vunpack.c.l.b16 %v3619
    %v4629 = vunpack.c.h.b16 %v3619
    %v4630 = vunpack.c.l.b16 %v3620
    %v4631 = vunpack.c.h.b16 %v3620
    %v4632 = vunpack.c.l.b16 %v3621
    %v4633 = vunpack.c.h.b16 %v3621
    %v4634 = vunpack.c.l.b16 %v3622
    %v4635 = vunpack.c.h.b16 %v3622
    %v4636 = vunpack.c.l.b16 %v3623
    %v4637 = vunpack.c.h.b16 %v3623
    %v4638 = vunpack.c.l.b16 %v3624
    %v4639 = vunpack.c.h.b16 %v3624
    %v4640 = vunpack.c.l.b16 %v3625
    %v4641 = vunpack.c.h.b16 %v3625
    %v4642 = vunpack.c.l.b16 %v3626
    %v4643 = vunpack.c.h.b16 %v3626
    %v4644 = vunpack.c.l.b16 %v3627
    %v4645 = vunpack.c.h.b16 %v3627
    %v4646 = vunpack.c.l.b16 %v3628
    %v4647 = vunpack.c.h.b16 %v3628
    %v4648 = vunpack.c.l.b16 %v3629
    %v4649 = vunpack.c.h.b16 %v3629
    %v4650 = vunpack.c.l.b16 %v3630
    %v4651 = vunpack.c.h.b16 %v3630
    %v4652 = vunpack.c.l.b16 %v3631
    %v4653 = vunpack.c.h.b16 %v3631
    %v4654 = vunpack.c.l.b16 %v3632
    %v4655 = vunpack.c.h.b16 %v3632
    %v4656 = vunpack.c.l.b16 %v3633
    %v4657 = vunpack.c.h.b16 %v3633
    %v4658 = vunpack.c.l.b16 %v3634
    %v4659 = vunpack.c.h.b16 %v3634
    %v4660 = vunpack.c.l.b16 %v3635
    %v4661 = vunpack.c.h.b16 %v3635
    %v4662 = vunpack.c.l.b16 %v3636
    %v4663 = vunpack.c.h.b16 %v3636
    %v4664 = vunpack.c.l.b16 %v3637
    %v4665 = vunpack.c.h.b16 %v3637
    %v4666 = vunpack.c.l.b16 %v3638
    %v4667 = vunpack.c.h.b16 %v3638
    %v4668 = vunpack.c.l.b16 %v3639
    %v4669 = vunpack.c.h.b16 %v3639
    %v4670 = vunpack.c.l.b16 %v3640
    %v4671 = vunpack.c.h.b16 %v3640
    %v4672 = vunpack.c.l.b16 %v3641
    %v4673 = vunpack.c.h.b16 %v3641
    %v4674 = vunpack.c.l.b16 %v3642
    %v4675 = vunpack.c.h.b16 %v3642
    %v4676 = vunpack.c.l.b16 %v3643
    %v4677 = vunpack.c.h.b16 %v3643
    %v4678 = vunpack.c.l.b16 %v3644
    %v4679 = vunpack.c.h.b16 %v3644
    %v4680 = vunpack.c.l.b16 %v3645
    %v4681 = vunpack.c.h.b16 %v3645
    %v4682 = vunpack.c.l.b16 %v3646
    %v4683 = vunpack.c.h.b16 %v3646
    %v4684 = vunpack.c.l.b16 %v3647
    %v4685 = vunpack.c.h.b16 %v3647
    %v4686 = vunpack.c.l.b16 %v3648
    %v4687 = vunpack.c.h.b16 %v3648
    %v4688 = vunpack.c.l.b16 %v3649
    %v4689 = vunpack.c.h.b16 %v3649
    %v4690 = vunpack.c.l.b16 %v3650
    %v4691 = vunpack.c.h.b16 %v3650
    %v4692 = vunpack.c.l.b16 %v3651
    %v4693 = vunpack.c.h.b16 %v3651
    %v4694 = vunpack.c.l.b16 %v3652
    %v4695 = vunpack.c.h.b16 %v3652
    %v4696 = vunpack.c.l.b16 %v3653
    %v4697 = vunpack.c.h.b16 %v3653
    %v4698 = vunpack.c.l.b16 %v3654
    %v4699 = vunpack.c.h.b16 %v3654
    %v4700 = vunpack.c.l.b16 %v3655
    %v4701 = vunpack.c.h.b16 %v3655
    %v4702 = vunpack.c.l.b16 %v3656
    %v4703 = vunpack.c.h.b16 %v3656
    %v4704 = vunpack.c.l.b16 %v3657
    %v4705 = vunpack.c.h.b16 %v3657
    %v4706 = vunpack.c.l.b16 %v3658
    %v4707 = vunpack.c.h.b16 %v3658
    %v4708 = vunpack.c.l.b16 %v3659
    %v4709 = vunpack.c.h.b16 %v3659
    %v4710 = vunpack.c.l.b16 %v3660
    %v4711 = vunpack.c.h.b16 %v3660
    %v4712 = vunpack.c.l.b16 %v3661
    %v4713 = vunpack.c.h.b16 %v3661
    %v4714 = vunpack.c.l.b16 %v3662
    %v4715 = vunpack.c.h.b16 %v3662
    %v4716 = vunpack.c.l.b16 %v3663
    %v4717 = vunpack.c.h.b16 %v3663
    %v4718 = vunpack.c.l.b16 %v3664
    %v4719 = vunpack.c.h.b16 %v3664
    %v4720 = vunpack.c.l.b16 %v3665
    %v4721 = vunpack.c.h.b16 %v3665
    %v4722 = vunpack.c.l.b16 %v3666
    %v4723 = vunpack.c.h.b16 %v3666
    %v4724 = vunpack.c.l.b16 %v3667
    %v4725 = vunpack.c.h.b16 %v3667
    %v4726 = vunpack.c.l.b16 %v3668
    %v4727 = vunpack.c.h.b16 %v3668
    %v4728 = vunpack.c.l.b16 %v3669
    %v4729 = vunpack.c.h.b16 %v3669
    %v4730 = vunpack.c.l.b16 %v3670
    %v4731 = vunpack.c.h.b16 %v3670
    %v4732 = vunpack.c.l.b16 %v3671
    %v4733 = vunpack.c.h.b16 %v3671
    %v4734 = vunpack.c.l.b16 %v3672
    %v4735 = vunpack.c.h.b16 %v3672
    %v4736 = vunpack.c.l.b16 %v3673
    %v4737 = vunpack.c.h.b16 %v3673
    %v4738 = vunpack.c.l.b16 %v3674
    %v4739 = vunpack.c.h.b16 %v3674
    %v4740 = vunpack.c.l.b16 %v3675
    %v4741 = vunpack.c.h.b16 %v3675
    %v4742 = vunpack.c.l.b16 %v3676
    %v4743 = vunpack.c.h.b16 %v3676
    %v4744 = vunpack.c.l.b16 %v3677
    %v4745 = vunpack.c.h.b16 %v3677
    %v4746 = vunpack.c.l.b16 %v3678
    %v4747 = vunpack.c.h.b16 %v3678
    %v4748 = vunpack.c.l.b16 %v3679
    %v4749 = vunpack.c.h.b16 %v3679
    %v4750 = vunpack.c.l.b16 %v3680
    %v4751 = vunpack.c.h.b16 %v3680
    %v4752 = vunpack.c.l.b16 %v3681
    %v4753 = vunpack.c.h.b16 %v3681
    %v4754 = vunpack.c.l.b16 %v3682
    %v4755 = vunpack.c.h.b16 %v3682
    %v4756 = vunpack.c.l.b16 %v3683
    %v4757 = vunpack.c.h.b16 %v3683
    %v4758 = vunpack.c.l.b16 %v3684
    %v4759 = vunpack.c.h.b16 %v3684
    %v4760 = vunpack.c.l.b16 %v3685
    %v4761 = vunpack.c.h.b16 %v3685
    %v4762 = vunpack.c.l.b16 %v3686
    %v4763 = vunpack.c.h.b16 %v3686
    %v4764 = vunpack.c.l.b16 %v3687
    %v4765 = vunpack.c.h.b16 %v3687
    %v4766 = vunpack.c.l.b16 %v3688
    %v4767 = vunpack.c.h.b16 %v3688
    %v4768 = vunpack.c.l.b16 %v3689
    %v4769 = vunpack.c.h.b16 %v3689
    %v4770 = vunpack.c.l.b16 %v3690
    %v4771 = vunpack.c.h.b16 %v3690
    %v4772 = vunpack.c.l.b16 %v3691
    %v4773 = vunpack.c.h.b16 %v3691
    %v4774 = vunpack.c.l.b16 %v3692
    %v4775 = vunpack.c.h.b16 %v3692
    %v4776 = vunpack.c.l.b16 %v3693
    %v4777 = vunpack.c.h.b16 %v3693
    %v4778 = vunpack.c.l.b16 %v3694
    %v4779 = vunpack.c.h.b16 %v3694
    %v4780 = vunpack.c.l.b16 %v3695
    %v4781 = vunpack.c.h.b16 %v3695
    %v4782 = vunpack.c.l.b16 %v3696
    %v4783 = vunpack.c.h.b16 %v3696
    %v4784 = vunpack.c.l.b16 %v3697
    %v4785 = vunpack.c.h.b16 %v3697
    %v4786 = vunpack.c.l.b16 %v3698
    %v4787 = vunpack.c.h.b16 %v3698
    %v4788 = vunpack.c.l.b16 %v3699
    %v4789 = vunpack.c.h.b16 %v3699
    %v4790 = vunpack.c.l.b16 %v3700
    %v4791 = vunpack.c.h.b16 %v3700
    %v4792 = vunpack.c.l.b16 %v3701
    %v4793 = vunpack.c.h.b16 %v3701
    %v4794 = vunpack.c.l.b16 %v3702
    %v4795 = vunpack.c.h.b16 %v3702
    %v4796 = vunpack.c.l.b16 %v3703
    %v4797 = vunpack.c.h.b16 %v3703
    %v4798 = vunpack.c.l.b16 %v3704
    %v4799 = vunpack.c.h.b16 %v3704
    %v4800 = vunpack.c.l.b16 %v3705
    %v4801 = vunpack.c.h.b16 %v3705
    %v4802 = vunpack.c.l.b16 %v3706
    %v4803 = vunpack.c.h.b16 %v3706
    %v4804 = vunpack.c.l.b16 %v3707
    %v4805 = vunpack.c.h.b16 %v3707
    %v4806 = vunpack.c.l.b16 %v3708
    %v4807 = vunpack.c.h.b16 %v3708
    %v4808 = vunpack.c.l.b16 %v3709
    %v4809 = vunpack.c.h.b16 %v3709
    %v4810 = vunpack.c.l.b16 %v3710
    %v4811 = vunpack.c.h.b16 %v3710
    %v4812 = vunpack.c.l.b16 %v3711
    %v4813 = vunpack.c.h.b16 %v3711
    %v4814 = vunpack.c.l.b16 %v3712
    %v4815 = vunpack.c.h.b16 %v3712
    %v4816 = vunpack.c.l.b16 %v3713
    %v4817 = vunpack.c.h.b16 %v3713
    %v4818 = vunpack.c.l.b16 %v3714
    %v4819 = vunpack.c.h.b16 %v3714
    %v4820 = vunpack.c.l.b16 %v3715
    %v4821 = vunpack.c.h.b16 %v3715
    %v4822 = vunpack.c.l.b16 %v3716
    %v4823 = vunpack.c.h.b16 %v3716
    %v4824 = vunpack.c.l.b16 %v3717
    %v4825 = vunpack.c.h.b16 %v3717
    %v4826 = vunpack.c.l.b16 %v3718
    %v4827 = vunpack.c.h.b16 %v3718
    %v4828 = vunpack.c.l.b16 %v3719
    %v4829 = vunpack.c.h.b16 %v3719
    %v4830 = vunpack.c.l.b16 %v3720
    %v4831 = vunpack.c.h.b16 %v3720
    %v4832 = vunpack.c.l.b16 %v3721
    %v4833 = vunpack.c.h.b16 %v3721
    %v4834 = vunpack.c.l.b16 %v3722
    %v4835 = vunpack.c.h.b16 %v3722
    %v4836 = vunpack.c.l.b16 %v3723
    %v4837 = vunpack.c.h.b16 %v3723
    %v4838 = vunpack.c.l.b16 %v3724
    %v4839 = vunpack.c.h.b16 %v3724
    %v4840 = vunpack.c.l.b16 %v3725
    %v4841 = vunpack.c.h.b16 %v3725
    %v4842 = vunpack.c.l.b16 %v3726
    %v4843 = vunpack.c.h.b16 %v3726
    %v4844 = vunpack.c.l.b16 %v3727
    %v4845 = vunpack.c.h.b16 %v3727
    %v4846 = vunpack.c.l.b16 %v3728
    %v4847 = vunpack.c.h.b16 %v3728
    %v4848 = vunpack.c.l.b16 %v3729
    %v4849 = vunpack.c.h.b16 %v3729
    %v4850 = vunpack.c.l.b16 %v3730
    %v4851 = vunpack.c.h.b16 %v3730
    %v4852 = vunpack.c.l.b16 %v3731
    %v4853 = vunpack.c.h.b16 %v3731
    %v4854 = vunpack.c.l.b16 %v3732
    %v4855 = vunpack.c.h.b16 %v3732
    %v4856 = vunpack.c.l.b16 %v3733
    %v4857 = vunpack.c.h.b16 %v3733
    %v4858 = vunpack.c.l.b16 %v3734
    %v4859 = vunpack.c.h.b16 %v3734
    %v4860 = vunpack.c.l.b16 %v3735
    %v4861 = vunpack.c.h.b16 %v3735
    %v4862 = vunpack.c.l.b16 %v3736
    %v4863 = vunpack.c.h.b16 %v3736
    %v4864 = vunpack.c.l.b16 %v3737
    %v4865 = vunpack.c.h.b16 %v3737
    %v4866 = vunpack.c.l.b16 %v3738
    %v4867 = vunpack.c.h.b16 %v3738
    %v4868 = vunpack.c.l.b16 %v3739
    %v4869 = vunpack.c.h.b16 %v3739
    %v4870 = vunpack.c.l.b16 %v3740
    %v4871 = vunpack.c.h.b16 %v3740
    %v4872 = vunpack.c.l.b16 %v3741
    %v4873 = vunpack.c.h.b16 %v3741
    %v4874 = vunpack.c.l.b16 %v3742
    %v4875 = vunpack.c.h.b16 %v3742
    %v4876 = vunpack.c.l.b16 %v3743
    %v4877 = vunpack.c.h.b16 %v3743
    %v4878 = vunpack.c.l.b16 %v3744
    %v4879 = vunpack.c.h.b16 %v3744
    %v4880 = vunpack.c.l.b16 %v3745
    %v4881 = vunpack.c.h.b16 %v3745
    %v4882 = vunpack.c.l.b16 %v3746
    %v4883 = vunpack.c.h.b16 %v3746
    %v4884 = vunpack.c.l.b16 %v3747
    %v4885 = vunpack.c.h.b16 %v3747
    %v4886 = vunpack.c.l.b16 %v3748
    %v4887 = vunpack.c.h.b16 %v3748
    %v4888 = vunpack.c.l.b16 %v3749
    %v4889 = vunpack.c.h.b16 %v3749
    %v4890 = vunpack.c.l.b16 %v3750
    %v4891 = vunpack.c.h.b16 %v3750
    %v4892 = vunpack.c.l.b16 %v3751
    %v4893 = vunpack.c.h.b16 %v3751
    %v4894 = vunpack.c.l.b16 %v3752
    %v4895 = vunpack.c.h.b16 %v3752
    %v4896 = vunpack.c.l.b16 %v3753
    %v4897 = vunpack.c.h.b16 %v3753
    %v4898 = vunpack.c.l.b16 %v3754
    %v4899 = vunpack.c.h.b16 %v3754
    %v4900 = vunpack.c.l.b16 %v3755
    %v4901 = vunpack.c.h.b16 %v3755
    %v4902 = vunpack.c.l.b16 %v3756
    %v4903 = vunpack.c.h.b16 %v3756
    %v4904 = vunpack.c.l.b16 %v3757
    %v4905 = vunpack.c.h.b16 %v3757
    %v4906 = vunpack.c.l.b16 %v3758
    %v4907 = vunpack.c.h.b16 %v3758
    %v4908 = vunpack.c.l.b16 %v3759
    %v4909 = vunpack.c.h.b16 %v3759
    %v4910 = vunpack.c.l.b16 %v3760
    %v4911 = vunpack.c.h.b16 %v3760
    %v4912 = vunpack.c.l.b16 %v3761
    %v4913 = vunpack.c.h.b16 %v3761
    %v4914 = vunpack.c.l.b16 %v3762
    %v4915 = vunpack.c.h.b16 %v3762
    %v4916 = vunpack.c.l.b16 %v3763
    %v4917 = vunpack.c.h.b16 %v3763
    %v4918 = vunpack.c.l.b16 %v3764
    %v4919 = vunpack.c.h.b16 %v3764
    %v4920 = vunpack.c.l.b16 %v3765
    %v4921 = vunpack.c.h.b16 %v3765
    %v4922 = vunpack.c.l.b16 %v3766
    %v4923 = vunpack.c.h.b16 %v3766
    %v4924 = vunpack.c.l.b16 %v3767
    %v4925 = vunpack.c.h.b16 %v3767
    %v4926 = vunpack.c.l.b16 %v3768
    %v4927 = vunpack.c.h.b16 %v3768
    %v4928 = vunpack.c.l.b16 %v3769
    %v4929 = vunpack.c.h.b16 %v3769
    %v4930 = vunpack.c.l.b16 %v3770
    %v4931 = vunpack.c.h.b16 %v3770
    %v4932 = vunpack.c.l.b16 %v3771
    %v4933 = vunpack.c.h.b16 %v3771
    %v4934 = vunpack.c.l.b16 %v3772
    %v4935 = vunpack.c.h.b16 %v3772
    %v4936 = vunpack.c.l.b16 %v3773
    %v4937 = vunpack.c.h.b16 %v3773
    %v4938 = vunpack.c.l.b16 %v3774
    %v4939 = vunpack.c.h.b16 %v3774
    %v4940 = vunpack.c.l.b16 %v3775
    %v4941 = vunpack.c.h.b16 %v3775
    %v4942 = vunpack.c.l.b16 %v3776
    %v4943 = vunpack.c.h.b16 %v3776
    %v4944 = vunpack.c.l.b16 %v3777
    %v4945 = vunpack.c.h.b16 %v3777
    %v4946 = vunpack.c.l.b16 %v3778
    %v4947 = vunpack.c.h.b16 %v3778
    %v4948 = vunpack.c.l.b16 %v3779
    %v4949 = vunpack.c.h.b16 %v3779
    %v4950 = vunpack.c.l.b16 %v3780
    %v4951 = vunpack.c.h.b16 %v3780
    %v4952 = vunpack.c.l.b16 %v3781
    %v4953 = vunpack.c.h.b16 %v3781
    %v4954 = vunpack.c.l.b16 %v3782
    %v4955 = vunpack.c.h.b16 %v3782
    %v4956 = vunpack.c.l.b16 %v3783
    %v4957 = vunpack.c.h.b16 %v3783
    %v4958 = vunpack.c.l.b16 %v3784
    %v4959 = vunpack.c.h.b16 %v3784
    %v4960 = vunpack.c.l.b16 %v3785
    %v4961 = vunpack.c.h.b16 %v3785
    %v4962 = vunpack.c.l.b16 %v3786
    %v4963 = vunpack.c.h.b16 %v3786
    %v4964 = vunpack.c.l.b16 %v3787
    %v4965 = vunpack.c.h.b16 %v3787
    %v4966 = vunpack.c.l.b16 %v3788
    %v4967 = vunpack.c.h.b16 %v3788
    %v4968 = vunpack.c.l.b16 %v3789
    %v4969 = vunpack.c.h.b16 %v3789
    %v4970 = vpack.c.b16 %v4214, %v4202
    %v4971 = vpack.c.b16 %v4215, %v4203
    %v4972 = vpack.c.b16 %v4216, %v4204
    %v4973 = vpack.c.b16 %v4217, %v4205
    %v4974 = vpack.c.b16 %v4218, %v4206
    %v4975 = vpack.c.b16 %v4219, %v4207
    %v4976 = vpack.c.b16 %v4220, %v4208
    %v4977 = vpack.c.b16 %v4221, %v4209
    %v4978 = vpack.c.b16 %v4222, %v4210
    %v4979 = vpack.c.b16 %v4223, %v4211
    %v4980 = vpack.c.b16 %v4224, %v4212
    %v4981 = vpack.c.b16 %v4225, %v4213
    %v4982 = vpack.c.b16 %v4238, %v4226
    %v4983 = vpack.c.b16 %v4239, %v4227
    %v4984 = vpack.c.b16 %v4240, %v4228
    %v4985 = vpack.c.b16 %v4241, %v4229
    %v4986 = vpack.c.b16 %v4242, %v4230
    %v4987 = vpack.c.b16 %v4243, %v4231
    %v4988 = vpack.c.b16 %v4244, %v4232
    %v4989 = vpack.c.b16 %v4245, %v4233
    %v4990 = vpack.c.b16 %v4246, %v4234
    %v4991 = vpack.c.b16 %v4247, %v4235
    %v4992 = vpack.c.b16 %v4248, %v4236
    %v4993 = vpack.c.b16 %v4249, %v4237
    %v4994 = vpack.c.b16 %v4262, %v4250
    %v4995 = vpack.c.b16 %v4263, %v4251
    %v4996 = vpack.c.b16 %v4264, %v4252
    %v4997 = vpack.c.b16 %v4265, %v4253
    %v4998 = vpack.c.b16 %v4266, %v4254
    %v4999 = vpack.c.b16 %v4267, %v4255
    %v5000 = vpack.c.b16 %v4268, %v4256
    %v5001 = vpack.c.b16 %v4269, %v4257
    %v5002 = vpack.c.b16 %v4270, %v4258
    %v5003 = vpack.c.b16 %v4271, %v4259
    %v5004 = vpack.c.b16 %v4272, %v4260
    %v5005 = vpack.c.b16 %v4273, %v4261
    %v5006 = vpack.c.b16 %v4286, %v4274
    %v5007 = vpack.c.b16 %v4287, %v4275
    %v5008 = vpack.c.b16 %v4288, %v4276
    %v5009 = vpack.c.b16 %v4289, %v4277
    %v5010 = vpack.c.b16 %v4290, %v4278
    %v5011 = vpack.c.b16 %v4291, %v4279
    %v5012 = vpack.c.b16 %v4292, %v4280
    %v5013 = vpack.c.b16 %v4293, %v4281
    %v5014 = vpack.c.b16 %v4294, %v4282
    %v5015 = vpack.c.b16 %v4295, %v4283
    %v5016 = vpack.c.b16 %v4296, %v4284
    %v5017 = vpack.c.b16 %v4297, %v4285
    %v5018 = vpack.c.b16 %v4310, %v4298
    %v5019 = vpack.c.b16 %v4311, %v4299
    %v5020 = vpack.c.b16 %v4312, %v4300
    %v5021 = vpack.c.b16 %v4313, %v4301
    %v5022 = vpack.c.b16 %v4314, %v4302
    %v5023 = vpack.c.b16 %v4315, %v4303
    %v5024 = vpack.c.b16 %v4316, %v4304
    %v5025 = vpack.c.b16 %v4317, %v4305
    %v5026 = vpack.c.b16 %v4318, %v4306
    %v5027 = vpack.c.b16 %v4319, %v4307
    %v5028 = vpack.c.b16 %v4320, %v4308
    %v5029 = vpack.c.b16 %v4321, %v4309
    %v5030 = vpack.c.b16 %v4334, %v4322
    %v5031 = vpack.c.b16 %v4335, %v4323
    %v5032 = vpack.c.b16 %v4336, %v4324
    %v5033 = vpack.c.b16 %v4337, %v4325
    %v5034 = vpack.c.b16 %v4338, %v4326
    %v5035 = vpack.c.b16 %v4339, %v4327
    %v5036 = vpack.c.b16 %v4340, %v4328
    %v5037 = vpack.c.b16 %v4341, %v4329
    %v5038 = vpack.c.b16 %v4342, %v4330
    %v5039 = vpack.c.b16 %v4343, %v4331
    %v5040 = vpack.c.b16 %v4344, %v4332
    %v5041 = vpack.c.b16 %v4345, %v4333
    %v5042 = vpack.c.b16 %v4358, %v4346
    %v5043 = vpack.c.b16 %v4359, %v4347
    %v5044 = vpack.c.b16 %v4360, %v4348
    %v5045 = vpack.c.b16 %v4361, %v4349
    %v5046 = vpack.c.b16 %v4362, %v4350
    %v5047 = vpack.c.b16 %v4363, %v4351
    %v5048 = vpack.c.b16 %v4364, %v4352
    %v5049 = vpack.c.b16 %v4365, %v4353
    %v5050 = vpack.c.b16 %v4366, %v4354
    %v5051 = vpack.c.b16 %v4367, %v4355
    %v5052 = vpack.c.b16 %v4368, %v4356
    %v5053 = vpack.c.b16 %v4369, %v4357
    %v5054 = vpack.c.b16 %v4382, %v4370
    %v5055 = vpack.c.b16 %v4383, %v4371
    %v5056 = vpack.c.b16 %v4384, %v4372
    %v5057 = vpack.c.b16 %v4385, %v4373
    %v5058 = vpack.c.b16 %v4386, %v4374
    %v5059 = vpack.c.b16 %v4387, %v4375
    %v5060 = vpack.c.b16 %v4388, %v4376
    %v5061 = vpack.c.b16 %v4389, %v4377
    %v5062 = vpack.c.b16 %v4390, %v4378
    %v5063 = vpack.c.b16 %v4391, %v4379
    %v5064 = vpack.c.b16 %v4392, %v4380
    %v5065 = vpack.c.b16 %v4393, %v4381
    %v5066 = vpack.c.b16 %v4406, %v4394
    %v5067 = vpack.c.b16 %v4407, %v4395
    %v5068 = vpack.c.b16 %v4408, %v4396
    %v5069 = vpack.c.b16 %v4409, %v4397
    %v5070 = vpack.c.b16 %v4410, %v4398
    %v5071 = vpack.c.b16 %v4411, %v4399
    %v5072 = vpack.c.b16 %v4412, %v4400
    %v5073 = vpack.c.b16 %v4413, %v4401
    %v5074 = vpack.c.b16 %v4414, %v4402
    %v5075 = vpack.c.b16 %v4415, %v4403
    %v5076 = vpack.c.b16 %v4416, %v4404
    %v5077 = vpack.c.b16 %v4417, %v4405
    %v5078 = vpack.c.b16 %v4430, %v4418
    %v5079 = vpack.c.b16 %v4431, %v4419
    %v5080 = vpack.c.b16 %v4432, %v4420
    %v5081 = vpack.c.b16 %v4433, %v4421
    %v5082 = vpack.c.b16 %v4434, %v4422
    %v5083 = vpack.c.b16 %v4435, %v4423
    %v5084 = vpack.c.b16 %v4436, %v4424
    %v5085 = vpack.c.b16 %v4437, %v4425
    %v5086 = vpack.c.b16 %v4438, %v4426
    %v5087 = vpack.c.b16 %v4439, %v4427
    %v5088 = vpack.c.b16 %v4440, %v4428
    %v5089 = vpack.c.b16 %v4441, %v4429
    %v5090 = vpack.c.b16 %v4454, %v4442
    %v5091 = vpack.c.b16 %v4455, %v4443
    %v5092 = vpack.c.b16 %v4456, %v4444
    %v5093 = vpack.c.b16 %v4457, %v4445
    %v5094 = vpack.c.b16 %v4458, %v4446
    %v5095 = vpack.c.b16 %v4459, %v4447
    %v5096 = vpack.c.b16 %v4460, %v4448
    %v5097 = vpack.c.b16 %v4461, %v4449
    %v5098 = vpack.c.b16 %v4462, %v4450
    %v5099 = vpack.c.b16 %v4463, %v4451
    %v5100 = vpack.c.b16 %v4464, %v4452
    %v5101 = vpack.c.b16 %v4465, %v4453
    %v5102 = vpack.c.b16 %v4478, %v4466
    %v5103 = vpack.c.b16 %v4479, %v4467
    %v5104 = vpack.c.b16 %v4480, %v4468
    %v5105 = vpack.c.b16 %v4481, %v4469
    %v5106 = vpack.c.b16 %v4482, %v4470
    %v5107 = vpack.c.b16 %v4483, %v4471
    %v5108 = vpack.c.b16 %v4484, %v4472
    %v5109 = vpack.c.b16 %v4485, %v4473
    %v5110 = vpack.c.b16 %v4486, %v4474
    %v5111 = vpack.c.b16 %v4487, %v4475
    %v5112 = vpack.c.b16 %v4488, %v4476
    %v5113 = vpack.c.b16 %v4489, %v4477
    %v5114 = vpack.c.b16 %v4502, %v4490
    %v5115 = vpack.c.b16 %v4503, %v4491
    %v5116 = vpack.c.b16 %v4504, %v4492
    %v5117 = vpack.c.b16 %v4505, %v4493
    %v5118 = vpack.c.b16 %v4506, %v4494
    %v5119 = vpack.c.b16 %v4507, %v4495
    %v5120 = vpack.c.b16 %v4508, %v4496
    %v5121 = vpack.c.b16 %v4509, %v4497
    %v5122 = vpack.c.b16 %v4510, %v4498
    %v5123 = vpack.c.b16 %v4511, %v4499
    %v5124 = vpack.c.b16 %v4512, %v4500
    %v5125 = vpack.c.b16 %v4513, %v4501
    %v5126 = vpack.c.b16 %v4526, %v4514
    %v5127 = vpack.c.b16 %v4527, %v4515
    %v5128 = vpack.c.b16 %v4528, %v4516
    %v5129 = vpack.c.b16 %v4529, %v4517
    %v5130 = vpack.c.b16 %v4530, %v4518
    %v5131 = vpack.c.b16 %v4531, %v4519
    %v5132 = vpack.c.b16 %v4532, %v4520
    %v5133 = vpack.c.b16 %v4533, %v4521
    %v5134 = vpack.c.b16 %v4534, %v4522
    %v5135 = vpack.c.b16 %v4535, %v4523
    %v5136 = vpack.c.b16 %v4536, %v4524
    %v5137 = vpack.c.b16 %v4537, %v4525
    %v5138 = vpack.c.b16 %v4550, %v4538
    %v5139 = vpack.c.b16 %v4551, %v4539
    %v5140 = vpack.c.b16 %v4552, %v4540
    %v5141 = vpack.c.b16 %v4553, %v4541
    %v5142 = vpack.c.b16 %v4554, %v4542
    %v5143 = vpack.c.b16 %v4555, %v4543
    %v5144 = vpack.c.b16 %v4556, %v4544
    %v5145 = vpack.c.b16 %v4557, %v4545
    %v5146 = vpack.c.b16 %v4558, %v4546
    %v5147 = vpack.c.b16 %v4559, %v4547
    %v5148 = vpack.c.b16 %v4560, %v4548
    %v5149 = vpack.c.b16 %v4561, %v4549
    %v5150 = vpack.c.b16 %v4574, %v4562
    %v5151 = vpack.c.b16 %v4575, %v4563
    %v5152 = vpack.c.b16 %v4576, %v4564
    %v5153 = vpack.c.b16 %v4577, %v4565
    %v5154 = vpack.c.b16 %v4578, %v4566
    %v5155 = vpack.c.b16 %v4579, %v4567
    %v5156 = vpack.c.b16 %v4580, %v4568
    %v5157 = vpack.c.b16 %v4581, %v4569
    %v5158 = vpack.c.b16 %v4582, %v4570
    %v5159 = vpack.c.b16 %v4583, %v4571
    %v5160 = vpack.c.b16 %v4584, %v4572
    %v5161 = vpack.c.b16 %v4585, %v4573
    %v5162 = vpack.c.b16 %v4598, %v4586
    %v5163 = vpack.c.b16 %v4599, %v4587
    %v5164 = vpack.c.b16 %v4600, %v4588
    %v5165 = vpack.c.b16 %v4601, %v4589
    %v5166 = vpack.c.b16 %v4602, %v4590
    %v5167 = vpack.c.b16 %v4603, %v4591
    %v5168 = vpack.c.b16 %v4604, %v4592
    %v5169 = vpack.c.b16 %v4605, %v4593
    %v5170 = vpack.c.b16 %v4606, %v4594
    %v5171 = vpack.c.b16 %v4607, %v4595
    %v5172 = vpack.c.b16 %v4608, %v4596
    %v5173 = vpack.c.b16 %v4609, %v4597
    %v5174 = vpack.c.b16 %v4622, %v4610
    %v5175 = vpack.c.b16 %v4623, %v4611
    %v5176 = vpack.c.b16 %v4624, %v4612
    %v5177 = vpack.c.b16 %v4625, %v4613
    %v5178 = vpack.c.b16 %v4626, %v4614
    %v5179 = vpack.c.b16 %v4627, %v4615
    %v5180 = vpack.c.b16 %v4628, %v4616
    %v5181 = vpack.c.b16 %v4629, %v4617
    %v5182 = vpack.c.b16 %v4630, %v4618
    %v5183 = vpack.c.b16 %v4631, %v4619
    %v5184 = vpack.c.b16 %v4632, %v4620
    %v5185 = vpack.c.b16 %v4633, %v4621
    %v5186 = vpack.c.b16 %v4646, %v4634
    %v5187 = vpack.c.b16 %v4647, %v4635
    %v5188 = vpack.c.b16 %v4648, %v4636
    %v5189 = vpack.c.b16 %v4649, %v4637
    %v5190 = vpack.c.b16 %v4650, %v4638
    %v5191 = vpack.c.b16 %v4651, %v4639
    %v5192 = vpack.c.b16 %v4652, %v4640
    %v5193 = vpack.c.b16 %v4653, %v4641
    %v5194 = vpack.c.b16 %v4654, %v4642
    %v5195 = vpack.c.b16 %v4655, %v4643
    %v5196 = vpack.c.b16 %v4656, %v4644
    %v5197 = vpack.c.b16 %v4657, %v4645
    %v5198 = vpack.c.b16 %v4670, %v4658
    %v5199 = vpack.c.b16 %v4671, %v4659
    %v5200 = vpack.c.b16 %v4672, %v4660
    %v5201 = vpack.c.b16 %v4673, %v4661
    %v5202 = vpack.c.b16 %v4674, %v4662
    %v5203 = vpack.c.b16 %v4675, %v4663
    %v5204 = vpack.c.b16 %v4676, %v4664
    %v5205 = vpack.c.b16 %v4677, %v4665
    %v5206 = vpack.c.b16 %v4678, %v4666
    %v5207 = vpack.c.b16 %v4679, %v4667
    %v5208 = vpack.c.b16 %v4680, %v4668
    %v5209 = vpack.c.b16 %v4681, %v4669
    %v5210 = vpack.c.b16 %v4694, %v4682
    %v5211 = vpack.c.b16 %v4695, %v4683
    %v5212 = vpack.c.b16 %v4696, %v4684
    %v5213 = vpack.c.b16 %v4697, %v4685
    %v5214 = vpack.c.b16 %v4698, %v4686
    %v5215 = vpack.c.b16 %v4699, %v4687
    %v5216 = vpack.c.b16 %v4700, %v4688
    %v5217 = vpack.c.b16 %v4701, %v4689
    %v5218 = vpack.c.b16 %v4702, %v4690
    %v5219 = vpack.c.b16 %v4703, %v4691
    %v5220 = vpack.c.b16 %v4704, %v4692
    %v5221 = vpack.c.b16 %v4705, %v4693
    %v5222 = vpack.c.b16 %v4718, %v4706
    %v5223 = vpack.c.b16 %v4719, %v4707
    %v5224 = vpack.c.b16 %v4720, %v4708
    %v5225 = vpack.c.b16 %v4721, %v4709
    %v5226 = vpack.c.b16 %v4722, %v4710
    %v5227 = vpack.c.b16 %v4723, %v4711
    %v5228 = vpack.c.b16 %v4724, %v4712
    %v5229 = vpack.c.b16 %v4725, %v4713
    %v5230 = vpack.c.b16 %v4726, %v4714
    %v5231 = vpack.c.b16 %v4727, %v4715
    %v5232 = vpack.c.b16 %v4728, %v4716
    %v5233 = vpack.c.b16 %v4729, %v4717
    %v5234 = vpack.c.b16 %v4742, %v4730
    %v5235 = vpack.c.b16 %v4743, %v4731
    %v5236 = vpack.c.b16 %v4744, %v4732
    %v5237 = vpack.c.b16 %v4745, %v4733
    %v5238 = vpack.c.b16 %v4746, %v4734
    %v5239 = vpack.c.b16 %v4747, %v4735
    %v5240 = vpack.c.b16 %v4748, %v4736
    %v5241 = vpack.c.b16 %v4749, %v4737
    %v5242 = vpack.c.b16 %v4750, %v4738
    %v5243 = vpack.c.b16 %v4751, %v4739
    %v5244 = vpack.c.b16 %v4752, %v4740
    %v5245 = vpack.c.b16 %v4753, %v4741
    %v5246 = vpack.c.b16 %v4766, %v4754
    %v5247 = vpack.c.b16 %v4767, %v4755
    %v5248 = vpack.c.b16 %v4768, %v4756
    %v5249 = vpack.c.b16 %v4769, %v4757
    %v5250 = vpack.c.b16 %v4770, %v4758
    %v5251 = vpack.c.b16 %v4771, %v4759
    %v5252 = vpack.c.b16 %v4772, %v4760
    %v5253 = vpack.c.b16 %v4773, %v4761
    %v5254 = vpack.c.b16 %v4774, %v4762
    %v5255 = vpack.c.b16 %v4775, %v4763
    %v5256 = vpack.c.b16 %v4776, %v4764
    %v5257 = vpack.c.b16 %v4777, %v4765
    %v5258 = vpack.c.b16 %v4790, %v4778
    %v5259 = vpack.c.b16 %v4791, %v4779
    %v5260 = vpack.c.b16 %v4792, %v4780
    %v5261 = vpack.c.b16 %v4793, %v4781
    %v5262 = vpack.c.b16 %v4794, %v4782
    %v5263 = vpack.c.b16 %v4795, %v4783
    %v5264 = vpack.c.b16 %v4796, %v4784
    %v5265 = vpack.c.b16 %v4797, %v4785
    %v5266 = vpack.c.b16 %v4798, %v4786
    %v5267 = vpack.c.b16 %v4799, %v4787
    %v5268 = vpack.c.b16 %v4800, %v4788
    %v5269 = vpack.c.b16 %v4801, %v4789
    %v5270 = vpack.c.b16 %v4814, %v4802
    %v5271 = vpack.c.b16 %v4815, %v4803
    %v5272 = vpack.c.b16 %v4816, %v4804
    %v5273 = vpack.c.b16 %v4817, %v4805
    %v5274 = vpack.c.b16 %v4818, %v4806
    %v5275 = vpack.c.b16 %v4819, %v4807
    %v5276 = vpack.c.b16 %v4820, %v4808
    %v5277 = vpack.c.b16 %v4821, %v4809
    %v5278 = vpack.c.b16 %v4822, %v4810
    %v5279 = vpack.c.b16 %v4823, %v4811
    %v5280 = vpack.c.b16 %v4824, %v4812
    %v5281 = vpack.c.b16 %v4825, %v4813
    %v5282 = vpack.c.b16 %v4838, %v4826
    %v5283 = vpack.c.b16 %v4839, %v4827
    %v5284 = vpack.c.b16 %v4840, %v4828
    %v5285 = vpack.c.b16 %v4841, %v4829
    %v5286 = vpack.c.b16 %v4842, %v4830
    %v5287 = vpack.c.b16 %v4843, %v4831
    %v5288 = vpack.c.b16 %v4844, %v4832
    %v5289 = vpack.c.b16 %v4845, %v4833
    %v5290 = vpack.c.b16 %v4846, %v4834
    %v5291 = vpack.c.b16 %v4847, %v4835
    %v5292 = vpack.c.b16 %v4848, %v4836
    %v5293 = vpack.c.b16 %v4849, %v4837
    %v5294 = vpack.c.b16 %v4862, %v4850
    %v5295 = vpack.c.b16 %v4863, %v4851
    %v5296 = vpack.c.b16 %v4864, %v4852
    %v5297 = vpack.c.b16 %v4865, %v4853
    %v5298 = vpack.c.b16 %v4866, %v4854
    %v5299 = vpack.c.b16 %v4867, %v4855
    %v5300 = vpack.c.b16 %v4868, %v4856
    %v5301 = vpack.c.b16 %v4869, %v4857
    %v5302 = vpack.c.b16 %v4870, %v4858
    %v5303 = vpack.c.b16 %v4871, %v4859
    %v5304 = vpack.c.b16 %v4872, %v4860
    %v5305 = vpack.c.b16 %v4873, %v4861
    %v5306 = vpack.c.b16 %v4886, %v4874
    %v5307 = vpack.c.b16 %v4887, %v4875
    %v5308 = vpack.c.b16 %v4888, %v4876
    %v5309 = vpack.c.b16 %v4889, %v4877
    %v5310 = vpack.c.b16 %v4890, %v4878
    %v5311 = vpack.c.b16 %v4891, %v4879
    %v5312 = vpack.c.b16 %v4892, %v4880
    %v5313 = vpack.c.b16 %v4893, %v4881
    %v5314 = vpack.c.b16 %v4894, %v4882
    %v5315 = vpack.c.b16 %v4895, %v4883
    %v5316 = vpack.c.b16 %v4896, %v4884
    %v5317 = vpack.c.b16 %v4897, %v4885
    %v5318 = vpack.c.b16 %v4910, %v4898
    %v5319 = vpack.c.b16 %v4911, %v4899
    %v5320 = vpack.c.b16 %v4912, %v4900
    %v5321 = vpack.c.b16 %v4913, %v4901
    %v5322 = vpack.c.b16 %v4914, %v4902
    %v5323 = vpack.c.b16 %v4915, %v4903
    %v5324 = vpack.c.b16 %v4916, %v4904
    %v5325 = vpack.c.b16 %v4917, %v4905
    %v5326 = vpack.c.b16 %v4918, %v4906
    %v5327 = vpack.c.b16 %v4919, %v4907
    %v5328 = vpack.c.b16 %v4920, %v4908
    %v5329 = vpack.c.b16 %v4921, %v4909
    %v5330 = vpack.c.b16 %v4934, %v4922
    %v5331 = vpack.c.b16 %v4935, %v4923
    %v5332 = vpack.c.b16 %v4936, %v4924
    %v5333 = vpack.c.b16 %v4937, %v4925
    %v5334 = vpack.c.b16 %v4938, %v4926
    %v5335 = vpack.c.b16 %v4939, %v4927
    %v5336 = vpack.c.b16 %v4940, %v4928
    %v5337 = vpack.c.b16 %v4941, %v4929
    %v5338 = vpack.c.b16 %v4942, %v4930
    %v5339 = vpack.c.b16 %v4943, %v4931
    %v5340 = vpack.c.b16 %v4944, %v4932
    %v5341 = vpack.c.b16 %v4945, %v4933
    %v5342 = vpack.c.b16 %v4958, %v4946
    %v5343 = vpack.c.b16 %v4959, %v4947
    %v5344 = vpack.c.b16 %v4960, %v4948
    %v5345 = vpack.c.b16 %v4961, %v4949
    %v5346 = vpack.c.b16 %v4962, %v4950
    %v5347 = vpack.c.b16 %v4963, %v4951
    %v5348 = vpack.c.b16 %v4964, %v4952
    %v5349 = vpack.c.b16 %v4965, %v4953
    %v5350 = vpack.c.b16 %v4966, %v4954
    %v5351 = vpack.c.b16 %v4967, %v4955
    %v5352 = vpack.c.b16 %v4968, %v4956
    %v5353 = vpack.c.b16 %v4969, %v4957
    %5738 = vmatpush.bf16.msra.mxu0 %v5054
    %5739 = vmatpush.bf16.msra.mxu0 %v5042
    %5740 = vmatpush.bf16.msra.mxu0 %v5030
    %5741 = vmatpush.bf16.msra.mxu0 %v5018
    %5742 = vmatpush.bf16.msra.mxu0 %v5006
    %5743 = vmatpush.bf16.msra.mxu0 %v4994
    %5744 = vmatpush.bf16.msra.mxu0 %v4982
    %5745 = vmatpush.bf16.msra.mxu0 %v4970
    %5746 = vmatmul.bf16.gmra.mxu0 %v3402
    %v5747 = vpop.f32.mrf.mxu0
    %v5748 = vadd.f32 %v3794, %v5747
    %v5749 = vpop.f32.mrf.mxu0
    %5750 = vdwg.mxu0
    %5751 = vmatpush.bf16.msra.mxu0 %v5150
    %5752 = vmatpush.bf16.msra.mxu0 %v5138
    %5753 = vmatpush.bf16.msra.mxu0 %v5126
    %5754 = vmatpush.bf16.msra.mxu0 %v5114
    %5755 = vmatpush.bf16.msra.mxu0 %v5102
    %5756 = vmatpush.bf16.msra.mxu0 %v5090
    %5757 = vmatpush.bf16.msra.mxu0 %v5078
    %5758 = vmatpush.bf16.msra.mxu0 %v5066
    %5759 = vmatmul.bf16.gmra.mxu0 %v3403
    %v5760 = vpop.f32.mrf.mxu0
    %v5761 = vadd.f32 %v5748, %v5760
    %v5762 = vpop.f32.mrf.mxu0
    %5763 = vdwg.mxu0
    %5764 = vmatpush.bf16.msra.mxu0 %v5246
    %5765 = vmatpush.bf16.msra.mxu0 %v5234
    %5766 = vmatpush.bf16.msra.mxu0 %v5222
    %5767 = vmatpush.bf16.msra.mxu0 %v5210
    %5768 = vmatpush.bf16.msra.mxu0 %v5198
    %5769 = vmatpush.bf16.msra.mxu0 %v5186
    %5770 = vmatpush.bf16.msra.mxu0 %v5174
    %5771 = vmatpush.bf16.msra.mxu0 %v5162
    %5772 = vmatmul.bf16.gmra.mxu0 %v3404
    %v5773 = vpop.f32.mrf.mxu0
    %v5774 = vadd.f32 %v5761, %v5773
    %v5775 = vpop.f32.mrf.mxu0
    %5776 = vdwg.mxu0
    %5777 = vmatpush.bf16.msra.mxu0 %v5342
    %5778 = vmatpush.bf16.msra.mxu0 %v5330
    %5779 = vmatpush.bf16.msra.mxu0 %v5318
    %5780 = vmatpush.bf16.msra.mxu0 %v5306
    %5781 = vmatpush.bf16.msra.mxu0 %v5294
    %5782 = vmatpush.bf16.msra.mxu0 %v5282
    %5783 = vmatpush.bf16.msra.mxu0 %v5270
    %5784 = vmatpush.bf16.msra.mxu0 %v5258
    %5785 = vmatmul.bf16.gmra.mxu0 %v3405
    %v5786 = vpop.f32.mrf.mxu0
    %v5787 = vadd.f32 %v5774, %v5786
    %v5788 = vpop.f32.mrf.mxu0
    %5789 = vdwg.mxu0
    %5790 = vmatpush.bf16.msra.mxu0 %v5055
    %5791 = vmatpush.bf16.msra.mxu0 %v5043
    %5792 = vmatpush.bf16.msra.mxu0 %v5031
    %5793 = vmatpush.bf16.msra.mxu0 %v5019
    %5794 = vmatpush.bf16.msra.mxu0 %v5007
    %5795 = vmatpush.bf16.msra.mxu0 %v4995
    %5796 = vmatpush.bf16.msra.mxu0 %v4983
    %5797 = vmatpush.bf16.msra.mxu0 %v4971
    %5798 = vmatmul.bf16.gmra.mxu0 %v3402
    %v5799 = vpop.f32.mrf.mxu0
    %v5800 = vadd.f32 %v3795, %v5799
    %v5801 = vpop.f32.mrf.mxu0
    %5802 = vdwg.mxu0
    %5803 = vmatpush.bf16.msra.mxu0 %v5151
    %5804 = vmatpush.bf16.msra.mxu0 %v5139
    %5805 = vmatpush.bf16.msra.mxu0 %v5127
    %5806 = vmatpush.bf16.msra.mxu0 %v5115
    %5807 = vmatpush.bf16.msra.mxu0 %v5103
    %5808 = vmatpush.bf16.msra.mxu0 %v5091
    %5809 = vmatpush.bf16.msra.mxu0 %v5079
    %5810 = vmatpush.bf16.msra.mxu0 %v5067
    %5811 = vmatmul.bf16.gmra.mxu0 %v3403
    %v5812 = vpop.f32.mrf.mxu0
    %v5813 = vadd.f32 %v5800, %v5812
    %v5814 = vpop.f32.mrf.mxu0
    %5815 = vdwg.mxu0
    %5816 = vmatpush.bf16.msra.mxu0 %v5247
    %5817 = vmatpush.bf16.msra.mxu0 %v5235
    %5818 = vmatpush.bf16.msra.mxu0 %v5223
    %5819 = vmatpush.bf16.msra.mxu0 %v5211
    %5820 = vmatpush.bf16.msra.mxu0 %v5199
    %5821 = vmatpush.bf16.msra.mxu0 %v5187
    %5822 = vmatpush.bf16.msra.mxu0 %v5175
    %5823 = vmatpush.bf16.msra.mxu0 %v5163
    %5824 = vmatmul.bf16.gmra.mxu0 %v3404
    %v5825 = vpop.f32.mrf.mxu0
    %v5826 = vadd.f32 %v5813, %v5825
    %v5827 = vpop.f32.mrf.mxu0
    %5828 = vdwg.mxu0
    %5829 = vmatpush.bf16.msra.mxu0 %v5343
    %5830 = vmatpush.bf16.msra.mxu0 %v5331
    %5831 = vmatpush.bf16.msra.mxu0 %v5319
    %5832 = vmatpush.bf16.msra.mxu0 %v5307
    %5833 = vmatpush.bf16.msra.mxu0 %v5295
    %5834 = vmatpush.bf16.msra.mxu0 %v5283
    %5835 = vmatpush.bf16.msra.mxu0 %v5271
    %5836 = vmatpush.bf16.msra.mxu0 %v5259
    %5837 = vmatmul.bf16.gmra.mxu0 %v3405
    %v5838 = vpop.f32.mrf.mxu0
    %v5839 = vadd.f32 %v5826, %v5838
    %v5840 = vpop.f32.mrf.mxu0
    %5841 = vdwg.mxu0
    %5842 = vmatpush.bf16.msra.mxu0 %v5056
    %5843 = vmatpush.bf16.msra.mxu0 %v5044
    %5844 = vmatpush.bf16.msra.mxu0 %v5032
    %5845 = vmatpush.bf16.msra.mxu0 %v5020
    %5846 = vmatpush.bf16.msra.mxu0 %v5008
    %5847 = vmatpush.bf16.msra.mxu0 %v4996
    %5848 = vmatpush.bf16.msra.mxu0 %v4984
    %5849 = vmatpush.bf16.msra.mxu0 %v4972
    %5850 = vmatmul.bf16.gmra.mxu0 %v3402
    %v5851 = vpop.f32.mrf.mxu0
    %v5852 = vadd.f32 %v3796, %v5851
    %v5853 = vpop.f32.mrf.mxu0
    %5854 = vdwg.mxu0
    %5855 = vmatpush.bf16.msra.mxu0 %v5152
    %5856 = vmatpush.bf16.msra.mxu0 %v5140
    %5857 = vmatpush.bf16.msra.mxu0 %v5128
    %5858 = vmatpush.bf16.msra.mxu0 %v5116
    %5859 = vmatpush.bf16.msra.mxu0 %v5104
    %5860 = vmatpush.bf16.msra.mxu0 %v5092
    %5861 = vmatpush.bf16.msra.mxu0 %v5080
    %5862 = vmatpush.bf16.msra.mxu0 %v5068
    %5863 = vmatmul.bf16.gmra.mxu0 %v3403
    %v5864 = vpop.f32.mrf.mxu0
    %v5865 = vadd.f32 %v5852, %v5864
    %v5866 = vpop.f32.mrf.mxu0
    %5867 = vdwg.mxu0
    %5868 = vmatpush.bf16.msra.mxu0 %v5248
    %5869 = vmatpush.bf16.msra.mxu0 %v5236
    %5870 = vmatpush.bf16.msra.mxu0 %v5224
    %5871 = vmatpush.bf16.msra.mxu0 %v5212
    %5872 = vmatpush.bf16.msra.mxu0 %v5200
    %5873 = vmatpush.bf16.msra.mxu0 %v5188
    %5874 = vmatpush.bf16.msra.mxu0 %v5176
    %5875 = vmatpush.bf16.msra.mxu0 %v5164
    %5876 = vmatmul.bf16.gmra.mxu0 %v3404
    %v5877 = vpop.f32.mrf.mxu0
    %v5878 = vadd.f32 %v5865, %v5877
    %v5879 = vpop.f32.mrf.mxu0
    %5880 = vdwg.mxu0
    %5881 = vmatpush.bf16.msra.mxu0 %v5344
    %5882 = vmatpush.bf16.msra.mxu0 %v5332
    %5883 = vmatpush.bf16.msra.mxu0 %v5320
    %5884 = vmatpush.bf16.msra.mxu0 %v5308
    %5885 = vmatpush.bf16.msra.mxu0 %v5296
    %5886 = vmatpush.bf16.msra.mxu0 %v5284
    %5887 = vmatpush.bf16.msra.mxu0 %v5272
    %5888 = vmatpush.bf16.msra.mxu0 %v5260
    %5889 = vmatmul.bf16.gmra.mxu0 %v3405
    %v5890 = vpop.f32.mrf.mxu0
    %v5891 = vadd.f32 %v5878, %v5890
    %v5892 = vpop.f32.mrf.mxu0
    %5893 = vdwg.mxu0
    %5894 = vmatpush.bf16.msra.mxu0 %v5057
    %5895 = vmatpush.bf16.msra.mxu0 %v5045
    %5896 = vmatpush.bf16.msra.mxu0 %v5033
    %5897 = vmatpush.bf16.msra.mxu0 %v5021
    %5898 = vmatpush.bf16.msra.mxu0 %v5009
    %5899 = vmatpush.bf16.msra.mxu0 %v4997
    %5900 = vmatpush.bf16.msra.mxu0 %v4985
    %5901 = vmatpush.bf16.msra.mxu0 %v4973
    %5902 = vmatmul.bf16.gmra.mxu0 %v3402
    %v5903 = vpop.f32.mrf.mxu0
    %v5904 = vadd.f32 %v3797, %v5903
    %v5905 = vpop.f32.mrf.mxu0
    %5906 = vdwg.mxu0
    %5907 = vmatpush.bf16.msra.mxu0 %v5153
    %5908 = vmatpush.bf16.msra.mxu0 %v5141
    %5909 = vmatpush.bf16.msra.mxu0 %v5129
    %5910 = vmatpush.bf16.msra.mxu0 %v5117
    %5911 = vmatpush.bf16.msra.mxu0 %v5105
    %5912 = vmatpush.bf16.msra.mxu0 %v5093
    %5913 = vmatpush.bf16.msra.mxu0 %v5081
    %5914 = vmatpush.bf16.msra.mxu0 %v5069
    %5915 = vmatmul.bf16.gmra.mxu0 %v3403
    %v5916 = vpop.f32.mrf.mxu0
    %v5917 = vadd.f32 %v5904, %v5916
    %v5918 = vpop.f32.mrf.mxu0
    %5919 = vdwg.mxu0
    %5920 = vmatpush.bf16.msra.mxu0 %v5249
    %5921 = vmatpush.bf16.msra.mxu0 %v5237
    %5922 = vmatpush.bf16.msra.mxu0 %v5225
    %5923 = vmatpush.bf16.msra.mxu0 %v5213
    %5924 = vmatpush.bf16.msra.mxu0 %v5201
    %5925 = vmatpush.bf16.msra.mxu0 %v5189
    %5926 = vmatpush.bf16.msra.mxu0 %v5177
    %5927 = vmatpush.bf16.msra.mxu0 %v5165
    %5928 = vmatmul.bf16.gmra.mxu0 %v3404
    %v5929 = vpop.f32.mrf.mxu0
    %v5930 = vadd.f32 %v5917, %v5929
    %v5931 = vpop.f32.mrf.mxu0
    %5932 = vdwg.mxu0
    %5933 = vmatpush.bf16.msra.mxu0 %v5345
    %5934 = vmatpush.bf16.msra.mxu0 %v5333
    %5935 = vmatpush.bf16.msra.mxu0 %v5321
    %5936 = vmatpush.bf16.msra.mxu0 %v5309
    %5937 = vmatpush.bf16.msra.mxu0 %v5297
    %5938 = vmatpush.bf16.msra.mxu0 %v5285
    %5939 = vmatpush.bf16.msra.mxu0 %v5273
    %5940 = vmatpush.bf16.msra.mxu0 %v5261
    %5941 = vmatmul.bf16.gmra.mxu0 %v3405
    %v5942 = vpop.f32.mrf.mxu0
    %v5943 = vadd.f32 %v5930, %v5942
    %v5944 = vpop.f32.mrf.mxu0
    %5945 = vdwg.mxu0
    %5946 = vmatpush.bf16.msra.mxu0 %v5058
    %5947 = vmatpush.bf16.msra.mxu0 %v5046
    %5948 = vmatpush.bf16.msra.mxu0 %v5034
    %5949 = vmatpush.bf16.msra.mxu0 %v5022
    %5950 = vmatpush.bf16.msra.mxu0 %v5010
    %5951 = vmatpush.bf16.msra.mxu0 %v4998
    %5952 = vmatpush.bf16.msra.mxu0 %v4986
    %5953 = vmatpush.bf16.msra.mxu0 %v4974
    %5954 = vmatmul.bf16.gmra.mxu0 %v3402
    %v5955 = vpop.f32.mrf.mxu0
    %v5956 = vadd.f32 %v3798, %v5955
    %v5957 = vpop.f32.mrf.mxu0
    %5958 = vdwg.mxu0
    %5959 = vmatpush.bf16.msra.mxu0 %v5154
    %5960 = vmatpush.bf16.msra.mxu0 %v5142
    %5961 = vmatpush.bf16.msra.mxu0 %v5130
    %5962 = vmatpush.bf16.msra.mxu0 %v5118
    %5963 = vmatpush.bf16.msra.mxu0 %v5106
    %5964 = vmatpush.bf16.msra.mxu0 %v5094
    %5965 = vmatpush.bf16.msra.mxu0 %v5082
    %5966 = vmatpush.bf16.msra.mxu0 %v5070
    %5967 = vmatmul.bf16.gmra.mxu0 %v3403
    %v5968 = vpop.f32.mrf.mxu0
    %v5969 = vadd.f32 %v5956, %v5968
    %v5970 = vpop.f32.mrf.mxu0
    %5971 = vdwg.mxu0
    %5972 = vmatpush.bf16.msra.mxu0 %v5250
    %5973 = vmatpush.bf16.msra.mxu0 %v5238
    %5974 = vmatpush.bf16.msra.mxu0 %v5226
    %5975 = vmatpush.bf16.msra.mxu0 %v5214
    %5976 = vmatpush.bf16.msra.mxu0 %v5202
    %5977 = vmatpush.bf16.msra.mxu0 %v5190
    %5978 = vmatpush.bf16.msra.mxu0 %v5178
    %5979 = vmatpush.bf16.msra.mxu0 %v5166
    %5980 = vmatmul.bf16.gmra.mxu0 %v3404
    %v5981 = vpop.f32.mrf.mxu0
    %v5982 = vadd.f32 %v5969, %v5981
    %v5983 = vpop.f32.mrf.mxu0
    %5984 = vdwg.mxu0
    %5985 = vmatpush.bf16.msra.mxu0 %v5346
    %5986 = vmatpush.bf16.msra.mxu0 %v5334
    %5987 = vmatpush.bf16.msra.mxu0 %v5322
    %5988 = vmatpush.bf16.msra.mxu0 %v5310
    %5989 = vmatpush.bf16.msra.mxu0 %v5298
    %5990 = vmatpush.bf16.msra.mxu0 %v5286
    %5991 = vmatpush.bf16.msra.mxu0 %v5274
    %5992 = vmatpush.bf16.msra.mxu0 %v5262
    %5993 = vmatmul.bf16.gmra.mxu0 %v3405
    %v5994 = vpop.f32.mrf.mxu0
    %v5995 = vadd.f32 %v5982, %v5994
    %v5996 = vpop.f32.mrf.mxu0
    %5997 = vdwg.mxu0
    %5998 = vmatpush.bf16.msra.mxu0 %v5059
    %5999 = vmatpush.bf16.msra.mxu0 %v5047
    %6000 = vmatpush.bf16.msra.mxu0 %v5035
    %6001 = vmatpush.bf16.msra.mxu0 %v5023
    %6002 = vmatpush.bf16.msra.mxu0 %v5011
    %6003 = vmatpush.bf16.msra.mxu0 %v4999
    %6004 = vmatpush.bf16.msra.mxu0 %v4987
    %6005 = vmatpush.bf16.msra.mxu0 %v4975
    %6006 = vmatmul.bf16.gmra.mxu0 %v3402
    %v6007 = vpop.f32.mrf.mxu0
    %v6008 = vadd.f32 %v3799, %v6007
    %v6009 = vpop.f32.mrf.mxu0
    %6010 = vdwg.mxu0
    %6011 = vmatpush.bf16.msra.mxu0 %v5155
    %6012 = vmatpush.bf16.msra.mxu0 %v5143
    %6013 = vmatpush.bf16.msra.mxu0 %v5131
    %6014 = vmatpush.bf16.msra.mxu0 %v5119
    %6015 = vmatpush.bf16.msra.mxu0 %v5107
    %6016 = vmatpush.bf16.msra.mxu0 %v5095
    %6017 = vmatpush.bf16.msra.mxu0 %v5083
    %6018 = vmatpush.bf16.msra.mxu0 %v5071
    %6019 = vmatmul.bf16.gmra.mxu0 %v3403
    %v6020 = vpop.f32.mrf.mxu0
    %v6021 = vadd.f32 %v6008, %v6020
    %v6022 = vpop.f32.mrf.mxu0
    %6023 = vdwg.mxu0
    %6024 = vmatpush.bf16.msra.mxu0 %v5251
    %6025 = vmatpush.bf16.msra.mxu0 %v5239
    %6026 = vmatpush.bf16.msra.mxu0 %v5227
    %6027 = vmatpush.bf16.msra.mxu0 %v5215
    %6028 = vmatpush.bf16.msra.mxu0 %v5203
    %6029 = vmatpush.bf16.msra.mxu0 %v5191
    %6030 = vmatpush.bf16.msra.mxu0 %v5179
    %6031 = vmatpush.bf16.msra.mxu0 %v5167
    %6032 = vmatmul.bf16.gmra.mxu0 %v3404
    %v6033 = vpop.f32.mrf.mxu0
    %v6034 = vadd.f32 %v6021, %v6033
    %v6035 = vpop.f32.mrf.mxu0
    %6036 = vdwg.mxu0
    %6037 = vmatpush.bf16.msra.mxu0 %v5347
    %6038 = vmatpush.bf16.msra.mxu0 %v5335
    %6039 = vmatpush.bf16.msra.mxu0 %v5323
    %6040 = vmatpush.bf16.msra.mxu0 %v5311
    %6041 = vmatpush.bf16.msra.mxu0 %v5299
    %6042 = vmatpush.bf16.msra.mxu0 %v5287
    %6043 = vmatpush.bf16.msra.mxu0 %v5275
    %6044 = vmatpush.bf16.msra.mxu0 %v5263
    %6045 = vmatmul.bf16.gmra.mxu0 %v3405
    %v6046 = vpop.f32.mrf.mxu0
    %v6047 = vadd.f32 %v6034, %v6046
    %v6048 = vpop.f32.mrf.mxu0
    %6049 = vdwg.mxu0
    %6050 = vmatpush.bf16.msra.mxu0 %v5060
    %6051 = vmatpush.bf16.msra.mxu0 %v5048
    %6052 = vmatpush.bf16.msra.mxu0 %v5036
    %6053 = vmatpush.bf16.msra.mxu0 %v5024
    %6054 = vmatpush.bf16.msra.mxu0 %v5012
    %6055 = vmatpush.bf16.msra.mxu0 %v5000
    %6056 = vmatpush.bf16.msra.mxu0 %v4988
    %6057 = vmatpush.bf16.msra.mxu0 %v4976
    %6058 = vmatmul.bf16.gmra.mxu0 %v3402
    %v6059 = vpop.f32.mrf.mxu0
    %v6060 = vadd.f32 %v3800, %v6059
    %v6061 = vpop.f32.mrf.mxu0
    %6062 = vdwg.mxu0
    %6063 = vmatpush.bf16.msra.mxu0 %v5156
    %6064 = vmatpush.bf16.msra.mxu0 %v5144
    %6065 = vmatpush.bf16.msra.mxu0 %v5132
    %6066 = vmatpush.bf16.msra.mxu0 %v5120
    %6067 = vmatpush.bf16.msra.mxu0 %v5108
    %6068 = vmatpush.bf16.msra.mxu0 %v5096
    %6069 = vmatpush.bf16.msra.mxu0 %v5084
    %6070 = vmatpush.bf16.msra.mxu0 %v5072
    %6071 = vmatmul.bf16.gmra.mxu0 %v3403
    %v6072 = vpop.f32.mrf.mxu0
    %v6073 = vadd.f32 %v6060, %v6072
    %v6074 = vpop.f32.mrf.mxu0
    %6075 = vdwg.mxu0
    %6076 = vmatpush.bf16.msra.mxu0 %v5252
    %6077 = vmatpush.bf16.msra.mxu0 %v5240
    %6078 = vmatpush.bf16.msra.mxu0 %v5228
    %6079 = vmatpush.bf16.msra.mxu0 %v5216
    %6080 = vmatpush.bf16.msra.mxu0 %v5204
    %6081 = vmatpush.bf16.msra.mxu0 %v5192
    %6082 = vmatpush.bf16.msra.mxu0 %v5180
    %6083 = vmatpush.bf16.msra.mxu0 %v5168
    %6084 = vmatmul.bf16.gmra.mxu0 %v3404
    %v6085 = vpop.f32.mrf.mxu0
    %v6086 = vadd.f32 %v6073, %v6085
    %v6087 = vpop.f32.mrf.mxu0
    %6088 = vdwg.mxu0
    %6089 = vmatpush.bf16.msra.mxu0 %v5348
    %6090 = vmatpush.bf16.msra.mxu0 %v5336
    %6091 = vmatpush.bf16.msra.mxu0 %v5324
    %6092 = vmatpush.bf16.msra.mxu0 %v5312
    %6093 = vmatpush.bf16.msra.mxu0 %v5300
    %6094 = vmatpush.bf16.msra.mxu0 %v5288
    %6095 = vmatpush.bf16.msra.mxu0 %v5276
    %6096 = vmatpush.bf16.msra.mxu0 %v5264
    %6097 = vmatmul.bf16.gmra.mxu0 %v3405
    %v6098 = vpop.f32.mrf.mxu0
    %v6099 = vadd.f32 %v6086, %v6098
    %v6100 = vpop.f32.mrf.mxu0
    %6101 = vdwg.mxu0
    %6102 = vmatpush.bf16.msra.mxu0 %v5061
    %6103 = vmatpush.bf16.msra.mxu0 %v5049
    %6104 = vmatpush.bf16.msra.mxu0 %v5037
    %6105 = vmatpush.bf16.msra.mxu0 %v5025
    %6106 = vmatpush.bf16.msra.mxu0 %v5013
    %6107 = vmatpush.bf16.msra.mxu0 %v5001
    %6108 = vmatpush.bf16.msra.mxu0 %v4989
    %6109 = vmatpush.bf16.msra.mxu0 %v4977
    %6110 = vmatmul.bf16.gmra.mxu0 %v3402
    %v6111 = vpop.f32.mrf.mxu0
    %v6112 = vadd.f32 %v3801, %v6111
    %v6113 = vpop.f32.mrf.mxu0
    %6114 = vdwg.mxu0
    %6115 = vmatpush.bf16.msra.mxu0 %v5157
    %6116 = vmatpush.bf16.msra.mxu0 %v5145
    %6117 = vmatpush.bf16.msra.mxu0 %v5133
    %6118 = vmatpush.bf16.msra.mxu0 %v5121
    %6119 = vmatpush.bf16.msra.mxu0 %v5109
    %6120 = vmatpush.bf16.msra.mxu0 %v5097
    %6121 = vmatpush.bf16.msra.mxu0 %v5085
    %6122 = vmatpush.bf16.msra.mxu0 %v5073
    %6123 = vmatmul.bf16.gmra.mxu0 %v3403
    %v6124 = vpop.f32.mrf.mxu0
    %v6125 = vadd.f32 %v6112, %v6124
    %v6126 = vpop.f32.mrf.mxu0
    %6127 = vdwg.mxu0
    %6128 = vmatpush.bf16.msra.mxu0 %v5253
    %6129 = vmatpush.bf16.msra.mxu0 %v5241
    %6130 = vmatpush.bf16.msra.mxu0 %v5229
    %6131 = vmatpush.bf16.msra.mxu0 %v5217
    %6132 = vmatpush.bf16.msra.mxu0 %v5205
    %6133 = vmatpush.bf16.msra.mxu0 %v5193
    %6134 = vmatpush.bf16.msra.mxu0 %v5181
    %6135 = vmatpush.bf16.msra.mxu0 %v5169
    %6136 = vmatmul.bf16.gmra.mxu0 %v3404
    %v6137 = vpop.f32.mrf.mxu0
    %v6138 = vadd.f32 %v6125, %v6137
    %v6139 = vpop.f32.mrf.mxu0
    %6140 = vdwg.mxu0
    %6141 = vmatpush.bf16.msra.mxu0 %v5349
    %6142 = vmatpush.bf16.msra.mxu0 %v5337
    %6143 = vmatpush.bf16.msra.mxu0 %v5325
    %6144 = vmatpush.bf16.msra.mxu0 %v5313
    %6145 = vmatpush.bf16.msra.mxu0 %v5301
    %6146 = vmatpush.bf16.msra.mxu0 %v5289
    %6147 = vmatpush.bf16.msra.mxu0 %v5277
    %6148 = vmatpush.bf16.msra.mxu0 %v5265
    %6149 = vmatmul.bf16.gmra.mxu0 %v3405
    %v6150 = vpop.f32.mrf.mxu0
    %v6151 = vadd.f32 %v6138, %v6150
    %v6152 = vpop.f32.mrf.mxu0
    %6153 = vdwg.mxu0
    %6154 = vmatpush.bf16.msra.mxu0 %v5062
    %6155 = vmatpush.bf16.msra.mxu0 %v5050
    %6156 = vmatpush.bf16.msra.mxu0 %v5038
    %6157 = vmatpush.bf16.msra.mxu0 %v5026
    %6158 = vmatpush.bf16.msra.mxu0 %v5014
    %6159 = vmatpush.bf16.msra.mxu0 %v5002
    %6160 = vmatpush.bf16.msra.mxu0 %v4990
    %6161 = vmatpush.bf16.msra.mxu0 %v4978
    %6162 = vmatmul.bf16.gmra.mxu0 %v3402
    %v6163 = vpop.f32.mrf.mxu0
    %v6164 = vadd.f32 %v3802, %v6163
    %v6165 = vpop.f32.mrf.mxu0
    %6166 = vdwg.mxu0
    %6167 = vmatpush.bf16.msra.mxu0 %v5158
    %6168 = vmatpush.bf16.msra.mxu0 %v5146
    %6169 = vmatpush.bf16.msra.mxu0 %v5134
    %6170 = vmatpush.bf16.msra.mxu0 %v5122
    %6171 = vmatpush.bf16.msra.mxu0 %v5110
    %6172 = vmatpush.bf16.msra.mxu0 %v5098
    %6173 = vmatpush.bf16.msra.mxu0 %v5086
    %6174 = vmatpush.bf16.msra.mxu0 %v5074
    %6175 = vmatmul.bf16.gmra.mxu0 %v3403
    %v6176 = vpop.f32.mrf.mxu0
    %v6177 = vadd.f32 %v6164, %v6176
    %v6178 = vpop.f32.mrf.mxu0
    %6179 = vdwg.mxu0
    %6180 = vmatpush.bf16.msra.mxu0 %v5254
    %6181 = vmatpush.bf16.msra.mxu0 %v5242
    %6182 = vmatpush.bf16.msra.mxu0 %v5230
    %6183 = vmatpush.bf16.msra.mxu0 %v5218
    %6184 = vmatpush.bf16.msra.mxu0 %v5206
    %6185 = vmatpush.bf16.msra.mxu0 %v5194
    %6186 = vmatpush.bf16.msra.mxu0 %v5182
    %6187 = vmatpush.bf16.msra.mxu0 %v5170
    %6188 = vmatmul.bf16.gmra.mxu0 %v3404
    %v6189 = vpop.f32.mrf.mxu0
    %v6190 = vadd.f32 %v6177, %v6189
    %v6191 = vpop.f32.mrf.mxu0
    %6192 = vdwg.mxu0
    %6193 = vmatpush.bf16.msra.mxu0 %v5350
    %6194 = vmatpush.bf16.msra.mxu0 %v5338
    %6195 = vmatpush.bf16.msra.mxu0 %v5326
    %6196 = vmatpush.bf16.msra.mxu0 %v5314
    %6197 = vmatpush.bf16.msra.mxu0 %v5302
    %6198 = vmatpush.bf16.msra.mxu0 %v5290
    %6199 = vmatpush.bf16.msra.mxu0 %v5278
    %6200 = vmatpush.bf16.msra.mxu0 %v5266
    %6201 = vmatmul.bf16.gmra.mxu0 %v3405
    %v6202 = vpop.f32.mrf.mxu0
    %v6203 = vadd.f32 %v6190, %v6202
    %v6204 = vpop.f32.mrf.mxu0
    %6205 = vdwg.mxu0
    %6206 = vmatpush.bf16.msra.mxu0 %v5063
    %6207 = vmatpush.bf16.msra.mxu0 %v5051
    %6208 = vmatpush.bf16.msra.mxu0 %v5039
    %6209 = vmatpush.bf16.msra.mxu0 %v5027
    %6210 = vmatpush.bf16.msra.mxu0 %v5015
    %6211 = vmatpush.bf16.msra.mxu0 %v5003
    %6212 = vmatpush.bf16.msra.mxu0 %v4991
    %6213 = vmatpush.bf16.msra.mxu0 %v4979
    %6214 = vmatmul.bf16.gmra.mxu0 %v3402
    %v6215 = vpop.f32.mrf.mxu0
    %v6216 = vadd.f32 %v3803, %v6215
    %v6217 = vpop.f32.mrf.mxu0
    %6218 = vdwg.mxu0
    %6219 = vmatpush.bf16.msra.mxu0 %v5159
    %6220 = vmatpush.bf16.msra.mxu0 %v5147
    %6221 = vmatpush.bf16.msra.mxu0 %v5135
    %6222 = vmatpush.bf16.msra.mxu0 %v5123
    %6223 = vmatpush.bf16.msra.mxu0 %v5111
    %6224 = vmatpush.bf16.msra.mxu0 %v5099
    %6225 = vmatpush.bf16.msra.mxu0 %v5087
    %6226 = vmatpush.bf16.msra.mxu0 %v5075
    %6227 = vmatmul.bf16.gmra.mxu0 %v3403
    %v6228 = vpop.f32.mrf.mxu0
    %v6229 = vadd.f32 %v6216, %v6228
    %v6230 = vpop.f32.mrf.mxu0
    %6231 = vdwg.mxu0
    %6232 = vmatpush.bf16.msra.mxu0 %v5255
    %6233 = vmatpush.bf16.msra.mxu0 %v5243
    %6234 = vmatpush.bf16.msra.mxu0 %v5231
    %6235 = vmatpush.bf16.msra.mxu0 %v5219
    %6236 = vmatpush.bf16.msra.mxu0 %v5207
    %6237 = vmatpush.bf16.msra.mxu0 %v5195
    %6238 = vmatpush.bf16.msra.mxu0 %v5183
    %6239 = vmatpush.bf16.msra.mxu0 %v5171
    %6240 = vmatmul.bf16.gmra.mxu0 %v3404
    %v6241 = vpop.f32.mrf.mxu0
    %v6242 = vadd.f32 %v6229, %v6241
    %v6243 = vpop.f32.mrf.mxu0
    %6244 = vdwg.mxu0
    %6245 = vmatpush.bf16.msra.mxu0 %v5351
    %6246 = vmatpush.bf16.msra.mxu0 %v5339
    %6247 = vmatpush.bf16.msra.mxu0 %v5327
    %6248 = vmatpush.bf16.msra.mxu0 %v5315
    %6249 = vmatpush.bf16.msra.mxu0 %v5303
    %6250 = vmatpush.bf16.msra.mxu0 %v5291
    %6251 = vmatpush.bf16.msra.mxu0 %v5279
    %6252 = vmatpush.bf16.msra.mxu0 %v5267
    %6253 = vmatmul.bf16.gmra.mxu0 %v3405
    %v6254 = vpop.f32.mrf.mxu0
    %v6255 = vadd.f32 %v6242, %v6254
    %v6256 = vpop.f32.mrf.mxu0
    %6257 = vdwg.mxu0
    %6258 = vmatpush.bf16.msra.mxu0 %v5064
    %6259 = vmatpush.bf16.msra.mxu0 %v5052
    %6260 = vmatpush.bf16.msra.mxu0 %v5040
    %6261 = vmatpush.bf16.msra.mxu0 %v5028
    %6262 = vmatpush.bf16.msra.mxu0 %v5016
    %6263 = vmatpush.bf16.msra.mxu0 %v5004
    %6264 = vmatpush.bf16.msra.mxu0 %v4992
    %6265 = vmatpush.bf16.msra.mxu0 %v4980
    %6266 = vmatmul.bf16.gmra.mxu0 %v3402
    %v6267 = vpop.f32.mrf.mxu0
    %v6268 = vadd.f32 %v3804, %v6267
    %v6269 = vpop.f32.mrf.mxu0
    %6270 = vdwg.mxu0
    %6271 = vmatpush.bf16.msra.mxu0 %v5160
    %6272 = vmatpush.bf16.msra.mxu0 %v5148
    %6273 = vmatpush.bf16.msra.mxu0 %v5136
    %6274 = vmatpush.bf16.msra.mxu0 %v5124
    %6275 = vmatpush.bf16.msra.mxu0 %v5112
    %6276 = vmatpush.bf16.msra.mxu0 %v5100
    %6277 = vmatpush.bf16.msra.mxu0 %v5088
    %6278 = vmatpush.bf16.msra.mxu0 %v5076
    %6279 = vmatmul.bf16.gmra.mxu0 %v3403
    %v6280 = vpop.f32.mrf.mxu0
    %v6281 = vadd.f32 %v6268, %v6280
    %v6282 = vpop.f32.mrf.mxu0
    %6283 = vdwg.mxu0
    %6284 = vmatpush.bf16.msra.mxu0 %v5256
    %6285 = vmatpush.bf16.msra.mxu0 %v5244
    %6286 = vmatpush.bf16.msra.mxu0 %v5232
    %6287 = vmatpush.bf16.msra.mxu0 %v5220
    %6288 = vmatpush.bf16.msra.mxu0 %v5208
    %6289 = vmatpush.bf16.msra.mxu0 %v5196
    %6290 = vmatpush.bf16.msra.mxu0 %v5184
    %6291 = vmatpush.bf16.msra.mxu0 %v5172
    %6292 = vmatmul.bf16.gmra.mxu0 %v3404
    %v6293 = vpop.f32.mrf.mxu0
    %v6294 = vadd.f32 %v6281, %v6293
    %v6295 = vpop.f32.mrf.mxu0
    %6296 = vdwg.mxu0
    %6297 = vmatpush.bf16.msra.mxu0 %v5352
    %6298 = vmatpush.bf16.msra.mxu0 %v5340
    %6299 = vmatpush.bf16.msra.mxu0 %v5328
    %6300 = vmatpush.bf16.msra.mxu0 %v5316
    %6301 = vmatpush.bf16.msra.mxu0 %v5304
    %6302 = vmatpush.bf16.msra.mxu0 %v5292
    %6303 = vmatpush.bf16.msra.mxu0 %v5280
    %6304 = vmatpush.bf16.msra.mxu0 %v5268
    %6305 = vmatmul.bf16.gmra.mxu0 %v3405
    %v6306 = vpop.f32.mrf.mxu0
    %v6307 = vadd.f32 %v6294, %v6306
    %v6308 = vpop.f32.mrf.mxu0
    %6309 = vdwg.mxu0
    %6310 = vmatpush.bf16.msra.mxu0 %v5065
    %6311 = vmatpush.bf16.msra.mxu0 %v5053
    %6312 = vmatpush.bf16.msra.mxu0 %v5041
    %6313 = vmatpush.bf16.msra.mxu0 %v5029
    %6314 = vmatpush.bf16.msra.mxu0 %v5017
    %6315 = vmatpush.bf16.msra.mxu0 %v5005
    %6316 = vmatpush.bf16.msra.mxu0 %v4993
    %6317 = vmatpush.bf16.msra.mxu0 %v4981
    %6318 = vmatmul.bf16.gmra.mxu0 %v3402
    %v6319 = vpop.f32.mrf.mxu0
    %v6320 = vadd.f32 %v3805, %v6319
    %v6321 = vpop.f32.mrf.mxu0
    %6322 = vdwg.mxu0
    %6323 = vmatpush.bf16.msra.mxu0 %v5161
    %6324 = vmatpush.bf16.msra.mxu0 %v5149
    %6325 = vmatpush.bf16.msra.mxu0 %v5137
    %6326 = vmatpush.bf16.msra.mxu0 %v5125
    %6327 = vmatpush.bf16.msra.mxu0 %v5113
    %6328 = vmatpush.bf16.msra.mxu0 %v5101
    %6329 = vmatpush.bf16.msra.mxu0 %v5089
    %6330 = vmatpush.bf16.msra.mxu0 %v5077
    %6331 = vmatmul.bf16.gmra.mxu0 %v3403
    %v6332 = vpop.f32.mrf.mxu0
    %v6333 = vadd.f32 %v6320, %v6332
    %v6334 = vpop.f32.mrf.mxu0
    %6335 = vdwg.mxu0
    %6336 = vmatpush.bf16.msra.mxu0 %v5257
    %6337 = vmatpush.bf16.msra.mxu0 %v5245
    %6338 = vmatpush.bf16.msra.mxu0 %v5233
    %6339 = vmatpush.bf16.msra.mxu0 %v5221
    %6340 = vmatpush.bf16.msra.mxu0 %v5209
    %6341 = vmatpush.bf16.msra.mxu0 %v5197
    %6342 = vmatpush.bf16.msra.mxu0 %v5185
    %6343 = vmatpush.bf16.msra.mxu0 %v5173
    %6344 = vmatmul.bf16.gmra.mxu0 %v3404
    %v6345 = vpop.f32.mrf.mxu0
    %v6346 = vadd.f32 %v6333, %v6345
    %v6347 = vpop.f32.mrf.mxu0
    %6348 = vdwg.mxu0
    %6349 = vmatpush.bf16.msra.mxu0 %v5353
    %6350 = vmatpush.bf16.msra.mxu0 %v5341
    %6351 = vmatpush.bf16.msra.mxu0 %v5329
    %6352 = vmatpush.bf16.msra.mxu0 %v5317
    %6353 = vmatpush.bf16.msra.mxu0 %v5305
    %6354 = vmatpush.bf16.msra.mxu0 %v5293
    %6355 = vmatpush.bf16.msra.mxu0 %v5281
    %6356 = vmatpush.bf16.msra.mxu0 %v5269
    %6357 = vmatmul.bf16.gmra.mxu0 %v3405
    %v6358 = vpop.f32.mrf.mxu0
    %v6359 = vadd.f32 %v6346, %v6358
    %v6360 = vpop.f32.mrf.mxu0
    %6361 = vdwg.mxu0
    %v6362 = vxor.u32 %v5787, 2147483648
    %v6363 = vxor.u32 %v5839, 2147483648
    %v6364 = vmul.f32 %v6362, 1.442695
    %v6365 = vpow.pop %v6364
    %v6366 = vmul.f32 %v6363, 1.442695
    %v6367 = vpow.pop %v6366
    %v6368 = vadd.f32 %v6365, 1.0
    %v6369 = vadd.f32 %v6367, 1.0
    %v6370 = vrcp.pop %v6368
    %v6371 = vmul.f32 %v6368, %v6370
    %v6372 = vsub.f32 1.0, %v6371
    %v6373 = vmul.f32 %v6370, %v6372
    %v6374 = vadd.f32 %v6370, %v6373
    %vm6375 = vweird.f32 %v6368
    %vm6376 = vweird.f32 %v6370
    %vm6377 = vmor %vm6375, %vm6376
    %v6378 = vsel %vm6377, %v6370, %v6374
    %v6379 = vand.u32 2147483647, %v6368
    %vm6380 = vcmp.eq.f32.partialorder %v6379, 8.507059e+37
    %v6381 = vand.u32 %v6368, 2147483648
    %v6382 = vor.u32 1.1754944e-38, %v6381
    %v6383 = vsel %vm6380, %v6382, %v6378
    %v6384 = vmul.f32 1.0, %v6383
    %v6385 = vrcp.pop %v6369
    %v6386 = vmul.f32 %v6369, %v6385
    %v6387 = vsub.f32 1.0, %v6386
    %v6388 = vmul.f32 %v6385, %v6387
    %v6389 = vadd.f32 %v6385, %v6388
    %vm6390 = vweird.f32 %v6369
    %vm6391 = vweird.f32 %v6385
    %vm6392 = vmor %vm6390, %vm6391
    %v6393 = vsel %vm6392, %v6385, %v6389
    %v6394 = vand.u32 2147483647, %v6369
    %vm6395 = vcmp.eq.f32.partialorder %v6394, 8.507059e+37
    %v6396 = vand.u32 %v6369, 2147483648
    %v6397 = vor.u32 1.1754944e-38, %v6396
    %v6398 = vsel %vm6395, %v6397, %v6393
    %v6399 = vmul.f32 1.0, %v6398
    %v6400 = vtanh.pop %v5891
    %v6401 = vtanh.pop %v5943
    %v6402 = vxor.u32 %v5995, 2147483648
    %v6403 = vxor.u32 %v6047, 2147483648
    %v6404 = vmul.f32 %v6402, 1.442695
    %v6405 = vpow.pop %v6404
    %v6406 = vmul.f32 %v6403, 1.442695
    %v6407 = vpow.pop %v6406
    %v6408 = vadd.f32 %v6405, 1.0
    %v6409 = vadd.f32 %v6407, 1.0
    %v6410 = vrcp.pop %v6408
    %v6411 = vmul.f32 %v6408, %v6410
    %v6412 = vsub.f32 1.0, %v6411
    %v6413 = vmul.f32 %v6410, %v6412
    %v6414 = vadd.f32 %v6410, %v6413
    %vm6415 = vweird.f32 %v6408
    %vm6416 = vweird.f32 %v6410
    %vm6417 = vmor %vm6415, %vm6416
    %v6418 = vsel %vm6417, %v6410, %v6414
    %v6419 = vand.u32 2147483647, %v6408
    %vm6420 = vcmp.eq.f32.partialorder %v6419, 8.507059e+37
    %v6421 = vand.u32 %v6408, 2147483648
    %v6422 = vor.u32 1.1754944e-38, %v6421
    %v6423 = vsel %vm6420, %v6422, %v6418
    %v6424 = vmul.f32 1.0, %v6423
    %v6425 = vrcp.pop %v6409
    %v6426 = vmul.f32 %v6409, %v6425
    %v6427 = vsub.f32 1.0, %v6426
    %v6428 = vmul.f32 %v6425, %v6427
    %v6429 = vadd.f32 %v6425, %v6428
    %vm6430 = vweird.f32 %v6409
    %vm6431 = vweird.f32 %v6425
    %vm6432 = vmor %vm6430, %vm6431
    %v6433 = vsel %vm6432, %v6425, %v6429
    %v6434 = vand.u32 2147483647, %v6409
    %vm6435 = vcmp.eq.f32.partialorder %v6434, 8.507059e+37
    %v6436 = vand.u32 %v6409, 2147483648
    %v6437 = vor.u32 1.1754944e-38, %v6436
    %v6438 = vsel %vm6435, %v6437, %v6433
    %v6439 = vmul.f32 1.0, %v6438
    %v6440 = vmul.f32 %v6384, %v6400
    %v6441 = vmul.f32 %v6399, %v6401
    %v6442 = vtanh.pop %v6440
    %v6443 = vtanh.pop %v6441
    %v6444 = vmul.f32 %v6424, %v6442
    %v6445 = vmul.f32 %v6439, %v6443
    %v6446 = vxor.u32 %v6099, 2147483648
    %v6447 = vxor.u32 %v6151, 2147483648
    %v6448 = vmul.f32 %v6446, 1.442695
    %v6449 = vpow.pop %v6448
    %v6450 = vmul.f32 %v6447, 1.442695
    %v6451 = vpow.pop %v6450
    %v6452 = vadd.f32 %v6449, 1.0
    %v6453 = vadd.f32 %v6451, 1.0
    %v6454 = vrcp.pop %v6452
    %v6455 = vmul.f32 %v6452, %v6454
    %v6456 = vsub.f32 1.0, %v6455
    %v6457 = vmul.f32 %v6454, %v6456
    %v6458 = vadd.f32 %v6454, %v6457
    %vm6459 = vweird.f32 %v6452
    %vm6460 = vweird.f32 %v6454
    %vm6461 = vmor %vm6459, %vm6460
    %v6462 = vsel %vm6461, %v6454, %v6458
    %v6463 = vand.u32 2147483647, %v6452
    %vm6464 = vcmp.eq.f32.partialorder %v6463, 8.507059e+37
    %v6465 = vand.u32 %v6452, 2147483648
    %v6466 = vor.u32 1.1754944e-38, %v6465
    %v6467 = vsel %vm6464, %v6466, %v6462
    %v6468 = vmul.f32 1.0, %v6467
    %v6469 = vrcp.pop %v6453
    %v6470 = vmul.f32 %v6453, %v6469
    %v6471 = vsub.f32 1.0, %v6470
    %v6472 = vmul.f32 %v6469, %v6471
    %v6473 = vadd.f32 %v6469, %v6472
    %vm6474 = vweird.f32 %v6453
    %vm6475 = vweird.f32 %v6469
    %vm6476 = vmor %vm6474, %vm6475
    %v6477 = vsel %vm6476, %v6469, %v6473
    %v6478 = vand.u32 2147483647, %v6453
    %vm6479 = vcmp.eq.f32.partialorder %v6478, 8.507059e+37
    %v6480 = vand.u32 %v6453, 2147483648
    %v6481 = vor.u32 1.1754944e-38, %v6480
    %v6482 = vsel %vm6479, %v6481, %v6477
    %v6483 = vmul.f32 1.0, %v6482
    %v6484 = vtanh.pop %v6203
    %v6485 = vtanh.pop %v6255
    %v6486 = vxor.u32 %v6307, 2147483648
    %v6487 = vxor.u32 %v6359, 2147483648
    %v6488 = vmul.f32 %v6486, 1.442695
    %v6489 = vpow.pop %v6488
    %v6490 = vmul.f32 %v6487, 1.442695
    %v6491 = vpow.pop %v6490
    %v6492 = vadd.f32 %v6489, 1.0
    %v6493 = vadd.f32 %v6491, 1.0
    %v6494 = vrcp.pop %v6492
    %v6495 = vmul.f32 %v6492, %v6494
    %v6496 = vsub.f32 1.0, %v6495
    %v6497 = vmul.f32 %v6494, %v6496
    %v6498 = vadd.f32 %v6494, %v6497
    %vm6499 = vweird.f32 %v6492
    %vm6500 = vweird.f32 %v6494
    %vm6501 = vmor %vm6499, %vm6500
    %v6502 = vsel %vm6501, %v6494, %v6498
    %v6503 = vand.u32 2147483647, %v6492
    %vm6504 = vcmp.eq.f32.partialorder %v6503, 8.507059e+37
    %v6505 = vand.u32 %v6492, 2147483648
    %v6506 = vor.u32 1.1754944e-38, %v6505
    %v6507 = vsel %vm6504, %v6506, %v6502
    %v6508 = vmul.f32 1.0, %v6507
    %v6509 = vrcp.pop %v6493
    %v6510 = vmul.f32 %v6493, %v6509
    %v6511 = vsub.f32 1.0, %v6510
    %v6512 = vmul.f32 %v6509, %v6511
    %v6513 = vadd.f32 %v6509, %v6512
    %vm6514 = vweird.f32 %v6493
    %vm6515 = vweird.f32 %v6509
    %vm6516 = vmor %vm6514, %vm6515
    %v6517 = vsel %vm6516, %v6509, %v6513
    %v6518 = vand.u32 2147483647, %v6493
    %vm6519 = vcmp.eq.f32.partialorder %v6518, 8.507059e+37
    %v6520 = vand.u32 %v6493, 2147483648
    %v6521 = vor.u32 1.1754944e-38, %v6520
    %v6522 = vsel %vm6519, %v6521, %v6517
    %v6523 = vmul.f32 1.0, %v6522
    %v6524 = vmul.f32 %v6468, %v6484
    %v6525 = vmul.f32 %v6483, %v6485
    %v6526 = vtanh.pop %v6524
    %v6527 = vtanh.pop %v6525
    %v6528 = vmul.f32 %v6508, %v6526
    %v6529 = vmul.f32 %v6523, %v6527
    %v6530 = vld [vmem:[#allocation17] sm:$0xff]
    %v6531 = vld [vmem:[#allocation17 + $0x8] sm:$0xff]
    %v6532 = vld [vmem:[#allocation17 + $0x10] sm:$0xff]
    %v6533 = vld [vmem:[#allocation17 + $0x18] sm:$0xff]
    %v6534 = vld [vmem:[#allocation17 + $0x20] sm:$0xff]
    %v6535 = vld [vmem:[#allocation17 + $0x28] sm:$0xff]
    %v6536 = vld [vmem:[#allocation17 + $0x30] sm:$0xff]
    %v6537 = vld [vmem:[#allocation17 + $0x38] sm:$0xff]
    %v6538 = vld [vmem:[#allocation17 + $0x40] sm:$0xff]
    %v6539 = vld [vmem:[#allocation17 + $0x48] sm:$0xff]
    %v6540 = vld [vmem:[#allocation17 + $0x50] sm:$0xff]
    %v6541 = vld [vmem:[#allocation17 + $0x58] sm:$0xff]
    %v6542 = vld [vmem:[#allocation17 + $0x60] sm:$0xff]
    %v6543 = vld [vmem:[#allocation17 + $0x68] sm:$0xff]
    %v6544 = vld [vmem:[#allocation17 + $0x70] sm:$0xff]
    %v6545 = vld [vmem:[#allocation17 + $0x78] sm:$0xff]
    %v6546 = vld [vmem:[#allocation17 + $0x80] sm:$0xff]
    %v6547 = vld [vmem:[#allocation17 + $0x88] sm:$0xff]
    %v6548 = vld [vmem:[#allocation17 + $0x90] sm:$0xff]
    %v6549 = vld [vmem:[#allocation17 + $0x98] sm:$0xff]
    %v6550 = vld [vmem:[#allocation17 + $0xa0] sm:$0xff]
    %v6551 = vld [vmem:[#allocation17 + $0xa8] sm:$0xff]
    %v6552 = vld [vmem:[#allocation17 + $0xb0] sm:$0xff]
    %v6553 = vld [vmem:[#allocation17 + $0xb8] sm:$0xff]
    %v6554 = vld [vmem:[#allocation17 + $0xc0] sm:$0xff]
    %v6555 = vld [vmem:[#allocation17 + $0xc8] sm:$0xff]
    %v6556 = vld [vmem:[#allocation17 + $0xd0] sm:$0xff]
    %v6557 = vld [vmem:[#allocation17 + $0xd8] sm:$0xff]
    %v6558 = vld [vmem:[#allocation17 + $0xe0] sm:$0xff]
    %v6559 = vld [vmem:[#allocation17 + $0xe8] sm:$0xff]
    %v6560 = vld [vmem:[#allocation17 + $0xf0] sm:$0xff]
    %v6561 = vld [vmem:[#allocation17 + $0xf8] sm:$0xff]
    %v6562 = vld [vmem:[#allocation17 + $0x100] sm:$0xff]
    %v6563 = vld [vmem:[#allocation17 + $0x108] sm:$0xff]
    %v6564 = vld [vmem:[#allocation17 + $0x110] sm:$0xff]
    %v6565 = vld [vmem:[#allocation17 + $0x118] sm:$0xff]
    %v6566 = vld [vmem:[#allocation17 + $0x120] sm:$0xff]
    %v6567 = vld [vmem:[#allocation17 + $0x128] sm:$0xff]
    %v6568 = vld [vmem:[#allocation17 + $0x130] sm:$0xff]
    %v6569 = vld [vmem:[#allocation17 + $0x138] sm:$0xff]
    %v6570 = vld [vmem:[#allocation17 + $0x140] sm:$0xff]
    %v6571 = vld [vmem:[#allocation17 + $0x148] sm:$0xff]
    %v6572 = vld [vmem:[#allocation17 + $0x150] sm:$0xff]
    %v6573 = vld [vmem:[#allocation17 + $0x158] sm:$0xff]
    %v6574 = vld [vmem:[#allocation17 + $0x160] sm:$0xff]
    %v6575 = vld [vmem:[#allocation17 + $0x168] sm:$0xff]
    %v6576 = vld [vmem:[#allocation17 + $0x170] sm:$0xff]
    %v6577 = vld [vmem:[#allocation17 + $0x178] sm:$0xff]
    %v6578 = vld [vmem:[#allocation17 + $0x180] sm:$0xff]
    %v6579 = vld [vmem:[#allocation17 + $0x188] sm:$0xff]
    %v6580 = vld [vmem:[#allocation17 + $0x190] sm:$0xff]
    %v6581 = vld [vmem:[#allocation17 + $0x198] sm:$0xff]
    %v6582 = vld [vmem:[#allocation17 + $0x1a0] sm:$0xff]
    %v6583 = vld [vmem:[#allocation17 + $0x1a8] sm:$0xff]
    %v6584 = vld [vmem:[#allocation17 + $0x1b0] sm:$0xff]
    %v6585 = vld [vmem:[#allocation17 + $0x1b8] sm:$0xff]
    %v6586 = vld [vmem:[#allocation17 + $0x1c0] sm:$0xff]
    %v6587 = vld [vmem:[#allocation17 + $0x1c8] sm:$0xff]
    %v6588 = vld [vmem:[#allocation17 + $0x1d0] sm:$0xff]
    %v6589 = vld [vmem:[#allocation17 + $0x1d8] sm:$0xff]
    %v6590 = vld [vmem:[#allocation17 + $0x1e0] sm:$0xff]
    %v6591 = vld [vmem:[#allocation17 + $0x1e8] sm:$0xff]
    %v6592 = vld [vmem:[#allocation17 + $0x1f0] sm:$0xff]
    %v6593 = vld [vmem:[#allocation17 + $0x1f8] sm:$0xff]
    %v6594 = vld [vmem:[#allocation17 + $0x200] sm:$0xff]
    %v6595 = vld [vmem:[#allocation17 + $0x208] sm:$0xff]
    %v6596 = vld [vmem:[#allocation17 + $0x210] sm:$0xff]
    %v6597 = vld [vmem:[#allocation17 + $0x218] sm:$0xff]
    %v6598 = vld [vmem:[#allocation17 + $0x220] sm:$0xff]
    %v6599 = vld [vmem:[#allocation17 + $0x228] sm:$0xff]
    %v6600 = vld [vmem:[#allocation17 + $0x230] sm:$0xff]
    %v6601 = vld [vmem:[#allocation17 + $0x238] sm:$0xff]
    %v6602 = vld [vmem:[#allocation17 + $0x240] sm:$0xff]
    %v6603 = vld [vmem:[#allocation17 + $0x248] sm:$0xff]
    %v6604 = vld [vmem:[#allocation17 + $0x250] sm:$0xff]
    %v6605 = vld [vmem:[#allocation17 + $0x258] sm:$0xff]
    %v6606 = vld [vmem:[#allocation17 + $0x260] sm:$0xff]
    %v6607 = vld [vmem:[#allocation17 + $0x268] sm:$0xff]
    %v6608 = vld [vmem:[#allocation17 + $0x270] sm:$0xff]
    %v6609 = vld [vmem:[#allocation17 + $0x278] sm:$0xff]
    %v6610 = vld [vmem:[#allocation17 + $0x280] sm:$0xff]
    %v6611 = vld [vmem:[#allocation17 + $0x288] sm:$0xff]
    %v6612 = vld [vmem:[#allocation17 + $0x290] sm:$0xff]
    %v6613 = vld [vmem:[#allocation17 + $0x298] sm:$0xff]
    %v6614 = vld [vmem:[#allocation17 + $0x2a0] sm:$0xff]
    %v6615 = vld [vmem:[#allocation17 + $0x2a8] sm:$0xff]
    %v6616 = vld [vmem:[#allocation17 + $0x2b0] sm:$0xff]
    %v6617 = vld [vmem:[#allocation17 + $0x2b8] sm:$0xff]
    %v6618 = vld [vmem:[#allocation17 + $0x2c0] sm:$0xff]
    %v6619 = vld [vmem:[#allocation17 + $0x2c8] sm:$0xff]
    %v6620 = vld [vmem:[#allocation17 + $0x2d0] sm:$0xff]
    %v6621 = vld [vmem:[#allocation17 + $0x2d8] sm:$0xff]
    %v6622 = vld [vmem:[#allocation17 + $0x2e0] sm:$0xff]
    %v6623 = vld [vmem:[#allocation17 + $0x2e8] sm:$0xff]
    %v6624 = vld [vmem:[#allocation17 + $0x2f0] sm:$0xff]
    %v6625 = vld [vmem:[#allocation17 + $0x2f8] sm:$0xff]
    %v6626 = vld [vmem:[#allocation17 + $0x300] sm:$0xff]
    %v6627 = vld [vmem:[#allocation17 + $0x308] sm:$0xff]
    %v6628 = vld [vmem:[#allocation17 + $0x310] sm:$0xff]
    %v6629 = vld [vmem:[#allocation17 + $0x318] sm:$0xff]
    %v6630 = vld [vmem:[#allocation17 + $0x320] sm:$0xff]
    %v6631 = vld [vmem:[#allocation17 + $0x328] sm:$0xff]
    %v6632 = vld [vmem:[#allocation17 + $0x330] sm:$0xff]
    %v6633 = vld [vmem:[#allocation17 + $0x338] sm:$0xff]
    %v6634 = vld [vmem:[#allocation17 + $0x340] sm:$0xff]
    %v6635 = vld [vmem:[#allocation17 + $0x348] sm:$0xff]
    %v6636 = vld [vmem:[#allocation17 + $0x350] sm:$0xff]
    %v6637 = vld [vmem:[#allocation17 + $0x358] sm:$0xff]
    %v6638 = vld [vmem:[#allocation17 + $0x360] sm:$0xff]
    %v6639 = vld [vmem:[#allocation17 + $0x368] sm:$0xff]
    %v6640 = vld [vmem:[#allocation17 + $0x370] sm:$0xff]
    %v6641 = vld [vmem:[#allocation17 + $0x378] sm:$0xff]
    %v6642 = vld [vmem:[#allocation17 + $0x380] sm:$0xff]
    %v6643 = vld [vmem:[#allocation17 + $0x388] sm:$0xff]
    %v6644 = vld [vmem:[#allocation17 + $0x390] sm:$0xff]
    %v6645 = vld [vmem:[#allocation17 + $0x398] sm:$0xff]
    %v6646 = vld [vmem:[#allocation17 + $0x3a0] sm:$0xff]
    %v6647 = vld [vmem:[#allocation17 + $0x3a8] sm:$0xff]
    %v6648 = vld [vmem:[#allocation17 + $0x3b0] sm:$0xff]
    %v6649 = vld [vmem:[#allocation17 + $0x3b8] sm:$0xff]
    %v6650 = vld [vmem:[#allocation17 + $0x3c0] sm:$0xff]
    %v6651 = vld [vmem:[#allocation17 + $0x3c8] sm:$0xff]
    %v6652 = vld [vmem:[#allocation17 + $0x3d0] sm:$0xff]
    %v6653 = vld [vmem:[#allocation17 + $0x3d8] sm:$0xff]
    %v6654 = vld [vmem:[#allocation17 + $0x3e0] sm:$0xff]
    %v6655 = vld [vmem:[#allocation17 + $0x3e8] sm:$0xff]
    %v6656 = vld [vmem:[#allocation17 + $0x3f0] sm:$0xff]
    %v6657 = vld [vmem:[#allocation17 + $0x3f8] sm:$0xff]
    %v6658 = vld [vmem:[#allocation17 + $0x400] sm:$0xff]
    %v6659 = vld [vmem:[#allocation17 + $0x408] sm:$0xff]
    %v6660 = vld [vmem:[#allocation17 + $0x410] sm:$0xff]
    %v6661 = vld [vmem:[#allocation17 + $0x418] sm:$0xff]
    %v6662 = vld [vmem:[#allocation17 + $0x420] sm:$0xff]
    %v6663 = vld [vmem:[#allocation17 + $0x428] sm:$0xff]
    %v6664 = vld [vmem:[#allocation17 + $0x430] sm:$0xff]
    %v6665 = vld [vmem:[#allocation17 + $0x438] sm:$0xff]
    %v6666 = vld [vmem:[#allocation17 + $0x440] sm:$0xff]
    %v6667 = vld [vmem:[#allocation17 + $0x448] sm:$0xff]
    %v6668 = vld [vmem:[#allocation17 + $0x450] sm:$0xff]
    %v6669 = vld [vmem:[#allocation17 + $0x458] sm:$0xff]
    %v6670 = vld [vmem:[#allocation17 + $0x460] sm:$0xff]
    %v6671 = vld [vmem:[#allocation17 + $0x468] sm:$0xff]
    %v6672 = vld [vmem:[#allocation17 + $0x470] sm:$0xff]
    %v6673 = vld [vmem:[#allocation17 + $0x478] sm:$0xff]
    %v6674 = vld [vmem:[#allocation17 + $0x480] sm:$0xff]
    %v6675 = vld [vmem:[#allocation17 + $0x488] sm:$0xff]
    %v6676 = vld [vmem:[#allocation17 + $0x490] sm:$0xff]
    %v6677 = vld [vmem:[#allocation17 + $0x498] sm:$0xff]
    %v6678 = vld [vmem:[#allocation17 + $0x4a0] sm:$0xff]
    %v6679 = vld [vmem:[#allocation17 + $0x4a8] sm:$0xff]
    %v6680 = vld [vmem:[#allocation17 + $0x4b0] sm:$0xff]
    %v6681 = vld [vmem:[#allocation17 + $0x4b8] sm:$0xff]
    %v6682 = vld [vmem:[#allocation17 + $0x4c0] sm:$0xff]
    %v6683 = vld [vmem:[#allocation17 + $0x4c8] sm:$0xff]
    %v6684 = vld [vmem:[#allocation17 + $0x4d0] sm:$0xff]
    %v6685 = vld [vmem:[#allocation17 + $0x4d8] sm:$0xff]
    %v6686 = vld [vmem:[#allocation17 + $0x4e0] sm:$0xff]
    %v6687 = vld [vmem:[#allocation17 + $0x4e8] sm:$0xff]
    %v6688 = vld [vmem:[#allocation17 + $0x4f0] sm:$0xff]
    %v6689 = vld [vmem:[#allocation17 + $0x4f8] sm:$0xff]
    %v6690 = vld [vmem:[#allocation17 + $0x500] sm:$0xff]
    %v6691 = vld [vmem:[#allocation17 + $0x508] sm:$0xff]
    %v6692 = vld [vmem:[#allocation17 + $0x510] sm:$0xff]
    %v6693 = vld [vmem:[#allocation17 + $0x518] sm:$0xff]
    %v6694 = vld [vmem:[#allocation17 + $0x520] sm:$0xff]
    %v6695 = vld [vmem:[#allocation17 + $0x528] sm:$0xff]
    %v6696 = vld [vmem:[#allocation17 + $0x530] sm:$0xff]
    %v6697 = vld [vmem:[#allocation17 + $0x538] sm:$0xff]
    %v6698 = vld [vmem:[#allocation17 + $0x540] sm:$0xff]
    %v6699 = vld [vmem:[#allocation17 + $0x548] sm:$0xff]
    %v6700 = vld [vmem:[#allocation17 + $0x550] sm:$0xff]
    %v6701 = vld [vmem:[#allocation17 + $0x558] sm:$0xff]
    %v6702 = vld [vmem:[#allocation17 + $0x560] sm:$0xff]
    %v6703 = vld [vmem:[#allocation17 + $0x568] sm:$0xff]
    %v6704 = vld [vmem:[#allocation17 + $0x570] sm:$0xff]
    %v6705 = vld [vmem:[#allocation17 + $0x578] sm:$0xff]
    %v6706 = vld [vmem:[#allocation17 + $0x580] sm:$0xff]
    %v6707 = vld [vmem:[#allocation17 + $0x588] sm:$0xff]
    %v6708 = vld [vmem:[#allocation17 + $0x590] sm:$0xff]
    %v6709 = vld [vmem:[#allocation17 + $0x598] sm:$0xff]
    %v6710 = vld [vmem:[#allocation17 + $0x5a0] sm:$0xff]
    %v6711 = vld [vmem:[#allocation17 + $0x5a8] sm:$0xff]
    %v6712 = vld [vmem:[#allocation17 + $0x5b0] sm:$0xff]
    %v6713 = vld [vmem:[#allocation17 + $0x5b8] sm:$0xff]
    %v6714 = vld [vmem:[#allocation17 + $0x5c0] sm:$0xff]
    %v6715 = vld [vmem:[#allocation17 + $0x5c8] sm:$0xff]
    %v6716 = vld [vmem:[#allocation17 + $0x5d0] sm:$0xff]
    %v6717 = vld [vmem:[#allocation17 + $0x5d8] sm:$0xff]
    %v6718 = vld [vmem:[#allocation17 + $0x5e0] sm:$0xff]
    %v6719 = vld [vmem:[#allocation17 + $0x5e8] sm:$0xff]
    %v6720 = vld [vmem:[#allocation17 + $0x5f0] sm:$0xff]
    %v6721 = vld [vmem:[#allocation17 + $0x5f8] sm:$0xff]
    %v6722 = vld [vmem:[#allocation17 + $0x600] sm:$0xff]
    %v6723 = vld [vmem:[#allocation17 + $0x608] sm:$0xff]
    %v6724 = vld [vmem:[#allocation17 + $0x610] sm:$0xff]
    %v6725 = vld [vmem:[#allocation17 + $0x618] sm:$0xff]
    %v6726 = vld [vmem:[#allocation17 + $0x620] sm:$0xff]
    %v6727 = vld [vmem:[#allocation17 + $0x628] sm:$0xff]
    %v6728 = vld [vmem:[#allocation17 + $0x630] sm:$0xff]
    %v6729 = vld [vmem:[#allocation17 + $0x638] sm:$0xff]
    %v6730 = vld [vmem:[#allocation17 + $0x640] sm:$0xff]
    %v6731 = vld [vmem:[#allocation17 + $0x648] sm:$0xff]
    %v6732 = vld [vmem:[#allocation17 + $0x650] sm:$0xff]
    %v6733 = vld [vmem:[#allocation17 + $0x658] sm:$0xff]
    %v6734 = vld [vmem:[#allocation17 + $0x660] sm:$0xff]
    %v6735 = vld [vmem:[#allocation17 + $0x668] sm:$0xff]
    %v6736 = vld [vmem:[#allocation17 + $0x670] sm:$0xff]
    %v6737 = vld [vmem:[#allocation17 + $0x678] sm:$0xff]
    %v6738 = vld [vmem:[#allocation17 + $0x680] sm:$0xff]
    %v6739 = vld [vmem:[#allocation17 + $0x688] sm:$0xff]
    %v6740 = vld [vmem:[#allocation17 + $0x690] sm:$0xff]
    %v6741 = vld [vmem:[#allocation17 + $0x698] sm:$0xff]
    %v6742 = vld [vmem:[#allocation17 + $0x6a0] sm:$0xff]
    %v6743 = vld [vmem:[#allocation17 + $0x6a8] sm:$0xff]
    %v6744 = vld [vmem:[#allocation17 + $0x6b0] sm:$0xff]
    %v6745 = vld [vmem:[#allocation17 + $0x6b8] sm:$0xff]
    %v6746 = vld [vmem:[#allocation17 + $0x6c0] sm:$0xff]
    %v6747 = vld [vmem:[#allocation17 + $0x6c8] sm:$0xff]
    %v6748 = vld [vmem:[#allocation17 + $0x6d0] sm:$0xff]
    %v6749 = vld [vmem:[#allocation17 + $0x6d8] sm:$0xff]
    %v6750 = vld [vmem:[#allocation17 + $0x6e0] sm:$0xff]
    %v6751 = vld [vmem:[#allocation17 + $0x6e8] sm:$0xff]
    %v6752 = vld [vmem:[#allocation17 + $0x6f0] sm:$0xff]
    %v6753 = vld [vmem:[#allocation17 + $0x6f8] sm:$0xff]
    %v6754 = vld [vmem:[#allocation17 + $0x700] sm:$0xff]
    %v6755 = vld [vmem:[#allocation17 + $0x708] sm:$0xff]
    %v6756 = vld [vmem:[#allocation17 + $0x710] sm:$0xff]
    %v6757 = vld [vmem:[#allocation17 + $0x718] sm:$0xff]
    %v6758 = vld [vmem:[#allocation17 + $0x720] sm:$0xff]
    %v6759 = vld [vmem:[#allocation17 + $0x728] sm:$0xff]
    %v6760 = vld [vmem:[#allocation17 + $0x730] sm:$0xff]
    %v6761 = vld [vmem:[#allocation17 + $0x738] sm:$0xff]
    %v6762 = vld [vmem:[#allocation17 + $0x740] sm:$0xff]
    %v6763 = vld [vmem:[#allocation17 + $0x748] sm:$0xff]
    %v6764 = vld [vmem:[#allocation17 + $0x750] sm:$0xff]
    %v6765 = vld [vmem:[#allocation17 + $0x758] sm:$0xff]
    %v6766 = vld [vmem:[#allocation17 + $0x760] sm:$0xff]
    %v6767 = vld [vmem:[#allocation17 + $0x768] sm:$0xff]
    %v6768 = vld [vmem:[#allocation17 + $0x770] sm:$0xff]
    %v6769 = vld [vmem:[#allocation17 + $0x778] sm:$0xff]
    %v6770 = vld [vmem:[#allocation17 + $0x780] sm:$0xff]
    %v6771 = vld [vmem:[#allocation17 + $0x788] sm:$0xff]
    %v6772 = vld [vmem:[#allocation17 + $0x790] sm:$0xff]
    %v6773 = vld [vmem:[#allocation17 + $0x798] sm:$0xff]
    %v6774 = vld [vmem:[#allocation17 + $0x7a0] sm:$0xff]
    %v6775 = vld [vmem:[#allocation17 + $0x7a8] sm:$0xff]
    %v6776 = vld [vmem:[#allocation17 + $0x7b0] sm:$0xff]
    %v6777 = vld [vmem:[#allocation17 + $0x7b8] sm:$0xff]
    %v6778 = vld [vmem:[#allocation17 + $0x7c0] sm:$0xff]
    %v6779 = vld [vmem:[#allocation17 + $0x7c8] sm:$0xff]
    %v6780 = vld [vmem:[#allocation17 + $0x7d0] sm:$0xff]
    %v6781 = vld [vmem:[#allocation17 + $0x7d8] sm:$0xff]
    %v6782 = vld [vmem:[#allocation17 + $0x7e0] sm:$0xff]
    %v6783 = vld [vmem:[#allocation17 + $0x7e8] sm:$0xff]
    %v6784 = vld [vmem:[#allocation17 + $0x7f0] sm:$0xff]
    %v6785 = vld [vmem:[#allocation17 + $0x7f8] sm:$0xff]
    %v6786 = vpack.c.bf16 %v6444, %v6444
    %v6787 = vpack.c.bf16 %v6445, %v6445
    %v6788 = vpack.c.bf16 %v6528, %v6528
    %v6789 = vpack.c.bf16 %v6529, %v6529
    %v6790 = vld [vmem:[#allocation18] sm:$0xff]
    %v6791 = vld [vmem:[#allocation18 + $0x8] sm:$0xff]
    %v6792 = vld [vmem:[#allocation18 + $0x10] sm:$0xff]
    %v6793 = vld [vmem:[#allocation18 + $0x18] sm:$0xff]
    %v6794 = vld [vmem:[#allocation18 + $0x20] sm:$0xff]
    %v6795 = vld [vmem:[#allocation18 + $0x28] sm:$0xff]
    %v6796 = vld [vmem:[#allocation18 + $0x30] sm:$0xff]
    %v6797 = vld [vmem:[#allocation18 + $0x38] sm:$0xff]
    %v6798 = vld [vmem:[#allocation18 + $0x40] sm:$0xff]
    %v6799 = vld [vmem:[#allocation18 + $0x48] sm:$0xff]
    %v6800 = vld [vmem:[#allocation18 + $0x50] sm:$0xff]
    %v6801 = vld [vmem:[#allocation18 + $0x58] sm:$0xff]
    %v6802 = vld [vmem:[#allocation18 + $0x60] sm:$0xff]
    %v6803 = vld [vmem:[#allocation18 + $0x68] sm:$0xff]
    %v6804 = vld [vmem:[#allocation18 + $0x70] sm:$0xff]
    %v6805 = vld [vmem:[#allocation18 + $0x78] sm:$0xff]
    %v6806 = vld [vmem:[#allocation18 + $0x80] sm:$0xff]
    %v6807 = vld [vmem:[#allocation18 + $0x88] sm:$0xff]
    %v6808 = vld [vmem:[#allocation18 + $0x90] sm:$0xff]
    %v6809 = vld [vmem:[#allocation18 + $0x98] sm:$0xff]
    %v6810 = vld [vmem:[#allocation18 + $0xa0] sm:$0xff]
    %v6811 = vld [vmem:[#allocation18 + $0xa8] sm:$0xff]
    %v6812 = vld [vmem:[#allocation18 + $0xb0] sm:$0xff]
    %v6813 = vld [vmem:[#allocation18 + $0xb8] sm:$0xff]
    %v6814 = vld [vmem:[#allocation18 + $0xc0] sm:$0xff]
    %v6815 = vld [vmem:[#allocation18 + $0xc8] sm:$0xff]
    %v6816 = vld [vmem:[#allocation18 + $0xd0] sm:$0xff]
    %v6817 = vld [vmem:[#allocation18 + $0xd8] sm:$0xff]
    %v6818 = vld [vmem:[#allocation18 + $0xe0] sm:$0xff]
    %v6819 = vld [vmem:[#allocation18 + $0xe8] sm:$0xff]
    %v6820 = vld [vmem:[#allocation18 + $0xf0] sm:$0xff]
    %v6821 = vld [vmem:[#allocation18 + $0xf8] sm:$0xff]
    %v6822 = vld [vmem:[#allocation18 + $0x100] sm:$0xff]
    %v6823 = vld [vmem:[#allocation18 + $0x108] sm:$0xff]
    %v6824 = vld [vmem:[#allocation18 + $0x110] sm:$0xff]
    %v6825 = vld [vmem:[#allocation18 + $0x118] sm:$0xff]
    %v6826 = vld [vmem:[#allocation18 + $0x120] sm:$0xff]
    %v6827 = vld [vmem:[#allocation18 + $0x128] sm:$0xff]
    %v6828 = vld [vmem:[#allocation18 + $0x130] sm:$0xff]
    %v6829 = vld [vmem:[#allocation18 + $0x138] sm:$0xff]
    %v6830 = vld [vmem:[#allocation18 + $0x140] sm:$0xff]
    %v6831 = vld [vmem:[#allocation18 + $0x148] sm:$0xff]
    %v6832 = vld [vmem:[#allocation18 + $0x150] sm:$0xff]
    %v6833 = vld [vmem:[#allocation18 + $0x158] sm:$0xff]
    %v6834 = vld [vmem:[#allocation18 + $0x160] sm:$0xff]
    %v6835 = vld [vmem:[#allocation18 + $0x168] sm:$0xff]
    %v6836 = vld [vmem:[#allocation18 + $0x170] sm:$0xff]
    %v6837 = vld [vmem:[#allocation18 + $0x178] sm:$0xff]
    %v6838 = vld [vmem:[#allocation18 + $0x180] sm:$0xff]
    %v6839 = vld [vmem:[#allocation18 + $0x188] sm:$0xff]
    %v6840 = vld [vmem:[#allocation18 + $0x190] sm:$0xff]
    %v6841 = vld [vmem:[#allocation18 + $0x198] sm:$0xff]
    %v6842 = vld [vmem:[#allocation18 + $0x1a0] sm:$0xff]
    %v6843 = vld [vmem:[#allocation18 + $0x1a8] sm:$0xff]
    %v6844 = vld [vmem:[#allocation18 + $0x1b0] sm:$0xff]
    %v6845 = vld [vmem:[#allocation18 + $0x1b8] sm:$0xff]
    %v6846 = vld [vmem:[#allocation18 + $0x1c0] sm:$0xff]
    %v6847 = vld [vmem:[#allocation18 + $0x1c8] sm:$0xff]
    %v6848 = vld [vmem:[#allocation18 + $0x1d0] sm:$0xff]
    %v6849 = vld [vmem:[#allocation18 + $0x1d8] sm:$0xff]
    %v6850 = vld [vmem:[#allocation18 + $0x1e0] sm:$0xff]
    %v6851 = vld [vmem:[#allocation18 + $0x1e8] sm:$0xff]
    %v6852 = vld [vmem:[#allocation18 + $0x1f0] sm:$0xff]
    %v6853 = vld [vmem:[#allocation18 + $0x1f8] sm:$0xff]
    %v6854 = vld [vmem:[#allocation18 + $0x200] sm:$0xff]
    %v6855 = vld [vmem:[#allocation18 + $0x208] sm:$0xff]
    %v6856 = vld [vmem:[#allocation18 + $0x210] sm:$0xff]
    %v6857 = vld [vmem:[#allocation18 + $0x218] sm:$0xff]
    %v6858 = vld [vmem:[#allocation18 + $0x220] sm:$0xff]
    %v6859 = vld [vmem:[#allocation18 + $0x228] sm:$0xff]
    %v6860 = vld [vmem:[#allocation18 + $0x230] sm:$0xff]
    %v6861 = vld [vmem:[#allocation18 + $0x238] sm:$0xff]
    %v6862 = vld [vmem:[#allocation18 + $0x240] sm:$0xff]
    %v6863 = vld [vmem:[#allocation18 + $0x248] sm:$0xff]
    %v6864 = vld [vmem:[#allocation18 + $0x250] sm:$0xff]
    %v6865 = vld [vmem:[#allocation18 + $0x258] sm:$0xff]
    %v6866 = vld [vmem:[#allocation18 + $0x260] sm:$0xff]
    %v6867 = vld [vmem:[#allocation18 + $0x268] sm:$0xff]
    %v6868 = vld [vmem:[#allocation18 + $0x270] sm:$0xff]
    %v6869 = vld [vmem:[#allocation18 + $0x278] sm:$0xff]
    %v6870 = vld [vmem:[#allocation18 + $0x280] sm:$0xff]
    %v6871 = vld [vmem:[#allocation18 + $0x288] sm:$0xff]
    %v6872 = vld [vmem:[#allocation18 + $0x290] sm:$0xff]
    %v6873 = vld [vmem:[#allocation18 + $0x298] sm:$0xff]
    %v6874 = vld [vmem:[#allocation18 + $0x2a0] sm:$0xff]
    %v6875 = vld [vmem:[#allocation18 + $0x2a8] sm:$0xff]
    %v6876 = vld [vmem:[#allocation18 + $0x2b0] sm:$0xff]
    %v6877 = vld [vmem:[#allocation18 + $0x2b8] sm:$0xff]
    %v6878 = vld [vmem:[#allocation18 + $0x2c0] sm:$0xff]
    %v6879 = vld [vmem:[#allocation18 + $0x2c8] sm:$0xff]
    %v6880 = vld [vmem:[#allocation18 + $0x2d0] sm:$0xff]
    %v6881 = vld [vmem:[#allocation18 + $0x2d8] sm:$0xff]
    %v6882 = vld [vmem:[#allocation18 + $0x2e0] sm:$0xff]
    %v6883 = vld [vmem:[#allocation18 + $0x2e8] sm:$0xff]
    %v6884 = vld [vmem:[#allocation18 + $0x2f0] sm:$0xff]
    %v6885 = vld [vmem:[#allocation18 + $0x2f8] sm:$0xff]
    %v6886 = vld [vmem:[#allocation18 + $0x300] sm:$0xff]
    %v6887 = vld [vmem:[#allocation18 + $0x308] sm:$0xff]
    %v6888 = vld [vmem:[#allocation18 + $0x310] sm:$0xff]
    %v6889 = vld [vmem:[#allocation18 + $0x318] sm:$0xff]
    %v6890 = vld [vmem:[#allocation18 + $0x320] sm:$0xff]
    %v6891 = vld [vmem:[#allocation18 + $0x328] sm:$0xff]
    %v6892 = vld [vmem:[#allocation18 + $0x330] sm:$0xff]
    %v6893 = vld [vmem:[#allocation18 + $0x338] sm:$0xff]
    %v6894 = vld [vmem:[#allocation18 + $0x340] sm:$0xff]
    %v6895 = vld [vmem:[#allocation18 + $0x348] sm:$0xff]
    %v6896 = vld [vmem:[#allocation18 + $0x350] sm:$0xff]
    %v6897 = vld [vmem:[#allocation18 + $0x358] sm:$0xff]
    %v6898 = vld [vmem:[#allocation18 + $0x360] sm:$0xff]
    %v6899 = vld [vmem:[#allocation18 + $0x368] sm:$0xff]
    %v6900 = vld [vmem:[#allocation18 + $0x370] sm:$0xff]
    %v6901 = vld [vmem:[#allocation18 + $0x378] sm:$0xff]
    %v6902 = vld [vmem:[#allocation18 + $0x380] sm:$0xff]
    %v6903 = vld [vmem:[#allocation18 + $0x388] sm:$0xff]
    %v6904 = vld [vmem:[#allocation18 + $0x390] sm:$0xff]
    %v6905 = vld [vmem:[#allocation18 + $0x398] sm:$0xff]
    %v6906 = vld [vmem:[#allocation18 + $0x3a0] sm:$0xff]
    %v6907 = vld [vmem:[#allocation18 + $0x3a8] sm:$0xff]
    %v6908 = vld [vmem:[#allocation18 + $0x3b0] sm:$0xff]
    %v6909 = vld [vmem:[#allocation18 + $0x3b8] sm:$0xff]
    %v6910 = vld [vmem:[#allocation18 + $0x3c0] sm:$0xff]
    %v6911 = vld [vmem:[#allocation18 + $0x3c8] sm:$0xff]
    %v6912 = vld [vmem:[#allocation18 + $0x3d0] sm:$0xff]
    %v6913 = vld [vmem:[#allocation18 + $0x3d8] sm:$0xff]
    %v6914 = vld [vmem:[#allocation18 + $0x3e0] sm:$0xff]
    %v6915 = vld [vmem:[#allocation18 + $0x3e8] sm:$0xff]
    %v6916 = vld [vmem:[#allocation18 + $0x3f0] sm:$0xff]
    %v6917 = vld [vmem:[#allocation18 + $0x3f8] sm:$0xff]
    %v7046 = vunpack.c.l.b16 %v6790
    %v7047 = vunpack.c.h.b16 %v6790
    %v7048 = vunpack.c.l.b16 %v6791
    %v7049 = vunpack.c.h.b16 %v6791
    %v7050 = vunpack.c.l.b16 %v6792
    %v7051 = vunpack.c.h.b16 %v6792
    %v7052 = vunpack.c.l.b16 %v6793
    %v7053 = vunpack.c.h.b16 %v6793
    %v7054 = vunpack.c.l.b16 %v6794
    %v7055 = vunpack.c.h.b16 %v6794
    %v7056 = vunpack.c.l.b16 %v6795
    %v7057 = vunpack.c.h.b16 %v6795
    %v7058 = vunpack.c.l.b16 %v6796
    %v7059 = vunpack.c.h.b16 %v6796
    %v7060 = vunpack.c.l.b16 %v6797
    %v7061 = vunpack.c.h.b16 %v6797
    %v7062 = vunpack.c.l.b16 %v6798
    %v7063 = vunpack.c.h.b16 %v6798
    %v7064 = vunpack.c.l.b16 %v6799
    %v7065 = vunpack.c.h.b16 %v6799
    %v7066 = vunpack.c.l.b16 %v6800
    %v7067 = vunpack.c.h.b16 %v6800
    %v7068 = vunpack.c.l.b16 %v6801
    %v7069 = vunpack.c.h.b16 %v6801
    %v7070 = vunpack.c.l.b16 %v6802
    %v7071 = vunpack.c.h.b16 %v6802
    %v7072 = vunpack.c.l.b16 %v6803
    %v7073 = vunpack.c.h.b16 %v6803
    %v7074 = vunpack.c.l.b16 %v6804
    %v7075 = vunpack.c.h.b16 %v6804
    %v7076 = vunpack.c.l.b16 %v6805
    %v7077 = vunpack.c.h.b16 %v6805
    %v7078 = vunpack.c.l.b16 %v6806
    %v7079 = vunpack.c.h.b16 %v6806
    %v7080 = vunpack.c.l.b16 %v6807
    %v7081 = vunpack.c.h.b16 %v6807
    %v7082 = vunpack.c.l.b16 %v6808
    %v7083 = vunpack.c.h.b16 %v6808
    %v7084 = vunpack.c.l.b16 %v6809
    %v7085 = vunpack.c.h.b16 %v6809
    %v7086 = vunpack.c.l.b16 %v6810
    %v7087 = vunpack.c.h.b16 %v6810
    %v7088 = vunpack.c.l.b16 %v6811
    %v7089 = vunpack.c.h.b16 %v6811
    %v7090 = vunpack.c.l.b16 %v6812
    %v7091 = vunpack.c.h.b16 %v6812
    %v7092 = vunpack.c.l.b16 %v6813
    %v7093 = vunpack.c.h.b16 %v6813
    %v7094 = vunpack.c.l.b16 %v6814
    %v7095 = vunpack.c.h.b16 %v6814
    %v7096 = vunpack.c.l.b16 %v6815
    %v7097 = vunpack.c.h.b16 %v6815
    %v7098 = vunpack.c.l.b16 %v6816
    %v7099 = vunpack.c.h.b16 %v6816
    %v7100 = vunpack.c.l.b16 %v6817
    %v7101 = vunpack.c.h.b16 %v6817
    %v7102 = vunpack.c.l.b16 %v6818
    %v7103 = vunpack.c.h.b16 %v6818
    %v7104 = vunpack.c.l.b16 %v6819
    %v7105 = vunpack.c.h.b16 %v6819
    %v7106 = vunpack.c.l.b16 %v6820
    %v7107 = vunpack.c.h.b16 %v6820
    %v7108 = vunpack.c.l.b16 %v6821
    %v7109 = vunpack.c.h.b16 %v6821
    %v7110 = vunpack.c.l.b16 %v6822
    %v7111 = vunpack.c.h.b16 %v6822
    %v7112 = vunpack.c.l.b16 %v6823
    %v7113 = vunpack.c.h.b16 %v6823
    %v7114 = vunpack.c.l.b16 %v6824
    %v7115 = vunpack.c.h.b16 %v6824
    %v7116 = vunpack.c.l.b16 %v6825
    %v7117 = vunpack.c.h.b16 %v6825
    %v7118 = vunpack.c.l.b16 %v6826
    %v7119 = vunpack.c.h.b16 %v6826
    %v7120 = vunpack.c.l.b16 %v6827
    %v7121 = vunpack.c.h.b16 %v6827
    %v7122 = vunpack.c.l.b16 %v6828
    %v7123 = vunpack.c.h.b16 %v6828
    %v7124 = vunpack.c.l.b16 %v6829
    %v7125 = vunpack.c.h.b16 %v6829
    %v7126 = vunpack.c.l.b16 %v6830
    %v7127 = vunpack.c.h.b16 %v6830
    %v7128 = vunpack.c.l.b16 %v6831
    %v7129 = vunpack.c.h.b16 %v6831
    %v7130 = vunpack.c.l.b16 %v6832
    %v7131 = vunpack.c.h.b16 %v6832
    %v7132 = vunpack.c.l.b16 %v6833
    %v7133 = vunpack.c.h.b16 %v6833
    %v7134 = vunpack.c.l.b16 %v6834
    %v7135 = vunpack.c.h.b16 %v6834
    %v7136 = vunpack.c.l.b16 %v6835
    %v7137 = vunpack.c.h.b16 %v6835
    %v7138 = vunpack.c.l.b16 %v6836
    %v7139 = vunpack.c.h.b16 %v6836
    %v7140 = vunpack.c.l.b16 %v6837
    %v7141 = vunpack.c.h.b16 %v6837
    %v7142 = vunpack.c.l.b16 %v6838
    %v7143 = vunpack.c.h.b16 %v6838
    %v7144 = vunpack.c.l.b16 %v6839
    %v7145 = vunpack.c.h.b16 %v6839
    %v7146 = vunpack.c.l.b16 %v6840
    %v7147 = vunpack.c.h.b16 %v6840
    %v7148 = vunpack.c.l.b16 %v6841
    %v7149 = vunpack.c.h.b16 %v6841
    %v7150 = vunpack.c.l.b16 %v6842
    %v7151 = vunpack.c.h.b16 %v6842
    %v7152 = vunpack.c.l.b16 %v6843
    %v7153 = vunpack.c.h.b16 %v6843
    %v7154 = vunpack.c.l.b16 %v6844
    %v7155 = vunpack.c.h.b16 %v6844
    %v7156 = vunpack.c.l.b16 %v6845
    %v7157 = vunpack.c.h.b16 %v6845
    %v7158 = vunpack.c.l.b16 %v6846
    %v7159 = vunpack.c.h.b16 %v6846
    %v7160 = vunpack.c.l.b16 %v6847
    %v7161 = vunpack.c.h.b16 %v6847
    %v7162 = vunpack.c.l.b16 %v6848
    %v7163 = vunpack.c.h.b16 %v6848
    %v7164 = vunpack.c.l.b16 %v6849
    %v7165 = vunpack.c.h.b16 %v6849
    %v7166 = vunpack.c.l.b16 %v6850
    %v7167 = vunpack.c.h.b16 %v6850
    %v7168 = vunpack.c.l.b16 %v6851
    %v7169 = vunpack.c.h.b16 %v6851
    %v7170 = vunpack.c.l.b16 %v6852
    %v7171 = vunpack.c.h.b16 %v6852
    %v7172 = vunpack.c.l.b16 %v6853
    %v7173 = vunpack.c.h.b16 %v6853
    %v7174 = vunpack.c.l.b16 %v6854
    %v7175 = vunpack.c.h.b16 %v6854
    %v7176 = vunpack.c.l.b16 %v6855
    %v7177 = vunpack.c.h.b16 %v6855
    %v7178 = vunpack.c.l.b16 %v6856
    %v7179 = vunpack.c.h.b16 %v6856
    %v7180 = vunpack.c.l.b16 %v6857
    %v7181 = vunpack.c.h.b16 %v6857
    %v7182 = vunpack.c.l.b16 %v6858
    %v7183 = vunpack.c.h.b16 %v6858
    %v7184 = vunpack.c.l.b16 %v6859
    %v7185 = vunpack.c.h.b16 %v6859
    %v7186 = vunpack.c.l.b16 %v6860
    %v7187 = vunpack.c.h.b16 %v6860
    %v7188 = vunpack.c.l.b16 %v6861
    %v7189 = vunpack.c.h.b16 %v6861
    %v7190 = vunpack.c.l.b16 %v6862
    %v7191 = vunpack.c.h.b16 %v6862
    %v7192 = vunpack.c.l.b16 %v6863
    %v7193 = vunpack.c.h.b16 %v6863
    %v7194 = vunpack.c.l.b16 %v6864
    %v7195 = vunpack.c.h.b16 %v6864
    %v7196 = vunpack.c.l.b16 %v6865
    %v7197 = vunpack.c.h.b16 %v6865
    %v7198 = vunpack.c.l.b16 %v6866
    %v7199 = vunpack.c.h.b16 %v6866
    %v7200 = vunpack.c.l.b16 %v6867
    %v7201 = vunpack.c.h.b16 %v6867
    %v7202 = vunpack.c.l.b16 %v6868
    %v7203 = vunpack.c.h.b16 %v6868
    %v7204 = vunpack.c.l.b16 %v6869
    %v7205 = vunpack.c.h.b16 %v6869
    %v7206 = vunpack.c.l.b16 %v6870
    %v7207 = vunpack.c.h.b16 %v6870
    %v7208 = vunpack.c.l.b16 %v6871
    %v7209 = vunpack.c.h.b16 %v6871
    %v7210 = vunpack.c.l.b16 %v6872
    %v7211 = vunpack.c.h.b16 %v6872
    %v7212 = vunpack.c.l.b16 %v6873
    %v7213 = vunpack.c.h.b16 %v6873
    %v7214 = vunpack.c.l.b16 %v6874
    %v7215 = vunpack.c.h.b16 %v6874
    %v7216 = vunpack.c.l.b16 %v6875
    %v7217 = vunpack.c.h.b16 %v6875
    %v7218 = vunpack.c.l.b16 %v6876
    %v7219 = vunpack.c.h.b16 %v6876
    %v7220 = vunpack.c.l.b16 %v6877
    %v7221 = vunpack.c.h.b16 %v6877
    %v7222 = vunpack.c.l.b16 %v6878
    %v7223 = vunpack.c.h.b16 %v6878
    %v7224 = vunpack.c.l.b16 %v6879
    %v7225 = vunpack.c.h.b16 %v6879
    %v7226 = vunpack.c.l.b16 %v6880
    %v7227 = vunpack.c.h.b16 %v6880
    %v7228 = vunpack.c.l.b16 %v6881
    %v7229 = vunpack.c.h.b16 %v6881
    %v7230 = vunpack.c.l.b16 %v6882
    %v7231 = vunpack.c.h.b16 %v6882
    %v7232 = vunpack.c.l.b16 %v6883
    %v7233 = vunpack.c.h.b16 %v6883
    %v7234 = vunpack.c.l.b16 %v6884
    %v7235 = vunpack.c.h.b16 %v6884
    %v7236 = vunpack.c.l.b16 %v6885
    %v7237 = vunpack.c.h.b16 %v6885
    %v7238 = vunpack.c.l.b16 %v6886
    %v7239 = vunpack.c.h.b16 %v6886
    %v7240 = vunpack.c.l.b16 %v6887
    %v7241 = vunpack.c.h.b16 %v6887
    %v7242 = vunpack.c.l.b16 %v6888
    %v7243 = vunpack.c.h.b16 %v6888
    %v7244 = vunpack.c.l.b16 %v6889
    %v7245 = vunpack.c.h.b16 %v6889
    %v7246 = vunpack.c.l.b16 %v6890
    %v7247 = vunpack.c.h.b16 %v6890
    %v7248 = vunpack.c.l.b16 %v6891
    %v7249 = vunpack.c.h.b16 %v6891
    %v7250 = vunpack.c.l.b16 %v6892
    %v7251 = vunpack.c.h.b16 %v6892
    %v7252 = vunpack.c.l.b16 %v6893
    %v7253 = vunpack.c.h.b16 %v6893
    %v7254 = vunpack.c.l.b16 %v6894
    %v7255 = vunpack.c.h.b16 %v6894
    %v7256 = vunpack.c.l.b16 %v6895
    %v7257 = vunpack.c.h.b16 %v6895
    %v7258 = vunpack.c.l.b16 %v6896
    %v7259 = vunpack.c.h.b16 %v6896
    %v7260 = vunpack.c.l.b16 %v6897
    %v7261 = vunpack.c.h.b16 %v6897
    %v7262 = vunpack.c.l.b16 %v6898
    %v7263 = vunpack.c.h.b16 %v6898
    %v7264 = vunpack.c.l.b16 %v6899
    %v7265 = vunpack.c.h.b16 %v6899
    %v7266 = vunpack.c.l.b16 %v6900
    %v7267 = vunpack.c.h.b16 %v6900
    %v7268 = vunpack.c.l.b16 %v6901
    %v7269 = vunpack.c.h.b16 %v6901
    %v7270 = vunpack.c.l.b16 %v6902
    %v7271 = vunpack.c.h.b16 %v6902
    %v7272 = vunpack.c.l.b16 %v6903
    %v7273 = vunpack.c.h.b16 %v6903
    %v7274 = vunpack.c.l.b16 %v6904
    %v7275 = vunpack.c.h.b16 %v6904
    %v7276 = vunpack.c.l.b16 %v6905
    %v7277 = vunpack.c.h.b16 %v6905
    %v7278 = vunpack.c.l.b16 %v6906
    %v7279 = vunpack.c.h.b16 %v6906
    %v7280 = vunpack.c.l.b16 %v6907
    %v7281 = vunpack.c.h.b16 %v6907
    %v7282 = vunpack.c.l.b16 %v6908
    %v7283 = vunpack.c.h.b16 %v6908
    %v7284 = vunpack.c.l.b16 %v6909
    %v7285 = vunpack.c.h.b16 %v6909
    %v7286 = vunpack.c.l.b16 %v6910
    %v7287 = vunpack.c.h.b16 %v6910
    %v7288 = vunpack.c.l.b16 %v6911
    %v7289 = vunpack.c.h.b16 %v6911
    %v7290 = vunpack.c.l.b16 %v6912
    %v7291 = vunpack.c.h.b16 %v6912
    %v7292 = vunpack.c.l.b16 %v6913
    %v7293 = vunpack.c.h.b16 %v6913
    %v7294 = vunpack.c.l.b16 %v6914
    %v7295 = vunpack.c.h.b16 %v6914
    %v7296 = vunpack.c.l.b16 %v6915
    %v7297 = vunpack.c.h.b16 %v6915
    %v7298 = vunpack.c.l.b16 %v6916
    %v7299 = vunpack.c.h.b16 %v6916
    %v7300 = vunpack.c.l.b16 %v6917
    %v7301 = vunpack.c.h.b16 %v6917
    %v7302 = vpack.c.b16 %v7050, %v7046
    %v7303 = vpack.c.b16 %v7051, %v7047
    %v7304 = vpack.c.b16 %v7052, %v7048
    %v7305 = vpack.c.b16 %v7053, %v7049
    %v7306 = vpack.c.b16 %v7058, %v7054
    %v7307 = vpack.c.b16 %v7059, %v7055
    %v7308 = vpack.c.b16 %v7060, %v7056
    %v7309 = vpack.c.b16 %v7061, %v7057
    %v7310 = vpack.c.b16 %v7066, %v7062
    %v7311 = vpack.c.b16 %v7067, %v7063
    %v7312 = vpack.c.b16 %v7068, %v7064
    %v7313 = vpack.c.b16 %v7069, %v7065
    %v7314 = vpack.c.b16 %v7074, %v7070
    %v7315 = vpack.c.b16 %v7075, %v7071
    %v7316 = vpack.c.b16 %v7076, %v7072
    %v7317 = vpack.c.b16 %v7077, %v7073
    %v7318 = vpack.c.b16 %v7082, %v7078
    %v7319 = vpack.c.b16 %v7083, %v7079
    %v7320 = vpack.c.b16 %v7084, %v7080
    %v7321 = vpack.c.b16 %v7085, %v7081
    %v7322 = vpack.c.b16 %v7090, %v7086
    %v7323 = vpack.c.b16 %v7091, %v7087
    %v7324 = vpack.c.b16 %v7092, %v7088
    %v7325 = vpack.c.b16 %v7093, %v7089
    %v7326 = vpack.c.b16 %v7098, %v7094
    %v7327 = vpack.c.b16 %v7099, %v7095
    %v7328 = vpack.c.b16 %v7100, %v7096
    %v7329 = vpack.c.b16 %v7101, %v7097
    %v7330 = vpack.c.b16 %v7106, %v7102
    %v7331 = vpack.c.b16 %v7107, %v7103
    %v7332 = vpack.c.b16 %v7108, %v7104
    %v7333 = vpack.c.b16 %v7109, %v7105
    %v7334 = vpack.c.b16 %v7114, %v7110
    %v7335 = vpack.c.b16 %v7115, %v7111
    %v7336 = vpack.c.b16 %v7116, %v7112
    %v7337 = vpack.c.b16 %v7117, %v7113
    %v7338 = vpack.c.b16 %v7122, %v7118
    %v7339 = vpack.c.b16 %v7123, %v7119
    %v7340 = vpack.c.b16 %v7124, %v7120
    %v7341 = vpack.c.b16 %v7125, %v7121
    %v7342 = vpack.c.b16 %v7130, %v7126
    %v7343 = vpack.c.b16 %v7131, %v7127
    %v7344 = vpack.c.b16 %v7132, %v7128
    %v7345 = vpack.c.b16 %v7133, %v7129
    %v7346 = vpack.c.b16 %v7138, %v7134
    %v7347 = vpack.c.b16 %v7139, %v7135
    %v7348 = vpack.c.b16 %v7140, %v7136
    %v7349 = vpack.c.b16 %v7141, %v7137
    %v7350 = vpack.c.b16 %v7146, %v7142
    %v7351 = vpack.c.b16 %v7147, %v7143
    %v7352 = vpack.c.b16 %v7148, %v7144
    %v7353 = vpack.c.b16 %v7149, %v7145
    %v7354 = vpack.c.b16 %v7154, %v7150
    %v7355 = vpack.c.b16 %v7155, %v7151
    %v7356 = vpack.c.b16 %v7156, %v7152
    %v7357 = vpack.c.b16 %v7157, %v7153
    %v7358 = vpack.c.b16 %v7162, %v7158
    %v7359 = vpack.c.b16 %v7163, %v7159
    %v7360 = vpack.c.b16 %v7164, %v7160
    %v7361 = vpack.c.b16 %v7165, %v7161
    %v7362 = vpack.c.b16 %v7170, %v7166
    %v7363 = vpack.c.b16 %v7171, %v7167
    %v7364 = vpack.c.b16 %v7172, %v7168
    %v7365 = vpack.c.b16 %v7173, %v7169
    %v7366 = vpack.c.b16 %v7178, %v7174
    %v7367 = vpack.c.b16 %v7179, %v7175
    %v7368 = vpack.c.b16 %v7180, %v7176
    %v7369 = vpack.c.b16 %v7181, %v7177
    %v7370 = vpack.c.b16 %v7186, %v7182
    %v7371 = vpack.c.b16 %v7187, %v7183
    %v7372 = vpack.c.b16 %v7188, %v7184
    %v7373 = vpack.c.b16 %v7189, %v7185
    %v7374 = vpack.c.b16 %v7194, %v7190
    %v7375 = vpack.c.b16 %v7195, %v7191
    %v7376 = vpack.c.b16 %v7196, %v7192
    %v7377 = vpack.c.b16 %v7197, %v7193
    %v7378 = vpack.c.b16 %v7202, %v7198
    %v7379 = vpack.c.b16 %v7203, %v7199
    %v7380 = vpack.c.b16 %v7204, %v7200
    %v7381 = vpack.c.b16 %v7205, %v7201
    %v7382 = vpack.c.b16 %v7210, %v7206
    %v7383 = vpack.c.b16 %v7211, %v7207
    %v7384 = vpack.c.b16 %v7212, %v7208
    %v7385 = vpack.c.b16 %v7213, %v7209
    %v7386 = vpack.c.b16 %v7218, %v7214
    %v7387 = vpack.c.b16 %v7219, %v7215
    %v7388 = vpack.c.b16 %v7220, %v7216
    %v7389 = vpack.c.b16 %v7221, %v7217
    %v7390 = vpack.c.b16 %v7226, %v7222
    %v7391 = vpack.c.b16 %v7227, %v7223
    %v7392 = vpack.c.b16 %v7228, %v7224
    %v7393 = vpack.c.b16 %v7229, %v7225
    %v7394 = vpack.c.b16 %v7234, %v7230
    %v7395 = vpack.c.b16 %v7235, %v7231
    %v7396 = vpack.c.b16 %v7236, %v7232
    %v7397 = vpack.c.b16 %v7237, %v7233
    %v7398 = vpack.c.b16 %v7242, %v7238
    %v7399 = vpack.c.b16 %v7243, %v7239
    %v7400 = vpack.c.b16 %v7244, %v7240
    %v7401 = vpack.c.b16 %v7245, %v7241
    %v7402 = vpack.c.b16 %v7250, %v7246
    %v7403 = vpack.c.b16 %v7251, %v7247
    %v7404 = vpack.c.b16 %v7252, %v7248
    %v7405 = vpack.c.b16 %v7253, %v7249
    %v7406 = vpack.c.b16 %v7258, %v7254
    %v7407 = vpack.c.b16 %v7259, %v7255
    %v7408 = vpack.c.b16 %v7260, %v7256
    %v7409 = vpack.c.b16 %v7261, %v7257
    %v7410 = vpack.c.b16 %v7266, %v7262
    %v7411 = vpack.c.b16 %v7267, %v7263
    %v7412 = vpack.c.b16 %v7268, %v7264
    %v7413 = vpack.c.b16 %v7269, %v7265
    %v7414 = vpack.c.b16 %v7274, %v7270
    %v7415 = vpack.c.b16 %v7275, %v7271
    %v7416 = vpack.c.b16 %v7276, %v7272
    %v7417 = vpack.c.b16 %v7277, %v7273
    %v7418 = vpack.c.b16 %v7282, %v7278
    %v7419 = vpack.c.b16 %v7283, %v7279
    %v7420 = vpack.c.b16 %v7284, %v7280
    %v7421 = vpack.c.b16 %v7285, %v7281
    %v7422 = vpack.c.b16 %v7290, %v7286
    %v7423 = vpack.c.b16 %v7291, %v7287
    %v7424 = vpack.c.b16 %v7292, %v7288
    %v7425 = vpack.c.b16 %v7293, %v7289
    %v7426 = vpack.c.b16 %v7298, %v7294
    %v7427 = vpack.c.b16 %v7299, %v7295
    %v7428 = vpack.c.b16 %v7300, %v7296
    %v7429 = vpack.c.b16 %v7301, %v7297
    %7558 = vmatpush.bf16.msra.mxu0 %v7330
    %7559 = vmatpush.bf16.msra.mxu0 %v7326
    %7560 = vmatpush.bf16.msra.mxu0 %v7322
    %7561 = vmatpush.bf16.msra.mxu0 %v7318
    %7562 = vmatpush.bf16.msra.mxu0 %v7314
    %7563 = vmatpush.bf16.msra.mxu0 %v7310
    %7564 = vmatpush.bf16.msra.mxu0 %v7306
    %7565 = vmatpush.bf16.msra.mxu0 %v7302
    %7566 = vmatmul.bf16.gmra.mxu0 %v6786
    %v7567 = vpop.f32.mrf.mxu0
    %v7568 = vadd.f32 0.0, %v7567
    %v7569 = vpop.f32.mrf.mxu0
    %7570 = vdwg.mxu0
    %7571 = vmatpush.bf16.msra.mxu0 %v7362
    %7572 = vmatpush.bf16.msra.mxu0 %v7358
    %7573 = vmatpush.bf16.msra.mxu0 %v7354
    %7574 = vmatpush.bf16.msra.mxu0 %v7350
    %7575 = vmatpush.bf16.msra.mxu0 %v7346
    %7576 = vmatpush.bf16.msra.mxu0 %v7342
    %7577 = vmatpush.bf16.msra.mxu0 %v7338
    %7578 = vmatpush.bf16.msra.mxu0 %v7334
    %7579 = vmatmul.bf16.gmra.mxu0 %v6787
    %v7580 = vpop.f32.mrf.mxu0
    %v7581 = vadd.f32 %v7568, %v7580
    %v7582 = vpop.f32.mrf.mxu0
    %7583 = vdwg.mxu0
    %7584 = vmatpush.bf16.msra.mxu0 %v7394
    %7585 = vmatpush.bf16.msra.mxu0 %v7390
    %7586 = vmatpush.bf16.msra.mxu0 %v7386
    %7587 = vmatpush.bf16.msra.mxu0 %v7382
    %7588 = vmatpush.bf16.msra.mxu0 %v7378
    %7589 = vmatpush.bf16.msra.mxu0 %v7374
    %7590 = vmatpush.bf16.msra.mxu0 %v7370
    %7591 = vmatpush.bf16.msra.mxu0 %v7366
    %7592 = vmatmul.bf16.gmra.mxu0 %v6788
    %v7593 = vpop.f32.mrf.mxu0
    %v7594 = vadd.f32 %v7581, %v7593
    %v7595 = vpop.f32.mrf.mxu0
    %7596 = vdwg.mxu0
    %7597 = vmatpush.bf16.msra.mxu0 %v7426
    %7598 = vmatpush.bf16.msra.mxu0 %v7422
    %7599 = vmatpush.bf16.msra.mxu0 %v7418
    %7600 = vmatpush.bf16.msra.mxu0 %v7414
    %7601 = vmatpush.bf16.msra.mxu0 %v7410
    %7602 = vmatpush.bf16.msra.mxu0 %v7406
    %7603 = vmatpush.bf16.msra.mxu0 %v7402
    %7604 = vmatpush.bf16.msra.mxu0 %v7398
    %7605 = vmatmul.bf16.gmra.mxu0 %v6789
    %v7606 = vpop.f32.mrf.mxu0
    %v7607 = vadd.f32 %v7594, %v7606
    %v7608 = vpop.f32.mrf.mxu0
    %7609 = vdwg.mxu0
    %7610 = vmatpush.bf16.msra.mxu0 %v7331
    %7611 = vmatpush.bf16.msra.mxu0 %v7327
    %7612 = vmatpush.bf16.msra.mxu0 %v7323
    %7613 = vmatpush.bf16.msra.mxu0 %v7319
    %7614 = vmatpush.bf16.msra.mxu0 %v7315
    %7615 = vmatpush.bf16.msra.mxu0 %v7311
    %7616 = vmatpush.bf16.msra.mxu0 %v7307
    %7617 = vmatpush.bf16.msra.mxu0 %v7303
    %7618 = vmatmul.bf16.gmra.mxu0 %v6786
    %v7619 = vpop.f32.mrf.mxu0
    %v7620 = vadd.f32 0.0, %v7619
    %v7621 = vpop.f32.mrf.mxu0
    %7622 = vdwg.mxu0
    %7623 = vmatpush.bf16.msra.mxu0 %v7363
    %7624 = vmatpush.bf16.msra.mxu0 %v7359
    %7625 = vmatpush.bf16.msra.mxu0 %v7355
    %7626 = vmatpush.bf16.msra.mxu0 %v7351
    %7627 = vmatpush.bf16.msra.mxu0 %v7347
    %7628 = vmatpush.bf16.msra.mxu0 %v7343
    %7629 = vmatpush.bf16.msra.mxu0 %v7339
    %7630 = vmatpush.bf16.msra.mxu0 %v7335
    %7631 = vmatmul.bf16.gmra.mxu0 %v6787
    %v7632 = vpop.f32.mrf.mxu0
    %v7633 = vadd.f32 %v7620, %v7632
    %v7634 = vpop.f32.mrf.mxu0
    %7635 = vdwg.mxu0
    %7636 = vmatpush.bf16.msra.mxu0 %v7395
    %7637 = vmatpush.bf16.msra.mxu0 %v7391
    %7638 = vmatpush.bf16.msra.mxu0 %v7387
    %7639 = vmatpush.bf16.msra.mxu0 %v7383
    %7640 = vmatpush.bf16.msra.mxu0 %v7379
    %7641 = vmatpush.bf16.msra.mxu0 %v7375
    %7642 = vmatpush.bf16.msra.mxu0 %v7371
    %7643 = vmatpush.bf16.msra.mxu0 %v7367
    %7644 = vmatmul.bf16.gmra.mxu0 %v6788
    %v7645 = vpop.f32.mrf.mxu0
    %v7646 = vadd.f32 %v7633, %v7645
    %v7647 = vpop.f32.mrf.mxu0
    %7648 = vdwg.mxu0
    %7649 = vmatpush.bf16.msra.mxu0 %v7427
    %7650 = vmatpush.bf16.msra.mxu0 %v7423
    %7651 = vmatpush.bf16.msra.mxu0 %v7419
    %7652 = vmatpush.bf16.msra.mxu0 %v7415
    %7653 = vmatpush.bf16.msra.mxu0 %v7411
    %7654 = vmatpush.bf16.msra.mxu0 %v7407
    %7655 = vmatpush.bf16.msra.mxu0 %v7403
    %7656 = vmatpush.bf16.msra.mxu0 %v7399
    %7657 = vmatmul.bf16.gmra.mxu0 %v6789
    %v7658 = vpop.f32.mrf.mxu0
    %v7659 = vadd.f32 %v7646, %v7658
    %v7660 = vpop.f32.mrf.mxu0
    %7661 = vdwg.mxu0
    %7662 = vmatpush.bf16.msra.mxu0 %v7332
    %7663 = vmatpush.bf16.msra.mxu0 %v7328
    %7664 = vmatpush.bf16.msra.mxu0 %v7324
    %7665 = vmatpush.bf16.msra.mxu0 %v7320
    %7666 = vmatpush.bf16.msra.mxu0 %v7316
    %7667 = vmatpush.bf16.msra.mxu0 %v7312
    %7668 = vmatpush.bf16.msra.mxu0 %v7308
    %7669 = vmatpush.bf16.msra.mxu0 %v7304
    %7670 = vmatmul.bf16.gmra.mxu0 %v6786
    %v7671 = vpop.f32.mrf.mxu0
    %v7672 = vadd.f32 0.0, %v7671
    %v7673 = vpop.f32.mrf.mxu0
    %7674 = vdwg.mxu0
    %7675 = vmatpush.bf16.msra.mxu0 %v7364
    %7676 = vmatpush.bf16.msra.mxu0 %v7360
    %7677 = vmatpush.bf16.msra.mxu0 %v7356
    %7678 = vmatpush.bf16.msra.mxu0 %v7352
    %7679 = vmatpush.bf16.msra.mxu0 %v7348
    %7680 = vmatpush.bf16.msra.mxu0 %v7344
    %7681 = vmatpush.bf16.msra.mxu0 %v7340
    %7682 = vmatpush.bf16.msra.mxu0 %v7336
    %7683 = vmatmul.bf16.gmra.mxu0 %v6787
    %v7684 = vpop.f32.mrf.mxu0
    %v7685 = vadd.f32 %v7672, %v7684
    %v7686 = vpop.f32.mrf.mxu0
    %7687 = vdwg.mxu0
    %7688 = vmatpush.bf16.msra.mxu0 %v7396
    %7689 = vmatpush.bf16.msra.mxu0 %v7392
    %7690 = vmatpush.bf16.msra.mxu0 %v7388
    %7691 = vmatpush.bf16.msra.mxu0 %v7384
    %7692 = vmatpush.bf16.msra.mxu0 %v7380
    %7693 = vmatpush.bf16.msra.mxu0 %v7376
    %7694 = vmatpush.bf16.msra.mxu0 %v7372
    %7695 = vmatpush.bf16.msra.mxu0 %v7368
    %7696 = vmatmul.bf16.gmra.mxu0 %v6788
    %v7697 = vpop.f32.mrf.mxu0
    %v7698 = vadd.f32 %v7685, %v7697
    %v7699 = vpop.f32.mrf.mxu0
    %7700 = vdwg.mxu0
    %7701 = vmatpush.bf16.msra.mxu0 %v7428
    %7702 = vmatpush.bf16.msra.mxu0 %v7424
    %7703 = vmatpush.bf16.msra.mxu0 %v7420
    %7704 = vmatpush.bf16.msra.mxu0 %v7416
    %7705 = vmatpush.bf16.msra.mxu0 %v7412
    %7706 = vmatpush.bf16.msra.mxu0 %v7408
    %7707 = vmatpush.bf16.msra.mxu0 %v7404
    %7708 = vmatpush.bf16.msra.mxu0 %v7400
    %7709 = vmatmul.bf16.gmra.mxu0 %v6789
    %v7710 = vpop.f32.mrf.mxu0
    %v7711 = vadd.f32 %v7698, %v7710
    %v7712 = vpop.f32.mrf.mxu0
    %7713 = vdwg.mxu0
    %7714 = vmatpush.bf16.msra.mxu0 %v7333
    %7715 = vmatpush.bf16.msra.mxu0 %v7329
    %7716 = vmatpush.bf16.msra.mxu0 %v7325
    %7717 = vmatpush.bf16.msra.mxu0 %v7321
    %7718 = vmatpush.bf16.msra.mxu0 %v7317
    %7719 = vmatpush.bf16.msra.mxu0 %v7313
    %7720 = vmatpush.bf16.msra.mxu0 %v7309
    %7721 = vmatpush.bf16.msra.mxu0 %v7305
    %7722 = vmatmul.bf16.gmra.mxu0 %v6786
    %v7723 = vpop.f32.mrf.mxu0
    %v7724 = vadd.f32 0.0, %v7723
    %v7725 = vpop.f32.mrf.mxu0
    %7726 = vdwg.mxu0
    %7727 = vmatpush.bf16.msra.mxu0 %v7365
    %7728 = vmatpush.bf16.msra.mxu0 %v7361
    %7729 = vmatpush.bf16.msra.mxu0 %v7357
    %7730 = vmatpush.bf16.msra.mxu0 %v7353
    %7731 = vmatpush.bf16.msra.mxu0 %v7349
    %7732 = vmatpush.bf16.msra.mxu0 %v7345
    %7733 = vmatpush.bf16.msra.mxu0 %v7341
    %7734 = vmatpush.bf16.msra.mxu0 %v7337
    %7735 = vmatmul.bf16.gmra.mxu0 %v6787
    %v7736 = vpop.f32.mrf.mxu0
    %v7737 = vadd.f32 %v7724, %v7736
    %v7738 = vpop.f32.mrf.mxu0
    %7739 = vdwg.mxu0
    %7740 = vmatpush.bf16.msra.mxu0 %v7397
    %7741 = vmatpush.bf16.msra.mxu0 %v7393
    %7742 = vmatpush.bf16.msra.mxu0 %v7389
    %7743 = vmatpush.bf16.msra.mxu0 %v7385
    %7744 = vmatpush.bf16.msra.mxu0 %v7381
    %7745 = vmatpush.bf16.msra.mxu0 %v7377
    %7746 = vmatpush.bf16.msra.mxu0 %v7373
    %7747 = vmatpush.bf16.msra.mxu0 %v7369
    %7748 = vmatmul.bf16.gmra.mxu0 %v6788
    %v7749 = vpop.f32.mrf.mxu0
    %v7750 = vadd.f32 %v7737, %v7749
    %v7751 = vpop.f32.mrf.mxu0
    %7752 = vdwg.mxu0
    %7753 = vmatpush.bf16.msra.mxu0 %v7429
    %7754 = vmatpush.bf16.msra.mxu0 %v7425
    %7755 = vmatpush.bf16.msra.mxu0 %v7421
    %7756 = vmatpush.bf16.msra.mxu0 %v7417
    %7757 = vmatpush.bf16.msra.mxu0 %v7413
    %7758 = vmatpush.bf16.msra.mxu0 %v7409
    %7759 = vmatpush.bf16.msra.mxu0 %v7405
    %7760 = vmatpush.bf16.msra.mxu0 %v7401
    %7761 = vmatmul.bf16.gmra.mxu0 %v6789
    %v7762 = vpop.f32.mrf.mxu0
    %v7763 = vadd.f32 %v7750, %v7762
    %v7764 = vpop.f32.mrf.mxu0
    %7765 = vdwg.mxu0
    %v8022 = vunpack.c.l.b16 %v6530
    %v8023 = vunpack.c.h.b16 %v6530
    %v8024 = vunpack.c.l.b16 %v6531
    %v8025 = vunpack.c.h.b16 %v6531
    %v8026 = vunpack.c.l.b16 %v6532
    %v8027 = vunpack.c.h.b16 %v6532
    %v8028 = vunpack.c.l.b16 %v6533
    %v8029 = vunpack.c.h.b16 %v6533
    %v8030 = vunpack.c.l.b16 %v6534
    %v8031 = vunpack.c.h.b16 %v6534
    %v8032 = vunpack.c.l.b16 %v6535
    %v8033 = vunpack.c.h.b16 %v6535
    %v8034 = vunpack.c.l.b16 %v6536
    %v8035 = vunpack.c.h.b16 %v6536
    %v8036 = vunpack.c.l.b16 %v6537
    %v8037 = vunpack.c.h.b16 %v6537
    %v8038 = vunpack.c.l.b16 %v6538
    %v8039 = vunpack.c.h.b16 %v6538
    %v8040 = vunpack.c.l.b16 %v6539
    %v8041 = vunpack.c.h.b16 %v6539
    %v8042 = vunpack.c.l.b16 %v6540
    %v8043 = vunpack.c.h.b16 %v6540
    %v8044 = vunpack.c.l.b16 %v6541
    %v8045 = vunpack.c.h.b16 %v6541
    %v8046 = vunpack.c.l.b16 %v6542
    %v8047 = vunpack.c.h.b16 %v6542
    %v8048 = vunpack.c.l.b16 %v6543
    %v8049 = vunpack.c.h.b16 %v6543
    %v8050 = vunpack.c.l.b16 %v6544
    %v8051 = vunpack.c.h.b16 %v6544
    %v8052 = vunpack.c.l.b16 %v6545
    %v8053 = vunpack.c.h.b16 %v6545
    %v8054 = vunpack.c.l.b16 %v6546
    %v8055 = vunpack.c.h.b16 %v6546
    %v8056 = vunpack.c.l.b16 %v6547
    %v8057 = vunpack.c.h.b16 %v6547
    %v8058 = vunpack.c.l.b16 %v6548
    %v8059 = vunpack.c.h.b16 %v6548
    %v8060 = vunpack.c.l.b16 %v6549
    %v8061 = vunpack.c.h.b16 %v6549
    %v8062 = vunpack.c.l.b16 %v6550
    %v8063 = vunpack.c.h.b16 %v6550
    %v8064 = vunpack.c.l.b16 %v6551
    %v8065 = vunpack.c.h.b16 %v6551
    %v8066 = vunpack.c.l.b16 %v6552
    %v8067 = vunpack.c.h.b16 %v6552
    %v8068 = vunpack.c.l.b16 %v6553
    %v8069 = vunpack.c.h.b16 %v6553
    %v8070 = vunpack.c.l.b16 %v6554
    %v8071 = vunpack.c.h.b16 %v6554
    %v8072 = vunpack.c.l.b16 %v6555
    %v8073 = vunpack.c.h.b16 %v6555
    %v8074 = vunpack.c.l.b16 %v6556
    %v8075 = vunpack.c.h.b16 %v6556
    %v8076 = vunpack.c.l.b16 %v6557
    %v8077 = vunpack.c.h.b16 %v6557
    %v8078 = vunpack.c.l.b16 %v6558
    %v8079 = vunpack.c.h.b16 %v6558
    %v8080 = vunpack.c.l.b16 %v6559
    %v8081 = vunpack.c.h.b16 %v6559
    %v8082 = vunpack.c.l.b16 %v6560
    %v8083 = vunpack.c.h.b16 %v6560
    %v8084 = vunpack.c.l.b16 %v6561
    %v8085 = vunpack.c.h.b16 %v6561
    %v8086 = vunpack.c.l.b16 %v6562
    %v8087 = vunpack.c.h.b16 %v6562
    %v8088 = vunpack.c.l.b16 %v6563
    %v8089 = vunpack.c.h.b16 %v6563
    %v8090 = vunpack.c.l.b16 %v6564
    %v8091 = vunpack.c.h.b16 %v6564
    %v8092 = vunpack.c.l.b16 %v6565
    %v8093 = vunpack.c.h.b16 %v6565
    %v8094 = vunpack.c.l.b16 %v6566
    %v8095 = vunpack.c.h.b16 %v6566
    %v8096 = vunpack.c.l.b16 %v6567
    %v8097 = vunpack.c.h.b16 %v6567
    %v8098 = vunpack.c.l.b16 %v6568
    %v8099 = vunpack.c.h.b16 %v6568
    %v8100 = vunpack.c.l.b16 %v6569
    %v8101 = vunpack.c.h.b16 %v6569
    %v8102 = vunpack.c.l.b16 %v6570
    %v8103 = vunpack.c.h.b16 %v6570
    %v8104 = vunpack.c.l.b16 %v6571
    %v8105 = vunpack.c.h.b16 %v6571
    %v8106 = vunpack.c.l.b16 %v6572
    %v8107 = vunpack.c.h.b16 %v6572
    %v8108 = vunpack.c.l.b16 %v6573
    %v8109 = vunpack.c.h.b16 %v6573
    %v8110 = vunpack.c.l.b16 %v6574
    %v8111 = vunpack.c.h.b16 %v6574
    %v8112 = vunpack.c.l.b16 %v6575
    %v8113 = vunpack.c.h.b16 %v6575
    %v8114 = vunpack.c.l.b16 %v6576
    %v8115 = vunpack.c.h.b16 %v6576
    %v8116 = vunpack.c.l.b16 %v6577
    %v8117 = vunpack.c.h.b16 %v6577
    %v8118 = vunpack.c.l.b16 %v6578
    %v8119 = vunpack.c.h.b16 %v6578
    %v8120 = vunpack.c.l.b16 %v6579
    %v8121 = vunpack.c.h.b16 %v6579
    %v8122 = vunpack.c.l.b16 %v6580
    %v8123 = vunpack.c.h.b16 %v6580
    %v8124 = vunpack.c.l.b16 %v6581
    %v8125 = vunpack.c.h.b16 %v6581
    %v8126 = vunpack.c.l.b16 %v6582
    %v8127 = vunpack.c.h.b16 %v6582
    %v8128 = vunpack.c.l.b16 %v6583
    %v8129 = vunpack.c.h.b16 %v6583
    %v8130 = vunpack.c.l.b16 %v6584
    %v8131 = vunpack.c.h.b16 %v6584
    %v8132 = vunpack.c.l.b16 %v6585
    %v8133 = vunpack.c.h.b16 %v6585
    %v8134 = vunpack.c.l.b16 %v6586
    %v8135 = vunpack.c.h.b16 %v6586
    %v8136 = vunpack.c.l.b16 %v6587
    %v8137 = vunpack.c.h.b16 %v6587
    %v8138 = vunpack.c.l.b16 %v6588
    %v8139 = vunpack.c.h.b16 %v6588
    %v8140 = vunpack.c.l.b16 %v6589
    %v8141 = vunpack.c.h.b16 %v6589
    %v8142 = vunpack.c.l.b16 %v6590
    %v8143 = vunpack.c.h.b16 %v6590
    %v8144 = vunpack.c.l.b16 %v6591
    %v8145 = vunpack.c.h.b16 %v6591
    %v8146 = vunpack.c.l.b16 %v6592
    %v8147 = vunpack.c.h.b16 %v6592
    %v8148 = vunpack.c.l.b16 %v6593
    %v8149 = vunpack.c.h.b16 %v6593
    %v8150 = vunpack.c.l.b16 %v6594
    %v8151 = vunpack.c.h.b16 %v6594
    %v8152 = vunpack.c.l.b16 %v6595
    %v8153 = vunpack.c.h.b16 %v6595
    %v8154 = vunpack.c.l.b16 %v6596
    %v8155 = vunpack.c.h.b16 %v6596
    %v8156 = vunpack.c.l.b16 %v6597
    %v8157 = vunpack.c.h.b16 %v6597
    %v8158 = vunpack.c.l.b16 %v6598
    %v8159 = vunpack.c.h.b16 %v6598
    %v8160 = vunpack.c.l.b16 %v6599
    %v8161 = vunpack.c.h.b16 %v6599
    %v8162 = vunpack.c.l.b16 %v6600
    %v8163 = vunpack.c.h.b16 %v6600
    %v8164 = vunpack.c.l.b16 %v6601
    %v8165 = vunpack.c.h.b16 %v6601
    %v8166 = vunpack.c.l.b16 %v6602
    %v8167 = vunpack.c.h.b16 %v6602
    %v8168 = vunpack.c.l.b16 %v6603
    %v8169 = vunpack.c.h.b16 %v6603
    %v8170 = vunpack.c.l.b16 %v6604
    %v8171 = vunpack.c.h.b16 %v6604
    %v8172 = vunpack.c.l.b16 %v6605
    %v8173 = vunpack.c.h.b16 %v6605
    %v8174 = vunpack.c.l.b16 %v6606
    %v8175 = vunpack.c.h.b16 %v6606
    %v8176 = vunpack.c.l.b16 %v6607
    %v8177 = vunpack.c.h.b16 %v6607
    %v8178 = vunpack.c.l.b16 %v6608
    %v8179 = vunpack.c.h.b16 %v6608
    %v8180 = vunpack.c.l.b16 %v6609
    %v8181 = vunpack.c.h.b16 %v6609
    %v8182 = vunpack.c.l.b16 %v6610
    %v8183 = vunpack.c.h.b16 %v6610
    %v8184 = vunpack.c.l.b16 %v6611
    %v8185 = vunpack.c.h.b16 %v6611
    %v8186 = vunpack.c.l.b16 %v6612
    %v8187 = vunpack.c.h.b16 %v6612
    %v8188 = vunpack.c.l.b16 %v6613
    %v8189 = vunpack.c.h.b16 %v6613
    %v8190 = vunpack.c.l.b16 %v6614
    %v8191 = vunpack.c.h.b16 %v6614
    %v8192 = vunpack.c.l.b16 %v6615
    %v8193 = vunpack.c.h.b16 %v6615
    %v8194 = vunpack.c.l.b16 %v6616
    %v8195 = vunpack.c.h.b16 %v6616
    %v8196 = vunpack.c.l.b16 %v6617
    %v8197 = vunpack.c.h.b16 %v6617
    %v8198 = vunpack.c.l.b16 %v6618
    %v8199 = vunpack.c.h.b16 %v6618
    %v8200 = vunpack.c.l.b16 %v6619
    %v8201 = vunpack.c.h.b16 %v6619
    %v8202 = vunpack.c.l.b16 %v6620
    %v8203 = vunpack.c.h.b16 %v6620
    %v8204 = vunpack.c.l.b16 %v6621
    %v8205 = vunpack.c.h.b16 %v6621
    %v8206 = vunpack.c.l.b16 %v6622
    %v8207 = vunpack.c.h.b16 %v6622
    %v8208 = vunpack.c.l.b16 %v6623
    %v8209 = vunpack.c.h.b16 %v6623
    %v8210 = vunpack.c.l.b16 %v6624
    %v8211 = vunpack.c.h.b16 %v6624
    %v8212 = vunpack.c.l.b16 %v6625
    %v8213 = vunpack.c.h.b16 %v6625
    %v8214 = vunpack.c.l.b16 %v6626
    %v8215 = vunpack.c.h.b16 %v6626
    %v8216 = vunpack.c.l.b16 %v6627
    %v8217 = vunpack.c.h.b16 %v6627
    %v8218 = vunpack.c.l.b16 %v6628
    %v8219 = vunpack.c.h.b16 %v6628
    %v8220 = vunpack.c.l.b16 %v6629
    %v8221 = vunpack.c.h.b16 %v6629
    %v8222 = vunpack.c.l.b16 %v6630
    %v8223 = vunpack.c.h.b16 %v6630
    %v8224 = vunpack.c.l.b16 %v6631
    %v8225 = vunpack.c.h.b16 %v6631
    %v8226 = vunpack.c.l.b16 %v6632
    %v8227 = vunpack.c.h.b16 %v6632
    %v8228 = vunpack.c.l.b16 %v6633
    %v8229 = vunpack.c.h.b16 %v6633
    %v8230 = vunpack.c.l.b16 %v6634
    %v8231 = vunpack.c.h.b16 %v6634
    %v8232 = vunpack.c.l.b16 %v6635
    %v8233 = vunpack.c.h.b16 %v6635
    %v8234 = vunpack.c.l.b16 %v6636
    %v8235 = vunpack.c.h.b16 %v6636
    %v8236 = vunpack.c.l.b16 %v6637
    %v8237 = vunpack.c.h.b16 %v6637
    %v8238 = vunpack.c.l.b16 %v6638
    %v8239 = vunpack.c.h.b16 %v6638
    %v8240 = vunpack.c.l.b16 %v6639
    %v8241 = vunpack.c.h.b16 %v6639
    %v8242 = vunpack.c.l.b16 %v6640
    %v8243 = vunpack.c.h.b16 %v6640
    %v8244 = vunpack.c.l.b16 %v6641
    %v8245 = vunpack.c.h.b16 %v6641
    %v8246 = vunpack.c.l.b16 %v6642
    %v8247 = vunpack.c.h.b16 %v6642
    %v8248 = vunpack.c.l.b16 %v6643
    %v8249 = vunpack.c.h.b16 %v6643
    %v8250 = vunpack.c.l.b16 %v6644
    %v8251 = vunpack.c.h.b16 %v6644
    %v8252 = vunpack.c.l.b16 %v6645
    %v8253 = vunpack.c.h.b16 %v6645
    %v8254 = vunpack.c.l.b16 %v6646
    %v8255 = vunpack.c.h.b16 %v6646
    %v8256 = vunpack.c.l.b16 %v6647
    %v8257 = vunpack.c.h.b16 %v6647
    %v8258 = vunpack.c.l.b16 %v6648
    %v8259 = vunpack.c.h.b16 %v6648
    %v8260 = vunpack.c.l.b16 %v6649
    %v8261 = vunpack.c.h.b16 %v6649
    %v8262 = vunpack.c.l.b16 %v6650
    %v8263 = vunpack.c.h.b16 %v6650
    %v8264 = vunpack.c.l.b16 %v6651
    %v8265 = vunpack.c.h.b16 %v6651
    %v8266 = vunpack.c.l.b16 %v6652
    %v8267 = vunpack.c.h.b16 %v6652
    %v8268 = vunpack.c.l.b16 %v6653
    %v8269 = vunpack.c.h.b16 %v6653
    %v8270 = vunpack.c.l.b16 %v6654
    %v8271 = vunpack.c.h.b16 %v6654
    %v8272 = vunpack.c.l.b16 %v6655
    %v8273 = vunpack.c.h.b16 %v6655
    %v8274 = vunpack.c.l.b16 %v6656
    %v8275 = vunpack.c.h.b16 %v6656
    %v8276 = vunpack.c.l.b16 %v6657
    %v8277 = vunpack.c.h.b16 %v6657
    %v8278 = vunpack.c.l.b16 %v6658
    %v8279 = vunpack.c.h.b16 %v6658
    %v8280 = vunpack.c.l.b16 %v6659
    %v8281 = vunpack.c.h.b16 %v6659
    %v8282 = vunpack.c.l.b16 %v6660
    %v8283 = vunpack.c.h.b16 %v6660
    %v8284 = vunpack.c.l.b16 %v6661
    %v8285 = vunpack.c.h.b16 %v6661
    %v8286 = vunpack.c.l.b16 %v6662
    %v8287 = vunpack.c.h.b16 %v6662
    %v8288 = vunpack.c.l.b16 %v6663
    %v8289 = vunpack.c.h.b16 %v6663
    %v8290 = vunpack.c.l.b16 %v6664
    %v8291 = vunpack.c.h.b16 %v6664
    %v8292 = vunpack.c.l.b16 %v6665
    %v8293 = vunpack.c.h.b16 %v6665
    %v8294 = vunpack.c.l.b16 %v6666
    %v8295 = vunpack.c.h.b16 %v6666
    %v8296 = vunpack.c.l.b16 %v6667
    %v8297 = vunpack.c.h.b16 %v6667
    %v8298 = vunpack.c.l.b16 %v6668
    %v8299 = vunpack.c.h.b16 %v6668
    %v8300 = vunpack.c.l.b16 %v6669
    %v8301 = vunpack.c.h.b16 %v6669
    %v8302 = vunpack.c.l.b16 %v6670
    %v8303 = vunpack.c.h.b16 %v6670
    %v8304 = vunpack.c.l.b16 %v6671
    %v8305 = vunpack.c.h.b16 %v6671
    %v8306 = vunpack.c.l.b16 %v6672
    %v8307 = vunpack.c.h.b16 %v6672
    %v8308 = vunpack.c.l.b16 %v6673
    %v8309 = vunpack.c.h.b16 %v6673
    %v8310 = vunpack.c.l.b16 %v6674
    %v8311 = vunpack.c.h.b16 %v6674
    %v8312 = vunpack.c.l.b16 %v6675
    %v8313 = vunpack.c.h.b16 %v6675
    %v8314 = vunpack.c.l.b16 %v6676
    %v8315 = vunpack.c.h.b16 %v6676
    %v8316 = vunpack.c.l.b16 %v6677
    %v8317 = vunpack.c.h.b16 %v6677
    %v8318 = vunpack.c.l.b16 %v6678
    %v8319 = vunpack.c.h.b16 %v6678
    %v8320 = vunpack.c.l.b16 %v6679
    %v8321 = vunpack.c.h.b16 %v6679
    %v8322 = vunpack.c.l.b16 %v6680
    %v8323 = vunpack.c.h.b16 %v6680
    %v8324 = vunpack.c.l.b16 %v6681
    %v8325 = vunpack.c.h.b16 %v6681
    %v8326 = vunpack.c.l.b16 %v6682
    %v8327 = vunpack.c.h.b16 %v6682
    %v8328 = vunpack.c.l.b16 %v6683
    %v8329 = vunpack.c.h.b16 %v6683
    %v8330 = vunpack.c.l.b16 %v6684
    %v8331 = vunpack.c.h.b16 %v6684
    %v8332 = vunpack.c.l.b16 %v6685
    %v8333 = vunpack.c.h.b16 %v6685
    %v8334 = vunpack.c.l.b16 %v6686
    %v8335 = vunpack.c.h.b16 %v6686
    %v8336 = vunpack.c.l.b16 %v6687
    %v8337 = vunpack.c.h.b16 %v6687
    %v8338 = vunpack.c.l.b16 %v6688
    %v8339 = vunpack.c.h.b16 %v6688
    %v8340 = vunpack.c.l.b16 %v6689
    %v8341 = vunpack.c.h.b16 %v6689
    %v8342 = vunpack.c.l.b16 %v6690
    %v8343 = vunpack.c.h.b16 %v6690
    %v8344 = vunpack.c.l.b16 %v6691
    %v8345 = vunpack.c.h.b16 %v6691
    %v8346 = vunpack.c.l.b16 %v6692
    %v8347 = vunpack.c.h.b16 %v6692
    %v8348 = vunpack.c.l.b16 %v6693
    %v8349 = vunpack.c.h.b16 %v6693
    %v8350 = vunpack.c.l.b16 %v6694
    %v8351 = vunpack.c.h.b16 %v6694
    %v8352 = vunpack.c.l.b16 %v6695
    %v8353 = vunpack.c.h.b16 %v6695
    %v8354 = vunpack.c.l.b16 %v6696
    %v8355 = vunpack.c.h.b16 %v6696
    %v8356 = vunpack.c.l.b16 %v6697
    %v8357 = vunpack.c.h.b16 %v6697
    %v8358 = vunpack.c.l.b16 %v6698
    %v8359 = vunpack.c.h.b16 %v6698
    %v8360 = vunpack.c.l.b16 %v6699
    %v8361 = vunpack.c.h.b16 %v6699
    %v8362 = vunpack.c.l.b16 %v6700
    %v8363 = vunpack.c.h.b16 %v6700
    %v8364 = vunpack.c.l.b16 %v6701
    %v8365 = vunpack.c.h.b16 %v6701
    %v8366 = vunpack.c.l.b16 %v6702
    %v8367 = vunpack.c.h.b16 %v6702
    %v8368 = vunpack.c.l.b16 %v6703
    %v8369 = vunpack.c.h.b16 %v6703
    %v8370 = vunpack.c.l.b16 %v6704
    %v8371 = vunpack.c.h.b16 %v6704
    %v8372 = vunpack.c.l.b16 %v6705
    %v8373 = vunpack.c.h.b16 %v6705
    %v8374 = vunpack.c.l.b16 %v6706
    %v8375 = vunpack.c.h.b16 %v6706
    %v8376 = vunpack.c.l.b16 %v6707
    %v8377 = vunpack.c.h.b16 %v6707
    %v8378 = vunpack.c.l.b16 %v6708
    %v8379 = vunpack.c.h.b16 %v6708
    %v8380 = vunpack.c.l.b16 %v6709
    %v8381 = vunpack.c.h.b16 %v6709
    %v8382 = vunpack.c.l.b16 %v6710
    %v8383 = vunpack.c.h.b16 %v6710
    %v8384 = vunpack.c.l.b16 %v6711
    %v8385 = vunpack.c.h.b16 %v6711
    %v8386 = vunpack.c.l.b16 %v6712
    %v8387 = vunpack.c.h.b16 %v6712
    %v8388 = vunpack.c.l.b16 %v6713
    %v8389 = vunpack.c.h.b16 %v6713
    %v8390 = vunpack.c.l.b16 %v6714
    %v8391 = vunpack.c.h.b16 %v6714
    %v8392 = vunpack.c.l.b16 %v6715
    %v8393 = vunpack.c.h.b16 %v6715
    %v8394 = vunpack.c.l.b16 %v6716
    %v8395 = vunpack.c.h.b16 %v6716
    %v8396 = vunpack.c.l.b16 %v6717
    %v8397 = vunpack.c.h.b16 %v6717
    %v8398 = vunpack.c.l.b16 %v6718
    %v8399 = vunpack.c.h.b16 %v6718
    %v8400 = vunpack.c.l.b16 %v6719
    %v8401 = vunpack.c.h.b16 %v6719
    %v8402 = vunpack.c.l.b16 %v6720
    %v8403 = vunpack.c.h.b16 %v6720
    %v8404 = vunpack.c.l.b16 %v6721
    %v8405 = vunpack.c.h.b16 %v6721
    %v8406 = vunpack.c.l.b16 %v6722
    %v8407 = vunpack.c.h.b16 %v6722
    %v8408 = vunpack.c.l.b16 %v6723
    %v8409 = vunpack.c.h.b16 %v6723
    %v8410 = vunpack.c.l.b16 %v6724
    %v8411 = vunpack.c.h.b16 %v6724
    %v8412 = vunpack.c.l.b16 %v6725
    %v8413 = vunpack.c.h.b16 %v6725
    %v8414 = vunpack.c.l.b16 %v6726
    %v8415 = vunpack.c.h.b16 %v6726
    %v8416 = vunpack.c.l.b16 %v6727
    %v8417 = vunpack.c.h.b16 %v6727
    %v8418 = vunpack.c.l.b16 %v6728
    %v8419 = vunpack.c.h.b16 %v6728
    %v8420 = vunpack.c.l.b16 %v6729
    %v8421 = vunpack.c.h.b16 %v6729
    %v8422 = vunpack.c.l.b16 %v6730
    %v8423 = vunpack.c.h.b16 %v6730
    %v8424 = vunpack.c.l.b16 %v6731
    %v8425 = vunpack.c.h.b16 %v6731
    %v8426 = vunpack.c.l.b16 %v6732
    %v8427 = vunpack.c.h.b16 %v6732
    %v8428 = vunpack.c.l.b16 %v6733
    %v8429 = vunpack.c.h.b16 %v6733
    %v8430 = vunpack.c.l.b16 %v6734
    %v8431 = vunpack.c.h.b16 %v6734
    %v8432 = vunpack.c.l.b16 %v6735
    %v8433 = vunpack.c.h.b16 %v6735
    %v8434 = vunpack.c.l.b16 %v6736
    %v8435 = vunpack.c.h.b16 %v6736
    %v8436 = vunpack.c.l.b16 %v6737
    %v8437 = vunpack.c.h.b16 %v6737
    %v8438 = vunpack.c.l.b16 %v6738
    %v8439 = vunpack.c.h.b16 %v6738
    %v8440 = vunpack.c.l.b16 %v6739
    %v8441 = vunpack.c.h.b16 %v6739
    %v8442 = vunpack.c.l.b16 %v6740
    %v8443 = vunpack.c.h.b16 %v6740
    %v8444 = vunpack.c.l.b16 %v6741
    %v8445 = vunpack.c.h.b16 %v6741
    %v8446 = vunpack.c.l.b16 %v6742
    %v8447 = vunpack.c.h.b16 %v6742
    %v8448 = vunpack.c.l.b16 %v6743
    %v8449 = vunpack.c.h.b16 %v6743
    %v8450 = vunpack.c.l.b16 %v6744
    %v8451 = vunpack.c.h.b16 %v6744
    %v8452 = vunpack.c.l.b16 %v6745
    %v8453 = vunpack.c.h.b16 %v6745
    %v8454 = vunpack.c.l.b16 %v6746
    %v8455 = vunpack.c.h.b16 %v6746
    %v8456 = vunpack.c.l.b16 %v6747
    %v8457 = vunpack.c.h.b16 %v6747
    %v8458 = vunpack.c.l.b16 %v6748
    %v8459 = vunpack.c.h.b16 %v6748
    %v8460 = vunpack.c.l.b16 %v6749
    %v8461 = vunpack.c.h.b16 %v6749
    %v8462 = vunpack.c.l.b16 %v6750
    %v8463 = vunpack.c.h.b16 %v6750
    %v8464 = vunpack.c.l.b16 %v6751
    %v8465 = vunpack.c.h.b16 %v6751
    %v8466 = vunpack.c.l.b16 %v6752
    %v8467 = vunpack.c.h.b16 %v6752
    %v8468 = vunpack.c.l.b16 %v6753
    %v8469 = vunpack.c.h.b16 %v6753
    %v8470 = vunpack.c.l.b16 %v6754
    %v8471 = vunpack.c.h.b16 %v6754
    %v8472 = vunpack.c.l.b16 %v6755
    %v8473 = vunpack.c.h.b16 %v6755
    %v8474 = vunpack.c.l.b16 %v6756
    %v8475 = vunpack.c.h.b16 %v6756
    %v8476 = vunpack.c.l.b16 %v6757
    %v8477 = vunpack.c.h.b16 %v6757
    %v8478 = vunpack.c.l.b16 %v6758
    %v8479 = vunpack.c.h.b16 %v6758
    %v8480 = vunpack.c.l.b16 %v6759
    %v8481 = vunpack.c.h.b16 %v6759
    %v8482 = vunpack.c.l.b16 %v6760
    %v8483 = vunpack.c.h.b16 %v6760
    %v8484 = vunpack.c.l.b16 %v6761
    %v8485 = vunpack.c.h.b16 %v6761
    %v8486 = vunpack.c.l.b16 %v6762
    %v8487 = vunpack.c.h.b16 %v6762
    %v8488 = vunpack.c.l.b16 %v6763
    %v8489 = vunpack.c.h.b16 %v6763
    %v8490 = vunpack.c.l.b16 %v6764
    %v8491 = vunpack.c.h.b16 %v6764
    %v8492 = vunpack.c.l.b16 %v6765
    %v8493 = vunpack.c.h.b16 %v6765
    %v8494 = vunpack.c.l.b16 %v6766
    %v8495 = vunpack.c.h.b16 %v6766
    %v8496 = vunpack.c.l.b16 %v6767
    %v8497 = vunpack.c.h.b16 %v6767
    %v8498 = vunpack.c.l.b16 %v6768
    %v8499 = vunpack.c.h.b16 %v6768
    %v8500 = vunpack.c.l.b16 %v6769
    %v8501 = vunpack.c.h.b16 %v6769
    %v8502 = vunpack.c.l.b16 %v6770
    %v8503 = vunpack.c.h.b16 %v6770
    %v8504 = vunpack.c.l.b16 %v6771
    %v8505 = vunpack.c.h.b16 %v6771
    %v8506 = vunpack.c.l.b16 %v6772
    %v8507 = vunpack.c.h.b16 %v6772
    %v8508 = vunpack.c.l.b16 %v6773
    %v8509 = vunpack.c.h.b16 %v6773
    %v8510 = vunpack.c.l.b16 %v6774
    %v8511 = vunpack.c.h.b16 %v6774
    %v8512 = vunpack.c.l.b16 %v6775
    %v8513 = vunpack.c.h.b16 %v6775
    %v8514 = vunpack.c.l.b16 %v6776
    %v8515 = vunpack.c.h.b16 %v6776
    %v8516 = vunpack.c.l.b16 %v6777
    %v8517 = vunpack.c.h.b16 %v6777
    %v8518 = vunpack.c.l.b16 %v6778
    %v8519 = vunpack.c.h.b16 %v6778
    %v8520 = vunpack.c.l.b16 %v6779
    %v8521 = vunpack.c.h.b16 %v6779
    %v8522 = vunpack.c.l.b16 %v6780
    %v8523 = vunpack.c.h.b16 %v6780
    %v8524 = vunpack.c.l.b16 %v6781
    %v8525 = vunpack.c.h.b16 %v6781
    %v8526 = vunpack.c.l.b16 %v6782
    %v8527 = vunpack.c.h.b16 %v6782
    %v8528 = vunpack.c.l.b16 %v6783
    %v8529 = vunpack.c.h.b16 %v6783
    %v8530 = vunpack.c.l.b16 %v6784
    %v8531 = vunpack.c.h.b16 %v6784
    %v8532 = vunpack.c.l.b16 %v6785
    %v8533 = vunpack.c.h.b16 %v6785
    %v8534 = vpack.c.b16 %v8026, %v8022
    %v8535 = vpack.c.b16 %v8027, %v8023
    %v8536 = vpack.c.b16 %v8028, %v8024
    %v8537 = vpack.c.b16 %v8029, %v8025
    %v8538 = vpack.c.b16 %v8034, %v8030
    %v8539 = vpack.c.b16 %v8035, %v8031
    %v8540 = vpack.c.b16 %v8036, %v8032
    %v8541 = vpack.c.b16 %v8037, %v8033
    %v8542 = vpack.c.b16 %v8042, %v8038
    %v8543 = vpack.c.b16 %v8043, %v8039
    %v8544 = vpack.c.b16 %v8044, %v8040
    %v8545 = vpack.c.b16 %v8045, %v8041
    %v8546 = vpack.c.b16 %v8050, %v8046
    %v8547 = vpack.c.b16 %v8051, %v8047
    %v8548 = vpack.c.b16 %v8052, %v8048
    %v8549 = vpack.c.b16 %v8053, %v8049
    %v8550 = vpack.c.b16 %v8058, %v8054
    %v8551 = vpack.c.b16 %v8059, %v8055
    %v8552 = vpack.c.b16 %v8060, %v8056
    %v8553 = vpack.c.b16 %v8061, %v8057
    %v8554 = vpack.c.b16 %v8066, %v8062
    %v8555 = vpack.c.b16 %v8067, %v8063
    %v8556 = vpack.c.b16 %v8068, %v8064
    %v8557 = vpack.c.b16 %v8069, %v8065
    %v8558 = vpack.c.b16 %v8074, %v8070
    %v8559 = vpack.c.b16 %v8075, %v8071
    %v8560 = vpack.c.b16 %v8076, %v8072
    %v8561 = vpack.c.b16 %v8077, %v8073
    %v8562 = vpack.c.b16 %v8082, %v8078
    %v8563 = vpack.c.b16 %v8083, %v8079
    %v8564 = vpack.c.b16 %v8084, %v8080
    %v8565 = vpack.c.b16 %v8085, %v8081
    %v8566 = vpack.c.b16 %v8090, %v8086
    %v8567 = vpack.c.b16 %v8091, %v8087
    %v8568 = vpack.c.b16 %v8092, %v8088
    %v8569 = vpack.c.b16 %v8093, %v8089
    %v8570 = vpack.c.b16 %v8098, %v8094
    %v8571 = vpack.c.b16 %v8099, %v8095
    %v8572 = vpack.c.b16 %v8100, %v8096
    %v8573 = vpack.c.b16 %v8101, %v8097
    %v8574 = vpack.c.b16 %v8106, %v8102
    %v8575 = vpack.c.b16 %v8107, %v8103
    %v8576 = vpack.c.b16 %v8108, %v8104
    %v8577 = vpack.c.b16 %v8109, %v8105
    %v8578 = vpack.c.b16 %v8114, %v8110
    %v8579 = vpack.c.b16 %v8115, %v8111
    %v8580 = vpack.c.b16 %v8116, %v8112
    %v8581 = vpack.c.b16 %v8117, %v8113
    %v8582 = vpack.c.b16 %v8122, %v8118
    %v8583 = vpack.c.b16 %v8123, %v8119
    %v8584 = vpack.c.b16 %v8124, %v8120
    %v8585 = vpack.c.b16 %v8125, %v8121
    %v8586 = vpack.c.b16 %v8130, %v8126
    %v8587 = vpack.c.b16 %v8131, %v8127
    %v8588 = vpack.c.b16 %v8132, %v8128
    %v8589 = vpack.c.b16 %v8133, %v8129
    %v8590 = vpack.c.b16 %v8138, %v8134
    %v8591 = vpack.c.b16 %v8139, %v8135
    %v8592 = vpack.c.b16 %v8140, %v8136
    %v8593 = vpack.c.b16 %v8141, %v8137
    %v8594 = vpack.c.b16 %v8146, %v8142
    %v8595 = vpack.c.b16 %v8147, %v8143
    %v8596 = vpack.c.b16 %v8148, %v8144
    %v8597 = vpack.c.b16 %v8149, %v8145
    %v8598 = vpack.c.b16 %v8154, %v8150
    %v8599 = vpack.c.b16 %v8155, %v8151
    %v8600 = vpack.c.b16 %v8156, %v8152
    %v8601 = vpack.c.b16 %v8157, %v8153
    %v8602 = vpack.c.b16 %v8162, %v8158
    %v8603 = vpack.c.b16 %v8163, %v8159
    %v8604 = vpack.c.b16 %v8164, %v8160
    %v8605 = vpack.c.b16 %v8165, %v8161
    %v8606 = vpack.c.b16 %v8170, %v8166
    %v8607 = vpack.c.b16 %v8171, %v8167
    %v8608 = vpack.c.b16 %v8172, %v8168
    %v8609 = vpack.c.b16 %v8173, %v8169
    %v8610 = vpack.c.b16 %v8178, %v8174
    %v8611 = vpack.c.b16 %v8179, %v8175
    %v8612 = vpack.c.b16 %v8180, %v8176
    %v8613 = vpack.c.b16 %v8181, %v8177
    %v8614 = vpack.c.b16 %v8186, %v8182
    %v8615 = vpack.c.b16 %v8187, %v8183
    %v8616 = vpack.c.b16 %v8188, %v8184
    %v8617 = vpack.c.b16 %v8189, %v8185
    %v8618 = vpack.c.b16 %v8194, %v8190
    %v8619 = vpack.c.b16 %v8195, %v8191
    %v8620 = vpack.c.b16 %v8196, %v8192
    %v8621 = vpack.c.b16 %v8197, %v8193
    %v8622 = vpack.c.b16 %v8202, %v8198
    %v8623 = vpack.c.b16 %v8203, %v8199
    %v8624 = vpack.c.b16 %v8204, %v8200
    %v8625 = vpack.c.b16 %v8205, %v8201
    %v8626 = vpack.c.b16 %v8210, %v8206
    %v8627 = vpack.c.b16 %v8211, %v8207
    %v8628 = vpack.c.b16 %v8212, %v8208
    %v8629 = vpack.c.b16 %v8213, %v8209
    %v8630 = vpack.c.b16 %v8218, %v8214
    %v8631 = vpack.c.b16 %v8219, %v8215
    %v8632 = vpack.c.b16 %v8220, %v8216
    %v8633 = vpack.c.b16 %v8221, %v8217
    %v8634 = vpack.c.b16 %v8226, %v8222
    %v8635 = vpack.c.b16 %v8227, %v8223
    %v8636 = vpack.c.b16 %v8228, %v8224
    %v8637 = vpack.c.b16 %v8229, %v8225
    %v8638 = vpack.c.b16 %v8234, %v8230
    %v8639 = vpack.c.b16 %v8235, %v8231
    %v8640 = vpack.c.b16 %v8236, %v8232
    %v8641 = vpack.c.b16 %v8237, %v8233
    %v8642 = vpack.c.b16 %v8242, %v8238
    %v8643 = vpack.c.b16 %v8243, %v8239
    %v8644 = vpack.c.b16 %v8244, %v8240
    %v8645 = vpack.c.b16 %v8245, %v8241
    %v8646 = vpack.c.b16 %v8250, %v8246
    %v8647 = vpack.c.b16 %v8251, %v8247
    %v8648 = vpack.c.b16 %v8252, %v8248
    %v8649 = vpack.c.b16 %v8253, %v8249
    %v8650 = vpack.c.b16 %v8258, %v8254
    %v8651 = vpack.c.b16 %v8259, %v8255
    %v8652 = vpack.c.b16 %v8260, %v8256
    %v8653 = vpack.c.b16 %v8261, %v8257
    %v8654 = vpack.c.b16 %v8266, %v8262
    %v8655 = vpack.c.b16 %v8267, %v8263
    %v8656 = vpack.c.b16 %v8268, %v8264
    %v8657 = vpack.c.b16 %v8269, %v8265
    %v8658 = vpack.c.b16 %v8274, %v8270
    %v8659 = vpack.c.b16 %v8275, %v8271
    %v8660 = vpack.c.b16 %v8276, %v8272
    %v8661 = vpack.c.b16 %v8277, %v8273
    %v8662 = vpack.c.b16 %v8282, %v8278
    %v8663 = vpack.c.b16 %v8283, %v8279
    %v8664 = vpack.c.b16 %v8284, %v8280
    %v8665 = vpack.c.b16 %v8285, %v8281
    %v8666 = vpack.c.b16 %v8290, %v8286
    %v8667 = vpack.c.b16 %v8291, %v8287
    %v8668 = vpack.c.b16 %v8292, %v8288
    %v8669 = vpack.c.b16 %v8293, %v8289
    %v8670 = vpack.c.b16 %v8298, %v8294
    %v8671 = vpack.c.b16 %v8299, %v8295
    %v8672 = vpack.c.b16 %v8300, %v8296
    %v8673 = vpack.c.b16 %v8301, %v8297
    %v8674 = vpack.c.b16 %v8306, %v8302
    %v8675 = vpack.c.b16 %v8307, %v8303
    %v8676 = vpack.c.b16 %v8308, %v8304
    %v8677 = vpack.c.b16 %v8309, %v8305
    %v8678 = vpack.c.b16 %v8314, %v8310
    %v8679 = vpack.c.b16 %v8315, %v8311
    %v8680 = vpack.c.b16 %v8316, %v8312
    %v8681 = vpack.c.b16 %v8317, %v8313
    %v8682 = vpack.c.b16 %v8322, %v8318
    %v8683 = vpack.c.b16 %v8323, %v8319
    %v8684 = vpack.c.b16 %v8324, %v8320
    %v8685 = vpack.c.b16 %v8325, %v8321
    %v8686 = vpack.c.b16 %v8330, %v8326
    %v8687 = vpack.c.b16 %v8331, %v8327
    %v8688 = vpack.c.b16 %v8332, %v8328
    %v8689 = vpack.c.b16 %v8333, %v8329
    %v8690 = vpack.c.b16 %v8338, %v8334
    %v8691 = vpack.c.b16 %v8339, %v8335
    %v8692 = vpack.c.b16 %v8340, %v8336
    %v8693 = vpack.c.b16 %v8341, %v8337
    %v8694 = vpack.c.b16 %v8346, %v8342
    %v8695 = vpack.c.b16 %v8347, %v8343
    %v8696 = vpack.c.b16 %v8348, %v8344
    %v8697 = vpack.c.b16 %v8349, %v8345
    %v8698 = vpack.c.b16 %v8354, %v8350
    %v8699 = vpack.c.b16 %v8355, %v8351
    %v8700 = vpack.c.b16 %v8356, %v8352
    %v8701 = vpack.c.b16 %v8357, %v8353
    %v8702 = vpack.c.b16 %v8362, %v8358
    %v8703 = vpack.c.b16 %v8363, %v8359
    %v8704 = vpack.c.b16 %v8364, %v8360
    %v8705 = vpack.c.b16 %v8365, %v8361
    %v8706 = vpack.c.b16 %v8370, %v8366
    %v8707 = vpack.c.b16 %v8371, %v8367
    %v8708 = vpack.c.b16 %v8372, %v8368
    %v8709 = vpack.c.b16 %v8373, %v8369
    %v8710 = vpack.c.b16 %v8378, %v8374
    %v8711 = vpack.c.b16 %v8379, %v8375
    %v8712 = vpack.c.b16 %v8380, %v8376
    %v8713 = vpack.c.b16 %v8381, %v8377
    %v8714 = vpack.c.b16 %v8386, %v8382
    %v8715 = vpack.c.b16 %v8387, %v8383
    %v8716 = vpack.c.b16 %v8388, %v8384
    %v8717 = vpack.c.b16 %v8389, %v8385
    %v8718 = vpack.c.b16 %v8394, %v8390
    %v8719 = vpack.c.b16 %v8395, %v8391
    %v8720 = vpack.c.b16 %v8396, %v8392
    %v8721 = vpack.c.b16 %v8397, %v8393
    %v8722 = vpack.c.b16 %v8402, %v8398
    %v8723 = vpack.c.b16 %v8403, %v8399
    %v8724 = vpack.c.b16 %v8404, %v8400
    %v8725 = vpack.c.b16 %v8405, %v8401
    %v8726 = vpack.c.b16 %v8410, %v8406
    %v8727 = vpack.c.b16 %v8411, %v8407
    %v8728 = vpack.c.b16 %v8412, %v8408
    %v8729 = vpack.c.b16 %v8413, %v8409
    %v8730 = vpack.c.b16 %v8418, %v8414
    %v8731 = vpack.c.b16 %v8419, %v8415
    %v8732 = vpack.c.b16 %v8420, %v8416
    %v8733 = vpack.c.b16 %v8421, %v8417
    %v8734 = vpack.c.b16 %v8426, %v8422
    %v8735 = vpack.c.b16 %v8427, %v8423
    %v8736 = vpack.c.b16 %v8428, %v8424
    %v8737 = vpack.c.b16 %v8429, %v8425
    %v8738 = vpack.c.b16 %v8434, %v8430
    %v8739 = vpack.c.b16 %v8435, %v8431
    %v8740 = vpack.c.b16 %v8436, %v8432
    %v8741 = vpack.c.b16 %v8437, %v8433
    %v8742 = vpack.c.b16 %v8442, %v8438
    %v8743 = vpack.c.b16 %v8443, %v8439
    %v8744 = vpack.c.b16 %v8444, %v8440
    %v8745 = vpack.c.b16 %v8445, %v8441
    %v8746 = vpack.c.b16 %v8450, %v8446
    %v8747 = vpack.c.b16 %v8451, %v8447
    %v8748 = vpack.c.b16 %v8452, %v8448
    %v8749 = vpack.c.b16 %v8453, %v8449
    %v8750 = vpack.c.b16 %v8458, %v8454
    %v8751 = vpack.c.b16 %v8459, %v8455
    %v8752 = vpack.c.b16 %v8460, %v8456
    %v8753 = vpack.c.b16 %v8461, %v8457
    %v8754 = vpack.c.b16 %v8466, %v8462
    %v8755 = vpack.c.b16 %v8467, %v8463
    %v8756 = vpack.c.b16 %v8468, %v8464
    %v8757 = vpack.c.b16 %v8469, %v8465
    %v8758 = vpack.c.b16 %v8474, %v8470
    %v8759 = vpack.c.b16 %v8475, %v8471
    %v8760 = vpack.c.b16 %v8476, %v8472
    %v8761 = vpack.c.b16 %v8477, %v8473
    %v8762 = vpack.c.b16 %v8482, %v8478
    %v8763 = vpack.c.b16 %v8483, %v8479
    %v8764 = vpack.c.b16 %v8484, %v8480
    %v8765 = vpack.c.b16 %v8485, %v8481
    %v8766 = vpack.c.b16 %v8490, %v8486
    %v8767 = vpack.c.b16 %v8491, %v8487
    %v8768 = vpack.c.b16 %v8492, %v8488
    %v8769 = vpack.c.b16 %v8493, %v8489
    %v8770 = vpack.c.b16 %v8498, %v8494
    %v8771 = vpack.c.b16 %v8499, %v8495
    %v8772 = vpack.c.b16 %v8500, %v8496
    %v8773 = vpack.c.b16 %v8501, %v8497
    %v8774 = vpack.c.b16 %v8506, %v8502
    %v8775 = vpack.c.b16 %v8507, %v8503
    %v8776 = vpack.c.b16 %v8508, %v8504
    %v8777 = vpack.c.b16 %v8509, %v8505
    %v8778 = vpack.c.b16 %v8514, %v8510
    %v8779 = vpack.c.b16 %v8515, %v8511
    %v8780 = vpack.c.b16 %v8516, %v8512
    %v8781 = vpack.c.b16 %v8517, %v8513
    %v8782 = vpack.c.b16 %v8522, %v8518
    %v8783 = vpack.c.b16 %v8523, %v8519
    %v8784 = vpack.c.b16 %v8524, %v8520
    %v8785 = vpack.c.b16 %v8525, %v8521
    %v8786 = vpack.c.b16 %v8530, %v8526
    %v8787 = vpack.c.b16 %v8531, %v8527
    %v8788 = vpack.c.b16 %v8532, %v8528
    %v8789 = vpack.c.b16 %v8533, %v8529
    %9046 = vmatpush.bf16.msra.mxu0 %v8562
    %9047 = vmatpush.bf16.msra.mxu0 %v8558
    %9048 = vmatpush.bf16.msra.mxu0 %v8554
    %9049 = vmatpush.bf16.msra.mxu0 %v8550
    %9050 = vmatpush.bf16.msra.mxu0 %v8546
    %9051 = vmatpush.bf16.msra.mxu0 %v8542
    %9052 = vmatpush.bf16.msra.mxu0 %v8538
    %9053 = vmatpush.bf16.msra.mxu0 %v8534
    %9054 = vmatmul.bf16.gmra.mxu0 %v2949
    %v9055 = vpop.f32.mrf.mxu0
    %v9056 = vadd.f32 %v7607, %v9055
    %v9057 = vpop.f32.mrf.mxu0
    %9058 = vdwg.mxu0
    %9059 = vmatpush.bf16.msra.mxu0 %v8594
    %9060 = vmatpush.bf16.msra.mxu0 %v8590
    %9061 = vmatpush.bf16.msra.mxu0 %v8586
    %9062 = vmatpush.bf16.msra.mxu0 %v8582
    %9063 = vmatpush.bf16.msra.mxu0 %v8578
    %9064 = vmatpush.bf16.msra.mxu0 %v8574
    %9065 = vmatpush.bf16.msra.mxu0 %v8570
    %9066 = vmatpush.bf16.msra.mxu0 %v8566
    %9067 = vmatmul.bf16.gmra.mxu0 %v2950
    %v9068 = vpop.f32.mrf.mxu0
    %v9069 = vadd.f32 %v9056, %v9068
    %v9070 = vpop.f32.mrf.mxu0
    %9071 = vdwg.mxu0
    %9072 = vmatpush.bf16.msra.mxu0 %v8626
    %9073 = vmatpush.bf16.msra.mxu0 %v8622
    %9074 = vmatpush.bf16.msra.mxu0 %v8618
    %9075 = vmatpush.bf16.msra.mxu0 %v8614
    %9076 = vmatpush.bf16.msra.mxu0 %v8610
    %9077 = vmatpush.bf16.msra.mxu0 %v8606
    %9078 = vmatpush.bf16.msra.mxu0 %v8602
    %9079 = vmatpush.bf16.msra.mxu0 %v8598
    %9080 = vmatmul.bf16.gmra.mxu0 %v2955
    %v9081 = vpop.f32.mrf.mxu0
    %v9082 = vadd.f32 %v9069, %v9081
    %v9083 = vpop.f32.mrf.mxu0
    %9084 = vdwg.mxu0
    %9085 = vmatpush.bf16.msra.mxu0 %v8658
    %9086 = vmatpush.bf16.msra.mxu0 %v8654
    %9087 = vmatpush.bf16.msra.mxu0 %v8650
    %9088 = vmatpush.bf16.msra.mxu0 %v8646
    %9089 = vmatpush.bf16.msra.mxu0 %v8642
    %9090 = vmatpush.bf16.msra.mxu0 %v8638
    %9091 = vmatpush.bf16.msra.mxu0 %v8634
    %9092 = vmatpush.bf16.msra.mxu0 %v8630
    %9093 = vmatmul.bf16.gmra.mxu0 %v2956
    %v9094 = vpop.f32.mrf.mxu0
    %v9095 = vadd.f32 %v9082, %v9094
    %v9096 = vpop.f32.mrf.mxu0
    %9097 = vdwg.mxu0
    %9098 = vmatpush.bf16.msra.mxu0 %v8690
    %9099 = vmatpush.bf16.msra.mxu0 %v8686
    %9100 = vmatpush.bf16.msra.mxu0 %v8682
    %9101 = vmatpush.bf16.msra.mxu0 %v8678
    %9102 = vmatpush.bf16.msra.mxu0 %v8674
    %9103 = vmatpush.bf16.msra.mxu0 %v8670
    %9104 = vmatpush.bf16.msra.mxu0 %v8666
    %9105 = vmatpush.bf16.msra.mxu0 %v8662
    %9106 = vmatmul.bf16.gmra.mxu0 %v2961
    %v9107 = vpop.f32.mrf.mxu0
    %v9108 = vadd.f32 %v9095, %v9107
    %v9109 = vpop.f32.mrf.mxu0
    %9110 = vdwg.mxu0
    %9111 = vmatpush.bf16.msra.mxu0 %v8722
    %9112 = vmatpush.bf16.msra.mxu0 %v8718
    %9113 = vmatpush.bf16.msra.mxu0 %v8714
    %9114 = vmatpush.bf16.msra.mxu0 %v8710
    %9115 = vmatpush.bf16.msra.mxu0 %v8706
    %9116 = vmatpush.bf16.msra.mxu0 %v8702
    %9117 = vmatpush.bf16.msra.mxu0 %v8698
    %9118 = vmatpush.bf16.msra.mxu0 %v8694
    %9119 = vmatmul.bf16.gmra.mxu0 %v2962
    %v9120 = vpop.f32.mrf.mxu0
    %v9121 = vadd.f32 %v9108, %v9120
    %v9122 = vpop.f32.mrf.mxu0
    %9123 = vdwg.mxu0
    %9124 = vmatpush.bf16.msra.mxu0 %v8754
    %9125 = vmatpush.bf16.msra.mxu0 %v8750
    %9126 = vmatpush.bf16.msra.mxu0 %v8746
    %9127 = vmatpush.bf16.msra.mxu0 %v8742
    %9128 = vmatpush.bf16.msra.mxu0 %v8738
    %9129 = vmatpush.bf16.msra.mxu0 %v8734
    %9130 = vmatpush.bf16.msra.mxu0 %v8730
    %9131 = vmatpush.bf16.msra.mxu0 %v8726
    %9132 = vmatmul.bf16.gmra.mxu0 %v2967
    %v9133 = vpop.f32.mrf.mxu0
    %v9134 = vadd.f32 %v9121, %v9133
    %v9135 = vpop.f32.mrf.mxu0
    %9136 = vdwg.mxu0
    %9137 = vmatpush.bf16.msra.mxu0 %v8786
    %9138 = vmatpush.bf16.msra.mxu0 %v8782
    %9139 = vmatpush.bf16.msra.mxu0 %v8778
    %9140 = vmatpush.bf16.msra.mxu0 %v8774
    %9141 = vmatpush.bf16.msra.mxu0 %v8770
    %9142 = vmatpush.bf16.msra.mxu0 %v8766
    %9143 = vmatpush.bf16.msra.mxu0 %v8762
    %9144 = vmatpush.bf16.msra.mxu0 %v8758
    %9145 = vmatmul.bf16.gmra.mxu0 %v2968
    %v9146 = vpop.f32.mrf.mxu0
    %v9147 = vadd.f32 %v9134, %v9146
    %v9148 = vpop.f32.mrf.mxu0
    %9149 = vdwg.mxu0
    %9150 = vmatpush.bf16.msra.mxu0 %v8563
    %9151 = vmatpush.bf16.msra.mxu0 %v8559
    %9152 = vmatpush.bf16.msra.mxu0 %v8555
    %9153 = vmatpush.bf16.msra.mxu0 %v8551
    %9154 = vmatpush.bf16.msra.mxu0 %v8547
    %9155 = vmatpush.bf16.msra.mxu0 %v8543
    %9156 = vmatpush.bf16.msra.mxu0 %v8539
    %9157 = vmatpush.bf16.msra.mxu0 %v8535
    %9158 = vmatmul.bf16.gmra.mxu0 %v2949
    %v9159 = vpop.f32.mrf.mxu0
    %v9160 = vadd.f32 %v7659, %v9159
    %v9161 = vpop.f32.mrf.mxu0
    %9162 = vdwg.mxu0
    %9163 = vmatpush.bf16.msra.mxu0 %v8595
    %9164 = vmatpush.bf16.msra.mxu0 %v8591
    %9165 = vmatpush.bf16.msra.mxu0 %v8587
    %9166 = vmatpush.bf16.msra.mxu0 %v8583
    %9167 = vmatpush.bf16.msra.mxu0 %v8579
    %9168 = vmatpush.bf16.msra.mxu0 %v8575
    %9169 = vmatpush.bf16.msra.mxu0 %v8571
    %9170 = vmatpush.bf16.msra.mxu0 %v8567
    %9171 = vmatmul.bf16.gmra.mxu0 %v2950
    %v9172 = vpop.f32.mrf.mxu0
    %v9173 = vadd.f32 %v9160, %v9172
    %v9174 = vpop.f32.mrf.mxu0
    %9175 = vdwg.mxu0
    %9176 = vmatpush.bf16.msra.mxu0 %v8627
    %9177 = vmatpush.bf16.msra.mxu0 %v8623
    %9178 = vmatpush.bf16.msra.mxu0 %v8619
    %9179 = vmatpush.bf16.msra.mxu0 %v8615
    %9180 = vmatpush.bf16.msra.mxu0 %v8611
    %9181 = vmatpush.bf16.msra.mxu0 %v8607
    %9182 = vmatpush.bf16.msra.mxu0 %v8603
    %9183 = vmatpush.bf16.msra.mxu0 %v8599
    %9184 = vmatmul.bf16.gmra.mxu0 %v2955
    %v9185 = vpop.f32.mrf.mxu0
    %v9186 = vadd.f32 %v9173, %v9185
    %v9187 = vpop.f32.mrf.mxu0
    %9188 = vdwg.mxu0
    %9189 = vmatpush.bf16.msra.mxu0 %v8659
    %9190 = vmatpush.bf16.msra.mxu0 %v8655
    %9191 = vmatpush.bf16.msra.mxu0 %v8651
    %9192 = vmatpush.bf16.msra.mxu0 %v8647
    %9193 = vmatpush.bf16.msra.mxu0 %v8643
    %9194 = vmatpush.bf16.msra.mxu0 %v8639
    %9195 = vmatpush.bf16.msra.mxu0 %v8635
    %9196 = vmatpush.bf16.msra.mxu0 %v8631
    %9197 = vmatmul.bf16.gmra.mxu0 %v2956
    %v9198 = vpop.f32.mrf.mxu0
    %v9199 = vadd.f32 %v9186, %v9198
    %v9200 = vpop.f32.mrf.mxu0
    %9201 = vdwg.mxu0
    %9202 = vmatpush.bf16.msra.mxu0 %v8691
    %9203 = vmatpush.bf16.msra.mxu0 %v8687
    %9204 = vmatpush.bf16.msra.mxu0 %v8683
    %9205 = vmatpush.bf16.msra.mxu0 %v8679
    %9206 = vmatpush.bf16.msra.mxu0 %v8675
    %9207 = vmatpush.bf16.msra.mxu0 %v8671
    %9208 = vmatpush.bf16.msra.mxu0 %v8667
    %9209 = vmatpush.bf16.msra.mxu0 %v8663
    %9210 = vmatmul.bf16.gmra.mxu0 %v2961
    %v9211 = vpop.f32.mrf.mxu0
    %v9212 = vadd.f32 %v9199, %v9211
    %v9213 = vpop.f32.mrf.mxu0
    %9214 = vdwg.mxu0
    %9215 = vmatpush.bf16.msra.mxu0 %v8723
    %9216 = vmatpush.bf16.msra.mxu0 %v8719
    %9217 = vmatpush.bf16.msra.mxu0 %v8715
    %9218 = vmatpush.bf16.msra.mxu0 %v8711
    %9219 = vmatpush.bf16.msra.mxu0 %v8707
    %9220 = vmatpush.bf16.msra.mxu0 %v8703
    %9221 = vmatpush.bf16.msra.mxu0 %v8699
    %9222 = vmatpush.bf16.msra.mxu0 %v8695
    %9223 = vmatmul.bf16.gmra.mxu0 %v2962
    %v9224 = vpop.f32.mrf.mxu0
    %v9225 = vadd.f32 %v9212, %v9224
    %v9226 = vpop.f32.mrf.mxu0
    %9227 = vdwg.mxu0
    %9228 = vmatpush.bf16.msra.mxu0 %v8755
    %9229 = vmatpush.bf16.msra.mxu0 %v8751
    %9230 = vmatpush.bf16.msra.mxu0 %v8747
    %9231 = vmatpush.bf16.msra.mxu0 %v8743
    %9232 = vmatpush.bf16.msra.mxu0 %v8739
    %9233 = vmatpush.bf16.msra.mxu0 %v8735
    %9234 = vmatpush.bf16.msra.mxu0 %v8731
    %9235 = vmatpush.bf16.msra.mxu0 %v8727
    %9236 = vmatmul.bf16.gmra.mxu0 %v2967
    %v9237 = vpop.f32.mrf.mxu0
    %v9238 = vadd.f32 %v9225, %v9237
    %v9239 = vpop.f32.mrf.mxu0
    %9240 = vdwg.mxu0
    %9241 = vmatpush.bf16.msra.mxu0 %v8787
    %9242 = vmatpush.bf16.msra.mxu0 %v8783
    %9243 = vmatpush.bf16.msra.mxu0 %v8779
    %9244 = vmatpush.bf16.msra.mxu0 %v8775
    %9245 = vmatpush.bf16.msra.mxu0 %v8771
    %9246 = vmatpush.bf16.msra.mxu0 %v8767
    %9247 = vmatpush.bf16.msra.mxu0 %v8763
    %9248 = vmatpush.bf16.msra.mxu0 %v8759
    %9249 = vmatmul.bf16.gmra.mxu0 %v2968
    %v9250 = vpop.f32.mrf.mxu0
    %v9251 = vadd.f32 %v9238, %v9250
    %v9252 = vpop.f32.mrf.mxu0
    %9253 = vdwg.mxu0
    %9254 = vmatpush.bf16.msra.mxu0 %v8564
    %9255 = vmatpush.bf16.msra.mxu0 %v8560
    %9256 = vmatpush.bf16.msra.mxu0 %v8556
    %9257 = vmatpush.bf16.msra.mxu0 %v8552
    %9258 = vmatpush.bf16.msra.mxu0 %v8548
    %9259 = vmatpush.bf16.msra.mxu0 %v8544
    %9260 = vmatpush.bf16.msra.mxu0 %v8540
    %9261 = vmatpush.bf16.msra.mxu0 %v8536
    %9262 = vmatmul.bf16.gmra.mxu0 %v2949
    %v9263 = vpop.f32.mrf.mxu0
    %v9264 = vadd.f32 %v7711, %v9263
    %v9265 = vpop.f32.mrf.mxu0
    %9266 = vdwg.mxu0
    %9267 = vmatpush.bf16.msra.mxu0 %v8596
    %9268 = vmatpush.bf16.msra.mxu0 %v8592
    %9269 = vmatpush.bf16.msra.mxu0 %v8588
    %9270 = vmatpush.bf16.msra.mxu0 %v8584
    %9271 = vmatpush.bf16.msra.mxu0 %v8580
    %9272 = vmatpush.bf16.msra.mxu0 %v8576
    %9273 = vmatpush.bf16.msra.mxu0 %v8572
    %9274 = vmatpush.bf16.msra.mxu0 %v8568
    %9275 = vmatmul.bf16.gmra.mxu0 %v2950
    %v9276 = vpop.f32.mrf.mxu0
    %v9277 = vadd.f32 %v9264, %v9276
    %v9278 = vpop.f32.mrf.mxu0
    %9279 = vdwg.mxu0
    %9280 = vmatpush.bf16.msra.mxu0 %v8628
    %9281 = vmatpush.bf16.msra.mxu0 %v8624
    %9282 = vmatpush.bf16.msra.mxu0 %v8620
    %9283 = vmatpush.bf16.msra.mxu0 %v8616
    %9284 = vmatpush.bf16.msra.mxu0 %v8612
    %9285 = vmatpush.bf16.msra.mxu0 %v8608
    %9286 = vmatpush.bf16.msra.mxu0 %v8604
    %9287 = vmatpush.bf16.msra.mxu0 %v8600
    %9288 = vmatmul.bf16.gmra.mxu0 %v2955
    %v9289 = vpop.f32.mrf.mxu0
    %v9290 = vadd.f32 %v9277, %v9289
    %v9291 = vpop.f32.mrf.mxu0
    %9292 = vdwg.mxu0
    %9293 = vmatpush.bf16.msra.mxu0 %v8660
    %9294 = vmatpush.bf16.msra.mxu0 %v8656
    %9295 = vmatpush.bf16.msra.mxu0 %v8652
    %9296 = vmatpush.bf16.msra.mxu0 %v8648
    %9297 = vmatpush.bf16.msra.mxu0 %v8644
    %9298 = vmatpush.bf16.msra.mxu0 %v8640
    %9299 = vmatpush.bf16.msra.mxu0 %v8636
    %9300 = vmatpush.bf16.msra.mxu0 %v8632
    %9301 = vmatmul.bf16.gmra.mxu0 %v2956
    %v9302 = vpop.f32.mrf.mxu0
    %v9303 = vadd.f32 %v9290, %v9302
    %v9304 = vpop.f32.mrf.mxu0
    %9305 = vdwg.mxu0
    %9306 = vmatpush.bf16.msra.mxu0 %v8692
    %9307 = vmatpush.bf16.msra.mxu0 %v8688
    %9308 = vmatpush.bf16.msra.mxu0 %v8684
    %9309 = vmatpush.bf16.msra.mxu0 %v8680
    %9310 = vmatpush.bf16.msra.mxu0 %v8676
    %9311 = vmatpush.bf16.msra.mxu0 %v8672
    %9312 = vmatpush.bf16.msra.mxu0 %v8668
    %9313 = vmatpush.bf16.msra.mxu0 %v8664
    %9314 = vmatmul.bf16.gmra.mxu0 %v2961
    %v9315 = vpop.f32.mrf.mxu0
    %v9316 = vadd.f32 %v9303, %v9315
    %v9317 = vpop.f32.mrf.mxu0
    %9318 = vdwg.mxu0
    %9319 = vmatpush.bf16.msra.mxu0 %v8724
    %9320 = vmatpush.bf16.msra.mxu0 %v8720
    %9321 = vmatpush.bf16.msra.mxu0 %v8716
    %9322 = vmatpush.bf16.msra.mxu0 %v8712
    %9323 = vmatpush.bf16.msra.mxu0 %v8708
    %9324 = vmatpush.bf16.msra.mxu0 %v8704
    %9325 = vmatpush.bf16.msra.mxu0 %v8700
    %9326 = vmatpush.bf16.msra.mxu0 %v8696
    %9327 = vmatmul.bf16.gmra.mxu0 %v2962
    %v9328 = vpop.f32.mrf.mxu0
    %v9329 = vadd.f32 %v9316, %v9328
    %v9330 = vpop.f32.mrf.mxu0
    %9331 = vdwg.mxu0
    %9332 = vmatpush.bf16.msra.mxu0 %v8756
    %9333 = vmatpush.bf16.msra.mxu0 %v8752
    %9334 = vmatpush.bf16.msra.mxu0 %v8748
    %9335 = vmatpush.bf16.msra.mxu0 %v8744
    %9336 = vmatpush.bf16.msra.mxu0 %v8740
    %9337 = vmatpush.bf16.msra.mxu0 %v8736
    %9338 = vmatpush.bf16.msra.mxu0 %v8732
    %9339 = vmatpush.bf16.msra.mxu0 %v8728
    %9340 = vmatmul.bf16.gmra.mxu0 %v2967
    %v9341 = vpop.f32.mrf.mxu0
    %v9342 = vadd.f32 %v9329, %v9341
    %v9343 = vpop.f32.mrf.mxu0
    %9344 = vdwg.mxu0
    %9345 = vmatpush.bf16.msra.mxu0 %v8788
    %9346 = vmatpush.bf16.msra.mxu0 %v8784
    %9347 = vmatpush.bf16.msra.mxu0 %v8780
    %9348 = vmatpush.bf16.msra.mxu0 %v8776
    %9349 = vmatpush.bf16.msra.mxu0 %v8772
    %9350 = vmatpush.bf16.msra.mxu0 %v8768
    %9351 = vmatpush.bf16.msra.mxu0 %v8764
    %9352 = vmatpush.bf16.msra.mxu0 %v8760
    %9353 = vmatmul.bf16.gmra.mxu0 %v2968
    %v9354 = vpop.f32.mrf.mxu0
    %v9355 = vadd.f32 %v9342, %v9354
    %v9356 = vpop.f32.mrf.mxu0
    %9357 = vdwg.mxu0
    %9358 = vmatpush.bf16.msra.mxu0 %v8565
    %9359 = vmatpush.bf16.msra.mxu0 %v8561
    %9360 = vmatpush.bf16.msra.mxu0 %v8557
    %9361 = vmatpush.bf16.msra.mxu0 %v8553
    %9362 = vmatpush.bf16.msra.mxu0 %v8549
    %9363 = vmatpush.bf16.msra.mxu0 %v8545
    %9364 = vmatpush.bf16.msra.mxu0 %v8541
    %9365 = vmatpush.bf16.msra.mxu0 %v8537
    %9366 = vmatmul.bf16.gmra.mxu0 %v2949
    %v9367 = vpop.f32.mrf.mxu0
    %v9368 = vadd.f32 %v7763, %v9367
    %v9369 = vpop.f32.mrf.mxu0
    %9370 = vdwg.mxu0
    %9371 = vmatpush.bf16.msra.mxu0 %v8597
    %9372 = vmatpush.bf16.msra.mxu0 %v8593
    %9373 = vmatpush.bf16.msra.mxu0 %v8589
    %9374 = vmatpush.bf16.msra.mxu0 %v8585
    %9375 = vmatpush.bf16.msra.mxu0 %v8581
    %9376 = vmatpush.bf16.msra.mxu0 %v8577
    %9377 = vmatpush.bf16.msra.mxu0 %v8573
    %9378 = vmatpush.bf16.msra.mxu0 %v8569
    %9379 = vmatmul.bf16.gmra.mxu0 %v2950
    %v9380 = vpop.f32.mrf.mxu0
    %v9381 = vadd.f32 %v9368, %v9380
    %v9382 = vpop.f32.mrf.mxu0
    %9383 = vdwg.mxu0
    %9384 = vmatpush.bf16.msra.mxu0 %v8629
    %9385 = vmatpush.bf16.msra.mxu0 %v8625
    %9386 = vmatpush.bf16.msra.mxu0 %v8621
    %9387 = vmatpush.bf16.msra.mxu0 %v8617
    %9388 = vmatpush.bf16.msra.mxu0 %v8613
    %9389 = vmatpush.bf16.msra.mxu0 %v8609
    %9390 = vmatpush.bf16.msra.mxu0 %v8605
    %9391 = vmatpush.bf16.msra.mxu0 %v8601
    %9392 = vmatmul.bf16.gmra.mxu0 %v2955
    %v9393 = vpop.f32.mrf.mxu0
    %v9394 = vadd.f32 %v9381, %v9393
    %v9395 = vpop.f32.mrf.mxu0
    %9396 = vdwg.mxu0
    %9397 = vmatpush.bf16.msra.mxu0 %v8661
    %9398 = vmatpush.bf16.msra.mxu0 %v8657
    %9399 = vmatpush.bf16.msra.mxu0 %v8653
    %9400 = vmatpush.bf16.msra.mxu0 %v8649
    %9401 = vmatpush.bf16.msra.mxu0 %v8645
    %9402 = vmatpush.bf16.msra.mxu0 %v8641
    %9403 = vmatpush.bf16.msra.mxu0 %v8637
    %9404 = vmatpush.bf16.msra.mxu0 %v8633
    %9405 = vmatmul.bf16.gmra.mxu0 %v2956
    %v9406 = vpop.f32.mrf.mxu0
    %v9407 = vadd.f32 %v9394, %v9406
    %v9408 = vpop.f32.mrf.mxu0
    %9409 = vdwg.mxu0
    %9410 = vmatpush.bf16.msra.mxu0 %v8693
    %9411 = vmatpush.bf16.msra.mxu0 %v8689
    %9412 = vmatpush.bf16.msra.mxu0 %v8685
    %9413 = vmatpush.bf16.msra.mxu0 %v8681
    %9414 = vmatpush.bf16.msra.mxu0 %v8677
    %9415 = vmatpush.bf16.msra.mxu0 %v8673
    %9416 = vmatpush.bf16.msra.mxu0 %v8669
    %9417 = vmatpush.bf16.msra.mxu0 %v8665
    %9418 = vmatmul.bf16.gmra.mxu0 %v2961
    %v9419 = vpop.f32.mrf.mxu0
    %v9420 = vadd.f32 %v9407, %v9419
    %v9421 = vpop.f32.mrf.mxu0
    %9422 = vdwg.mxu0
    %9423 = vmatpush.bf16.msra.mxu0 %v8725
    %9424 = vmatpush.bf16.msra.mxu0 %v8721
    %9425 = vmatpush.bf16.msra.mxu0 %v8717
    %9426 = vmatpush.bf16.msra.mxu0 %v8713
    %9427 = vmatpush.bf16.msra.mxu0 %v8709
    %9428 = vmatpush.bf16.msra.mxu0 %v8705
    %9429 = vmatpush.bf16.msra.mxu0 %v8701
    %9430 = vmatpush.bf16.msra.mxu0 %v8697
    %9431 = vmatmul.bf16.gmra.mxu0 %v2962
    %v9432 = vpop.f32.mrf.mxu0
    %v9433 = vadd.f32 %v9420, %v9432
    %v9434 = vpop.f32.mrf.mxu0
    %9435 = vdwg.mxu0
    %9436 = vmatpush.bf16.msra.mxu0 %v8757
    %9437 = vmatpush.bf16.msra.mxu0 %v8753
    %9438 = vmatpush.bf16.msra.mxu0 %v8749
    %9439 = vmatpush.bf16.msra.mxu0 %v8745
    %9440 = vmatpush.bf16.msra.mxu0 %v8741
    %9441 = vmatpush.bf16.msra.mxu0 %v8737
    %9442 = vmatpush.bf16.msra.mxu0 %v8733
    %9443 = vmatpush.bf16.msra.mxu0 %v8729
    %9444 = vmatmul.bf16.gmra.mxu0 %v2967
    %v9445 = vpop.f32.mrf.mxu0
    %v9446 = vadd.f32 %v9433, %v9445
    %v9447 = vpop.f32.mrf.mxu0
    %9448 = vdwg.mxu0
    %9449 = vmatpush.bf16.msra.mxu0 %v8789
    %9450 = vmatpush.bf16.msra.mxu0 %v8785
    %9451 = vmatpush.bf16.msra.mxu0 %v8781
    %9452 = vmatpush.bf16.msra.mxu0 %v8777
    %9453 = vmatpush.bf16.msra.mxu0 %v8773
    %9454 = vmatpush.bf16.msra.mxu0 %v8769
    %9455 = vmatpush.bf16.msra.mxu0 %v8765
    %9456 = vmatpush.bf16.msra.mxu0 %v8761
    %9457 = vmatmul.bf16.gmra.mxu0 %v2968
    %v9458 = vpop.f32.mrf.mxu0
    %v9459 = vadd.f32 %v9446, %v9458
    %v9460 = vpop.f32.mrf.mxu0
    %9461 = vdwg.mxu0
    %v9462 = vld [vmem:[#allocation20] sm:$0xf]
    %v9464 = vperm.slane %v9462, 0
    %v9465 = vperm.slane %v9462, 1
    %v9466 = vperm.slane %v9462, 2
    %v9467 = vperm.slane %v9462, 3
    %v9472 = vadd.f32 %v9147, %v9464
    %v9473 = vadd.f32 %v9251, %v9465
    %v9474 = vadd.f32 %v9355, %v9466
    %v9475 = vadd.f32 %v9459, %v9467
    %v9476 = vmax.f32 %v9472, 0.0
    %v9477 = vmax.f32 %v9473, 0.0
    %v9478 = vmax.f32 %v9474, 0.0
    %v9479 = vmax.f32 %v9475, 0.0
    %v9480 = vpack.c.bf16 %v9476, %v9476
    %v9481 = vpack.c.bf16 %v9477, %v9477
    %v9482 = vpack.c.bf16 %v9478, %v9478
    %v9483 = vpack.c.bf16 %v9479, %v9479
    %v9484 = vld [vmem:[#allocation21] sm:$0xff]
    %v9485 = vld [vmem:[#allocation21 + $0x8] sm:$0xff]
    %v9486 = vld [vmem:[#allocation21 + $0x10] sm:$0xff]
    %v9487 = vld [vmem:[#allocation21 + $0x18] sm:$0xff]
    %v9488 = vld [vmem:[#allocation21 + $0x20] sm:$0xff]
    %v9489 = vld [vmem:[#allocation21 + $0x28] sm:$0xff]
    %v9490 = vld [vmem:[#allocation21 + $0x30] sm:$0xff]
    %v9491 = vld [vmem:[#allocation21 + $0x38] sm:$0xff]
    %v9492 = vld [vmem:[#allocation21 + $0x40] sm:$0xff]
    %v9493 = vld [vmem:[#allocation21 + $0x48] sm:$0xff]
    %v9494 = vld [vmem:[#allocation21 + $0x50] sm:$0xff]
    %v9495 = vld [vmem:[#allocation21 + $0x58] sm:$0xff]
    %v9496 = vld [vmem:[#allocation21 + $0x60] sm:$0xff]
    %v9497 = vld [vmem:[#allocation21 + $0x68] sm:$0xff]
    %v9498 = vld [vmem:[#allocation21 + $0x70] sm:$0xff]
    %v9499 = vld [vmem:[#allocation21 + $0x78] sm:$0xff]
    %v9500 = vld [vmem:[#allocation21 + $0x80] sm:$0xff]
    %v9501 = vld [vmem:[#allocation21 + $0x88] sm:$0xff]
    %v9502 = vld [vmem:[#allocation21 + $0x90] sm:$0xff]
    %v9503 = vld [vmem:[#allocation21 + $0x98] sm:$0xff]
    %v9504 = vld [vmem:[#allocation21 + $0xa0] sm:$0xff]
    %v9505 = vld [vmem:[#allocation21 + $0xa8] sm:$0xff]
    %v9506 = vld [vmem:[#allocation21 + $0xb0] sm:$0xff]
    %v9507 = vld [vmem:[#allocation21 + $0xb8] sm:$0xff]
    %v9508 = vld [vmem:[#allocation21 + $0xc0] sm:$0xff]
    %v9509 = vld [vmem:[#allocation21 + $0xc8] sm:$0xff]
    %v9510 = vld [vmem:[#allocation21 + $0xd0] sm:$0xff]
    %v9511 = vld [vmem:[#allocation21 + $0xd8] sm:$0xff]
    %v9512 = vld [vmem:[#allocation21 + $0xe0] sm:$0xff]
    %v9513 = vld [vmem:[#allocation21 + $0xe8] sm:$0xff]
    %v9514 = vld [vmem:[#allocation21 + $0xf0] sm:$0xff]
    %v9515 = vld [vmem:[#allocation21 + $0xf8] sm:$0xff]
    %v9516 = vld [vmem:[#allocation21 + $0x100] sm:$0xff]
    %v9517 = vld [vmem:[#allocation21 + $0x108] sm:$0xff]
    %v9518 = vld [vmem:[#allocation21 + $0x110] sm:$0xff]
    %v9519 = vld [vmem:[#allocation21 + $0x118] sm:$0xff]
    %v9520 = vld [vmem:[#allocation21 + $0x120] sm:$0xff]
    %v9521 = vld [vmem:[#allocation21 + $0x128] sm:$0xff]
    %v9522 = vld [vmem:[#allocation21 + $0x130] sm:$0xff]
    %v9523 = vld [vmem:[#allocation21 + $0x138] sm:$0xff]
    %v9524 = vld [vmem:[#allocation21 + $0x140] sm:$0xff]
    %v9525 = vld [vmem:[#allocation21 + $0x148] sm:$0xff]
    %v9526 = vld [vmem:[#allocation21 + $0x150] sm:$0xff]
    %v9527 = vld [vmem:[#allocation21 + $0x158] sm:$0xff]
    %v9528 = vld [vmem:[#allocation21 + $0x160] sm:$0xff]
    %v9529 = vld [vmem:[#allocation21 + $0x168] sm:$0xff]
    %v9530 = vld [vmem:[#allocation21 + $0x170] sm:$0xff]
    %v9531 = vld [vmem:[#allocation21 + $0x178] sm:$0xff]
    %v9532 = vld [vmem:[#allocation21 + $0x180] sm:$0xff]
    %v9533 = vld [vmem:[#allocation21 + $0x188] sm:$0xff]
    %v9534 = vld [vmem:[#allocation21 + $0x190] sm:$0xff]
    %v9535 = vld [vmem:[#allocation21 + $0x198] sm:$0xff]
    %v9536 = vld [vmem:[#allocation21 + $0x1a0] sm:$0xff]
    %v9537 = vld [vmem:[#allocation21 + $0x1a8] sm:$0xff]
    %v9538 = vld [vmem:[#allocation21 + $0x1b0] sm:$0xff]
    %v9539 = vld [vmem:[#allocation21 + $0x1b8] sm:$0xff]
    %v9540 = vld [vmem:[#allocation21 + $0x1c0] sm:$0xff]
    %v9541 = vld [vmem:[#allocation21 + $0x1c8] sm:$0xff]
    %v9542 = vld [vmem:[#allocation21 + $0x1d0] sm:$0xff]
    %v9543 = vld [vmem:[#allocation21 + $0x1d8] sm:$0xff]
    %v9544 = vld [vmem:[#allocation21 + $0x1e0] sm:$0xff]
    %v9545 = vld [vmem:[#allocation21 + $0x1e8] sm:$0xff]
    %v9546 = vld [vmem:[#allocation21 + $0x1f0] sm:$0xff]
    %v9547 = vld [vmem:[#allocation21 + $0x1f8] sm:$0xff]
    %v9548 = vld [vmem:[#allocation23] sm:$0x3]
    %v9550 = vperm.slane %v9548, 0
    %v9551 = vperm.slane %v9548, 1
    %v9618 = vunpack.c.l.b16 %v9484
    %v9619 = vunpack.c.h.b16 %v9484
    %v9620 = vunpack.c.l.b16 %v9485
    %v9621 = vunpack.c.h.b16 %v9485
    %v9622 = vunpack.c.l.b16 %v9486
    %v9623 = vunpack.c.h.b16 %v9486
    %v9624 = vunpack.c.l.b16 %v9487
    %v9625 = vunpack.c.h.b16 %v9487
    %v9626 = vunpack.c.l.b16 %v9488
    %v9627 = vunpack.c.h.b16 %v9488
    %v9628 = vunpack.c.l.b16 %v9489
    %v9629 = vunpack.c.h.b16 %v9489
    %v9630 = vunpack.c.l.b16 %v9490
    %v9631 = vunpack.c.h.b16 %v9490
    %v9632 = vunpack.c.l.b16 %v9491
    %v9633 = vunpack.c.h.b16 %v9491
    %v9634 = vunpack.c.l.b16 %v9492
    %v9635 = vunpack.c.h.b16 %v9492
    %v9636 = vunpack.c.l.b16 %v9493
    %v9637 = vunpack.c.h.b16 %v9493
    %v9638 = vunpack.c.l.b16 %v9494
    %v9639 = vunpack.c.h.b16 %v9494
    %v9640 = vunpack.c.l.b16 %v9495
    %v9641 = vunpack.c.h.b16 %v9495
    %v9642 = vunpack.c.l.b16 %v9496
    %v9643 = vunpack.c.h.b16 %v9496
    %v9644 = vunpack.c.l.b16 %v9497
    %v9645 = vunpack.c.h.b16 %v9497
    %v9646 = vunpack.c.l.b16 %v9498
    %v9647 = vunpack.c.h.b16 %v9498
    %v9648 = vunpack.c.l.b16 %v9499
    %v9649 = vunpack.c.h.b16 %v9499
    %v9650 = vunpack.c.l.b16 %v9500
    %v9651 = vunpack.c.h.b16 %v9500
    %v9652 = vunpack.c.l.b16 %v9501
    %v9653 = vunpack.c.h.b16 %v9501
    %v9654 = vunpack.c.l.b16 %v9502
    %v9655 = vunpack.c.h.b16 %v9502
    %v9656 = vunpack.c.l.b16 %v9503
    %v9657 = vunpack.c.h.b16 %v9503
    %v9658 = vunpack.c.l.b16 %v9504
    %v9659 = vunpack.c.h.b16 %v9504
    %v9660 = vunpack.c.l.b16 %v9505
    %v9661 = vunpack.c.h.b16 %v9505
    %v9662 = vunpack.c.l.b16 %v9506
    %v9663 = vunpack.c.h.b16 %v9506
    %v9664 = vunpack.c.l.b16 %v9507
    %v9665 = vunpack.c.h.b16 %v9507
    %v9666 = vunpack.c.l.b16 %v9508
    %v9667 = vunpack.c.h.b16 %v9508
    %v9668 = vunpack.c.l.b16 %v9509
    %v9669 = vunpack.c.h.b16 %v9509
    %v9670 = vunpack.c.l.b16 %v9510
    %v9671 = vunpack.c.h.b16 %v9510
    %v9672 = vunpack.c.l.b16 %v9511
    %v9673 = vunpack.c.h.b16 %v9511
    %v9674 = vunpack.c.l.b16 %v9512
    %v9675 = vunpack.c.h.b16 %v9512
    %v9676 = vunpack.c.l.b16 %v9513
    %v9677 = vunpack.c.h.b16 %v9513
    %v9678 = vunpack.c.l.b16 %v9514
    %v9679 = vunpack.c.h.b16 %v9514
    %v9680 = vunpack.c.l.b16 %v9515
    %v9681 = vunpack.c.h.b16 %v9515
    %v9682 = vunpack.c.l.b16 %v9516
    %v9683 = vunpack.c.h.b16 %v9516
    %v9684 = vunpack.c.l.b16 %v9517
    %v9685 = vunpack.c.h.b16 %v9517
    %v9686 = vunpack.c.l.b16 %v9518
    %v9687 = vunpack.c.h.b16 %v9518
    %v9688 = vunpack.c.l.b16 %v9519
    %v9689 = vunpack.c.h.b16 %v9519
    %v9690 = vunpack.c.l.b16 %v9520
    %v9691 = vunpack.c.h.b16 %v9520
    %v9692 = vunpack.c.l.b16 %v9521
    %v9693 = vunpack.c.h.b16 %v9521
    %v9694 = vunpack.c.l.b16 %v9522
    %v9695 = vunpack.c.h.b16 %v9522
    %v9696 = vunpack.c.l.b16 %v9523
    %v9697 = vunpack.c.h.b16 %v9523
    %v9698 = vunpack.c.l.b16 %v9524
    %v9699 = vunpack.c.h.b16 %v9524
    %v9700 = vunpack.c.l.b16 %v9525
    %v9701 = vunpack.c.h.b16 %v9525
    %v9702 = vunpack.c.l.b16 %v9526
    %v9703 = vunpack.c.h.b16 %v9526
    %v9704 = vunpack.c.l.b16 %v9527
    %v9705 = vunpack.c.h.b16 %v9527
    %v9706 = vunpack.c.l.b16 %v9528
    %v9707 = vunpack.c.h.b16 %v9528
    %v9708 = vunpack.c.l.b16 %v9529
    %v9709 = vunpack.c.h.b16 %v9529
    %v9710 = vunpack.c.l.b16 %v9530
    %v9711 = vunpack.c.h.b16 %v9530
    %v9712 = vunpack.c.l.b16 %v9531
    %v9713 = vunpack.c.h.b16 %v9531
    %v9714 = vunpack.c.l.b16 %v9532
    %v9715 = vunpack.c.h.b16 %v9532
    %v9716 = vunpack.c.l.b16 %v9533
    %v9717 = vunpack.c.h.b16 %v9533
    %v9718 = vunpack.c.l.b16 %v9534
    %v9719 = vunpack.c.h.b16 %v9534
    %v9720 = vunpack.c.l.b16 %v9535
    %v9721 = vunpack.c.h.b16 %v9535
    %v9722 = vunpack.c.l.b16 %v9536
    %v9723 = vunpack.c.h.b16 %v9536
    %v9724 = vunpack.c.l.b16 %v9537
    %v9725 = vunpack.c.h.b16 %v9537
    %v9726 = vunpack.c.l.b16 %v9538
    %v9727 = vunpack.c.h.b16 %v9538
    %v9728 = vunpack.c.l.b16 %v9539
    %v9729 = vunpack.c.h.b16 %v9539
    %v9730 = vunpack.c.l.b16 %v9540
    %v9731 = vunpack.c.h.b16 %v9540
    %v9732 = vunpack.c.l.b16 %v9541
    %v9733 = vunpack.c.h.b16 %v9541
    %v9734 = vunpack.c.l.b16 %v9542
    %v9735 = vunpack.c.h.b16 %v9542
    %v9736 = vunpack.c.l.b16 %v9543
    %v9737 = vunpack.c.h.b16 %v9543
    %v9738 = vunpack.c.l.b16 %v9544
    %v9739 = vunpack.c.h.b16 %v9544
    %v9740 = vunpack.c.l.b16 %v9545
    %v9741 = vunpack.c.h.b16 %v9545
    %v9742 = vunpack.c.l.b16 %v9546
    %v9743 = vunpack.c.h.b16 %v9546
    %v9744 = vunpack.c.l.b16 %v9547
    %v9745 = vunpack.c.h.b16 %v9547
    %v9746 = vpack.c.b16 %v9620, %v9618
    %v9747 = vpack.c.b16 %v9621, %v9619
    %v9748 = vpack.c.b16 %v9624, %v9622
    %v9749 = vpack.c.b16 %v9625, %v9623
    %v9750 = vpack.c.b16 %v9628, %v9626
    %v9751 = vpack.c.b16 %v9629, %v9627
    %v9752 = vpack.c.b16 %v9632, %v9630
    %v9753 = vpack.c.b16 %v9633, %v9631
    %v9754 = vpack.c.b16 %v9636, %v9634
    %v9755 = vpack.c.b16 %v9637, %v9635
    %v9756 = vpack.c.b16 %v9640, %v9638
    %v9757 = vpack.c.b16 %v9641, %v9639
    %v9758 = vpack.c.b16 %v9644, %v9642
    %v9759 = vpack.c.b16 %v9645, %v9643
    %v9760 = vpack.c.b16 %v9648, %v9646
    %v9761 = vpack.c.b16 %v9649, %v9647
    %v9762 = vpack.c.b16 %v9652, %v9650
    %v9763 = vpack.c.b16 %v9653, %v9651
    %v9764 = vpack.c.b16 %v9656, %v9654
    %v9765 = vpack.c.b16 %v9657, %v9655
    %v9766 = vpack.c.b16 %v9660, %v9658
    %v9767 = vpack.c.b16 %v9661, %v9659
    %v9768 = vpack.c.b16 %v9664, %v9662
    %v9769 = vpack.c.b16 %v9665, %v9663
    %v9770 = vpack.c.b16 %v9668, %v9666
    %v9771 = vpack.c.b16 %v9669, %v9667
    %v9772 = vpack.c.b16 %v9672, %v9670
    %v9773 = vpack.c.b16 %v9673, %v9671
    %v9774 = vpack.c.b16 %v9676, %v9674
    %v9775 = vpack.c.b16 %v9677, %v9675
    %v9776 = vpack.c.b16 %v9680, %v9678
    %v9777 = vpack.c.b16 %v9681, %v9679
    %v9778 = vpack.c.b16 %v9684, %v9682
    %v9779 = vpack.c.b16 %v9685, %v9683
    %v9780 = vpack.c.b16 %v9688, %v9686
    %v9781 = vpack.c.b16 %v9689, %v9687
    %v9782 = vpack.c.b16 %v9692, %v9690
    %v9783 = vpack.c.b16 %v9693, %v9691
    %v9784 = vpack.c.b16 %v9696, %v9694
    %v9785 = vpack.c.b16 %v9697, %v9695
    %v9786 = vpack.c.b16 %v9700, %v9698
    %v9787 = vpack.c.b16 %v9701, %v9699
    %v9788 = vpack.c.b16 %v9704, %v9702
    %v9789 = vpack.c.b16 %v9705, %v9703
    %v9790 = vpack.c.b16 %v9708, %v9706
    %v9791 = vpack.c.b16 %v9709, %v9707
    %v9792 = vpack.c.b16 %v9712, %v9710
    %v9793 = vpack.c.b16 %v9713, %v9711
    %v9794 = vpack.c.b16 %v9716, %v9714
    %v9795 = vpack.c.b16 %v9717, %v9715
    %v9796 = vpack.c.b16 %v9720, %v9718
    %v9797 = vpack.c.b16 %v9721, %v9719
    %v9798 = vpack.c.b16 %v9724, %v9722
    %v9799 = vpack.c.b16 %v9725, %v9723
    %v9800 = vpack.c.b16 %v9728, %v9726
    %v9801 = vpack.c.b16 %v9729, %v9727
    %v9802 = vpack.c.b16 %v9732, %v9730
    %v9803 = vpack.c.b16 %v9733, %v9731
    %v9804 = vpack.c.b16 %v9736, %v9734
    %v9805 = vpack.c.b16 %v9737, %v9735
    %v9806 = vpack.c.b16 %v9740, %v9738
    %v9807 = vpack.c.b16 %v9741, %v9739
    %v9808 = vpack.c.b16 %v9744, %v9742
    %v9809 = vpack.c.b16 %v9745, %v9743
    %9874 = vmatpush.bf16.msra.mxu0 %v9760
    %9875 = vmatpush.bf16.msra.mxu0 %v9758
    %9876 = vmatpush.bf16.msra.mxu0 %v9756
    %9877 = vmatpush.bf16.msra.mxu0 %v9754
    %9878 = vmatpush.bf16.msra.mxu0 %v9752
    %9879 = vmatpush.bf16.msra.mxu0 %v9750
    %9880 = vmatpush.bf16.msra.mxu0 %v9748
    %9881 = vmatpush.bf16.msra.mxu0 %v9746
    %9882 = vmatmul.bf16.gmra.mxu0 %v9480
    %v9883 = vpop.f32.mrf.mxu0
    %v9884 = vadd.f32 %v9550, %v9883
    %v9885 = vpop.f32.mrf.mxu0
    %9886 = vdwg.mxu0
    %9887 = vmatpush.bf16.msra.mxu0 %v9776
    %9888 = vmatpush.bf16.msra.mxu0 %v9774
    %9889 = vmatpush.bf16.msra.mxu0 %v9772
    %9890 = vmatpush.bf16.msra.mxu0 %v9770
    %9891 = vmatpush.bf16.msra.mxu0 %v9768
    %9892 = vmatpush.bf16.msra.mxu0 %v9766
    %9893 = vmatpush.bf16.msra.mxu0 %v9764
    %9894 = vmatpush.bf16.msra.mxu0 %v9762
    %9895 = vmatmul.bf16.gmra.mxu0 %v9481
    %v9896 = vpop.f32.mrf.mxu0
    %v9897 = vadd.f32 %v9884, %v9896
    %v9898 = vpop.f32.mrf.mxu0
    %9899 = vdwg.mxu0
    %9900 = vmatpush.bf16.msra.mxu0 %v9792
    %9901 = vmatpush.bf16.msra.mxu0 %v9790
    %9902 = vmatpush.bf16.msra.mxu0 %v9788
    %9903 = vmatpush.bf16.msra.mxu0 %v9786
    %9904 = vmatpush.bf16.msra.mxu0 %v9784
    %9905 = vmatpush.bf16.msra.mxu0 %v9782
    %9906 = vmatpush.bf16.msra.mxu0 %v9780
    %9907 = vmatpush.bf16.msra.mxu0 %v9778
    %9908 = vmatmul.bf16.gmra.mxu0 %v9482
    %v9909 = vpop.f32.mrf.mxu0
    %v9910 = vadd.f32 %v9897, %v9909
    %v9911 = vpop.f32.mrf.mxu0
    %9912 = vdwg.mxu0
    %9913 = vmatpush.bf16.msra.mxu0 %v9808
    %9914 = vmatpush.bf16.msra.mxu0 %v9806
    %9915 = vmatpush.bf16.msra.mxu0 %v9804
    %9916 = vmatpush.bf16.msra.mxu0 %v9802
    %9917 = vmatpush.bf16.msra.mxu0 %v9800
    %9918 = vmatpush.bf16.msra.mxu0 %v9798
    %9919 = vmatpush.bf16.msra.mxu0 %v9796
    %9920 = vmatpush.bf16.msra.mxu0 %v9794
    %9921 = vmatmul.bf16.gmra.mxu0 %v9483
    %v9922 = vpop.f32.mrf.mxu0
    %v9923 = vadd.f32 %v9910, %v9922
    %v9924 = vpop.f32.mrf.mxu0
    %9925 = vdwg.mxu0
    %9926 = vmatpush.bf16.msra.mxu0 %v9761
    %9927 = vmatpush.bf16.msra.mxu0 %v9759
    %9928 = vmatpush.bf16.msra.mxu0 %v9757
    %9929 = vmatpush.bf16.msra.mxu0 %v9755
    %9930 = vmatpush.bf16.msra.mxu0 %v9753
    %9931 = vmatpush.bf16.msra.mxu0 %v9751
    %9932 = vmatpush.bf16.msra.mxu0 %v9749
    %9933 = vmatpush.bf16.msra.mxu0 %v9747
    %9934 = vmatmul.bf16.gmra.mxu0 %v9480
    %v9935 = vpop.f32.mrf.mxu0
    %v9936 = vadd.f32 %v9551, %v9935
    %v9937 = vpop.f32.mrf.mxu0
    %9938 = vdwg.mxu0
    %9939 = vmatpush.bf16.msra.mxu0 %v9777
    %9940 = vmatpush.bf16.msra.mxu0 %v9775
    %9941 = vmatpush.bf16.msra.mxu0 %v9773
    %9942 = vmatpush.bf16.msra.mxu0 %v9771
    %9943 = vmatpush.bf16.msra.mxu0 %v9769
    %9944 = vmatpush.bf16.msra.mxu0 %v9767
    %9945 = vmatpush.bf16.msra.mxu0 %v9765
    %9946 = vmatpush.bf16.msra.mxu0 %v9763
    %9947 = vmatmul.bf16.gmra.mxu0 %v9481
    %v9948 = vpop.f32.mrf.mxu0
    %v9949 = vadd.f32 %v9936, %v9948
    %v9950 = vpop.f32.mrf.mxu0
    %9951 = vdwg.mxu0
    %9952 = vmatpush.bf16.msra.mxu0 %v9793
    %9953 = vmatpush.bf16.msra.mxu0 %v9791
    %9954 = vmatpush.bf16.msra.mxu0 %v9789
    %9955 = vmatpush.bf16.msra.mxu0 %v9787
    %9956 = vmatpush.bf16.msra.mxu0 %v9785
    %9957 = vmatpush.bf16.msra.mxu0 %v9783
    %9958 = vmatpush.bf16.msra.mxu0 %v9781
    %9959 = vmatpush.bf16.msra.mxu0 %v9779
    %9960 = vmatmul.bf16.gmra.mxu0 %v9482
    %v9961 = vpop.f32.mrf.mxu0
    %v9962 = vadd.f32 %v9949, %v9961
    %v9963 = vpop.f32.mrf.mxu0
    %9964 = vdwg.mxu0
    %9965 = vmatpush.bf16.msra.mxu0 %v9809
    %9966 = vmatpush.bf16.msra.mxu0 %v9807
    %9967 = vmatpush.bf16.msra.mxu0 %v9805
    %9968 = vmatpush.bf16.msra.mxu0 %v9803
    %9969 = vmatpush.bf16.msra.mxu0 %v9801
    %9970 = vmatpush.bf16.msra.mxu0 %v9799
    %9971 = vmatpush.bf16.msra.mxu0 %v9797
    %9972 = vmatpush.bf16.msra.mxu0 %v9795
    %9973 = vmatmul.bf16.gmra.mxu0 %v9483
    %v9974 = vpop.f32.mrf.mxu0
    %v9975 = vadd.f32 %v9962, %v9974
    %v9976 = vpop.f32.mrf.mxu0
    %9977 = vdwg.mxu0
    %v9978 = vmax.f32 %v9923, 0.0
    %v9979 = vmax.f32 %v9975, 0.0
    %v9980 = vpack.c.bf16 %v9978, %v9978
    %v9981 = vpack.c.bf16 %v9979, %v9979
    %v9982 = vld [vmem:[#allocation24] sm:$0xf]
    %v9983 = vld [vmem:[#allocation24 + $0x4] sm:$0xf]
    %v9984 = vld [vmem:[#allocation24 + $0x8] sm:$0xf]
    %v9985 = vld [vmem:[#allocation24 + $0xc] sm:$0xf]
    %v9986 = vld [vmem:[#allocation24 + $0x10] sm:$0xf]
    %v9987 = vld [vmem:[#allocation24 + $0x14] sm:$0xf]
    %v9988 = vld [vmem:[#allocation24 + $0x18] sm:$0xf]
    %v9989 = vld [vmem:[#allocation24 + $0x1c] sm:$0xf]
    %v9990 = vld [vmem:[#allocation24 + $0x20] sm:$0xf]
    %v9991 = vld [vmem:[#allocation24 + $0x24] sm:$0xf]
    %v9992 = vld [vmem:[#allocation24 + $0x28] sm:$0xf]
    %v9993 = vld [vmem:[#allocation24 + $0x2c] sm:$0xf]
    %v9994 = vld [vmem:[#allocation24 + $0x30] sm:$0xf]
    %v9995 = vld [vmem:[#allocation24 + $0x34] sm:$0xf]
    %v9996 = vld [vmem:[#allocation24 + $0x38] sm:$0xf]
    %v9997 = vld [vmem:[#allocation24 + $0x3c] sm:$0xf]
    %v9998 = vld [vmem:[#allocation24 + $0x40] sm:$0xf]
    %v9999 = vld [vmem:[#allocation24 + $0x44] sm:$0xf]
    %v10000 = vld [vmem:[#allocation24 + $0x48] sm:$0xf]
    %v10001 = vld [vmem:[#allocation24 + $0x4c] sm:$0xf]
    %v10002 = vld [vmem:[#allocation24 + $0x50] sm:$0xf]
    %v10003 = vld [vmem:[#allocation24 + $0x54] sm:$0xf]
    %v10004 = vld [vmem:[#allocation24 + $0x58] sm:$0xf]
    %v10005 = vld [vmem:[#allocation24 + $0x5c] sm:$0xf]
    %v10006 = vld [vmem:[#allocation24 + $0x60] sm:$0xf]
    %v10007 = vld [vmem:[#allocation24 + $0x64] sm:$0xf]
    %v10008 = vld [vmem:[#allocation24 + $0x68] sm:$0xf]
    %v10009 = vld [vmem:[#allocation24 + $0x6c] sm:$0xf]
    %v10010 = vld [vmem:[#allocation24 + $0x70] sm:$0xf]
    %v10011 = vld [vmem:[#allocation24 + $0x74] sm:$0xf]
    %v10012 = vld [vmem:[#allocation24 + $0x78] sm:$0xf]
    %v10013 = vld [vmem:[#allocation24 + $0x7c] sm:$0xf]
    %v10014 = vld [vmem:[#allocation26] sm:$0x1]
    %v10016 = vperm.slane %v10014, 0
    %v10050 = vunpack.c.l.b16 %v9982
    %v10051 = vunpack.c.l.b16 %v9983
    %v10052 = vunpack.c.l.b16 %v9984
    %v10053 = vunpack.c.l.b16 %v9985
    %v10054 = vunpack.c.l.b16 %v9986
    %v10055 = vunpack.c.l.b16 %v9987
    %v10056 = vunpack.c.l.b16 %v9988
    %v10057 = vunpack.c.l.b16 %v9989
    %v10058 = vunpack.c.l.b16 %v9990
    %v10059 = vunpack.c.l.b16 %v9991
    %v10060 = vunpack.c.l.b16 %v9992
    %v10061 = vunpack.c.l.b16 %v9993
    %v10062 = vunpack.c.l.b16 %v9994
    %v10063 = vunpack.c.l.b16 %v9995
    %v10064 = vunpack.c.l.b16 %v9996
    %v10065 = vunpack.c.l.b16 %v9997
    %v10066 = vunpack.c.l.b16 %v9998
    %v10067 = vunpack.c.l.b16 %v9999
    %v10068 = vunpack.c.l.b16 %v10000
    %v10069 = vunpack.c.l.b16 %v10001
    %v10070 = vunpack.c.l.b16 %v10002
    %v10071 = vunpack.c.l.b16 %v10003
    %v10072 = vunpack.c.l.b16 %v10004
    %v10073 = vunpack.c.l.b16 %v10005
    %v10074 = vunpack.c.l.b16 %v10006
    %v10075 = vunpack.c.l.b16 %v10007
    %v10076 = vunpack.c.l.b16 %v10008
    %v10077 = vunpack.c.l.b16 %v10009
    %v10078 = vunpack.c.l.b16 %v10010
    %v10079 = vunpack.c.l.b16 %v10011
    %v10080 = vunpack.c.l.b16 %v10012
    %v10081 = vunpack.c.l.b16 %v10013
    %v10082 = vpack.c.b16 %v10051, %v10050
    %v10083 = vpack.c.b16 %v10053, %v10052
    %v10084 = vpack.c.b16 %v10055, %v10054
    %v10085 = vpack.c.b16 %v10057, %v10056
    %v10086 = vpack.c.b16 %v10059, %v10058
    %v10087 = vpack.c.b16 %v10061, %v10060
    %v10088 = vpack.c.b16 %v10063, %v10062
    %v10089 = vpack.c.b16 %v10065, %v10064
    %v10090 = vpack.c.b16 %v10067, %v10066
    %v10091 = vpack.c.b16 %v10069, %v10068
    %v10092 = vpack.c.b16 %v10071, %v10070
    %v10093 = vpack.c.b16 %v10073, %v10072
    %v10094 = vpack.c.b16 %v10075, %v10074
    %v10095 = vpack.c.b16 %v10077, %v10076
    %v10096 = vpack.c.b16 %v10079, %v10078
    %v10097 = vpack.c.b16 %v10081, %v10080
    %10114 = vmatpush.bf16.msra.mxu0 %v10089
    %10115 = vmatpush.bf16.msra.mxu0 %v10088
    %10116 = vmatpush.bf16.msra.mxu0 %v10087
    %10117 = vmatpush.bf16.msra.mxu0 %v10086
    %10118 = vmatpush.bf16.msra.mxu0 %v10085
    %10119 = vmatpush.bf16.msra.mxu0 %v10084
    %10120 = vmatpush.bf16.msra.mxu0 %v10083
    %10121 = vmatpush.bf16.msra.mxu0 %v10082
    %10122 = vmatmul.bf16.gmra.mxu0 %v9980
    %v10123 = vpop.f32.mrf.mxu0
    %v10124 = vadd.f32 %v10016, %v10123
    %v10125 = vpop.f32.mrf.mxu0
    %10126 = vdwg.mxu0
    %10127 = vmatpush.bf16.msra.mxu0 %v10097
    %10128 = vmatpush.bf16.msra.mxu0 %v10096
    %10129 = vmatpush.bf16.msra.mxu0 %v10095
    %10130 = vmatpush.bf16.msra.mxu0 %v10094
    %10131 = vmatpush.bf16.msra.mxu0 %v10093
    %10132 = vmatpush.bf16.msra.mxu0 %v10092
    %10133 = vmatpush.bf16.msra.mxu0 %v10091
    %10134 = vmatpush.bf16.msra.mxu0 %v10090
    %10135 = vmatmul.bf16.gmra.mxu0 %v9981
    %v10136 = vpop.f32.mrf.mxu0
    %v10137 = vadd.f32 %v10124, %v10136
    %v10138 = vpop.f32.mrf.mxu0
    %10139 = vdwg.mxu0
    %10140 = vst [vmem:[#allocation29] sm:$0xff] %v10137
    // Predicated region
    $region134: #{tpu_custom_call.1} parent=1 // pred_check
      _
    $region135: #{tpu_custom_call.1} parent=1 // pred_check_branch
      %10142 = sbr.rel (0) target = $region137
    $region136: #{tpu_custom_call.1} parent=1 // pred_region
      %10144 = vsyncadd [#allocation5], 0
      %s10146 = sshll.u32 [#allocation29], 4
      %s10147 = int_to_ptr.vmem [resolvable:$true] %s10146
      %s10148 = sshll.u32 %s17, 4
      %s10149 = int_to_ptr.hbm [resolvable:$true] %s10148
      %10151 = dma.vmem_to_hbm [thread:$0]  %s10147, 128, %s10149, [#allocation5]
    $region137: #{tpu_custom_call.1} parent=1 // pred_fallthru
      _
    // Predicated region
    $region138: #{tpu_custom_call.1} parent=1 // pred_check
      _
    $region139: #{tpu_custom_call.1} parent=1 // pred_check_branch
      %10153 = sbr.rel (0) target = $region141
    $region140: #{tpu_custom_call.1} parent=1 // pred_region
      %10155 = dma.done [#allocation5], 128
    $region141: #{tpu_custom_call.1} parent=1 // pred_fallthru
      _
    %10156 = vsyncpa [#allocation4], 1
    %10157 = vsyncpa [#allocation7], 1
    %10158 = vsyncpa [#allocation10], 1
    %10159 = vsyncpa [#allocation13], 1
    %10160 = vsyncpa [#allocation16], 1
    %10161 = vsyncpa [#allocation19], 1
    %10162 = vsyncpa [#allocation22], 1
    %10163 = vsyncpa [#allocation25], 1
    %10164 = vsyncpa [#allocation28], 1
    %10165 = vsyncpa [#allocation5], 1

</llo_original>
